<compile_context>
chip_gen: v6e
topology: v6e:2x2x1
jax: 0.10.0
libtpu: 0.0.40
codegen_flags: <defaults>
</compile_context>

<pallas_src>
import math
import functools

import jax
import jax.numpy as jnp
from jax.experimental import pallas as pl
from jax.experimental.pallas import tpu as pltpu

EPS = 1e-5


# ----------------------------- Pallas kernels ------------------------------

def _graph_mix_kernel(xg_ref, a_ref, xa_ref, *, num_k):
    """unit_gcn graph mixing:  xa_k = x @ A_k  for every adjacency subset.

    xg_ref: (1, C*T, V)   rows (c, t), graph nodes V on lanes
    a_ref : (K, V, V)
    xa_ref: (1, K*C*T, V) rows (k, c, t)
    One flat 2-D matmul per subset (M = C*T) instead of T tiny batched dots.
    """
    xv = xg_ref[0]                                           # (C*T, V) bf16
    rows = xv.shape[0]
    for k in range(num_k):                                   # static unroll, K small
        xa_k = jnp.dot(xv, a_ref[k],
                       preferred_element_type=jnp.float32)   # (C*T, V) f32 acc
        xa_ref[0, k * rows:(k + 1) * rows, :] = xa_k.astype(xa_ref.dtype)


def _unit_tail_kernel(*refs, kt, stride, V, T, t_out, residual):
    """Fused rest of a TCN_GCN_unit (everything lane-dense):

      g = relu(BN( W_gcn(O, K*C) @ xa(K*C, T*V) ))           # one channel-mix matmul
      y = relu(BN( temporal conv_kt(g, stride) ))            # kt tap matmuls in VMEM
      y += residual (identity x, or 1x1 strided "down" conv path)

    Scratch: VMEM buffer(s) holding g with zero-filled pad regions so every
    conv tap is a contiguous lane slice (for stride==2 the time axis arrives
    phase-permuted [even|odd] so two phase buffers keep taps contiguous).
    """
    if residual == 'down':
        (xa_ref, wg_ref, gsc_ref, gsh_ref, wt_ref, tsc_ref, tsh_ref,
         xd_ref, wd_ref, dsc_ref, dsh_ref, o_ref, *scratch) = refs
    elif residual == 'identity':
        (xa_ref, wg_ref, gsc_ref, gsh_ref, wt_ref, tsc_ref, tsh_ref,
         xr_ref, o_ref, *scratch) = refs
    else:
        (xa_ref, wg_ref, gsc_ref, gsh_ref, wt_ref, tsc_ref, tsh_ref,
         o_ref, *scratch) = refs

    O2 = o_ref.shape[1]
    pad = (kt - 1) // 2

    # ---- GCN channel mix (contraction depth K*C) + folded BN + ReLU --------
    xa = xa_ref[0]                                           # (K*C, T*V) bf16
    g = jnp.dot(wg_ref[...], xa,
                preferred_element_type=jnp.float32)          # (O, T*V) f32
    g = jnp.maximum(g * gsc_ref[...] + gsh_ref[...], 0.0)
    gb = g.astype(jnp.bfloat16)
    O = gb.shape[0]

    # ---- temporal conv (Unit2D): kt tap matmuls over contiguous lane slices -
    acc = jnp.zeros((O2, t_out * V), jnp.float32)
    if stride == 1:
        buf = scratch[0]                                     # (O, (T+2*pad)*V) bf16
        if pad > 0:                                          # zero only the halos
            zpad = jnp.zeros((O, pad * V), buf.dtype)
            buf[:, :pad * V] = zpad
            buf[:, (pad + T) * V:] = zpad
        buf[:, pad * V:(pad + T) * V] = gb
        for d in range(kt):                                  # static unroll over taps
            col = buf[:, d * V: d * V + t_out * V]
            acc = acc + jnp.dot(wt_ref[d], col,
                                preferred_element_type=jnp.float32)
    else:                                                    # stride == 2 (pad even)
        te = (T + 1) // 2                                    # number of even frames
        to = T // 2                                          # number of odd frames
        padl = pad // 2
        lb = t_out + pad
        ebuf, obuf = scratch                                 # phase-split padded bufs
        zl = jnp.zeros((O, padl * V), ebuf.dtype)
        ebuf[:, :padl * V] = zl
        obuf[:, :padl * V] = zl
        ebuf[:, padl * V:(padl + te) * V] = gb[:, :te * V]   # even frames of g
        obuf[:, padl * V:(padl + to) * V] = gb[:, te * V:]   # odd frames of g
        if (lb - padl - te) > 0:
            ebuf[:, (padl + te) * V:] = jnp.zeros((O, (lb - padl - te) * V), ebuf.dtype)
        if (lb - padl - to) > 0:
            obuf[:, (padl + to) * V:] = jnp.zeros((O, (lb - padl - to) * V), obuf.dtype)
        for d in range(kt):
            r = d % 2
            q = (d - r - pad) // 2                           # exact, pad is even
            off = (q + padl) * V
            src = ebuf if r == 0 else obuf
            col = src[:, off: off + t_out * V]
            acc = acc + jnp.dot(wt_ref[d], col,
                                preferred_element_type=jnp.float32)

    y = jnp.maximum(acc * tsc_ref[...] + tsh_ref[...], 0.0)  # folded BN + ReLU

    # ---- residual ------------------------------------------------------------
    if residual == 'identity':
        y = y + xr_ref[0].astype(jnp.float32)
    elif residual == 'down':                                 # Unit2D k=1, stride s
        res = jnp.dot(wd_ref[...], xd_ref[0],
                      preferred_element_type=jnp.float32)    # (O2, t_out*V)
        res = jnp.maximum(res * dsc_ref[...] + dsh_ref[...], 0.0)
        y = y + res

    o_ref[0] = y.astype(o_ref.dtype)                         # lane-dense store


# ------------------------------ layer wrappers ------------------------------

_CPARAMS = pltpu.CompilerParams(dimension_semantics=("parallel",),
                                vmem_limit_bytes=32 * 1024 * 1024)


def _graph_mix(x_bctv, A):
    """x_bctv: (B, C, T, V) bf16 (time axis possibly phase-permuted)."""
    B, C, T, V = x_bctv.shape
    K = A.shape[0]
    xg = x_bctv.reshape(B, C * T, V)
    xa = pl.pallas_call(
        functools.partial(_graph_mix_kernel, num_k=K),
        out_shape=jax.ShapeDtypeStruct((B, K * C * T, V), jnp.bfloat16),
        grid=(B,),
        in_specs=[
            pl.BlockSpec((1, C * T, V), lambda b: (b, 0, 0)),
            pl.BlockSpec((K, V, V), lambda b: (0, 0, 0)),
        ],
        out_specs=pl.BlockSpec((1, K * C * T, V), lambda b: (b, 0, 0)),
        compiler_params=_CPARAMS,
    )(xg, A)
    # Free (contiguous) re-view: columns become (t, v), lane-dense for kernel B.
    return xa.reshape(B, K * C, T * V)


def _unit_tail(xa, unit, x_res=None, x_down=None):
    B, KC, TV = xa.shape
    V = unit['V']
    T = TV // V
    wg = unit['wg']
    O = wg.shape[0]
    wt = unit['wt']
    kt, O2, _ = wt.shape
    stride = unit['stride']
    pad = (kt - 1) // 2
    t_out = (T + 2 * pad - kt) // stride + 1
    residual = unit['residual']

    gsc = unit['gscale'].reshape(O, 1)
    gsh = unit['gshift'].reshape(O, 1)
    tsc = unit['tscale'].reshape(O2, 1)
    tsh = unit['tshift'].reshape(O2, 1)

    inputs = [xa, wg, gsc, gsh, wt, tsc, tsh]
    in_specs = [
        pl.BlockSpec((1, KC, TV), lambda b: (b, 0, 0)),
        pl.BlockSpec((O, KC), lambda b: (0, 0)),
        pl.BlockSpec((O, 1), lambda b: (0, 0)),
        pl.BlockSpec((O, 1), lambda b: (0, 0)),
        pl.BlockSpec((kt, O2, O), lambda b: (0, 0, 0)),
        pl.BlockSpec((O2, 1), lambda b: (0, 0)),
        pl.BlockSpec((O2, 1), lambda b: (0, 0)),
    ]
    if residual == 'identity':
        inputs.append(x_res)
        in_specs.append(pl.BlockSpec((1, O2, t_out * V), lambda b: (b, 0, 0)))
    elif residual == 'down':
        c_in = x_down.shape[1]
        inputs += [x_down, unit['wd'],
                   unit['dscale'].reshape(O2, 1), unit['dshift'].reshape(O2, 1)]
        in_specs += [
            pl.BlockSpec((1, c_in, t_out * V), lambda b: (b, 0, 0)),
            pl.BlockSpec((O2, c_in), lambda b: (0, 0)),
            pl.BlockSpec((O2, 1), lambda b: (0, 0)),
            pl.BlockSpec((O2, 1), lambda b: (0, 0)),
        ]

    if stride == 1:
        scratch = [pltpu.VMEM((O, (T + 2 * pad) * V), jnp.bfloat16)]
    else:
        assert stride == 2 and pad % 2 == 0, "only strides 1 and 2 are used"
        lb = t_out + pad
        scratch = [pltpu.VMEM((O, lb * V), jnp.bfloat16),
                   pltpu.VMEM((O, lb * V), jnp.bfloat16)]

    kernel = functools.partial(_unit_tail_kernel, kt=kt, stride=stride, V=V,
                               T=T, t_out=t_out, residual=residual)
    return pl.pallas_call(
        kernel,
        out_shape=jax.ShapeDtypeStruct((B, O2, t_out * V), jnp.bfloat16),
        grid=(B,),
        in_specs=in_specs,
        out_specs=pl.BlockSpec((1, O2, t_out * V), lambda b: (b, 0, 0)),
        scratch_shapes=scratch,
        compiler_params=_CPARAMS,
    )(*inputs)


def unit_forward(x, unit):
    """One TCN_GCN_unit (or gcn0+tcn0 when residual == 'none').

    x: (B, C, T*V) bf16, natural time order.
    """
    V = unit['V']
    B, C, TV = x.shape
    T = TV // V
    stride = unit['stride']
    residual = unit['residual']

    x4 = x.reshape(B, C, T, V)
    if stride == 1:
        xg4 = x4
    else:
        # Phase-major time permutation ([even frames | odd frames]) so the
        # stride-2 temporal conv inside the fused kernel only needs contiguous
        # lane slices.  Cheap strided slices + concat (no gather); unit
        # outputs come back in natural time order.
        xg4 = jnp.concatenate([x4[:, :, 0::stride, :], x4[:, :, 1::stride, :]],
                              axis=2)
    xa = _graph_mix(xg4, unit['A'])

    x_res = x if residual == 'identity' else None
    x_down = None
    if residual == 'down':
        kt = unit['wt'].shape[0]
        pad = (kt - 1) // 2
        t_out = (T + 2 * pad - kt) // stride + 1
        x_down = x4[:, :, ::stride, :].reshape(B, C, t_out * V)   # plain-JAX glue
    return _unit_tail(xa, unit, x_res=x_res, x_down=x_down)


# ----------------------------- parameter setup ------------------------------

def _fold_bn(key, c, conv_bias):
    """Deterministic synthetic BN params folded with the conv bias (inference)."""
    k1, k2, k3, k4 = jax.random.split(key, 4)
    gamma = 1.0 + 0.1 * jax.random.normal(k1, (c,), jnp.float32)
    beta = 0.1 * jax.random.normal(k2, (c,), jnp.float32)
    mean = 0.1 * jax.random.normal(k3, (c,), jnp.float32)
    var = 1.0 + 0.1 * jax.random.uniform(k4, (c,), jnp.float32)
    scale = gamma / jnp.sqrt(var + EPS)
    shift = scale * (conv_bias - mean) + beta
    return scale, shift


def init_unit(key, in_c, out_c, A, kt, stride, residual, V):
    kg, kgb, kbng, ktw, ktb, kbnt, kd = jax.random.split(key, 7)
    K = A.shape[0]
    # unit_gcn: K 1x1 convs (out_c, in_c) summed, then BN (biases folded in).
    wg = jax.random.normal(kg, (K, out_c, in_c), jnp.float32) / math.sqrt(in_c)
    bg = 0.02 * jax.random.normal(kgb, (K, out_c), jnp.float32)
    gscale, gshift = _fold_bn(kbng, out_c, bg.sum(axis=0))
    wg_flat = jnp.transpose(wg, (1, 0, 2)).reshape(out_c, K * in_c)   # cols (k, c)
    # Unit2D temporal conv: per-tap weight (kt, out_c, out_c).
    wt = jax.random.normal(ktw, (kt, out_c, out_c), jnp.float32) / math.sqrt(out_c * kt)
    bt = 0.02 * jax.random.normal(ktb, (out_c,), jnp.float32)
    tscale, tshift = _fold_bn(kbnt, out_c, bt)
    unit = dict(A=A.astype(jnp.bfloat16), V=V,
                wg=wg_flat.astype(jnp.bfloat16), gscale=gscale, gshift=gshift,
                wt=wt.astype(jnp.bfloat16), tscale=tscale, tshift=tshift,
                stride=stride, residual=residual)
    if residual == 'down':
        kdw, kdb, kdbn = jax.random.split(kd, 3)
        wd = jax.random.normal(kdw, (out_c, in_c), jnp.float32) / math.sqrt(in_c)
        bd = 0.02 * jax.random.normal(kdb, (out_c,), jnp.float32)
        dscale, dshift = _fold_bn(kdbn, out_c, bd)
        unit.update(wd=wd.astype(jnp.bfloat16), dscale=dscale, dshift=dshift)
    return unit


def init_model(key, channel, V, backbone_config, num_subsets, kt):
    n_units = 1 + len(backbone_config)
    keys = jax.random.split(key, 1 + n_units)
    A = jax.random.uniform(keys[0], (num_subsets, V, V), jnp.float32) / V
    in_c0 = backbone_config[0][0]
    # gcn0 + tcn0 fused as a unit with no residual.
    units = [init_unit(keys[1], channel, in_c0, A, kt, 1, 'none', V)]
    for i, (in_c, out_c, stride) in enumerate(backbone_config):
        residual = 'identity' if (in_c == out_c and stride == 1) else 'down'
        units.append(init_unit(keys[2 + i], in_c, out_c, A, kt, stride, residual, V))
    return dict(units=units)


# ------------------------------- full forward -------------------------------

def model_forward(x, params):
    # x: (N, C, T, V, M); use_data_bn=False path of Model.forward
    N, C, T, V, M = x.shape
    x = jnp.transpose(x, (0, 4, 1, 2, 3)).reshape(N * M, C, T, V)   # torch permute+view
    x = x.reshape(N * M, C, T * V).astype(jnp.bfloat16)             # lane-dense layout

    for unit in params['units']:                                     # gcn0+tcn0, backbone
        x = unit_forward(x, unit)

    # Head: avg_pool2d over V -> mean over M -> avg_pool1d over T == mean over (M,T,V).
    # Plain JAX (memory-bound reduce; avoids a whole-tensor single-block VMEM pull).
    B, Cf, TfV = x.shape
    Tf = TfV // V
    xf = x.astype(jnp.float32).reshape(N, M, Cf, Tf, V)
    return xf.mean(axis=(1, 3, 4))
    # NOTE: self.fcn (Conv1d classifier) is constructed in __init__ but never
    # applied in Model.forward, so it is intentionally omitted here.


# ----------------------------------- main ------------------------------------

if __name__ == "__main__":
    key = jax.random.PRNGKey(0)
    k_param, k_data = jax.random.split(key)

    # small shapes consistent with the module: (N, C, T, V, M)
    N, C, T, V, M = 2, 3, 16, 16, 2
    backbone_config = [(16, 16, 1), (16, 32, 2), (32, 32, 1)]  # (in_c, out_c, stride)
    temporal_kernel_size = 9
    num_subsets = 3                                            # adjacency partitions K

    params = init_model(k_param, C, V, backbone_config, num_subsets,
                        temporal_kernel_size)
    x = jax.random.normal(k_data, (N, C, T, V, M), dtype=jnp.float32)

    fwd = jax.jit(lambda xx: model_forward(xx, params))
    out = jax.block_until_ready(fwd(x))
    assert out.shape == (N, backbone_config[-1][1]), out.shape
    print("KERNEL_OK")
</pallas_src>

<mosaic_0001>
module attributes {stable_mosaic.version = 11 : i64} {
  func.func @_graph_mix_kernel(%arg0: i32, %arg1: memref<1x48x16xbf16, #tpu.memory_space<vmem>>, %arg2: memref<3x16x16xbf16, #tpu.memory_space<vmem>>, %arg3: memref<1x144x16xbf16, #tpu.memory_space<vmem>>) attributes {dimension_semantics = [#tpu.dimension_semantics<parallel>], iteration_bounds = array<i64: 4>, scalar_prefetch = 0 : i64, scratch_operands = 0 : i64, tpu.core_type = #tpu.core_type<tc>, window_params = [{transform_indices = @transform_0, window_bounds = array<i64: 1, 48, 16>}, {pipeline_mode = #tpu.pipeline_mode<synchronous>, transform_indices = @transform_1, window_bounds = array<i64: 3, 16, 16>}, {transform_indices = @transform_2, window_bounds = array<i64: 1, 144, 16>}]} {
    %c0 = arith.constant 0 : index
    %c0_0 = arith.constant 0 : index
    %c0_1 = arith.constant 0 : index
    %0 = vector.load %arg1[%c0, %c0_0, %c0_1] : memref<1x48x16xbf16, #tpu.memory_space<vmem>>, vector<1x48x16xbf16>
    %1 = vector.shape_cast %0 : vector<1x48x16xbf16> to vector<48x16xbf16>
    %c0_2 = arith.constant 0 : index
    %c0_3 = arith.constant 0 : index
    %c0_4 = arith.constant 0 : index
    %2 = vector.load %arg2[%c0_2, %c0_3, %c0_4] : memref<3x16x16xbf16, #tpu.memory_space<vmem>>, vector<1x16x16xbf16>
    %3 = vector.shape_cast %2 : vector<1x16x16xbf16> to vector<16x16xbf16>
    %cst = arith.constant dense<0.000000e+00> : vector<48x16xf32>
    %4 = tpu.matmul %1, %3, %cst {dimension_numbers = #tpu.dot_dimension_numbers<[1], [0], [0], [1], [0, 0, 1, 1], [], []>} : vector<48x16xbf16>, vector<16x16xbf16>, vector<48x16xf32> -> vector<48x16xf32>
    %5 = arith.truncf %4 : vector<48x16xf32> to vector<48x16xbf16>
    %c0_5 = arith.constant 0 : index
    %c0_6 = arith.constant 0 : index
    %c0_7 = arith.constant 0 : index
    %6 = vector.load %arg3[%c0_5, %c0_6, %c0_7] : memref<1x144x16xbf16, #tpu.memory_space<vmem>>, vector<1x48x16xbf16>
    %7 = vector.shape_cast %6 : vector<1x48x16xbf16> to vector<48x16xbf16>
    %8 = vector.shape_cast %5 : vector<48x16xbf16> to vector<1x48x16xbf16>
    tpu.vector_store %arg3[%c0_5, %c0_6, %c0_7], %8 {strides = array<i32>} : memref<1x144x16xbf16, #tpu.memory_space<vmem>>, vector<1x48x16xbf16>,
    %c1 = arith.constant 1 : index
    %c0_8 = arith.constant 0 : index
    %c0_9 = arith.constant 0 : index
    %9 = vector.load %arg2[%c1, %c0_8, %c0_9] : memref<3x16x16xbf16, #tpu.memory_space<vmem>>, vector<1x16x16xbf16>
    %10 = vector.shape_cast %9 : vector<1x16x16xbf16> to vector<16x16xbf16>
    %cst_10 = arith.constant dense<0.000000e+00> : vector<48x16xf32>
    %11 = tpu.matmul %1, %10, %cst_10 {dimension_numbers = #tpu.dot_dimension_numbers<[1], [0], [0], [1], [0, 0, 1, 1], [], []>} : vector<48x16xbf16>, vector<16x16xbf16>, vector<48x16xf32> -> vector<48x16xf32>
    %12 = arith.truncf %11 : vector<48x16xf32> to vector<48x16xbf16>
    %c0_11 = arith.constant 0 : index
    %c48 = arith.constant 48 : index
    %c0_12 = arith.constant 0 : index
    %13 = vector.load %arg3[%c0_11, %c48, %c0_12] : memref<1x144x16xbf16, #tpu.memory_space<vmem>>, vector<1x48x16xbf16>
    %14 = vector.shape_cast %13 : vector<1x48x16xbf16> to vector<48x16xbf16>
    %15 = vector.shape_cast %12 : vector<48x16xbf16> to vector<1x48x16xbf16>
    tpu.vector_store %arg3[%c0_11, %c48, %c0_12], %15 {strides = array<i32>} : memref<1x144x16xbf16, #tpu.memory_space<vmem>>, vector<1x48x16xbf16>,
    %c2 = arith.constant 2 : index
    %c0_13 = arith.constant 0 : index
    %c0_14 = arith.constant 0 : index
    %16 = vector.load %arg2[%c2, %c0_13, %c0_14] : memref<3x16x16xbf16, #tpu.memory_space<vmem>>, vector<1x16x16xbf16>
    %17 = vector.shape_cast %16 : vector<1x16x16xbf16> to vector<16x16xbf16>
    %cst_15 = arith.constant dense<0.000000e+00> : vector<48x16xf32>
    %18 = tpu.matmul %1, %17, %cst_15 {dimension_numbers = #tpu.dot_dimension_numbers<[1], [0], [0], [1], [0, 0, 1, 1], [], []>} : vector<48x16xbf16>, vector<16x16xbf16>, vector<48x16xf32> -> vector<48x16xf32>
    %19 = arith.truncf %18 : vector<48x16xf32> to vector<48x16xbf16>
    %c0_16 = arith.constant 0 : index
    %c96 = arith.constant 96 : index
    %c0_17 = arith.constant 0 : index
    %20 = vector.load %arg3[%c0_16, %c96, %c0_17] : memref<1x144x16xbf16, #tpu.memory_space<vmem>>, vector<1x48x16xbf16>
    %21 = vector.shape_cast %20 : vector<1x48x16xbf16> to vector<48x16xbf16>
    %22 = vector.shape_cast %19 : vector<48x16xbf16> to vector<1x48x16xbf16>
    tpu.vector_store %arg3[%c0_16, %c96, %c0_17], %22 {strides = array<i32>} : memref<1x144x16xbf16, #tpu.memory_space<vmem>>, vector<1x48x16xbf16>,
    return
  }
  func.func @transform_0(%arg0: i32) -> (i32, i32, i32) {
    %c0_i32 = arith.constant 0 : i32
    %c0_i32_0 = arith.constant 0 : i32
    %c0_i32_1 = arith.constant 0 : i32
    return %arg0, %c0_i32, %c0_i32_0 : i32, i32, i32
  }
  func.func @transform_1(%arg0: i32) -> (i32, i32, i32) {
    %c0_i32 = arith.constant 0 : i32
    %c0_i32_0 = arith.constant 0 : i32
    %c0_i32_1 = arith.constant 0 : i32
    %c0_i32_2 = arith.constant 0 : i32
    return %c0_i32, %c0_i32_0, %c0_i32_1 : i32, i32, i32
  }
  func.func @transform_2(%arg0: i32) -> (i32, i32, i32) {
    %c0_i32 = arith.constant 0 : i32
    %c0_i32_0 = arith.constant 0 : i32
    %c0_i32_1 = arith.constant 0 : i32
    return %arg0, %c0_i32, %c0_i32_0 : i32, i32, i32
  }
}

module attributes {stable_mosaic.version = 11 : i64} {
  func.func @_unit_tail_kernel(%arg0: i32, %arg1: memref<1x9x256xbf16, #tpu.memory_space<vmem>>, %arg2: memref<16x9xbf16, #tpu.memory_space<vmem>>, %arg3: memref<16x1xf32, #tpu.memory_space<vmem>>, %arg4: memref<16x1xf32, #tpu.memory_space<vmem>>, %arg5: memref<9x16x16xbf16, #tpu.memory_space<vmem>>, %arg6: memref<16x1xf32, #tpu.memory_space<vmem>>, %arg7: memref<16x1xf32, #tpu.memory_space<vmem>>, %arg8: memref<1x16x256xbf16, #tpu.memory_space<vmem>>, %arg9: memref<16x384xbf16, #tpu.memory_space<vmem>>) attributes {dimension_semantics = [#tpu.dimension_semantics<parallel>], iteration_bounds = array<i64: 4>, scalar_prefetch = 0 : i64, scratch_operands = 1 : i64, tpu.core_type = #tpu.core_type<tc>, window_params = [{transform_indices = @transform_0, window_bounds = array<i64: 1, 9, 256>}, {pipeline_mode = #tpu.pipeline_mode<synchronous>, transform_indices = @transform_1, window_bounds = array<i64: 16, 9>}, {pipeline_mode = #tpu.pipeline_mode<synchronous>, transform_indices = @transform_2, window_bounds = array<i64: 16, 1>}, {pipeline_mode = #tpu.pipeline_mode<synchronous>, transform_indices = @transform_3, window_bounds = array<i64: 16, 1>}, {pipeline_mode = #tpu.pipeline_mode<synchronous>, transform_indices = @transform_4, window_bounds = array<i64: 9, 16, 16>}, {pipeline_mode = #tpu.pipeline_mode<synchronous>, transform_indices = @transform_5, window_bounds = array<i64: 16, 1>}, {pipeline_mode = #tpu.pipeline_mode<synchronous>, transform_indices = @transform_6, window_bounds = array<i64: 16, 1>}, {transform_indices = @transform_7, window_bounds = array<i64: 1, 16, 256>}]} {
    %c0 = arith.constant 0 : index
    %c0_0 = arith.constant 0 : index
    %c0_1 = arith.constant 0 : index
    %0 = vector.load %arg1[%c0, %c0_0, %c0_1] : memref<1x9x256xbf16, #tpu.memory_space<vmem>>, vector<1x9x256xbf16>
    %1 = vector.shape_cast %0 : vector<1x9x256xbf16> to vector<9x256xbf16>
    %c0_2 = arith.constant 0 : index
    %c0_3 = arith.constant 0 : index
    %2 = vector.load %arg2[%c0_2, %c0_3] : memref<16x9xbf16, #tpu.memory_space<vmem>>, vector<16x9xbf16>
    %cst = arith.constant dense<0.000000e+00> : vector<16x256xf32>
    %3 = tpu.matmul %2, %1, %cst {dimension_numbers = #tpu.dot_dimension_numbers<[1], [0], [0], [1], [0, 0, 1, 1], [], []>} : vector<16x9xbf16>, vector<9x256xbf16>, vector<16x256xf32> -> vector<16x256xf32>
    %c0_4 = arith.constant 0 : index
    %c0_5 = arith.constant 0 : index
    %4 = vector.load %arg3[%c0_4, %c0_5] : memref<16x1xf32, #tpu.memory_space<vmem>>, vector<16x1xf32>
    %5 = vector.broadcast %4 : vector<16x1xf32> to vector<16x256xf32>
    %6 = arith.mulf %3, %5 : vector<16x256xf32>
    %c0_6 = arith.constant 0 : index
    %c0_7 = arith.constant 0 : index
    %7 = vector.load %arg4[%c0_6, %c0_7] : memref<16x1xf32, #tpu.memory_space<vmem>>, vector<16x1xf32>
    %8 = vector.broadcast %7 : vector<16x1xf32> to vector<16x256xf32>
    %9 = arith.addf %6, %8 : vector<16x256xf32>
    %cst_8 = arith.constant 0.000000e+00 : f32
    %10 = vector.broadcast %cst_8 : f32 to vector<16x256xf32>
    %11 = arith.maximumf %9, %10 : vector<16x256xf32>
    %12 = arith.truncf %11 : vector<16x256xf32> to vector<16x256xbf16>
    %cst_9 = arith.constant 0.000000e+00 : f32
    %13 = vector.broadcast %cst_9 : f32 to vector<16x256xf32>
    %cst_10 = arith.constant 0.000000e+00 : bf16
    %14 = vector.broadcast %cst_10 : bf16 to vector<16x64xbf16>
    %c0_11 = arith.constant 0 : index
    %c0_12 = arith.constant 0 : index
    %15 = vector.load %arg9[%c0_11, %c0_12] : memref<16x384xbf16, #tpu.memory_space<vmem>>, vector<16x64xbf16>
    tpu.vector_store %arg9[%c0_11, %c0_12], %14 {strides = array<i32>} : memref<16x384xbf16, #tpu.memory_space<vmem>>, vector<16x64xbf16>,
    %c0_13 = arith.constant 0 : index
    %c320 = arith.constant 320 : index
    %16 = vector.load %arg9[%c0_13, %c320] : memref<16x384xbf16, #tpu.memory_space<vmem>>, vector<16x64xbf16>
    tpu.vector_store %arg9[%c0_13, %c320], %14 {strides = array<i32>} : memref<16x384xbf16, #tpu.memory_space<vmem>>, vector<16x64xbf16>,
    %c0_14 = arith.constant 0 : index
    %c64 = arith.constant 64 : index
    %17 = vector.load %arg9[%c0_14, %c64] : memref<16x384xbf16, #tpu.memory_space<vmem>>, vector<16x256xbf16>
    tpu.vector_store %arg9[%c0_14, %c64], %12 {strides = array<i32>} : memref<16x384xbf16, #tpu.memory_space<vmem>>, vector<16x256xbf16>,
    %c0_15 = arith.constant 0 : index
    %c0_16 = arith.constant 0 : index
    %18 = vector.load %arg9[%c0_15, %c0_16] : memref<16x384xbf16, #tpu.memory_space<vmem>>, vector<16x256xbf16>
    %c0_17 = arith.constant 0 : index
    %c0_18 = arith.constant 0 : index
    %c0_19 = arith.constant 0 : index
    %19 = vector.load %arg5[%c0_17, %c0_18, %c0_19] : memref<9x16x16xbf16, #tpu.memory_space<vmem>>, vector<1x16x16xbf16>
    %20 = vector.shape_cast %19 : vector<1x16x16xbf16> to vector<16x16xbf16>
    %cst_20 = arith.constant dense<0.000000e+00> : vector<16x256xf32>
    %21 = tpu.matmul %20, %18, %cst_20 {dimension_numbers = #tpu.dot_dimension_numbers<[1], [0], [0], [1], [0, 0, 1, 1], [], []>} : vector<16x16xbf16>, vector<16x256xbf16>, vector<16x256xf32> -> vector<16x256xf32>
    %22 = arith.addf %13, %21 : vector<16x256xf32>
    %c0_21 = arith.constant 0 : index
    %c16 = arith.constant 16 : index
    %23 = vector.load %arg9[%c0_21, %c16] : memref<16x384xbf16, #tpu.memory_space<vmem>>, vector<16x256xbf16>
    %c1 = arith.constant 1 : index
    %c0_22 = arith.constant 0 : index
    %c0_23 = arith.constant 0 : index
    %24 = vector.load %arg5[%c1, %c0_22, %c0_23] : memref<9x16x16xbf16, #tpu.memory_space<vmem>>, vector<1x16x16xbf16>
    %25 = vector.shape_cast %24 : vector<1x16x16xbf16> to vector<16x16xbf16>
    %cst_24 = arith.constant dense<0.000000e+00> : vector<16x256xf32>
    %26 = tpu.matmul %25, %23, %cst_24 {dimension_numbers = #tpu.dot_dimension_numbers<[1], [0], [0], [1], [0, 0, 1, 1], [], []>} : vector<16x16xbf16>, vector<16x256xbf16>, vector<16x256xf32> -> vector<16x256xf32>
    %27 = arith.addf %22, %26 : vector<16x256xf32>
    %c0_25 = arith.constant 0 : index
    %c32 = arith.constant 32 : index
    %28 = vector.load %arg9[%c0_25, %c32] : memref<16x384xbf16, #tpu.memory_space<vmem>>, vector<16x256xbf16>
    %c2 = arith.constant 2 : index
    %c0_26 = arith.constant 0 : index
    %c0_27 = arith.constant 0 : index
    %29 = vector.load %arg5[%c2, %c0_26, %c0_27] : memref<9x16x16xbf16, #tpu.memory_space<vmem>>, vector<1x16x16xbf16>
    %30 = vector.shape_cast %29 : vector<1x16x16xbf16> to vector<16x16xbf16>
    %cst_28 = arith.constant dense<0.000000e+00> : vector<16x256xf32>
    %31 = tpu.matmul %30, %28, %cst_28 {dimension_numbers = #tpu.dot_dimension_numbers<[1], [0], [0], [1], [0, 0, 1, 1], [], []>} : vector<16x16xbf16>, vector<16x256xbf16>, vector<16x256xf32> -> vector<16x256xf32>
    %32 = arith.addf %27, %31 : vector<16x256xf32>
    %c0_29 = arith.constant 0 : index
    %c48 = arith.constant 48 : index
    %33 = vector.load %arg9[%c0_29, %c48] : memref<16x384xbf16, #tpu.memory_space<vmem>>, vector<16x256xbf16>
    %c3 = arith.constant 3 : index
    %c0_30 = arith.constant 0 : index
    %c0_31 = arith.constant 0 : index
    %34 = vector.load %arg5[%c3, %c0_30, %c0_31] : memref<9x16x16xbf16, #tpu.memory_space<vmem>>, vector<1x16x16xbf16>
    %35 = vector.shape_cast %34 : vector<1x16x16xbf16> to vector<16x16xbf16>
    %cst_32 = arith.constant dense<0.000000e+00> : vector<16x256xf32>
    %36 = tpu.matmul %35, %33, %cst_32 {dimension_numbers = #tpu.dot_dimension_numbers<[1], [0], [0], [1], [0, 0, 1, 1], [], []>} : vector<16x16xbf16>, vector<16x256xbf16>, vector<16x256xf32> -> vector<16x256xf32>
    %37 = arith.addf %32, %36 : vector<16x256xf32>
    %c0_33 = arith.constant 0 : index
    %c64_34 = arith.constant 64 : index
    %38 = vector.load %arg9[%c0_33, %c64_34] : memref<16x384xbf16, #tpu.memory_space<vmem>>, vector<16x256xbf16>
    %c4 = arith.constant 4 : index
    %c0_35 = arith.constant 0 : index
    %c0_36 = arith.constant 0 : index
    %39 = vector.load %arg5[%c4, %c0_35, %c0_36] : memref<9x16x16xbf16, #tpu.memory_space<vmem>>, vector<1x16x16xbf16>
    %40 = vector.shape_cast %39 : vector<1x16x16xbf16> to vector<16x16xbf16>
    %cst_37 = arith.constant dense<0.000000e+00> : vector<16x256xf32>
    %41 = tpu.matmul %40, %38, %cst_37 {dimension_numbers = #tpu.dot_dimension_numbers<[1], [0], [0], [1], [0, 0, 1, 1], [], []>} : vector<16x16xbf16>, vector<16x256xbf16>, vector<16x256xf32> -> vector<16x256xf32>
    %42 = arith.addf %37, %41 : vector<16x256xf32>
    %c0_38 = arith.constant 0 : index
    %c80 = arith.constant 80 : index
    %43 = vector.load %arg9[%c0_38, %c80] : memref<16x384xbf16, #tpu.memory_space<vmem>>, vector<16x256xbf16>
    %c5 = arith.constant 5 : index
    %c0_39 = arith.constant 0 : index
    %c0_40 = arith.constant 0 : index
    %44 = vector.load %arg5[%c5, %c0_39, %c0_40] : memref<9x16x16xbf16, #tpu.memory_space<vmem>>, vector<1x16x16xbf16>
    %45 = vector.shape_cast %44 : vector<1x16x16xbf16> to vector<16x16xbf16>
    %cst_41 = arith.constant dense<0.000000e+00> : vector<16x256xf32>
    %46 = tpu.matmul %45, %43, %cst_41 {dimension_numbers = #tpu.dot_dimension_numbers<[1], [0], [0], [1], [0, 0, 1, 1], [], []>} : vector<16x16xbf16>, vector<16x256xbf16>, vector<16x256xf32> -> vector<16x256xf32>
    %47 = arith.addf %42, %46 : vector<16x256xf32>
    %c0_42 = arith.constant 0 : index
    %c96 = arith.constant 96 : index
    %48 = vector.load %arg9[%c0_42, %c96] : memref<16x384xbf16, #tpu.memory_space<vmem>>, vector<16x256xbf16>
    %c6 = arith.constant 6 : index
    %c0_43 = arith.constant 0 : index
    %c0_44 = arith.constant 0 : index
    %49 = vector.load %arg5[%c6, %c0_43, %c0_44] : memref<9x16x16xbf16, #tpu.memory_space<vmem>>, vector<1x16x16xbf16>
    %50 = vector.shape_cast %49 : vector<1x16x16xbf16> to vector<16x16xbf16>
    %cst_45 = arith.constant dense<0.000000e+00> : vector<16x256xf32>
    %51 = tpu.matmul %50, %48, %cst_45 {dimension_numbers = #tpu.dot_dimension_numbers<[1], [0], [0], [1], [0, 0, 1, 1], [], []>} : vector<16x16xbf16>, vector<16x256xbf16>, vector<16x256xf32> -> vector<16x256xf32>
    %52 = arith.addf %47, %51 : vector<16x256xf32>
    %c0_46 = arith.constant 0 : index
    %c112 = arith.constant 112 : index
    %53 = vector.load %arg9[%c0_46, %c112] : memref<16x384xbf16, #tpu.memory_space<vmem>>, vector<16x256xbf16>
    %c7 = arith.constant 7 : index
    %c0_47 = arith.constant 0 : index
    %c0_48 = arith.constant 0 : index
    %54 = vector.load %arg5[%c7, %c0_47, %c0_48] : memref<9x16x16xbf16, #tpu.memory_space<vmem>>, vector<1x16x16xbf16>
    %55 = vector.shape_cast %54 : vector<1x16x16xbf16> to vector<16x16xbf16>
    %cst_49 = arith.constant dense<0.000000e+00> : vector<16x256xf32>
    %56 = tpu.matmul %55, %53, %cst_49 {dimension_numbers = #tpu.dot_dimension_numbers<[1], [0], [0], [1], [0, 0, 1, 1], [], []>} : vector<16x16xbf16>, vector<16x256xbf16>, vector<16x256xf32> -> vector<16x256xf32>
    %57 = arith.addf %52, %56 : vector<16x256xf32>
    %c0_50 = arith.constant 0 : index
    %c128 = arith.constant 128 : index
    %58 = vector.load %arg9[%c0_50, %c128] : memref<16x384xbf16, #tpu.memory_space<vmem>>, vector<16x256xbf16>
    %c8 = arith.constant 8 : index
    %c0_51 = arith.constant 0 : index
    %c0_52 = arith.constant 0 : index
    %59 = vector.load %arg5[%c8, %c0_51, %c0_52] : memref<9x16x16xbf16, #tpu.memory_space<vmem>>, vector<1x16x16xbf16>
    %60 = vector.shape_cast %59 : vector<1x16x16xbf16> to vector<16x16xbf16>
    %cst_53 = arith.constant dense<0.000000e+00> : vector<16x256xf32>
    %61 = tpu.matmul %60, %58, %cst_53 {dimension_numbers = #tpu.dot_dimension_numbers<[1], [0], [0], [1], [0, 0, 1, 1], [], []>} : vector<16x16xbf16>, vector<16x256xbf16>, vector<16x256xf32> -> vector<16x256xf32>
    %62 = arith.addf %57, %61 : vector<16x256xf32>
    %c0_54 = arith.constant 0 : index
    %c0_55 = arith.constant 0 : index
    %63 = vector.load %arg6[%c0_54, %c0_55] : memref<16x1xf32, #tpu.memory_space<vmem>>, vector<16x1xf32>
    %64 = vector.broadcast %63 : vector<16x1xf32> to vector<16x256xf32>
    %65 = arith.mulf %62, %64 : vector<16x256xf32>
    %c0_56 = arith.constant 0 : index
    %c0_57 = arith.constant 0 : index
    %66 = vector.load %arg7[%c0_56, %c0_57] : memref<16x1xf32, #tpu.memory_space<vmem>>, vector<16x1xf32>
    %67 = vector.broadcast %66 : vector<16x1xf32> to vector<16x256xf32>
    %68 = arith.addf %65, %67 : vector<16x256xf32>
    %cst_58 = arith.constant 0.000000e+00 : f32
    %69 = vector.broadcast %cst_58 : f32 to vector<16x256xf32>
    %70 = arith.maximumf %68, %69 : vector<16x256xf32>
    %71 = arith.truncf %70 : vector<16x256xf32> to vector<16x256xbf16>
    %c0_59 = arith.constant 0 : index
    %c0_60 = arith.constant 0 : index
    %c0_61 = arith.constant 0 : index
    %72 = vector.load %arg8[%c0_59, %c0_60, %c0_61] : memref<1x16x256xbf16, #tpu.memory_space<vmem>>, vector<1x16x256xbf16>
    %73 = vector.shape_cast %72 : vector<1x16x256xbf16> to vector<16x256xbf16>
    %74 = vector.shape_cast %71 : vector<16x256xbf16> to vector<1x16x256xbf16>
    tpu.vector_store %arg8[%c0_59, %c0_60, %c0_61], %74 {strides = array<i32>} : memref<1x16x256xbf16, #tpu.memory_space<vmem>>, vector<1x16x256xbf16>,
    return
  }
  func.func @transform_0(%arg0: i32) -> (i32, i32, i32) {
    %c0_i32 = arith.constant 0 : i32
    %c0_i32_0 = arith.constant 0 : i32
    %c0_i32_1 = arith.constant 0 : i32
    return %arg0, %c0_i32, %c0_i32_0 : i32, i32, i32
  }
  func.func @transform_1(%arg0: i32) -> (i32, i32) {
    %c0_i32 = arith.constant 0 : i32
    %c0_i32_0 = arith.constant 0 : i32
    %c0_i32_1 = arith.constant 0 : i32
    return %c0_i32, %c0_i32_0 : i32, i32
  }
  func.func @transform_2(%arg0: i32) -> (i32, i32) {
    %c0_i32 = arith.constant 0 : i32
    %c0_i32_0 = arith.constant 0 : i32
    %c0_i32_1 = arith.constant 0 : i32
    return %c0_i32, %c0_i32_0 : i32, i32
  }
  func.func @transform_3(%arg0: i32) -> (i32, i32) {
    %c0_i32 = arith.constant 0 : i32
    %c0_i32_0 = arith.constant 0 : i32
    %c0_i32_1 = arith.constant 0 : i32
    return %c0_i32, %c0_i32_0 : i32, i32
  }
  func.func @transform_4(%arg0: i32) -> (i32, i32, i32) {
    %c0_i32 = arith.constant 0 : i32
    %c0_i32_0 = arith.constant 0 : i32
    %c0_i32_1 = arith.constant 0 : i32
    %c0_i32_2 = arith.constant 0 : i32
    return %c0_i32, %c0_i32_0, %c0_i32_1 : i32, i32, i32
  }
  func.func @transform_5(%arg0: i32) -> (i32, i32) {
    %c0_i32 = arith.constant 0 : i32
    %c0_i32_0 = arith.constant 0 : i32
    %c0_i32_1 = arith.constant 0 : i32
    return %c0_i32, %c0_i32_0 : i32, i32
  }
  func.func @transform_6(%arg0: i32) -> (i32, i32) {
    %c0_i32 = arith.constant 0 : i32
    %c0_i32_0 = arith.constant 0 : i32
    %c0_i32_1 = arith.constant 0 : i32
    return %c0_i32, %c0_i32_0 : i32, i32
  }
  func.func @transform_7(%arg0: i32) -> (i32, i32, i32) {
    %c0_i32 = arith.constant 0 : i32
    %c0_i32_0 = arith.constant 0 : i32
    %c0_i32_1 = arith.constant 0 : i32
    return %arg0, %c0_i32, %c0_i32_0 : i32, i32, i32
  }
}

module attributes {stable_mosaic.version = 11 : i64} {
  func.func @_graph_mix_kernel(%arg0: i32, %arg1: memref<1x256x16xbf16, #tpu.memory_space<vmem>>, %arg2: memref<3x16x16xbf16, #tpu.memory_space<vmem>>, %arg3: memref<1x768x16xbf16, #tpu.memory_space<vmem>>) attributes {dimension_semantics = [#tpu.dimension_semantics<parallel>], iteration_bounds = array<i64: 4>, scalar_prefetch = 0 : i64, scratch_operands = 0 : i64, tpu.core_type = #tpu.core_type<tc>, window_params = [{transform_indices = @transform_0, window_bounds = array<i64: 1, 256, 16>}, {pipeline_mode = #tpu.pipeline_mode<synchronous>, transform_indices = @transform_1, window_bounds = array<i64: 3, 16, 16>}, {transform_indices = @transform_2, window_bounds = array<i64: 1, 768, 16>}]} {
    %c0 = arith.constant 0 : index
    %c0_0 = arith.constant 0 : index
    %c0_1 = arith.constant 0 : index
    %0 = vector.load %arg1[%c0, %c0_0, %c0_1] : memref<1x256x16xbf16, #tpu.memory_space<vmem>>, vector<1x256x16xbf16>
    %1 = vector.shape_cast %0 : vector<1x256x16xbf16> to vector<256x16xbf16>
    %c0_2 = arith.constant 0 : index
    %c0_3 = arith.constant 0 : index
    %c0_4 = arith.constant 0 : index
    %2 = vector.load %arg2[%c0_2, %c0_3, %c0_4] : memref<3x16x16xbf16, #tpu.memory_space<vmem>>, vector<1x16x16xbf16>
    %3 = vector.shape_cast %2 : vector<1x16x16xbf16> to vector<16x16xbf16>
    %cst = arith.constant dense<0.000000e+00> : vector<256x16xf32>
    %4 = tpu.matmul %1, %3, %cst {dimension_numbers = #tpu.dot_dimension_numbers<[1], [0], [0], [1], [0, 0, 1, 1], [], []>} : vector<256x16xbf16>, vector<16x16xbf16>, vector<256x16xf32> -> vector<256x16xf32>
    %5 = arith.truncf %4 : vector<256x16xf32> to vector<256x16xbf16>
    %c0_5 = arith.constant 0 : index
    %c0_6 = arith.constant 0 : index
    %c0_7 = arith.constant 0 : index
    %6 = vector.load %arg3[%c0_5, %c0_6, %c0_7] : memref<1x768x16xbf16, #tpu.memory_space<vmem>>, vector<1x256x16xbf16>
    %7 = vector.shape_cast %6 : vector<1x256x16xbf16> to vector<256x16xbf16>
    %8 = vector.shape_cast %5 : vector<256x16xbf16> to vector<1x256x16xbf16>
    tpu.vector_store %arg3[%c0_5, %c0_6, %c0_7], %8 {strides = array<i32>} : memref<1x768x16xbf16, #tpu.memory_space<vmem>>, vector<1x256x16xbf16>,
    %c1 = arith.constant 1 : index
    %c0_8 = arith.constant 0 : index
    %c0_9 = arith.constant 0 : index
    %9 = vector.load %arg2[%c1, %c0_8, %c0_9] : memref<3x16x16xbf16, #tpu.memory_space<vmem>>, vector<1x16x16xbf16>
    %10 = vector.shape_cast %9 : vector<1x16x16xbf16> to vector<16x16xbf16>
    %cst_10 = arith.constant dense<0.000000e+00> : vector<256x16xf32>
    %11 = tpu.matmul %1, %10, %cst_10 {dimension_numbers = #tpu.dot_dimension_numbers<[1], [0], [0], [1], [0, 0, 1, 1], [], []>} : vector<256x16xbf16>, vector<16x16xbf16>, vector<256x16xf32> -> vector<256x16xf32>
    %12 = arith.truncf %11 : vector<256x16xf32> to vector<256x16xbf16>
    %c0_11 = arith.constant 0 : index
    %c256 = arith.constant 256 : index
    %c0_12 = arith.constant 0 : index
    %13 = vector.load %arg3[%c0_11, %c256, %c0_12] : memref<1x768x16xbf16, #tpu.memory_space<vmem>>, vector<1x256x16xbf16>
    %14 = vector.shape_cast %13 : vector<1x256x16xbf16> to vector<256x16xbf16>
    %15 = vector.shape_cast %12 : vector<256x16xbf16> to vector<1x256x16xbf16>
    tpu.vector_store %arg3[%c0_11, %c256, %c0_12], %15 {strides = array<i32>} : memref<1x768x16xbf16, #tpu.memory_space<vmem>>, vector<1x256x16xbf16>,
    %c2 = arith.constant 2 : index
    %c0_13 = arith.constant 0 : index
    %c0_14 = arith.constant 0 : index
    %16 = vector.load %arg2[%c2, %c0_13, %c0_14] : memref<3x16x16xbf16, #tpu.memory_space<vmem>>, vector<1x16x16xbf16>
    %17 = vector.shape_cast %16 : vector<1x16x16xbf16> to vector<16x16xbf16>
    %cst_15 = arith.constant dense<0.000000e+00> : vector<256x16xf32>
    %18 = tpu.matmul %1, %17, %cst_15 {dimension_numbers = #tpu.dot_dimension_numbers<[1], [0], [0], [1], [0, 0, 1, 1], [], []>} : vector<256x16xbf16>, vector<16x16xbf16>, vector<256x16xf32> -> vector<256x16xf32>
    %19 = arith.truncf %18 : vector<256x16xf32> to vector<256x16xbf16>
    %c0_16 = arith.constant 0 : index
    %c512 = arith.constant 512 : index
    %c0_17 = arith.constant 0 : index
    %20 = vector.load %arg3[%c0_16, %c512, %c0_17] : memref<1x768x16xbf16, #tpu.memory_space<vmem>>, vector<1x256x16xbf16>
    %21 = vector.shape_cast %20 : vector<1x256x16xbf16> to vector<256x16xbf16>
    %22 = vector.shape_cast %19 : vector<256x16xbf16> to vector<1x256x16xbf16>
    tpu.vector_store %arg3[%c0_16, %c512, %c0_17], %22 {strides = array<i32>} : memref<1x768x16xbf16, #tpu.memory_space<vmem>>, vector<1x256x16xbf16>,
    return
  }
  func.func @transform_0(%arg0: i32) -> (i32, i32, i32) {
    %c0_i32 = arith.constant 0 : i32
    %c0_i32_0 = arith.constant 0 : i32
    %c0_i32_1 = arith.constant 0 : i32
    return %arg0, %c0_i32, %c0_i32_0 : i32, i32, i32
  }
  func.func @transform_1(%arg0: i32) -> (i32, i32, i32) {
    %c0_i32 = arith.constant 0 : i32
    %c0_i32_0 = arith.constant 0 : i32
    %c0_i32_1 = arith.constant 0 : i32
    %c0_i32_2 = arith.constant 0 : i32
    return %c0_i32, %c0_i32_0, %c0_i32_1 : i32, i32, i32
  }
  func.func @transform_2(%arg0: i32) -> (i32, i32, i32) {
    %c0_i32 = arith.constant 0 : i32
    %c0_i32_0 = arith.constant 0 : i32
    %c0_i32_1 = arith.constant 0 : i32
    return %arg0, %c0_i32, %c0_i32_0 : i32, i32, i32
  }
}

module attributes {stable_mosaic.version = 11 : i64} {
  func.func @_unit_tail_kernel(%arg0: i32, %arg1: memref<1x48x256xbf16, #tpu.memory_space<vmem>>, %arg2: memref<16x48xbf16, #tpu.memory_space<vmem>>, %arg3: memref<16x1xf32, #tpu.memory_space<vmem>>, %arg4: memref<16x1xf32, #tpu.memory_space<vmem>>, %arg5: memref<9x16x16xbf16, #tpu.memory_space<vmem>>, %arg6: memref<16x1xf32, #tpu.memory_space<vmem>>, %arg7: memref<16x1xf32, #tpu.memory_space<vmem>>, %arg8: memref<1x16x256xbf16, #tpu.memory_space<vmem>>, %arg9: memref<1x16x256xbf16, #tpu.memory_space<vmem>>, %arg10: memref<16x384xbf16, #tpu.memory_space<vmem>>) attributes {dimension_semantics = [#tpu.dimension_semantics<parallel>], iteration_bounds = array<i64: 4>, scalar_prefetch = 0 : i64, scratch_operands = 1 : i64, tpu.core_type = #tpu.core_type<tc>, window_params = [{transform_indices = @transform_0, window_bounds = array<i64: 1, 48, 256>}, {pipeline_mode = #tpu.pipeline_mode<synchronous>, transform_indices = @transform_1, window_bounds = array<i64: 16, 48>}, {pipeline_mode = #tpu.pipeline_mode<synchronous>, transform_indices = @transform_2, window_bounds = array<i64: 16, 1>}, {pipeline_mode = #tpu.pipeline_mode<synchronous>, transform_indices = @transform_3, window_bounds = array<i64: 16, 1>}, {pipeline_mode = #tpu.pipeline_mode<synchronous>, transform_indices = @transform_4, window_bounds = array<i64: 9, 16, 16>}, {pipeline_mode = #tpu.pipeline_mode<synchronous>, transform_indices = @transform_5, window_bounds = array<i64: 16, 1>}, {pipeline_mode = #tpu.pipeline_mode<synchronous>, transform_indices = @transform_6, window_bounds = array<i64: 16, 1>}, {transform_indices = @transform_7, window_bounds = array<i64: 1, 16, 256>}, {transform_indices = @transform_8, window_bounds = array<i64: 1, 16, 256>}]} {
    %c0 = arith.constant 0 : index
    %c0_0 = arith.constant 0 : index
    %c0_1 = arith.constant 0 : index
    %0 = vector.load %arg1[%c0, %c0_0, %c0_1] : memref<1x48x256xbf16, #tpu.memory_space<vmem>>, vector<1x48x256xbf16>
    %1 = vector.shape_cast %0 : vector<1x48x256xbf16> to vector<48x256xbf16>
    %c0_2 = arith.constant 0 : index
    %c0_3 = arith.constant 0 : index
    %2 = vector.load %arg2[%c0_2, %c0_3] : memref<16x48xbf16, #tpu.memory_space<vmem>>, vector<16x48xbf16>
    %cst = arith.constant dense<0.000000e+00> : vector<16x256xf32>
    %3 = tpu.matmul %2, %1, %cst {dimension_numbers = #tpu.dot_dimension_numbers<[1], [0], [0], [1], [0, 0, 1, 1], [], []>} : vector<16x48xbf16>, vector<48x256xbf16>, vector<16x256xf32> -> vector<16x256xf32>
    %c0_4 = arith.constant 0 : index
    %c0_5 = arith.constant 0 : index
    %4 = vector.load %arg3[%c0_4, %c0_5] : memref<16x1xf32, #tpu.memory_space<vmem>>, vector<16x1xf32>
    %5 = vector.broadcast %4 : vector<16x1xf32> to vector<16x256xf32>
    %6 = arith.mulf %3, %5 : vector<16x256xf32>
    %c0_6 = arith.constant 0 : index
    %c0_7 = arith.constant 0 : index
    %7 = vector.load %arg4[%c0_6, %c0_7] : memref<16x1xf32, #tpu.memory_space<vmem>>, vector<16x1xf32>
    %8 = vector.broadcast %7 : vector<16x1xf32> to vector<16x256xf32>
    %9 = arith.addf %6, %8 : vector<16x256xf32>
    %cst_8 = arith.constant 0.000000e+00 : f32
    %10 = vector.broadcast %cst_8 : f32 to vector<16x256xf32>
    %11 = arith.maximumf %9, %10 : vector<16x256xf32>
    %12 = arith.truncf %11 : vector<16x256xf32> to vector<16x256xbf16>
    %cst_9 = arith.constant 0.000000e+00 : f32
    %13 = vector.broadcast %cst_9 : f32 to vector<16x256xf32>
    %cst_10 = arith.constant 0.000000e+00 : bf16
    %14 = vector.broadcast %cst_10 : bf16 to vector<16x64xbf16>
    %c0_11 = arith.constant 0 : index
    %c0_12 = arith.constant 0 : index
    %15 = vector.load %arg10[%c0_11, %c0_12] : memref<16x384xbf16, #tpu.memory_space<vmem>>, vector<16x64xbf16>
    tpu.vector_store %arg10[%c0_11, %c0_12], %14 {strides = array<i32>} : memref<16x384xbf16, #tpu.memory_space<vmem>>, vector<16x64xbf16>,
    %c0_13 = arith.constant 0 : index
    %c320 = arith.constant 320 : index
    %16 = vector.load %arg10[%c0_13, %c320] : memref<16x384xbf16, #tpu.memory_space<vmem>>, vector<16x64xbf16>
    tpu.vector_store %arg10[%c0_13, %c320], %14 {strides = array<i32>} : memref<16x384xbf16, #tpu.memory_space<vmem>>, vector<16x64xbf16>,
    %c0_14 = arith.constant 0 : index
    %c64 = arith.constant 64 : index
    %17 = vector.load %arg10[%c0_14, %c64] : memref<16x384xbf16, #tpu.memory_space<vmem>>, vector<16x256xbf16>
    tpu.vector_store %arg10[%c0_14, %c64], %12 {strides = array<i32>} : memref<16x384xbf16, #tpu.memory_space<vmem>>, vector<16x256xbf16>,
    %c0_15 = arith.constant 0 : index
    %c0_16 = arith.constant 0 : index
    %18 = vector.load %arg10[%c0_15, %c0_16] : memref<16x384xbf16, #tpu.memory_space<vmem>>, vector<16x256xbf16>
    %c0_17 = arith.constant 0 : index
    %c0_18 = arith.constant 0 : index
    %c0_19 = arith.constant 0 : index
    %19 = vector.load %arg5[%c0_17, %c0_18, %c0_19] : memref<9x16x16xbf16, #tpu.memory_space<vmem>>, vector<1x16x16xbf16>
    %20 = vector.shape_cast %19 : vector<1x16x16xbf16> to vector<16x16xbf16>
    %cst_20 = arith.constant dense<0.000000e+00> : vector<16x256xf32>
    %21 = tpu.matmul %20, %18, %cst_20 {dimension_numbers = #tpu.dot_dimension_numbers<[1], [0], [0], [1], [0, 0, 1, 1], [], []>} : vector<16x16xbf16>, vector<16x256xbf16>, vector<16x256xf32> -> vector<16x256xf32>
    %22 = arith.addf %13, %21 : vector<16x256xf32>
    %c0_21 = arith.constant 0 : index
    %c16 = arith.constant 16 : index
    %23 = vector.load %arg10[%c0_21, %c16] : memref<16x384xbf16, #tpu.memory_space<vmem>>, vector<16x256xbf16>
    %c1 = arith.constant 1 : index
    %c0_22 = arith.constant 0 : index
    %c0_23 = arith.constant 0 : index
    %24 = vector.load %arg5[%c1, %c0_22, %c0_23] : memref<9x16x16xbf16, #tpu.memory_space<vmem>>, vector<1x16x16xbf16>
    %25 = vector.shape_cast %24 : vector<1x16x16xbf16> to vector<16x16xbf16>
    %cst_24 = arith.constant dense<0.000000e+00> : vector<16x256xf32>
    %26 = tpu.matmul %25, %23, %cst_24 {dimension_numbers = #tpu.dot_dimension_numbers<[1], [0], [0], [1], [0, 0, 1, 1], [], []>} : vector<16x16xbf16>, vector<16x256xbf16>, vector<16x256xf32> -> vector<16x256xf32>
    %27 = arith.addf %22, %26 : vector<16x256xf32>
    %c0_25 = arith.constant 0 : index
    %c32 = arith.constant 32 : index
    %28 = vector.load %arg10[%c0_25, %c32] : memref<16x384xbf16, #tpu.memory_space<vmem>>, vector<16x256xbf16>
    %c2 = arith.constant 2 : index
    %c0_26 = arith.constant 0 : index
    %c0_27 = arith.constant 0 : index
    %29 = vector.load %arg5[%c2, %c0_26, %c0_27] : memref<9x16x16xbf16, #tpu.memory_space<vmem>>, vector<1x16x16xbf16>
    %30 = vector.shape_cast %29 : vector<1x16x16xbf16> to vector<16x16xbf16>
    %cst_28 = arith.constant dense<0.000000e+00> : vector<16x256xf32>
    %31 = tpu.matmul %30, %28, %cst_28 {dimension_numbers = #tpu.dot_dimension_numbers<[1], [0], [0], [1], [0, 0, 1, 1], [], []>} : vector<16x16xbf16>, vector<16x256xbf16>, vector<16x256xf32> -> vector<16x256xf32>
    %32 = arith.addf %27, %31 : vector<16x256xf32>
    %c0_29 = arith.constant 0 : index
    %c48 = arith.constant 48 : index
    %33 = vector.load %arg10[%c0_29, %c48] : memref<16x384xbf16, #tpu.memory_space<vmem>>, vector<16x256xbf16>
    %c3 = arith.constant 3 : index
    %c0_30 = arith.constant 0 : index
    %c0_31 = arith.constant 0 : index
    %34 = vector.load %arg5[%c3, %c0_30, %c0_31] : memref<9x16x16xbf16, #tpu.memory_space<vmem>>, vector<1x16x16xbf16>
    %35 = vector.shape_cast %34 : vector<1x16x16xbf16> to vector<16x16xbf16>
    %cst_32 = arith.constant dense<0.000000e+00> : vector<16x256xf32>
    %36 = tpu.matmul %35, %33, %cst_32 {dimension_numbers = #tpu.dot_dimension_numbers<[1], [0], [0], [1], [0, 0, 1, 1], [], []>} : vector<16x16xbf16>, vector<16x256xbf16>, vector<16x256xf32> -> vector<16x256xf32>
    %37 = arith.addf %32, %36 : vector<16x256xf32>
    %c0_33 = arith.constant 0 : index
    %c64_34 = arith.constant 64 : index
    %38 = vector.load %arg10[%c0_33, %c64_34] : memref<16x384xbf16, #tpu.memory_space<vmem>>, vector<16x256xbf16>
    %c4 = arith.constant 4 : index
    %c0_35 = arith.constant 0 : index
    %c0_36 = arith.constant 0 : index
    %39 = vector.load %arg5[%c4, %c0_35, %c0_36] : memref<9x16x16xbf16, #tpu.memory_space<vmem>>, vector<1x16x16xbf16>
    %40 = vector.shape_cast %39 : vector<1x16x16xbf16> to vector<16x16xbf16>
    %cst_37 = arith.constant dense<0.000000e+00> : vector<16x256xf32>
    %41 = tpu.matmul %40, %38, %cst_37 {dimension_numbers = #tpu.dot_dimension_numbers<[1], [0], [0], [1], [0, 0, 1, 1], [], []>} : vector<16x16xbf16>, vector<16x256xbf16>, vector<16x256xf32> -> vector<16x256xf32>
    %42 = arith.addf %37, %41 : vector<16x256xf32>
    %c0_38 = arith.constant 0 : index
    %c80 = arith.constant 80 : index
    %43 = vector.load %arg10[%c0_38, %c80] : memref<16x384xbf16, #tpu.memory_space<vmem>>, vector<16x256xbf16>
    %c5 = arith.constant 5 : index
    %c0_39 = arith.constant 0 : index
    %c0_40 = arith.constant 0 : index
    %44 = vector.load %arg5[%c5, %c0_39, %c0_40] : memref<9x16x16xbf16, #tpu.memory_space<vmem>>, vector<1x16x16xbf16>
    %45 = vector.shape_cast %44 : vector<1x16x16xbf16> to vector<16x16xbf16>
    %cst_41 = arith.constant dense<0.000000e+00> : vector<16x256xf32>
    %46 = tpu.matmul %45, %43, %cst_41 {dimension_numbers = #tpu.dot_dimension_numbers<[1], [0], [0], [1], [0, 0, 1, 1], [], []>} : vector<16x16xbf16>, vector<16x256xbf16>, vector<16x256xf32> -> vector<16x256xf32>
    %47 = arith.addf %42, %46 : vector<16x256xf32>
    %c0_42 = arith.constant 0 : index
    %c96 = arith.constant 96 : index
    %48 = vector.load %arg10[%c0_42, %c96] : memref<16x384xbf16, #tpu.memory_space<vmem>>, vector<16x256xbf16>
    %c6 = arith.constant 6 : index
    %c0_43 = arith.constant 0 : index
    %c0_44 = arith.constant 0 : index
    %49 = vector.load %arg5[%c6, %c0_43, %c0_44] : memref<9x16x16xbf16, #tpu.memory_space<vmem>>, vector<1x16x16xbf16>
    %50 = vector.shape_cast %49 : vector<1x16x16xbf16> to vector<16x16xbf16>
    %cst_45 = arith.constant dense<0.000000e+00> : vector<16x256xf32>
    %51 = tpu.matmul %50, %48, %cst_45 {dimension_numbers = #tpu.dot_dimension_numbers<[1], [0], [0], [1], [0, 0, 1, 1], [], []>} : vector<16x16xbf16>, vector<16x256xbf16>, vector<16x256xf32> -> vector<16x256xf32>
    %52 = arith.addf %47, %51 : vector<16x256xf32>
    %c0_46 = arith.constant 0 : index
    %c112 = arith.constant 112 : index
    %53 = vector.load %arg10[%c0_46, %c112] : memref<16x384xbf16, #tpu.memory_space<vmem>>, vector<16x256xbf16>
    %c7 = arith.constant 7 : index
    %c0_47 = arith.constant 0 : index
    %c0_48 = arith.constant 0 : index
    %54 = vector.load %arg5[%c7, %c0_47, %c0_48] : memref<9x16x16xbf16, #tpu.memory_space<vmem>>, vector<1x16x16xbf16>
    %55 = vector.shape_cast %54 : vector<1x16x16xbf16> to vector<16x16xbf16>
    %cst_49 = arith.constant dense<0.000000e+00> : vector<16x256xf32>
    %56 = tpu.matmul %55, %53, %cst_49 {dimension_numbers = #tpu.dot_dimension_numbers<[1], [0], [0], [1], [0, 0, 1, 1], [], []>} : vector<16x16xbf16>, vector<16x256xbf16>, vector<16x256xf32> -> vector<16x256xf32>
    %57 = arith.addf %52, %56 : vector<16x256xf32>
    %c0_50 = arith.constant 0 : index
    %c128 = arith.constant 128 : index
    %58 = vector.load %arg10[%c0_50, %c128] : memref<16x384xbf16, #tpu.memory_space<vmem>>, vector<16x256xbf16>
    %c8 = arith.constant 8 : index
    %c0_51 = arith.constant 0 : index
    %c0_52 = arith.constant 0 : index
    %59 = vector.load %arg5[%c8, %c0_51, %c0_52] : memref<9x16x16xbf16, #tpu.memory_space<vmem>>, vector<1x16x16xbf16>
    %60 = vector.shape_cast %59 : vector<1x16x16xbf16> to vector<16x16xbf16>
    %cst_53 = arith.constant dense<0.000000e+00> : vector<16x256xf32>
    %61 = tpu.matmul %60, %58, %cst_53 {dimension_numbers = #tpu.dot_dimension_numbers<[1], [0], [0], [1], [0, 0, 1, 1], [], []>} : vector<16x16xbf16>, vector<16x256xbf16>, vector<16x256xf32> -> vector<16x256xf32>
    %62 = arith.addf %57, %61 : vector<16x256xf32>
    %c0_54 = arith.constant 0 : index
    %c0_55 = arith.constant 0 : index
    %63 = vector.load %arg6[%c0_54, %c0_55] : memref<16x1xf32, #tpu.memory_space<vmem>>, vector<16x1xf32>
    %64 = vector.broadcast %63 : vector<16x1xf32> to vector<16x256xf32>
    %65 = arith.mulf %62, %64 : vector<16x256xf32>
    %c0_56 = arith.constant 0 : index
    %c0_57 = arith.constant 0 : index
    %66 = vector.load %arg7[%c0_56, %c0_57] : memref<16x1xf32, #tpu.memory_space<vmem>>, vector<16x1xf32>
    %67 = vector.broadcast %66 : vector<16x1xf32> to vector<16x256xf32>
    %68 = arith.addf %65, %67 : vector<16x256xf32>
    %cst_58 = arith.constant 0.000000e+00 : f32
    %69 = vector.broadcast %cst_58 : f32 to vector<16x256xf32>
    %70 = arith.maximumf %68, %69 : vector<16x256xf32>
    %c0_59 = arith.constant 0 : index
    %c0_60 = arith.constant 0 : index
    %c0_61 = arith.constant 0 : index
    %71 = vector.load %arg8[%c0_59, %c0_60, %c0_61] : memref<1x16x256xbf16, #tpu.memory_space<vmem>>, vector<1x16x256xbf16>
    %72 = vector.shape_cast %71 : vector<1x16x256xbf16> to vector<16x256xbf16>
    %73 = arith.extf %72 : vector<16x256xbf16> to vector<16x256xf32>
    %74 = arith.addf %70, %73 : vector<16x256xf32>
    %75 = arith.truncf %74 : vector<16x256xf32> to vector<16x256xbf16>
    %c0_62 = arith.constant 0 : index
    %c0_63 = arith.constant 0 : index
    %c0_64 = arith.constant 0 : index
    %76 = vector.load %arg9[%c0_62, %c0_63, %c0_64] : memref<1x16x256xbf16, #tpu.memory_space<vmem>>, vector<1x16x256xbf16>
    %77 = vector.shape_cast %76 : vector<1x16x256xbf16> to vector<16x256xbf16>
    %78 = vector.shape_cast %75 : vector<16x256xbf16> to vector<1x16x256xbf16>
    tpu.vector_store %arg9[%c0_62, %c0_63, %c0_64], %78 {strides = array<i32>} : memref<1x16x256xbf16, #tpu.memory_space<vmem>>, vector<1x16x256xbf16>,
    return
  }
  func.func @transform_0(%arg0: i32) -> (i32, i32, i32) {
    %c0_i32 = arith.constant 0 : i32
    %c0_i32_0 = arith.constant 0 : i32
    %c0_i32_1 = arith.constant 0 : i32
    return %arg0, %c0_i32, %c0_i32_0 : i32, i32, i32
  }
  func.func @transform_1(%arg0: i32) -> (i32, i32) {
    %c0_i32 = arith.constant 0 : i32
    %c0_i32_0 = arith.constant 0 : i32
    %c0_i32_1 = arith.constant 0 : i32
    return %c0_i32, %c0_i32_0 : i32, i32
  }
  func.func @transform_2(%arg0: i32) -> (i32, i32) {
    %c0_i32 = arith.constant 0 : i32
    %c0_i32_0 = arith.constant 0 : i32
    %c0_i32_1 = arith.constant 0 : i32
    return %c0_i32, %c0_i32_0 : i32, i32
  }
  func.func @transform_3(%arg0: i32) -> (i32, i32) {
    %c0_i32 = arith.constant 0 : i32
    %c0_i32_0 = arith.constant 0 : i32
    %c0_i32_1 = arith.constant 0 : i32
    return %c0_i32, %c0_i32_0 : i32, i32
  }
  func.func @transform_4(%arg0: i32) -> (i32, i32, i32) {
    %c0_i32 = arith.constant 0 : i32
    %c0_i32_0 = arith.constant 0 : i32
    %c0_i32_1 = arith.constant 0 : i32
    %c0_i32_2 = arith.constant 0 : i32
    return %c0_i32, %c0_i32_0, %c0_i32_1 : i32, i32, i32
  }
  func.func @transform_5(%arg0: i32) -> (i32, i32) {
    %c0_i32 = arith.constant 0 : i32
    %c0_i32_0 = arith.constant 0 : i32
    %c0_i32_1 = arith.constant 0 : i32
    return %c0_i32, %c0_i32_0 : i32, i32
  }
  func.func @transform_6(%arg0: i32) -> (i32, i32) {
    %c0_i32 = arith.constant 0 : i32
    %c0_i32_0 = arith.constant 0 : i32
    %c0_i32_1 = arith.constant 0 : i32
    return %c0_i32, %c0_i32_0 : i32, i32
  }
  func.func @transform_7(%arg0: i32) -> (i32, i32, i32) {
    %c0_i32 = arith.constant 0 : i32
    %c0_i32_0 = arith.constant 0 : i32
    %c0_i32_1 = arith.constant 0 : i32
    return %arg0, %c0_i32, %c0_i32_0 : i32, i32, i32
  }
  func.func @transform_8(%arg0: i32) -> (i32, i32, i32) {
    %c0_i32 = arith.constant 0 : i32
    %c0_i32_0 = arith.constant 0 : i32
    %c0_i32_1 = arith.constant 0 : i32
    return %arg0, %c0_i32, %c0_i32_0 : i32, i32, i32
  }
}

module attributes {stable_mosaic.version = 11 : i64} {
  func.func @_unit_tail_kernel(%arg0: i32, %arg1: memref<1x48x256xbf16, #tpu.memory_space<vmem>>, %arg2: memref<32x48xbf16, #tpu.memory_space<vmem>>, %arg3: memref<32x1xf32, #tpu.memory_space<vmem>>, %arg4: memref<32x1xf32, #tpu.memory_space<vmem>>, %arg5: memref<9x32x32xbf16, #tpu.memory_space<vmem>>, %arg6: memref<32x1xf32, #tpu.memory_space<vmem>>, %arg7: memref<32x1xf32, #tpu.memory_space<vmem>>, %arg8: memref<1x16x128xbf16, #tpu.memory_space<vmem>>, %arg9: memref<32x16xbf16, #tpu.memory_space<vmem>>, %arg10: memref<32x1xf32, #tpu.memory_space<vmem>>, %arg11: memref<32x1xf32, #tpu.memory_space<vmem>>, %arg12: memref<1x32x128xbf16, #tpu.memory_space<vmem>>, %arg13: memref<32x192xbf16, #tpu.memory_space<vmem>>, %arg14: memref<32x192xbf16, #tpu.memory_space<vmem>>) attributes {dimension_semantics = [#tpu.dimension_semantics<parallel>], iteration_bounds = array<i64: 4>, scalar_prefetch = 0 : i64, scratch_operands = 2 : i64, tpu.core_type = #tpu.core_type<tc>, window_params = [{transform_indices = @transform_0, window_bounds = array<i64: 1, 48, 256>}, {pipeline_mode = #tpu.pipeline_mode<synchronous>, transform_indices = @transform_1, window_bounds = array<i64: 32, 48>}, {pipeline_mode = #tpu.pipeline_mode<synchronous>, transform_indices = @transform_2, window_bounds = array<i64: 32, 1>}, {pipeline_mode = #tpu.pipeline_mode<synchronous>, transform_indices = @transform_3, window_bounds = array<i64: 32, 1>}, {pipeline_mode = #tpu.pipeline_mode<synchronous>, transform_indices = @transform_4, window_bounds = array<i64: 9, 32, 32>}, {pipeline_mode = #tpu.pipeline_mode<synchronous>, transform_indices = @transform_5, window_bounds = array<i64: 32, 1>}, {pipeline_mode = #tpu.pipeline_mode<synchronous>, transform_indices = @transform_6, window_bounds = array<i64: 32, 1>}, {transform_indices = @transform_7, window_bounds = array<i64: 1, 16, 128>}, {pipeline_mode = #tpu.pipeline_mode<synchronous>, transform_indices = @transform_8, window_bounds = array<i64: 32, 16>}, {pipeline_mode = #tpu.pipeline_mode<synchronous>, transform_indices = @transform_9, window_bounds = array<i64: 32, 1>}, {pipeline_mode = #tpu.pipeline_mode<synchronous>, transform_indices = @transform_10, window_bounds = array<i64: 32, 1>}, {transform_indices = @transform_11, window_bounds = array<i64: 1, 32, 128>}]} {
    %c0 = arith.constant 0 : index
    %c0_0 = arith.constant 0 : index
    %c0_1 = arith.constant 0 : index
    %0 = vector.load %arg1[%c0, %c0_0, %c0_1] : memref<1x48x256xbf16, #tpu.memory_space<vmem>>, vector<1x48x256xbf16>
    %1 = vector.shape_cast %0 : vector<1x48x256xbf16> to vector<48x256xbf16>
    %c0_2 = arith.constant 0 : index
    %c0_3 = arith.constant 0 : index
    %2 = vector.load %arg2[%c0_2, %c0_3] : memref<32x48xbf16, #tpu.memory_space<vmem>>, vector<32x48xbf16>
    %cst = arith.constant dense<0.000000e+00> : vector<32x256xf32>
    %3 = tpu.matmul %2, %1, %cst {dimension_numbers = #tpu.dot_dimension_numbers<[1], [0], [0], [1], [0, 0, 1, 1], [], []>} : vector<32x48xbf16>, vector<48x256xbf16>, vector<32x256xf32> -> vector<32x256xf32>
    %c0_4 = arith.constant 0 : index
    %c0_5 = arith.constant 0 : index
    %4 = vector.load %arg3[%c0_4, %c0_5] : memref<32x1xf32, #tpu.memory_space<vmem>>, vector<32x1xf32>
    %5 = vector.broadcast %4 : vector<32x1xf32> to vector<32x256xf32>
    %6 = arith.mulf %3, %5 : vector<32x256xf32>
    %c0_6 = arith.constant 0 : index
    %c0_7 = arith.constant 0 : index
    %7 = vector.load %arg4[%c0_6, %c0_7] : memref<32x1xf32, #tpu.memory_space<vmem>>, vector<32x1xf32>
    %8 = vector.broadcast %7 : vector<32x1xf32> to vector<32x256xf32>
    %9 = arith.addf %6, %8 : vector<32x256xf32>
    %cst_8 = arith.constant 0.000000e+00 : f32
    %10 = vector.broadcast %cst_8 : f32 to vector<32x256xf32>
    %11 = arith.maximumf %9, %10 : vector<32x256xf32>
    %12 = arith.truncf %11 : vector<32x256xf32> to vector<32x256xbf16>
    %cst_9 = arith.constant 0.000000e+00 : f32
    %13 = vector.broadcast %cst_9 : f32 to vector<32x128xf32>
    %cst_10 = arith.constant 0.000000e+00 : bf16
    %14 = vector.broadcast %cst_10 : bf16 to vector<32x32xbf16>
    %c0_11 = arith.constant 0 : index
    %c0_12 = arith.constant 0 : index
    %15 = vector.load %arg13[%c0_11, %c0_12] : memref<32x192xbf16, #tpu.memory_space<vmem>>, vector<32x32xbf16>
    tpu.vector_store %arg13[%c0_11, %c0_12], %14 {strides = array<i32>} : memref<32x192xbf16, #tpu.memory_space<vmem>>, vector<32x32xbf16>,
    %c0_13 = arith.constant 0 : index
    %c0_14 = arith.constant 0 : index
    %16 = vector.load %arg14[%c0_13, %c0_14] : memref<32x192xbf16, #tpu.memory_space<vmem>>, vector<32x32xbf16>
    tpu.vector_store %arg14[%c0_13, %c0_14], %14 {strides = array<i32>} : memref<32x192xbf16, #tpu.memory_space<vmem>>, vector<32x32xbf16>,
    %17 = vector.extract_strided_slice %12 {offsets = [0, 0], sizes = [32, 128], strides = [1, 1]} : vector<32x256xbf16> to vector<32x128xbf16>
    %c0_15 = arith.constant 0 : index
    %c32 = arith.constant 32 : index
    %18 = vector.load %arg13[%c0_15, %c32] : memref<32x192xbf16, #tpu.memory_space<vmem>>, vector<32x128xbf16>
    tpu.vector_store %arg13[%c0_15, %c32], %17 {strides = array<i32>} : memref<32x192xbf16, #tpu.memory_space<vmem>>, vector<32x128xbf16>,
    %19 = vector.extract_strided_slice %12 {offsets = [0, 128], sizes = [32, 128], strides = [1, 1]} : vector<32x256xbf16> to vector<32x128xbf16>
    %c0_16 = arith.constant 0 : index
    %c32_17 = arith.constant 32 : index
    %20 = vector.load %arg14[%c0_16, %c32_17] : memref<32x192xbf16, #tpu.memory_space<vmem>>, vector<32x128xbf16>
    tpu.vector_store %arg14[%c0_16, %c32_17], %19 {strides = array<i32>} : memref<32x192xbf16, #tpu.memory_space<vmem>>, vector<32x128xbf16>,
    %cst_18 = arith.constant 0.000000e+00 : bf16
    %21 = vector.broadcast %cst_18 : bf16 to vector<32x32xbf16>
    %c0_19 = arith.constant 0 : index
    %c160 = arith.constant 160 : index
    %22 = vector.load %arg13[%c0_19, %c160] : memref<32x192xbf16, #tpu.memory_space<vmem>>, vector<32x32xbf16>
    tpu.vector_store %arg13[%c0_19, %c160], %21 {strides = array<i32>} : memref<32x192xbf16, #tpu.memory_space<vmem>>, vector<32x32xbf16>,
    %cst_20 = arith.constant 0.000000e+00 : bf16
    %23 = vector.broadcast %cst_20 : bf16 to vector<32x32xbf16>
    %c0_21 = arith.constant 0 : index
    %c160_22 = arith.constant 160 : index
    %24 = vector.load %arg14[%c0_21, %c160_22] : memref<32x192xbf16, #tpu.memory_space<vmem>>, vector<32x32xbf16>
    tpu.vector_store %arg14[%c0_21, %c160_22], %23 {strides = array<i32>} : memref<32x192xbf16, #tpu.memory_space<vmem>>, vector<32x32xbf16>,
    %c0_23 = arith.constant 0 : index
    %c0_24 = arith.constant 0 : index
    %25 = vector.load %arg13[%c0_23, %c0_24] : memref<32x192xbf16, #tpu.memory_space<vmem>>, vector<32x128xbf16>
    %c0_25 = arith.constant 0 : index
    %c0_26 = arith.constant 0 : index
    %c0_27 = arith.constant 0 : index
    %26 = vector.load %arg5[%c0_25, %c0_26, %c0_27] : memref<9x32x32xbf16, #tpu.memory_space<vmem>>, vector<1x32x32xbf16>
    %27 = vector.shape_cast %26 : vector<1x32x32xbf16> to vector<32x32xbf16>
    %cst_28 = arith.constant dense<0.000000e+00> : vector<32x128xf32>
    %28 = tpu.matmul %27, %25, %cst_28 {dimension_numbers = #tpu.dot_dimension_numbers<[1], [0], [0], [1], [0, 0, 1, 1], [], []>} : vector<32x32xbf16>, vector<32x128xbf16>, vector<32x128xf32> -> vector<32x128xf32>
    %29 = arith.addf %13, %28 : vector<32x128xf32>
    %c0_29 = arith.constant 0 : index
    %c0_30 = arith.constant 0 : index
    %30 = vector.load %arg14[%c0_29, %c0_30] : memref<32x192xbf16, #tpu.memory_space<vmem>>, vector<32x128xbf16>
    %c1 = arith.constant 1 : index
    %c0_31 = arith.constant 0 : index
    %c0_32 = arith.constant 0 : index
    %31 = vector.load %arg5[%c1, %c0_31, %c0_32] : memref<9x32x32xbf16, #tpu.memory_space<vmem>>, vector<1x32x32xbf16>
    %32 = vector.shape_cast %31 : vector<1x32x32xbf16> to vector<32x32xbf16>
    %cst_33 = arith.constant dense<0.000000e+00> : vector<32x128xf32>
    %33 = tpu.matmul %32, %30, %cst_33 {dimension_numbers = #tpu.dot_dimension_numbers<[1], [0], [0], [1], [0, 0, 1, 1], [], []>} : vector<32x32xbf16>, vector<32x128xbf16>, vector<32x128xf32> -> vector<32x128xf32>
    %34 = arith.addf %29, %33 : vector<32x128xf32>
    %c0_34 = arith.constant 0 : index
    %c16 = arith.constant 16 : index
    %35 = vector.load %arg13[%c0_34, %c16] : memref<32x192xbf16, #tpu.memory_space<vmem>>, vector<32x128xbf16>
    %c2 = arith.constant 2 : index
    %c0_35 = arith.constant 0 : index
    %c0_36 = arith.constant 0 : index
    %36 = vector.load %arg5[%c2, %c0_35, %c0_36] : memref<9x32x32xbf16, #tpu.memory_space<vmem>>, vector<1x32x32xbf16>
    %37 = vector.shape_cast %36 : vector<1x32x32xbf16> to vector<32x32xbf16>
    %cst_37 = arith.constant dense<0.000000e+00> : vector<32x128xf32>
    %38 = tpu.matmul %37, %35, %cst_37 {dimension_numbers = #tpu.dot_dimension_numbers<[1], [0], [0], [1], [0, 0, 1, 1], [], []>} : vector<32x32xbf16>, vector<32x128xbf16>, vector<32x128xf32> -> vector<32x128xf32>
    %39 = arith.addf %34, %38 : vector<32x128xf32>
    %c0_38 = arith.constant 0 : index
    %c16_39 = arith.constant 16 : index
    %40 = vector.load %arg14[%c0_38, %c16_39] : memref<32x192xbf16, #tpu.memory_space<vmem>>, vector<32x128xbf16>
    %c3 = arith.constant 3 : index
    %c0_40 = arith.constant 0 : index
    %c0_41 = arith.constant 0 : index
    %41 = vector.load %arg5[%c3, %c0_40, %c0_41] : memref<9x32x32xbf16, #tpu.memory_space<vmem>>, vector<1x32x32xbf16>
    %42 = vector.shape_cast %41 : vector<1x32x32xbf16> to vector<32x32xbf16>
    %cst_42 = arith.constant dense<0.000000e+00> : vector<32x128xf32>
    %43 = tpu.matmul %42, %40, %cst_42 {dimension_numbers = #tpu.dot_dimension_numbers<[1], [0], [0], [1], [0, 0, 1, 1], [], []>} : vector<32x32xbf16>, vector<32x128xbf16>, vector<32x128xf32> -> vector<32x128xf32>
    %44 = arith.addf %39, %43 : vector<32x128xf32>
    %c0_43 = arith.constant 0 : index
    %c32_44 = arith.constant 32 : index
    %45 = vector.load %arg13[%c0_43, %c32_44] : memref<32x192xbf16, #tpu.memory_space<vmem>>, vector<32x128xbf16>
    %c4 = arith.constant 4 : index
    %c0_45 = arith.constant 0 : index
    %c0_46 = arith.constant 0 : index
    %46 = vector.load %arg5[%c4, %c0_45, %c0_46] : memref<9x32x32xbf16, #tpu.memory_space<vmem>>, vector<1x32x32xbf16>
    %47 = vector.shape_cast %46 : vector<1x32x32xbf16> to vector<32x32xbf16>
    %cst_47 = arith.constant dense<0.000000e+00> : vector<32x128xf32>
    %48 = tpu.matmul %47, %45, %cst_47 {dimension_numbers = #tpu.dot_dimension_numbers<[1], [0], [0], [1], [0, 0, 1, 1], [], []>} : vector<32x32xbf16>, vector<32x128xbf16>, vector<32x128xf32> -> vector<32x128xf32>
    %49 = arith.addf %44, %48 : vector<32x128xf32>
    %c0_48 = arith.constant 0 : index
    %c32_49 = arith.constant 32 : index
    %50 = vector.load %arg14[%c0_48, %c32_49] : memref<32x192xbf16, #tpu.memory_space<vmem>>, vector<32x128xbf16>
    %c5 = arith.constant 5 : index
    %c0_50 = arith.constant 0 : index
    %c0_51 = arith.constant 0 : index
    %51 = vector.load %arg5[%c5, %c0_50, %c0_51] : memref<9x32x32xbf16, #tpu.memory_space<vmem>>, vector<1x32x32xbf16>
    %52 = vector.shape_cast %51 : vector<1x32x32xbf16> to vector<32x32xbf16>
    %cst_52 = arith.constant dense<0.000000e+00> : vector<32x128xf32>
    %53 = tpu.matmul %52, %50, %cst_52 {dimension_numbers = #tpu.dot_dimension_numbers<[1], [0], [0], [1], [0, 0, 1, 1], [], []>} : vector<32x32xbf16>, vector<32x128xbf16>, vector<32x128xf32> -> vector<32x128xf32>
    %54 = arith.addf %49, %53 : vector<32x128xf32>
    %c0_53 = arith.constant 0 : index
    %c48 = arith.constant 48 : index
    %55 = vector.load %arg13[%c0_53, %c48] : memref<32x192xbf16, #tpu.memory_space<vmem>>, vector<32x128xbf16>
    %c6 = arith.constant 6 : index
    %c0_54 = arith.constant 0 : index
    %c0_55 = arith.constant 0 : index
    %56 = vector.load %arg5[%c6, %c0_54, %c0_55] : memref<9x32x32xbf16, #tpu.memory_space<vmem>>, vector<1x32x32xbf16>
    %57 = vector.shape_cast %56 : vector<1x32x32xbf16> to vector<32x32xbf16>
    %cst_56 = arith.constant dense<0.000000e+00> : vector<32x128xf32>
    %58 = tpu.matmul %57, %55, %cst_56 {dimension_numbers = #tpu.dot_dimension_numbers<[1], [0], [0], [1], [0, 0, 1, 1], [], []>} : vector<32x32xbf16>, vector<32x128xbf16>, vector<32x128xf32> -> vector<32x128xf32>
    %59 = arith.addf %54, %58 : vector<32x128xf32>
    %c0_57 = arith.constant 0 : index
    %c48_58 = arith.constant 48 : index
    %60 = vector.load %arg14[%c0_57, %c48_58] : memref<32x192xbf16, #tpu.memory_space<vmem>>, vector<32x128xbf16>
    %c7 = arith.constant 7 : index
    %c0_59 = arith.constant 0 : index
    %c0_60 = arith.constant 0 : index
    %61 = vector.load %arg5[%c7, %c0_59, %c0_60] : memref<9x32x32xbf16, #tpu.memory_space<vmem>>, vector<1x32x32xbf16>
    %62 = vector.shape_cast %61 : vector<1x32x32xbf16> to vector<32x32xbf16>
    %cst_61 = arith.constant dense<0.000000e+00> : vector<32x128xf32>
    %63 = tpu.matmul %62, %60, %cst_61 {dimension_numbers = #tpu.dot_dimension_numbers<[1], [0], [0], [1], [0, 0, 1, 1], [], []>} : vector<32x32xbf16>, vector<32x128xbf16>, vector<32x128xf32> -> vector<32x128xf32>
    %64 = arith.addf %59, %63 : vector<32x128xf32>
    %c0_62 = arith.constant 0 : index
    %c64 = arith.constant 64 : index
    %65 = vector.load %arg13[%c0_62, %c64] : memref<32x192xbf16, #tpu.memory_space<vmem>>, vector<32x128xbf16>
    %c8 = arith.constant 8 : index
    %c0_63 = arith.constant 0 : index
    %c0_64 = arith.constant 0 : index
    %66 = vector.load %arg5[%c8, %c0_63, %c0_64] : memref<9x32x32xbf16, #tpu.memory_space<vmem>>, vector<1x32x32xbf16>
    %67 = vector.shape_cast %66 : vector<1x32x32xbf16> to vector<32x32xbf16>
    %cst_65 = arith.constant dense<0.000000e+00> : vector<32x128xf32>
    %68 = tpu.matmul %67, %65, %cst_65 {dimension_numbers = #tpu.dot_dimension_numbers<[1], [0], [0], [1], [0, 0, 1, 1], [], []>} : vector<32x32xbf16>, vector<32x128xbf16>, vector<32x128xf32> -> vector<32x128xf32>
    %69 = arith.addf %64, %68 : vector<32x128xf32>
    %c0_66 = arith.constant 0 : index
    %c0_67 = arith.constant 0 : index
    %70 = vector.load %arg6[%c0_66, %c0_67] : memref<32x1xf32, #tpu.memory_space<vmem>>, vector<32x1xf32>
    %71 = vector.broadcast %70 : vector<32x1xf32> to vector<32x128xf32>
    %72 = arith.mulf %69, %71 : vector<32x128xf32>
    %c0_68 = arith.constant 0 : index
    %c0_69 = arith.constant 0 : index
    %73 = vector.load %arg7[%c0_68, %c0_69] : memref<32x1xf32, #tpu.memory_space<vmem>>, vector<32x1xf32>
    %74 = vector.broadcast %73 : vector<32x1xf32> to vector<32x128xf32>
    %75 = arith.addf %72, %74 : vector<32x128xf32>
    %cst_70 = arith.constant 0.000000e+00 : f32
    %76 = vector.broadcast %cst_70 : f32 to vector<32x128xf32>
    %77 = arith.maximumf %75, %76 : vector<32x128xf32>
    %c0_71 = arith.constant 0 : index
    %c0_72 = arith.constant 0 : index
    %78 = vector.load %arg9[%c0_71, %c0_72] : memref<32x16xbf16, #tpu.memory_space<vmem>>, vector<32x16xbf16>
    %c0_73 = arith.constant 0 : index
    %c0_74 = arith.constant 0 : index
    %c0_75 = arith.constant 0 : index
    %79 = vector.load %arg8[%c0_73, %c0_74, %c0_75] : memref<1x16x128xbf16, #tpu.memory_space<vmem>>, vector<1x16x128xbf16>
    %80 = vector.shape_cast %79 : vector<1x16x128xbf16> to vector<16x128xbf16>
    %cst_76 = arith.constant dense<0.000000e+00> : vector<32x128xf32>
    %81 = tpu.matmul %78, %80, %cst_76 {dimension_numbers = #tpu.dot_dimension_numbers<[1], [0], [0], [1], [0, 0, 1, 1], [], []>} : vector<32x16xbf16>, vector<16x128xbf16>, vector<32x128xf32> -> vector<32x128xf32>
    %c0_77 = arith.constant 0 : index
    %c0_78 = arith.constant 0 : index
    %82 = vector.load %arg10[%c0_77, %c0_78] : memref<32x1xf32, #tpu.memory_space<vmem>>, vector<32x1xf32>
    %83 = vector.broadcast %82 : vector<32x1xf32> to vector<32x128xf32>
    %84 = arith.mulf %81, %83 : vector<32x128xf32>
    %c0_79 = arith.constant 0 : index
    %c0_80 = arith.constant 0 : index
    %85 = vector.load %arg11[%c0_79, %c0_80] : memref<32x1xf32, #tpu.memory_space<vmem>>, vector<32x1xf32>
    %86 = vector.broadcast %85 : vector<32x1xf32> to vector<32x128xf32>
    %87 = arith.addf %84, %86 : vector<32x128xf32>
    %cst_81 = arith.constant 0.000000e+00 : f32
    %88 = vector.broadcast %cst_81 : f32 to vector<32x128xf32>
    %89 = arith.maximumf %87, %88 : vector<32x128xf32>
    %90 = arith.addf %77, %89 : vector<32x128xf32>
    %91 = arith.truncf %90 : vector<32x128xf32> to vector<32x128xbf16>
    %c0_82 = arith.constant 0 : index
    %c0_83 = arith.constant 0 : index
    %c0_84 = arith.constant 0 : index
    %92 = vector.load %arg12[%c0_82, %c0_83, %c0_84] : memref<1x32x128xbf16, #tpu.memory_space<vmem>>, vector<1x32x128xbf16>
    %93 = vector.shape_cast %92 : vector<1x32x128xbf16> to vector<32x128xbf16>
    %94 = vector.shape_cast %91 : vector<32x128xbf16> to vector<1x32x128xbf16>
    tpu.vector_store %arg12[%c0_82, %c0_83, %c0_84], %94 {strides = array<i32>} : memref<1x32x128xbf16, #tpu.memory_space<vmem>>, vector<1x32x128xbf16>,
    return
  }
  func.func @transform_0(%arg0: i32) -> (i32, i32, i32) {
    %c0_i32 = arith.constant 0 : i32
    %c0_i32_0 = arith.constant 0 : i32
    %c0_i32_1 = arith.constant 0 : i32
    return %arg0, %c0_i32, %c0_i32_0 : i32, i32, i32
  }
  func.func @transform_1(%arg0: i32) -> (i32, i32) {
    %c0_i32 = arith.constant 0 : i32
    %c0_i32_0 = arith.constant 0 : i32
    %c0_i32_1 = arith.constant 0 : i32
    return %c0_i32, %c0_i32_0 : i32, i32
  }
  func.func @transform_2(%arg0: i32) -> (i32, i32) {
    %c0_i32 = arith.constant 0 : i32
    %c0_i32_0 = arith.constant 0 : i32
    %c0_i32_1 = arith.constant 0 : i32
    return %c0_i32, %c0_i32_0 : i32, i32
  }
  func.func @transform_3(%arg0: i32) -> (i32, i32) {
    %c0_i32 = arith.constant 0 : i32
    %c0_i32_0 = arith.constant 0 : i32
    %c0_i32_1 = arith.constant 0 : i32
    return %c0_i32, %c0_i32_0 : i32, i32
  }
  func.func @transform_4(%arg0: i32) -> (i32, i32, i32) {
    %c0_i32 = arith.constant 0 : i32
    %c0_i32_0 = arith.constant 0 : i32
    %c0_i32_1 = arith.constant 0 : i32
    %c0_i32_2 = arith.constant 0 : i32
    return %c0_i32, %c0_i32_0, %c0_i32_1 : i32, i32, i32
  }
  func.func @transform_5(%arg0: i32) -> (i32, i32) {
    %c0_i32 = arith.constant 0 : i32
    %c0_i32_0 = arith.constant 0 : i32
    %c0_i32_1 = arith.constant 0 : i32
    return %c0_i32, %c0_i32_0 : i32, i32
  }
  func.func @transform_6(%arg0: i32) -> (i32, i32) {
    %c0_i32 = arith.constant 0 : i32
    %c0_i32_0 = arith.constant 0 : i32
    %c0_i32_1 = arith.constant 0 : i32
    return %c0_i32, %c0_i32_0 : i32, i32
  }
  func.func @transform_7(%arg0: i32) -> (i32, i32, i32) {
    %c0_i32 = arith.constant 0 : i32
    %c0_i32_0 = arith.constant 0 : i32
    %c0_i32_1 = arith.constant 0 : i32
    return %arg0, %c0_i32, %c0_i32_0 : i32, i32, i32
  }
  func.func @transform_8(%arg0: i32) -> (i32, i32) {
    %c0_i32 = arith.constant 0 : i32
    %c0_i32_0 = arith.constant 0 : i32
    %c0_i32_1 = arith.constant 0 : i32
    return %c0_i32, %c0_i32_0 : i32, i32
  }
  func.func @transform_9(%arg0: i32) -> (i32, i32) {
    %c0_i32 = arith.constant 0 : i32
    %c0_i32_0 = arith.constant 0 : i32
    %c0_i32_1 = arith.constant 0 : i32
    return %c0_i32, %c0_i32_0 : i32, i32
  }
  func.func @transform_10(%arg0: i32) -> (i32, i32) {
    %c0_i32 = arith.constant 0 : i32
    %c0_i32_0 = arith.constant 0 : i32
    %c0_i32_1 = arith.constant 0 : i32
    return %c0_i32, %c0_i32_0 : i32, i32
  }
  func.func @transform_11(%arg0: i32) -> (i32, i32, i32) {
    %c0_i32 = arith.constant 0 : i32
    %c0_i32_0 = arith.constant 0 : i32
    %c0_i32_1 = arith.constant 0 : i32
    return %arg0, %c0_i32, %c0_i32_0 : i32, i32, i32
  }
}

module attributes {stable_mosaic.version = 11 : i64} {
  func.func @_unit_tail_kernel(%arg0: i32, %arg1: memref<1x96x128xbf16, #tpu.memory_space<vmem>>, %arg2: memref<32x96xbf16, #tpu.memory_space<vmem>>, %arg3: memref<32x1xf32, #tpu.memory_space<vmem>>, %arg4: memref<32x1xf32, #tpu.memory_space<vmem>>, %arg5: memref<9x32x32xbf16, #tpu.memory_space<vmem>>, %arg6: memref<32x1xf32, #tpu.memory_space<vmem>>, %arg7: memref<32x1xf32, #tpu.memory_space<vmem>>, %arg8: memref<1x32x128xbf16, #tpu.memory_space<vmem>>, %arg9: memref<1x32x128xbf16, #tpu.memory_space<vmem>>, %arg10: memref<32x256xbf16, #tpu.memory_space<vmem>>) attributes {dimension_semantics = [#tpu.dimension_semantics<parallel>], iteration_bounds = array<i64: 4>, scalar_prefetch = 0 : i64, scratch_operands = 1 : i64, tpu.core_type = #tpu.core_type<tc>, window_params = [{transform_indices = @transform_0, window_bounds = array<i64: 1, 96, 128>}, {pipeline_mode = #tpu.pipeline_mode<synchronous>, transform_indices = @transform_1, window_bounds = array<i64: 32, 96>}, {pipeline_mode = #tpu.pipeline_mode<synchronous>, transform_indices = @transform_2, window_bounds = array<i64: 32, 1>}, {pipeline_mode = #tpu.pipeline_mode<synchronous>, transform_indices = @transform_3, window_bounds = array<i64: 32, 1>}, {pipeline_mode = #tpu.pipeline_mode<synchronous>, transform_indices = @transform_4, window_bounds = array<i64: 9, 32, 32>}, {pipeline_mode = #tpu.pipeline_mode<synchronous>, transform_indices = @transform_5, window_bounds = array<i64: 32, 1>}, {pipeline_mode = #tpu.pipeline_mode<synchronous>, transform_indices = @transform_6, window_bounds = array<i64: 32, 1>}, {transform_indices = @transform_7, window_bounds = array<i64: 1, 32, 128>}, {transform_indices = @transform_8, window_bounds = array<i64: 1, 32, 128>}]} {
    %c0 = arith.constant 0 : index
    %c0_0 = arith.constant 0 : index
    %c0_1 = arith.constant 0 : index
    %0 = vector.load %arg1[%c0, %c0_0, %c0_1] : memref<1x96x128xbf16, #tpu.memory_space<vmem>>, vector<1x96x128xbf16>
    %1 = vector.shape_cast %0 : vector<1x96x128xbf16> to vector<96x128xbf16>
    %c0_2 = arith.constant 0 : index
    %c0_3 = arith.constant 0 : index
    %2 = vector.load %arg2[%c0_2, %c0_3] : memref<32x96xbf16, #tpu.memory_space<vmem>>, vector<32x96xbf16>
    %cst = arith.constant dense<0.000000e+00> : vector<32x128xf32>
    %3 = tpu.matmul %2, %1, %cst {dimension_numbers = #tpu.dot_dimension_numbers<[1], [0], [0], [1], [0, 0, 1, 1], [], []>} : vector<32x96xbf16>, vector<96x128xbf16>, vector<32x128xf32> -> vector<32x128xf32>
    %c0_4 = arith.constant 0 : index
    %c0_5 = arith.constant 0 : index
    %4 = vector.load %arg3[%c0_4, %c0_5] : memref<32x1xf32, #tpu.memory_space<vmem>>, vector<32x1xf32>
    %5 = vector.broadcast %4 : vector<32x1xf32> to vector<32x128xf32>
    %6 = arith.mulf %3, %5 : vector<32x128xf32>
    %c0_6 = arith.constant 0 : index
    %c0_7 = arith.constant 0 : index
    %7 = vector.load %arg4[%c0_6, %c0_7] : memref<32x1xf32, #tpu.memory_space<vmem>>, vector<32x1xf32>
    %8 = vector.broadcast %7 : vector<32x1xf32> to vector<32x128xf32>
    %9 = arith.addf %6, %8 : vector<32x128xf32>
    %cst_8 = arith.constant 0.000000e+00 : f32
    %10 = vector.broadcast %cst_8 : f32 to vector<32x128xf32>
    %11 = arith.maximumf %9, %10 : vector<32x128xf32>
    %12 = arith.truncf %11 : vector<32x128xf32> to vector<32x128xbf16>
    %cst_9 = arith.constant 0.000000e+00 : f32
    %13 = vector.broadcast %cst_9 : f32 to vector<32x128xf32>
    %cst_10 = arith.constant 0.000000e+00 : bf16
    %14 = vector.broadcast %cst_10 : bf16 to vector<32x64xbf16>
    %c0_11 = arith.constant 0 : index
    %c0_12 = arith.constant 0 : index
    %15 = vector.load %arg10[%c0_11, %c0_12] : memref<32x256xbf16, #tpu.memory_space<vmem>>, vector<32x64xbf16>
    tpu.vector_store %arg10[%c0_11, %c0_12], %14 {strides = array<i32>} : memref<32x256xbf16, #tpu.memory_space<vmem>>, vector<32x64xbf16>,
    %c0_13 = arith.constant 0 : index
    %c192 = arith.constant 192 : index
    %16 = vector.load %arg10[%c0_13, %c192] : memref<32x256xbf16, #tpu.memory_space<vmem>>, vector<32x64xbf16>
    tpu.vector_store %arg10[%c0_13, %c192], %14 {strides = array<i32>} : memref<32x256xbf16, #tpu.memory_space<vmem>>, vector<32x64xbf16>,
    %c0_14 = arith.constant 0 : index
    %c64 = arith.constant 64 : index
    %17 = vector.load %arg10[%c0_14, %c64] : memref<32x256xbf16, #tpu.memory_space<vmem>>, vector<32x128xbf16>
    tpu.vector_store %arg10[%c0_14, %c64], %12 {strides = array<i32>} : memref<32x256xbf16, #tpu.memory_space<vmem>>, vector<32x128xbf16>,
    %c0_15 = arith.constant 0 : index
    %c0_16 = arith.constant 0 : index
    %18 = vector.load %arg10[%c0_15, %c0_16] : memref<32x256xbf16, #tpu.memory_space<vmem>>, vector<32x128xbf16>
    %c0_17 = arith.constant 0 : index
    %c0_18 = arith.constant 0 : index
    %c0_19 = arith.constant 0 : index
    %19 = vector.load %arg5[%c0_17, %c0_18, %c0_19] : memref<9x32x32xbf16, #tpu.memory_space<vmem>>, vector<1x32x32xbf16>
    %20 = vector.shape_cast %19 : vector<1x32x32xbf16> to vector<32x32xbf16>
    %cst_20 = arith.constant dense<0.000000e+00> : vector<32x128xf32>
    %21 = tpu.matmul %20, %18, %cst_20 {dimension_numbers = #tpu.dot_dimension_numbers<[1], [0], [0], [1], [0, 0, 1, 1], [], []>} : vector<32x32xbf16>, vector<32x128xbf16>, vector<32x128xf32> -> vector<32x128xf32>
    %22 = arith.addf %13, %21 : vector<32x128xf32>
    %c0_21 = arith.constant 0 : index
    %c16 = arith.constant 16 : index
    %23 = vector.load %arg10[%c0_21, %c16] : memref<32x256xbf16, #tpu.memory_space<vmem>>, vector<32x128xbf16>
    %c1 = arith.constant 1 : index
    %c0_22 = arith.constant 0 : index
    %c0_23 = arith.constant 0 : index
    %24 = vector.load %arg5[%c1, %c0_22, %c0_23] : memref<9x32x32xbf16, #tpu.memory_space<vmem>>, vector<1x32x32xbf16>
    %25 = vector.shape_cast %24 : vector<1x32x32xbf16> to vector<32x32xbf16>
    %cst_24 = arith.constant dense<0.000000e+00> : vector<32x128xf32>
    %26 = tpu.matmul %25, %23, %cst_24 {dimension_numbers = #tpu.dot_dimension_numbers<[1], [0], [0], [1], [0, 0, 1, 1], [], []>} : vector<32x32xbf16>, vector<32x128xbf16>, vector<32x128xf32> -> vector<32x128xf32>
    %27 = arith.addf %22, %26 : vector<32x128xf32>
    %c0_25 = arith.constant 0 : index
    %c32 = arith.constant 32 : index
    %28 = vector.load %arg10[%c0_25, %c32] : memref<32x256xbf16, #tpu.memory_space<vmem>>, vector<32x128xbf16>
    %c2 = arith.constant 2 : index
    %c0_26 = arith.constant 0 : index
    %c0_27 = arith.constant 0 : index
    %29 = vector.load %arg5[%c2, %c0_26, %c0_27] : memref<9x32x32xbf16, #tpu.memory_space<vmem>>, vector<1x32x32xbf16>
    %30 = vector.shape_cast %29 : vector<1x32x32xbf16> to vector<32x32xbf16>
    %cst_28 = arith.constant dense<0.000000e+00> : vector<32x128xf32>
    %31 = tpu.matmul %30, %28, %cst_28 {dimension_numbers = #tpu.dot_dimension_numbers<[1], [0], [0], [1], [0, 0, 1, 1], [], []>} : vector<32x32xbf16>, vector<32x128xbf16>, vector<32x128xf32> -> vector<32x128xf32>
    %32 = arith.addf %27, %31 : vector<32x128xf32>
    %c0_29 = arith.constant 0 : index
    %c48 = arith.constant 48 : index
    %33 = vector.load %arg10[%c0_29, %c48] : memref<32x256xbf16, #tpu.memory_space<vmem>>, vector<32x128xbf16>
    %c3 = arith.constant 3 : index
    %c0_30 = arith.constant 0 : index
    %c0_31 = arith.constant 0 : index
    %34 = vector.load %arg5[%c3, %c0_30, %c0_31] : memref<9x32x32xbf16, #tpu.memory_space<vmem>>, vector<1x32x32xbf16>
    %35 = vector.shape_cast %34 : vector<1x32x32xbf16> to vector<32x32xbf16>
    %cst_32 = arith.constant dense<0.000000e+00> : vector<32x128xf32>
    %36 = tpu.matmul %35, %33, %cst_32 {dimension_numbers = #tpu.dot_dimension_numbers<[1], [0], [0], [1], [0, 0, 1, 1], [], []>} : vector<32x32xbf16>, vector<32x128xbf16>, vector<32x128xf32> -> vector<32x128xf32>
    %37 = arith.addf %32, %36 : vector<32x128xf32>
    %c0_33 = arith.constant 0 : index
    %c64_34 = arith.constant 64 : index
    %38 = vector.load %arg10[%c0_33, %c64_34] : memref<32x256xbf16, #tpu.memory_space<vmem>>, vector<32x128xbf16>
    %c4 = arith.constant 4 : index
    %c0_35 = arith.constant 0 : index
    %c0_36 = arith.constant 0 : index
    %39 = vector.load %arg5[%c4, %c0_35, %c0_36] : memref<9x32x32xbf16, #tpu.memory_space<vmem>>, vector<1x32x32xbf16>
    %40 = vector.shape_cast %39 : vector<1x32x32xbf16> to vector<32x32xbf16>
    %cst_37 = arith.constant dense<0.000000e+00> : vector<32x128xf32>
    %41 = tpu.matmul %40, %38, %cst_37 {dimension_numbers = #tpu.dot_dimension_numbers<[1], [0], [0], [1], [0, 0, 1, 1], [], []>} : vector<32x32xbf16>, vector<32x128xbf16>, vector<32x128xf32> -> vector<32x128xf32>
    %42 = arith.addf %37, %41 : vector<32x128xf32>
    %c0_38 = arith.constant 0 : index
    %c80 = arith.constant 80 : index
    %43 = vector.load %arg10[%c0_38, %c80] : memref<32x256xbf16, #tpu.memory_space<vmem>>, vector<32x128xbf16>
    %c5 = arith.constant 5 : index
    %c0_39 = arith.constant 0 : index
    %c0_40 = arith.constant 0 : index
    %44 = vector.load %arg5[%c5, %c0_39, %c0_40] : memref<9x32x32xbf16, #tpu.memory_space<vmem>>, vector<1x32x32xbf16>
    %45 = vector.shape_cast %44 : vector<1x32x32xbf16> to vector<32x32xbf16>
    %cst_41 = arith.constant dense<0.000000e+00> : vector<32x128xf32>
    %46 = tpu.matmul %45, %43, %cst_41 {dimension_numbers = #tpu.dot_dimension_numbers<[1], [0], [0], [1], [0, 0, 1, 1], [], []>} : vector<32x32xbf16>, vector<32x128xbf16>, vector<32x128xf32> -> vector<32x128xf32>
    %47 = arith.addf %42, %46 : vector<32x128xf32>
    %c0_42 = arith.constant 0 : index
    %c96 = arith.constant 96 : index
    %48 = vector.load %arg10[%c0_42, %c96] : memref<32x256xbf16, #tpu.memory_space<vmem>>, vector<32x128xbf16>
    %c6 = arith.constant 6 : index
    %c0_43 = arith.constant 0 : index
    %c0_44 = arith.constant 0 : index
    %49 = vector.load %arg5[%c6, %c0_43, %c0_44] : memref<9x32x32xbf16, #tpu.memory_space<vmem>>, vector<1x32x32xbf16>
    %50 = vector.shape_cast %49 : vector<1x32x32xbf16> to vector<32x32xbf16>
    %cst_45 = arith.constant dense<0.000000e+00> : vector<32x128xf32>
    %51 = tpu.matmul %50, %48, %cst_45 {dimension_numbers = #tpu.dot_dimension_numbers<[1], [0], [0], [1], [0, 0, 1, 1], [], []>} : vector<32x32xbf16>, vector<32x128xbf16>, vector<32x128xf32> -> vector<32x128xf32>
    %52 = arith.addf %47, %51 : vector<32x128xf32>
    %c0_46 = arith.constant 0 : index
    %c112 = arith.constant 112 : index
    %53 = vector.load %arg10[%c0_46, %c112] : memref<32x256xbf16, #tpu.memory_space<vmem>>, vector<32x128xbf16>
    %c7 = arith.constant 7 : index
    %c0_47 = arith.constant 0 : index
    %c0_48 = arith.constant 0 : index
    %54 = vector.load %arg5[%c7, %c0_47, %c0_48] : memref<9x32x32xbf16, #tpu.memory_space<vmem>>, vector<1x32x32xbf16>
    %55 = vector.shape_cast %54 : vector<1x32x32xbf16> to vector<32x32xbf16>
    %cst_49 = arith.constant dense<0.000000e+00> : vector<32x128xf32>
    %56 = tpu.matmul %55, %53, %cst_49 {dimension_numbers = #tpu.dot_dimension_numbers<[1], [0], [0], [1], [0, 0, 1, 1], [], []>} : vector<32x32xbf16>, vector<32x128xbf16>, vector<32x128xf32> -> vector<32x128xf32>
    %57 = arith.addf %52, %56 : vector<32x128xf32>
    %c0_50 = arith.constant 0 : index
    %c128 = arith.constant 128 : index
    %58 = vector.load %arg10[%c0_50, %c128] : memref<32x256xbf16, #tpu.memory_space<vmem>>, vector<32x128xbf16>
    %c8 = arith.constant 8 : index
    %c0_51 = arith.constant 0 : index
    %c0_52 = arith.constant 0 : index
    %59 = vector.load %arg5[%c8, %c0_51, %c0_52] : memref<9x32x32xbf16, #tpu.memory_space<vmem>>, vector<1x32x32xbf16>
    %60 = vector.shape_cast %59 : vector<1x32x32xbf16> to vector<32x32xbf16>
    %cst_53 = arith.constant dense<0.000000e+00> : vector<32x128xf32>
    %61 = tpu.matmul %60, %58, %cst_53 {dimension_numbers = #tpu.dot_dimension_numbers<[1], [0], [0], [1], [0, 0, 1, 1], [], []>} : vector<32x32xbf16>, vector<32x128xbf16>, vector<32x128xf32> -> vector<32x128xf32>
    %62 = arith.addf %57, %61 : vector<32x128xf32>
    %c0_54 = arith.constant 0 : index
    %c0_55 = arith.constant 0 : index
    %63 = vector.load %arg6[%c0_54, %c0_55] : memref<32x1xf32, #tpu.memory_space<vmem>>, vector<32x1xf32>
    %64 = vector.broadcast %63 : vector<32x1xf32> to vector<32x128xf32>
    %65 = arith.mulf %62, %64 : vector<32x128xf32>
    %c0_56 = arith.constant 0 : index
    %c0_57 = arith.constant 0 : index
    %66 = vector.load %arg7[%c0_56, %c0_57] : memref<32x1xf32, #tpu.memory_space<vmem>>, vector<32x1xf32>
    %67 = vector.broadcast %66 : vector<32x1xf32> to vector<32x128xf32>
    %68 = arith.addf %65, %67 : vector<32x128xf32>
    %cst_58 = arith.constant 0.000000e+00 : f32
    %69 = vector.broadcast %cst_58 : f32 to vector<32x128xf32>
    %70 = arith.maximumf %68, %69 : vector<32x128xf32>
    %c0_59 = arith.constant 0 : index
    %c0_60 = arith.constant 0 : index
    %c0_61 = arith.constant 0 : index
    %71 = vector.load %arg8[%c0_59, %c0_60, %c0_61] : memref<1x32x128xbf16, #tpu.memory_space<vmem>>, vector<1x32x128xbf16>
    %72 = vector.shape_cast %71 : vector<1x32x128xbf16> to vector<32x128xbf16>
    %73 = arith.extf %72 : vector<32x128xbf16> to vector<32x128xf32>
    %74 = arith.addf %70, %73 : vector<32x128xf32>
    %75 = arith.truncf %74 : vector<32x128xf32> to vector<32x128xbf16>
    %c0_62 = arith.constant 0 : index
    %c0_63 = arith.constant 0 : index
    %c0_64 = arith.constant 0 : index
    %76 = vector.load %arg9[%c0_62, %c0_63, %c0_64] : memref<1x32x128xbf16, #tpu.memory_space<vmem>>, vector<1x32x128xbf16>
    %77 = vector.shape_cast %76 : vector<1x32x128xbf16> to vector<32x128xbf16>
    %78 = vector.shape_cast %75 : vector<32x128xbf16> to vector<1x32x128xbf16>
    tpu.vector_store %arg9[%c0_62, %c0_63, %c0_64], %78 {strides = array<i32>} : memref<1x32x128xbf16, #tpu.memory_space<vmem>>, vector<1x32x128xbf16>,
    return
  }
  func.func @transform_0(%arg0: i32) -> (i32, i32, i32) {
    %c0_i32 = arith.constant 0 : i32
    %c0_i32_0 = arith.constant 0 : i32
    %c0_i32_1 = arith.constant 0 : i32
    return %arg0, %c0_i32, %c0_i32_0 : i32, i32, i32
  }
  func.func @transform_1(%arg0: i32) -> (i32, i32) {
    %c0_i32 = arith.constant 0 : i32
    %c0_i32_0 = arith.constant 0 : i32
    %c0_i32_1 = arith.constant 0 : i32
    return %c0_i32, %c0_i32_0 : i32, i32
  }
  func.func @transform_2(%arg0: i32) -> (i32, i32) {
    %c0_i32 = arith.constant 0 : i32
    %c0_i32_0 = arith.constant 0 : i32
    %c0_i32_1 = arith.constant 0 : i32
    return %c0_i32, %c0_i32_0 : i32, i32
  }
  func.func @transform_3(%arg0: i32) -> (i32, i32) {
    %c0_i32 = arith.constant 0 : i32
    %c0_i32_0 = arith.constant 0 : i32
    %c0_i32_1 = arith.constant 0 : i32
    return %c0_i32, %c0_i32_0 : i32, i32
  }
  func.func @transform_4(%arg0: i32) -> (i32, i32, i32) {
    %c0_i32 = arith.constant 0 : i32
    %c0_i32_0 = arith.constant 0 : i32
    %c0_i32_1 = arith.constant 0 : i32
    %c0_i32_2 = arith.constant 0 : i32
    return %c0_i32, %c0_i32_0, %c0_i32_1 : i32, i32, i32
  }
  func.func @transform_5(%arg0: i32) -> (i32, i32) {
    %c0_i32 = arith.constant 0 : i32
    %c0_i32_0 = arith.constant 0 : i32
    %c0_i32_1 = arith.constant 0 : i32
    return %c0_i32, %c0_i32_0 : i32, i32
  }
  func.func @transform_6(%arg0: i32) -> (i32, i32) {
    %c0_i32 = arith.constant 0 : i32
    %c0_i32_0 = arith.constant 0 : i32
    %c0_i32_1 = arith.constant 0 : i32
    return %c0_i32, %c0_i32_0 : i32, i32
  }
  func.func @transform_7(%arg0: i32) -> (i32, i32, i32) {
    %c0_i32 = arith.constant 0 : i32
    %c0_i32_0 = arith.constant 0 : i32
    %c0_i32_1 = arith.constant 0 : i32
    return %arg0, %c0_i32, %c0_i32_0 : i32, i32, i32
  }
  func.func @transform_8(%arg0: i32) -> (i32, i32, i32) {
    %c0_i32 = arith.constant 0 : i32
    %c0_i32_0 = arith.constant 0 : i32
    %c0_i32_1 = arith.constant 0 : i32
    return %arg0, %c0_i32, %c0_i32_0 : i32, i32, i32
  }
}

</mosaic_0001>

<llo_original>
// kernel: _lambda_.8
$region0: #{_lambda_.8}
  #allocation0 [shape = 'u32[]', space=smem, size = 0x4, offset = 0x4, fixed_abs, tag = 'smem constant byte address 0x4 - core index']
  #allocation1 [shape = 'u32[144,128]{1,0:T(1,128)}', space=vmem, size = 0x12000, scoped, tag = 'internal scratch']
  %s0 = inlined_call_operand.vmem [shape: bf16[4,48,16], index: 0, kind: input, shape index: {}]
  %s1 = inlined_call_operand.vmem [shape: bf16[3,16,16], index: 1, kind: input, shape index: {}]
  %s2 = inlined_call_operand.vmem [shape: bf16[4,144,16], index: 2, kind: output, shape index: {}]
  %s3 = sld [smem:[#allocation0]]
  $region41: #{_lambda_.8} parent=0
    _
  %s5 = ssub.s32 1, %s3
  %s6 = scalar_select 0, %s5, %s3
  loop: start=0, step=1, limit=6
  $region2: #{_lambda_.8} parent=0 // loop_pre_header
    _
  $region3: #{_lambda_.8} parent=0 // loop_header
    %s8 = sphi 0, %s12
    %p9 = scmp.ge.s32.totalorder %s8, 6
    %s18 = sphi 0, %s20
    %s21 = sphi 0, %s18
    %s22 = sphi 0, %s21
    %s38 = sphi 0, %s22
    %s42 = sphi 0, %s42
    %s44 = sphi 0, %s42
    %s45 = sphi 0, %s44
    %s59 = sphi 0, %s45
    %s65 = sphi 0, %s67
    %s68 = sphi 0, %s65
    %s69 = sphi 0, %s68
    %s85 = sphi 0, %s69
  $region4: #{_lambda_.8} parent=0 // loop_header_branch
    %11 = sbr.rel (%p9) target = $region8
  $region5: #{_lambda_.8} parent=0 // loop_body
    %s13 = ssub.s32 %s8, 1
    %s14 = ssub.s32 %s8, 2
    %s15 = sadd.s32 %s8, 1
    %s16 = ssub.s32 %s8, %s15
    %p17 = scmp.eq.s32.totalorder %s16, 0
    %s19 = sadd.s32 %s18, 1
    %s20 = scalar_select %p17, %s18, %s19
    %p23 = pneg %p17
    %p24 = scmp.eq.s32.totalorder %s8, 3
    %p25 = por %p23, %p24
    %p26 = scmp.ne.s32.totalorder %s18, %s21
    %p27 = scmp.eq.s32.totalorder %s8, 0
    %p28 = por %p26, %p27
    %p29 = scmp.ne.s32.totalorder %s18, %s21
    %p30 = scmp.eq.s32.totalorder %s13, 3
    %p31 = por %p29, %p30
    %p32 = scmp.ne.s32.totalorder %s21, %s22
    %p33 = scmp.eq.s32.totalorder %s13, 0
    %p34 = por %p32, %p33
    %p35 = scmp.ne.s32.totalorder %s21, %s22
    %p36 = scmp.eq.s32.totalorder %s14, 3
    %p37 = por %p35, %p36
    %p39 = scmp.ne.s32.totalorder %s22, %s38
    %p40 = scmp.eq.s32.totalorder %s14, 0
    %p41 = por %p39, %p40
    %s43 = sadd.s32 %s42, 1
    %p46 = scmp.eq.s32.totalorder %s8, 3
    %p47 = scmp.ne.s32.totalorder %s42, %s44
    %p48 = scmp.eq.s32.totalorder %s8, 0
    %p49 = por %p47, %p48
    %p50 = scmp.ne.s32.totalorder %s42, %s44
    %p51 = scmp.eq.s32.totalorder %s13, 3
    %p52 = por %p50, %p51
    %p53 = scmp.ne.s32.totalorder %s44, %s45
    %p54 = scmp.eq.s32.totalorder %s13, 0
    %p55 = por %p53, %p54
    %p56 = scmp.ne.s32.totalorder %s44, %s45
    %p57 = scmp.eq.s32.totalorder %s14, 3
    %p58 = por %p56, %p57
    %p60 = scmp.ne.s32.totalorder %s45, %s59
    %p61 = scmp.eq.s32.totalorder %s14, 0
    %p62 = por %p60, %p61
    %s63 = ssub.s32 %s8, %s15
    %p64 = scmp.eq.s32.totalorder %s63, 0
    %s66 = sadd.s32 %s65, 1
    %s67 = scalar_select %p64, %s65, %s66
    %p70 = pneg %p64
    %p71 = scmp.eq.s32.totalorder %s8, 3
    %p72 = por %p70, %p71
    %p73 = scmp.ne.s32.totalorder %s65, %s68
    %p74 = scmp.eq.s32.totalorder %s8, 0
    %p75 = por %p73, %p74
    %p76 = scmp.ne.s32.totalorder %s65, %s68
    %p77 = scmp.eq.s32.totalorder %s13, 3
    %p78 = por %p76, %p77
    %p79 = scmp.ne.s32.totalorder %s68, %s69
    %p80 = scmp.eq.s32.totalorder %s13, 0
    %p81 = por %p79, %p80
    %p82 = scmp.ne.s32.totalorder %s68, %s69
    %p83 = scmp.eq.s32.totalorder %s14, 3
    %p84 = por %p82, %p83
    %p86 = scmp.ne.s32.totalorder %s69, %s85
    %p87 = scmp.eq.s32.totalorder %s14, 0
    %p88 = por %p86, %p87
    %p89 = scmp.le.s32.totalorder 1, %s8
    %p90 = scmp.lt.s32.totalorder %s8, 5
    %p91 = pnand %p89, %p90
    %p92 = pneg %p91
    // Predicated region
    $region9: #{_lambda_.8} parent=5 // pred_check
      _
    $region10: #{_lambda_.8} parent=5 // pred_check_branch
      %94 = sbr.rel (%p91) target = $region12
    $region11: #{_lambda_.8} parent=5 // pred_region
      %s95 = ssub.s32 %s8, 1
      // Predicated region
      $region13: #{_lambda_.8} parent=11 // pred_check
        %p96 = pneg %p55
      $region14: #{_lambda_.8} parent=11 // pred_check_branch
        %98 = sbr.rel (%p96) target = $region16
      $region15: #{_lambda_.8} parent=11 // pred_region
        _
      $region16: #{_lambda_.8} parent=11 // pred_fallthru
        _
    $region12: #{_lambda_.8} parent=5 // pred_fallthru
      _
    %p99 = scmp.lt.s32.totalorder %s8, 4
    // Predicated region
    $region17: #{_lambda_.8} parent=5 // pred_check
      %p100 = pneg %p99
    $region18: #{_lambda_.8} parent=5 // pred_check_branch
      %102 = sbr.rel (%p100) target = $region20
    $region19: #{_lambda_.8} parent=5 // pred_region
      // Predicated region
      $region21: #{_lambda_.8} parent=19 // pred_check
        %p103 = pneg %p28
      $region22: #{_lambda_.8} parent=19 // pred_check_branch
        %105 = sbr.rel (%p103) target = $region24
      $region23: #{_lambda_.8} parent=19 // pred_region
        %p106 = scmp.lt.s32.totalorder %s8, 3
        %s107 = scalar_select %p106, %s8, 3
        %s108 = smul.addr %s107, 6
        %s109 = smul.addr %s108, 4
        %s110 = scalar_lea.vmem %s0, %s109
      $region24: #{_lambda_.8} parent=19 // pred_fallthru
        _
    $region20: #{_lambda_.8} parent=5 // pred_fallthru
      _
    %p111 = scmp.le.s32.totalorder 1, %s8
    %p112 = scmp.lt.s32.totalorder %s8, 5
    %p113 = pnand %p111, %p112
    %p114 = pneg %p113
    // Predicated region
    $region25: #{_lambda_.8} parent=5 // pred_check
      _
    $region26: #{_lambda_.8} parent=5 // pred_check_branch
      %116 = sbr.rel (%p113) target = $region28
    $region27: #{_lambda_.8} parent=5 // pred_region
      %s117 = ssub.s32 %s8, 1
      %p118 = scmp.lt.s32.totalorder %s13, 3
      %s119 = scalar_select %p118, %s13, 3
      %s120 = smul.addr %s119, 6
      %s121 = smul.addr %s120, 4
      %s122 = scalar_lea.vmem %s0, %s121
      %p123 = pneg %p34
      %p124 = pneg %p31
      %p125 = pneg %p55
      %p126 = pneg %p52
      %p127 = pneg %p81
      %p128 = pneg %p78
      %p129 = scmp.lt.s32.totalorder %s13, 3
      %s130 = scalar_select %p129, %s13, 3
      %s131 = smul.addr %s130, 18
      %s132 = smul.addr %s131, 4
      %s133 = scalar_lea.vmem %s2, %s132
      %p134 = scmp.lt.s32.totalorder %s13, 3
      %s135 = scalar_select %p134, %s13, 3
      %s136 = smul.addr %s135, 6
      %s137 = smul.addr %s136, 4
      %s138 = scalar_lea.vmem %s0, %s137
      %p139 = scmp.lt.s32.totalorder %s13, 3
      %s140 = scalar_select %p139, %s13, 3
      %s141 = smul.addr %s140, 18
      %s142 = smul.addr %s141, 4
      %s143 = scalar_lea.vmem %s2, %s142
      %v145 = vld [vmem:[%s138] sm:$0xf]
      %v146 = vld [vmem:[%s138 + $0x4] sm:$0xf]
      %v147 = vld [vmem:[%s138 + $0x8] sm:$0xf]
      %v148 = vld [vmem:[%s138 + $0xc] sm:$0xf]
      %v149 = vld [vmem:[%s138 + $0x10] sm:$0xf]
      %v150 = vld [vmem:[%s138 + $0x14] sm:$0xf]
      %v151 = vld [vmem:[%s1] sm:$0xf]
      %v152 = vld [vmem:[%s1 + $0x4] sm:$0xf]
      %v159 = vunpack.c.l.b16 %v145
      %v160 = vunpack.c.l.b16 %v146
      %v161 = vunpack.c.l.b16 %v147
      %v162 = vunpack.c.l.b16 %v148
      %v163 = vunpack.c.l.b16 %v149
      %v164 = vunpack.c.l.b16 %v150
      %v165 = vpack.c.b16 %v160, %v159
      %v166 = vpack.c.b16 %v162, %v161
      %v167 = vpack.c.b16 %v164, %v163
      %v170 = vunpack.c.l.b16 %v151
      %v171 = vunpack.c.l.b16 %v152
      %v172 = vpack.c.b16 %v171, %v170
      %vm174 = vcmask 130048
      %v176 = vsel %vm174, %v165, 0
      %v179 = vsel %vm174, %v166, 0
      %v182 = vsel %vm174, %v167, 0
      %184 = vmatprep.subr.bf16.mxu0 0
      %185 = vmatpush1.bf16.msra.mxu0 0
      %186 = vmatprep.subr.bf16.mxu0 0
      %187 = vmatpush1.bf16.msra.mxu0 0
      %188 = vmatprep.subr.bf16.mxu0 0
      %189 = vmatpush1.bf16.msra.mxu0 0
      %190 = vmatprep.subr.bf16.mxu0 0
      %191 = vmatpush1.bf16.msra.mxu0 0
      %192 = vmatprep.subr.bf16.mxu0 0
      %193 = vmatpush1.bf16.msra.mxu0 0
      %194 = vmatprep.subr.bf16.mxu0 0
      %195 = vmatpush1.bf16.msra.mxu0 0
      %196 = vmatprep.subr.bf16.mxu0 0
      %197 = vmatpush1.bf16.msra.mxu0 0
      %198 = vmatprep.subr.bf16.mxu0 0
      %199 = vmatpush1.bf16.msra.mxu0 %v172
      %200 = vmatprep.subr.bf16.mxu0 0
      %201 = vmatpush2.bf16.msra.mxu0 0
      %202 = vmatprep.subr.bf16.mxu0 0
      %203 = vmatpush2.bf16.msra.mxu0 0
      %204 = vmatprep.subr.bf16.mxu0 0
      %205 = vmatpush2.bf16.msra.mxu0 0
      %206 = vmatprep.subr.bf16.mxu0 0
      %207 = vmatpush2.bf16.msra.mxu0 0
      %208 = vmatprep.subr.bf16.mxu0 0
      %209 = vmatpush2.bf16.msra.mxu0 0
      %210 = vmatprep.subr.bf16.mxu0 0
      %211 = vmatpush2.bf16.msra.mxu0 0
      %212 = vmatprep.subr.bf16.mxu0 0
      %213 = vmatpush2.bf16.msra.mxu0 0
      %214 = vmatprep.subr.bf16.mxu0 0
      %215 = vmatpush2.bf16.msra.mxu0 0
      %216 = vmatprep.mubr.bf16.mxu0 0
      %217 = vmatmul.mubr.bf16.gmra.mxu0 %v176
      %v218 = vpop.f32.mrf.mxu0
      %v219 = vadd.f32 0.0, %v218
      %v220 = vpop.f32.mrf.mxu0
      %v221 = vpop.f32.mrf.mxu0
      %v222 = vadd.f32 0.0, %v221
      %v223 = vpop.f32.mrf.mxu0
      %224 = vmatprep.mubr.bf16.mxu0 0
      %225 = vmatmul.mubr.bf16.gmra.mxu0 %v179
      %v226 = vpop.f32.mrf.mxu0
      %v227 = vadd.f32 0.0, %v226
      %v228 = vpop.f32.mrf.mxu0
      %v229 = vpop.f32.mrf.mxu0
      %v230 = vadd.f32 0.0, %v229
      %v231 = vpop.f32.mrf.mxu0
      %232 = vmatprep.mubr.bf16.mxu0 0
      %233 = vmatmul.mubr.bf16.gmra.mxu0 %v182
      %v234 = vpop.f32.mrf.mxu0
      %v235 = vadd.f32 0.0, %v234
      %v236 = vpop.f32.mrf.mxu0
      %v237 = vpop.f32.mrf.mxu0
      %v238 = vadd.f32 0.0, %v237
      %v239 = vpop.f32.mrf.mxu0
      %240 = vdwg.mxu0
      %v241 = vpack.c.bf16 %v222, %v219
      %v242 = vpack.c.bf16 %v230, %v227
      %v243 = vpack.c.bf16 %v238, %v235
      %v247 = vunpack.c.l.b16 %v241
      %v248 = vunpack.c.h.b16 %v241
      %v249 = vunpack.c.l.b16 %v242
      %v250 = vunpack.c.h.b16 %v242
      %v251 = vunpack.c.l.b16 %v243
      %v252 = vunpack.c.h.b16 %v243
      %v253 = vpack.c.b16 %v247, %v247
      %v254 = vpack.c.b16 %v248, %v248
      %v255 = vpack.c.b16 %v249, %v249
      %v256 = vpack.c.b16 %v250, %v250
      %v257 = vpack.c.b16 %v251, %v251
      %v258 = vpack.c.b16 %v252, %v252
      %vm265 = vcmask 125952
      %266 = vst.msk [vmem:[%s143] sm:$0xf] %vm265, %v253
      %267 = vst.msk [vmem:[%s143 + $0x4] sm:$0xf] %vm265, %v254
      %268 = vst.msk [vmem:[%s143 + $0x8] sm:$0xf] %vm265, %v255
      %269 = vst.msk [vmem:[%s143 + $0xc] sm:$0xf] %vm265, %v256
      %270 = vst.msk [vmem:[%s143 + $0x10] sm:$0xf] %vm265, %v257
      %271 = vst.msk [vmem:[%s143 + $0x14] sm:$0xf] %vm265, %v258
      %s272 = scalar_lea.vmem %s1, 8
      %v273 = vld [vmem:[%s272] sm:$0xf]
      %v274 = vld [vmem:[%s272 + $0x4] sm:$0xf]
      %v277 = vunpack.c.l.b16 %v273
      %v278 = vunpack.c.l.b16 %v274
      %v279 = vpack.c.b16 %v278, %v277
      %281 = vmatprep.subr.bf16.mxu0 0
      %282 = vmatpush1.bf16.msra.mxu0 0
      %283 = vmatprep.subr.bf16.mxu0 0
      %284 = vmatpush1.bf16.msra.mxu0 0
      %285 = vmatprep.subr.bf16.mxu0 0
      %286 = vmatpush1.bf16.msra.mxu0 0
      %287 = vmatprep.subr.bf16.mxu0 0
      %288 = vmatpush1.bf16.msra.mxu0 0
      %289 = vmatprep.subr.bf16.mxu0 0
      %290 = vmatpush1.bf16.msra.mxu0 0
      %291 = vmatprep.subr.bf16.mxu0 0
      %292 = vmatpush1.bf16.msra.mxu0 0
      %293 = vmatprep.subr.bf16.mxu0 0
      %294 = vmatpush1.bf16.msra.mxu0 0
      %295 = vmatprep.subr.bf16.mxu0 0
      %296 = vmatpush1.bf16.msra.mxu0 %v279
      %297 = vmatprep.subr.bf16.mxu0 0
      %298 = vmatpush2.bf16.msra.mxu0 0
      %299 = vmatprep.subr.bf16.mxu0 0
      %300 = vmatpush2.bf16.msra.mxu0 0
      %301 = vmatprep.subr.bf16.mxu0 0
      %302 = vmatpush2.bf16.msra.mxu0 0
      %303 = vmatprep.subr.bf16.mxu0 0
      %304 = vmatpush2.bf16.msra.mxu0 0
      %305 = vmatprep.subr.bf16.mxu0 0
      %306 = vmatpush2.bf16.msra.mxu0 0
      %307 = vmatprep.subr.bf16.mxu0 0
      %308 = vmatpush2.bf16.msra.mxu0 0
      %309 = vmatprep.subr.bf16.mxu0 0
      %310 = vmatpush2.bf16.msra.mxu0 0
      %311 = vmatprep.subr.bf16.mxu0 0
      %312 = vmatpush2.bf16.msra.mxu0 0
      %313 = vmatprep.mubr.bf16.mxu0 0
      %314 = vmatmul.mubr.bf16.gmra.mxu0 %v176
      %v315 = vpop.f32.mrf.mxu0
      %v316 = vadd.f32 0.0, %v315
      %v317 = vpop.f32.mrf.mxu0
      %v318 = vpop.f32.mrf.mxu0
      %v319 = vadd.f32 0.0, %v318
      %v320 = vpop.f32.mrf.mxu0
      %321 = vmatprep.mubr.bf16.mxu0 0
      %322 = vmatmul.mubr.bf16.gmra.mxu0 %v179
      %v323 = vpop.f32.mrf.mxu0
      %v324 = vadd.f32 0.0, %v323
      %v325 = vpop.f32.mrf.mxu0
      %v326 = vpop.f32.mrf.mxu0
      %v327 = vadd.f32 0.0, %v326
      %v328 = vpop.f32.mrf.mxu0
      %329 = vmatprep.mubr.bf16.mxu0 0
      %330 = vmatmul.mubr.bf16.gmra.mxu0 %v182
      %v331 = vpop.f32.mrf.mxu0
      %v332 = vadd.f32 0.0, %v331
      %v333 = vpop.f32.mrf.mxu0
      %v334 = vpop.f32.mrf.mxu0
      %v335 = vadd.f32 0.0, %v334
      %v336 = vpop.f32.mrf.mxu0
      %337 = vdwg.mxu0
      %v338 = vpack.c.bf16 %v319, %v316
      %v339 = vpack.c.bf16 %v327, %v324
      %v340 = vpack.c.bf16 %v335, %v332
      %v344 = vunpack.c.l.b16 %v338
      %v345 = vunpack.c.h.b16 %v338
      %v346 = vunpack.c.l.b16 %v339
      %v347 = vunpack.c.h.b16 %v339
      %v348 = vunpack.c.l.b16 %v340
      %v349 = vunpack.c.h.b16 %v340
      %v350 = vpack.c.b16 %v344, %v344
      %v351 = vpack.c.b16 %v345, %v345
      %v352 = vpack.c.b16 %v346, %v346
      %v353 = vpack.c.b16 %v347, %v347
      %v354 = vpack.c.b16 %v348, %v348
      %v355 = vpack.c.b16 %v349, %v349
      %362 = vst.msk [vmem:[%s143 + $0x18] sm:$0xf] %vm265, %v350
      %363 = vst.msk [vmem:[%s143 + $0x1c] sm:$0xf] %vm265, %v351
      %364 = vst.msk [vmem:[%s143 + $0x20] sm:$0xf] %vm265, %v352
      %365 = vst.msk [vmem:[%s143 + $0x24] sm:$0xf] %vm265, %v353
      %366 = vst.msk [vmem:[%s143 + $0x28] sm:$0xf] %vm265, %v354
      %367 = vst.msk [vmem:[%s143 + $0x2c] sm:$0xf] %vm265, %v355
      %s368 = scalar_lea.vmem %s1, 16
      %v369 = vld [vmem:[%s368] sm:$0xf]
      %v370 = vld [vmem:[%s368 + $0x4] sm:$0xf]
      %v373 = vunpack.c.l.b16 %v369
      %v374 = vunpack.c.l.b16 %v370
      %v375 = vpack.c.b16 %v374, %v373
      %377 = vmatprep.subr.bf16.mxu0 0
      %378 = vmatpush1.bf16.msra.mxu0 0
      %379 = vmatprep.subr.bf16.mxu0 0
      %380 = vmatpush1.bf16.msra.mxu0 0
      %381 = vmatprep.subr.bf16.mxu0 0
      %382 = vmatpush1.bf16.msra.mxu0 0
      %383 = vmatprep.subr.bf16.mxu0 0
      %384 = vmatpush1.bf16.msra.mxu0 0
      %385 = vmatprep.subr.bf16.mxu0 0
      %386 = vmatpush1.bf16.msra.mxu0 0
      %387 = vmatprep.subr.bf16.mxu0 0
      %388 = vmatpush1.bf16.msra.mxu0 0
      %389 = vmatprep.subr.bf16.mxu0 0
      %390 = vmatpush1.bf16.msra.mxu0 0
      %391 = vmatprep.subr.bf16.mxu0 0
      %392 = vmatpush1.bf16.msra.mxu0 %v375
      %393 = vmatprep.subr.bf16.mxu0 0
      %394 = vmatpush2.bf16.msra.mxu0 0
      %395 = vmatprep.subr.bf16.mxu0 0
      %396 = vmatpush2.bf16.msra.mxu0 0
      %397 = vmatprep.subr.bf16.mxu0 0
      %398 = vmatpush2.bf16.msra.mxu0 0
      %399 = vmatprep.subr.bf16.mxu0 0
      %400 = vmatpush2.bf16.msra.mxu0 0
      %401 = vmatprep.subr.bf16.mxu0 0
      %402 = vmatpush2.bf16.msra.mxu0 0
      %403 = vmatprep.subr.bf16.mxu0 0
      %404 = vmatpush2.bf16.msra.mxu0 0
      %405 = vmatprep.subr.bf16.mxu0 0
      %406 = vmatpush2.bf16.msra.mxu0 0
      %407 = vmatprep.subr.bf16.mxu0 0
      %408 = vmatpush2.bf16.msra.mxu0 0
      %409 = vmatprep.mubr.bf16.mxu0 0
      %410 = vmatmul.mubr.bf16.gmra.mxu0 %v176
      %v411 = vpop.f32.mrf.mxu0
      %v412 = vadd.f32 0.0, %v411
      %v413 = vpop.f32.mrf.mxu0
      %v414 = vpop.f32.mrf.mxu0
      %v415 = vadd.f32 0.0, %v414
      %v416 = vpop.f32.mrf.mxu0
      %417 = vmatprep.mubr.bf16.mxu0 0
      %418 = vmatmul.mubr.bf16.gmra.mxu0 %v179
      %v419 = vpop.f32.mrf.mxu0
      %v420 = vadd.f32 0.0, %v419
      %v421 = vpop.f32.mrf.mxu0
      %v422 = vpop.f32.mrf.mxu0
      %v423 = vadd.f32 0.0, %v422
      %v424 = vpop.f32.mrf.mxu0
      %425 = vmatprep.mubr.bf16.mxu0 0
      %426 = vmatmul.mubr.bf16.gmra.mxu0 %v182
      %v427 = vpop.f32.mrf.mxu0
      %v428 = vadd.f32 0.0, %v427
      %v429 = vpop.f32.mrf.mxu0
      %v430 = vpop.f32.mrf.mxu0
      %v431 = vadd.f32 0.0, %v430
      %v432 = vpop.f32.mrf.mxu0
      %433 = vdwg.mxu0
      %v434 = vpack.c.bf16 %v415, %v412
      %v435 = vpack.c.bf16 %v423, %v420
      %v436 = vpack.c.bf16 %v431, %v428
      %v440 = vunpack.c.l.b16 %v434
      %v441 = vunpack.c.h.b16 %v434
      %v442 = vunpack.c.l.b16 %v435
      %v443 = vunpack.c.h.b16 %v435
      %v444 = vunpack.c.l.b16 %v436
      %v445 = vunpack.c.h.b16 %v436
      %v446 = vpack.c.b16 %v440, %v440
      %v447 = vpack.c.b16 %v441, %v441
      %v448 = vpack.c.b16 %v442, %v442
      %v449 = vpack.c.b16 %v443, %v443
      %v450 = vpack.c.b16 %v444, %v444
      %v451 = vpack.c.b16 %v445, %v445
      %458 = vst.msk [vmem:[%s143 + $0x30] sm:$0xf] %vm265, %v446
      %459 = vst.msk [vmem:[%s143 + $0x34] sm:$0xf] %vm265, %v447
      %460 = vst.msk [vmem:[%s143 + $0x38] sm:$0xf] %vm265, %v448
      %461 = vst.msk [vmem:[%s143 + $0x3c] sm:$0xf] %vm265, %v449
      %462 = vst.msk [vmem:[%s143 + $0x40] sm:$0xf] %vm265, %v450
      %463 = vst.msk [vmem:[%s143 + $0x44] sm:$0xf] %vm265, %v451
      %p464 = scmp.lt.s32.totalorder %s13, 3
      %s465 = scalar_select %p464, %s13, 3
      %s466 = smul.addr %s465, 18
      %s467 = smul.addr %s466, 4
      %s468 = scalar_lea.vmem %s2, %s467
      // Predicated region
      $region29: #{_lambda_.8} parent=27 // pred_check
        %p469 = pneg %p78
      $region30: #{_lambda_.8} parent=27 // pred_check_branch
        %471 = sbr.rel (%p469) target = $region32
      $region31: #{_lambda_.8} parent=27 // pred_region
        _
      $region32: #{_lambda_.8} parent=27 // pred_fallthru
        _
    $region28: #{_lambda_.8} parent=5 // pred_fallthru
      _
    %p472 = scmp.le.s32.totalorder 2, %s8
    // Predicated region
    $region33: #{_lambda_.8} parent=5 // pred_check
      %p473 = pneg %p472
    $region34: #{_lambda_.8} parent=5 // pred_check_branch
      %475 = sbr.rel (%p473) target = $region36
    $region35: #{_lambda_.8} parent=5 // pred_region
      %s476 = ssub.s32 %s8, 2
      // Predicated region
      $region37: #{_lambda_.8} parent=35 // pred_check
        %p477 = pneg %p84
      $region38: #{_lambda_.8} parent=35 // pred_check_branch
        %479 = sbr.rel (%p477) target = $region40
      $region39: #{_lambda_.8} parent=35 // pred_region
        %p480 = scmp.lt.s32.totalorder %s14, 3
        %s481 = scalar_select %p480, %s14, 3
        %s482 = smul.addr %s481, 18
        %s483 = smul.addr %s482, 4
        %s484 = scalar_lea.vmem %s2, %s483
      $region40: #{_lambda_.8} parent=35 // pred_fallthru
        _
    $region36: #{_lambda_.8} parent=5 // pred_fallthru
      _
  $region6: #{_lambda_.8} parent=0 // loop_footer
    %s12 = sadd.s32 1, %s8
  $region7: #{_lambda_.8} parent=0 // loop_footer_branch
    %7 = sbr.rel target = $region3
  $region8: #{_lambda_.8} parent=0 // loop_exit
    _

// kernel: _lambda_.9
$region0: #{_lambda_.9}
  #allocation0 [shape = 'u32[]', space=smem, size = 0x4, offset = 0x4, fixed_abs, tag = 'smem constant byte address 0x4 - core index']
  #allocation1 [shape = 'u32[144,128]{1,0:T(1,128)}', space=vmem, size = 0x12000, scoped, tag = 'internal scratch']
  #allocation2 [shape = 'bf16[16,384]{1,0:T(8,128)(2,1)}', space=vmem, size = 0x3000, scoped, tag = 'scratch operand']
  %s0 = inlined_call_operand.vmem [shape: bf16[4,9,256], index: 0, kind: input, shape index: {}]
  %s1 = inlined_call_operand.vmem [shape: bf16[16,9], index: 1, kind: input, shape index: {}]
  %s2 = inlined_call_operand.vmem [shape: f32[16,1], index: 2, kind: input, shape index: {}]
  %s3 = inlined_call_operand.vmem [shape: f32[16,1], index: 3, kind: input, shape index: {}]
  %s4 = inlined_call_operand.vmem [shape: bf16[9,16,16], index: 4, kind: input, shape index: {}]
  %s5 = inlined_call_operand.vmem [shape: f32[16,1], index: 5, kind: input, shape index: {}]
  %s6 = inlined_call_operand.vmem [shape: f32[16,1], index: 6, kind: input, shape index: {}]
  %s7 = inlined_call_operand.vmem [shape: bf16[4,16,256], index: 7, kind: output, shape index: {}]
  %s8 = sld [smem:[#allocation0]]
  $region61: #{_lambda_.9} parent=0
    _
  %s10 = ssub.s32 1, %s8
  %s11 = scalar_select 0, %s10, %s8
  loop: start=0, step=1, limit=6
  $region2: #{_lambda_.9} parent=0 // loop_pre_header
    _
  $region3: #{_lambda_.9} parent=0 // loop_header
    %s13 = sphi 0, %s17
    %p14 = scmp.ge.s32.totalorder %s13, 6
    %s23 = sphi 0, %s25
    %s26 = sphi 0, %s23
    %s27 = sphi 0, %s26
    %s43 = sphi 0, %s27
    %s47 = sphi 0, %s47
    %s49 = sphi 0, %s47
    %s50 = sphi 0, %s49
    %s64 = sphi 0, %s50
    %s68 = sphi 0, %s68
    %s70 = sphi 0, %s68
    %s71 = sphi 0, %s70
    %s85 = sphi 0, %s71
    %s89 = sphi 0, %s89
    %s91 = sphi 0, %s89
    %s92 = sphi 0, %s91
    %s106 = sphi 0, %s92
    %s110 = sphi 0, %s110
    %s112 = sphi 0, %s110
    %s113 = sphi 0, %s112
    %s127 = sphi 0, %s113
    %s131 = sphi 0, %s131
    %s133 = sphi 0, %s131
    %s134 = sphi 0, %s133
    %s148 = sphi 0, %s134
    %s152 = sphi 0, %s152
    %s154 = sphi 0, %s152
    %s155 = sphi 0, %s154
    %s169 = sphi 0, %s155
    %s175 = sphi 0, %s177
    %s178 = sphi 0, %s175
    %s179 = sphi 0, %s178
    %s195 = sphi 0, %s179
  $region4: #{_lambda_.9} parent=0 // loop_header_branch
    %16 = sbr.rel (%p14) target = $region8
  $region5: #{_lambda_.9} parent=0 // loop_body
    %s18 = ssub.s32 %s13, 1
    %s19 = ssub.s32 %s13, 2
    %s20 = sadd.s32 %s13, 1
    %s21 = ssub.s32 %s13, %s20
    %p22 = scmp.eq.s32.totalorder %s21, 0
    %s24 = sadd.s32 %s23, 1
    %s25 = scalar_select %p22, %s23, %s24
    %p28 = pneg %p22
    %p29 = scmp.eq.s32.totalorder %s13, 3
    %p30 = por %p28, %p29
    %p31 = scmp.ne.s32.totalorder %s23, %s26
    %p32 = scmp.eq.s32.totalorder %s13, 0
    %p33 = por %p31, %p32
    %p34 = scmp.ne.s32.totalorder %s23, %s26
    %p35 = scmp.eq.s32.totalorder %s18, 3
    %p36 = por %p34, %p35
    %p37 = scmp.ne.s32.totalorder %s26, %s27
    %p38 = scmp.eq.s32.totalorder %s18, 0
    %p39 = por %p37, %p38
    %p40 = scmp.ne.s32.totalorder %s26, %s27
    %p41 = scmp.eq.s32.totalorder %s19, 3
    %p42 = por %p40, %p41
    %p44 = scmp.ne.s32.totalorder %s27, %s43
    %p45 = scmp.eq.s32.totalorder %s19, 0
    %p46 = por %p44, %p45
    %s48 = sadd.s32 %s47, 1
    %p51 = scmp.eq.s32.totalorder %s13, 3
    %p52 = scmp.ne.s32.totalorder %s47, %s49
    %p53 = scmp.eq.s32.totalorder %s13, 0
    %p54 = por %p52, %p53
    %p55 = scmp.ne.s32.totalorder %s47, %s49
    %p56 = scmp.eq.s32.totalorder %s18, 3
    %p57 = por %p55, %p56
    %p58 = scmp.ne.s32.totalorder %s49, %s50
    %p59 = scmp.eq.s32.totalorder %s18, 0
    %p60 = por %p58, %p59
    %p61 = scmp.ne.s32.totalorder %s49, %s50
    %p62 = scmp.eq.s32.totalorder %s19, 3
    %p63 = por %p61, %p62
    %p65 = scmp.ne.s32.totalorder %s50, %s64
    %p66 = scmp.eq.s32.totalorder %s19, 0
    %p67 = por %p65, %p66
    %s69 = sadd.s32 %s68, 1
    %p72 = scmp.eq.s32.totalorder %s13, 3
    %p73 = scmp.ne.s32.totalorder %s68, %s70
    %p74 = scmp.eq.s32.totalorder %s13, 0
    %p75 = por %p73, %p74
    %p76 = scmp.ne.s32.totalorder %s68, %s70
    %p77 = scmp.eq.s32.totalorder %s18, 3
    %p78 = por %p76, %p77
    %p79 = scmp.ne.s32.totalorder %s70, %s71
    %p80 = scmp.eq.s32.totalorder %s18, 0
    %p81 = por %p79, %p80
    %p82 = scmp.ne.s32.totalorder %s70, %s71
    %p83 = scmp.eq.s32.totalorder %s19, 3
    %p84 = por %p82, %p83
    %p86 = scmp.ne.s32.totalorder %s71, %s85
    %p87 = scmp.eq.s32.totalorder %s19, 0
    %p88 = por %p86, %p87
    %s90 = sadd.s32 %s89, 1
    %p93 = scmp.eq.s32.totalorder %s13, 3
    %p94 = scmp.ne.s32.totalorder %s89, %s91
    %p95 = scmp.eq.s32.totalorder %s13, 0
    %p96 = por %p94, %p95
    %p97 = scmp.ne.s32.totalorder %s89, %s91
    %p98 = scmp.eq.s32.totalorder %s18, 3
    %p99 = por %p97, %p98
    %p100 = scmp.ne.s32.totalorder %s91, %s92
    %p101 = scmp.eq.s32.totalorder %s18, 0
    %p102 = por %p100, %p101
    %p103 = scmp.ne.s32.totalorder %s91, %s92
    %p104 = scmp.eq.s32.totalorder %s19, 3
    %p105 = por %p103, %p104
    %p107 = scmp.ne.s32.totalorder %s92, %s106
    %p108 = scmp.eq.s32.totalorder %s19, 0
    %p109 = por %p107, %p108
    %s111 = sadd.s32 %s110, 1
    %p114 = scmp.eq.s32.totalorder %s13, 3
    %p115 = scmp.ne.s32.totalorder %s110, %s112
    %p116 = scmp.eq.s32.totalorder %s13, 0
    %p117 = por %p115, %p116
    %p118 = scmp.ne.s32.totalorder %s110, %s112
    %p119 = scmp.eq.s32.totalorder %s18, 3
    %p120 = por %p118, %p119
    %p121 = scmp.ne.s32.totalorder %s112, %s113
    %p122 = scmp.eq.s32.totalorder %s18, 0
    %p123 = por %p121, %p122
    %p124 = scmp.ne.s32.totalorder %s112, %s113
    %p125 = scmp.eq.s32.totalorder %s19, 3
    %p126 = por %p124, %p125
    %p128 = scmp.ne.s32.totalorder %s113, %s127
    %p129 = scmp.eq.s32.totalorder %s19, 0
    %p130 = por %p128, %p129
    %s132 = sadd.s32 %s131, 1
    %p135 = scmp.eq.s32.totalorder %s13, 3
    %p136 = scmp.ne.s32.totalorder %s131, %s133
    %p137 = scmp.eq.s32.totalorder %s13, 0
    %p138 = por %p136, %p137
    %p139 = scmp.ne.s32.totalorder %s131, %s133
    %p140 = scmp.eq.s32.totalorder %s18, 3
    %p141 = por %p139, %p140
    %p142 = scmp.ne.s32.totalorder %s133, %s134
    %p143 = scmp.eq.s32.totalorder %s18, 0
    %p144 = por %p142, %p143
    %p145 = scmp.ne.s32.totalorder %s133, %s134
    %p146 = scmp.eq.s32.totalorder %s19, 3
    %p147 = por %p145, %p146
    %p149 = scmp.ne.s32.totalorder %s134, %s148
    %p150 = scmp.eq.s32.totalorder %s19, 0
    %p151 = por %p149, %p150
    %s153 = sadd.s32 %s152, 1
    %p156 = scmp.eq.s32.totalorder %s13, 3
    %p157 = scmp.ne.s32.totalorder %s152, %s154
    %p158 = scmp.eq.s32.totalorder %s13, 0
    %p159 = por %p157, %p158
    %p160 = scmp.ne.s32.totalorder %s152, %s154
    %p161 = scmp.eq.s32.totalorder %s18, 3
    %p162 = por %p160, %p161
    %p163 = scmp.ne.s32.totalorder %s154, %s155
    %p164 = scmp.eq.s32.totalorder %s18, 0
    %p165 = por %p163, %p164
    %p166 = scmp.ne.s32.totalorder %s154, %s155
    %p167 = scmp.eq.s32.totalorder %s19, 3
    %p168 = por %p166, %p167
    %p170 = scmp.ne.s32.totalorder %s155, %s169
    %p171 = scmp.eq.s32.totalorder %s19, 0
    %p172 = por %p170, %p171
    %s173 = ssub.s32 %s13, %s20
    %p174 = scmp.eq.s32.totalorder %s173, 0
    %s176 = sadd.s32 %s175, 1
    %s177 = scalar_select %p174, %s175, %s176
    %p180 = pneg %p174
    %p181 = scmp.eq.s32.totalorder %s13, 3
    %p182 = por %p180, %p181
    %p183 = scmp.ne.s32.totalorder %s175, %s178
    %p184 = scmp.eq.s32.totalorder %s13, 0
    %p185 = por %p183, %p184
    %p186 = scmp.ne.s32.totalorder %s175, %s178
    %p187 = scmp.eq.s32.totalorder %s18, 3
    %p188 = por %p186, %p187
    %p189 = scmp.ne.s32.totalorder %s178, %s179
    %p190 = scmp.eq.s32.totalorder %s18, 0
    %p191 = por %p189, %p190
    %p192 = scmp.ne.s32.totalorder %s178, %s179
    %p193 = scmp.eq.s32.totalorder %s19, 3
    %p194 = por %p192, %p193
    %p196 = scmp.ne.s32.totalorder %s179, %s195
    %p197 = scmp.eq.s32.totalorder %s19, 0
    %p198 = por %p196, %p197
    %p199 = scmp.le.s32.totalorder 1, %s13
    %p200 = scmp.lt.s32.totalorder %s13, 5
    %p201 = pnand %p199, %p200
    %p202 = pneg %p201
    // Predicated region
    $region9: #{_lambda_.9} parent=5 // pred_check
      _
    $region10: #{_lambda_.9} parent=5 // pred_check_branch
      %204 = sbr.rel (%p201) target = $region12
    $region11: #{_lambda_.9} parent=5 // pred_region
      %s205 = ssub.s32 %s13, 1
      // Predicated region
      $region13: #{_lambda_.9} parent=11 // pred_check
        %p206 = pneg %p60
      $region14: #{_lambda_.9} parent=11 // pred_check_branch
        %208 = sbr.rel (%p206) target = $region16
      $region15: #{_lambda_.9} parent=11 // pred_region
        _
      $region16: #{_lambda_.9} parent=11 // pred_fallthru
        _
      // Predicated region
      $region17: #{_lambda_.9} parent=11 // pred_check
        %p209 = pneg %p81
      $region18: #{_lambda_.9} parent=11 // pred_check_branch
        %211 = sbr.rel (%p209) target = $region20
      $region19: #{_lambda_.9} parent=11 // pred_region
        _
      $region20: #{_lambda_.9} parent=11 // pred_fallthru
        _
      // Predicated region
      $region21: #{_lambda_.9} parent=11 // pred_check
        %p212 = pneg %p102
      $region22: #{_lambda_.9} parent=11 // pred_check_branch
        %214 = sbr.rel (%p212) target = $region24
      $region23: #{_lambda_.9} parent=11 // pred_region
        _
      $region24: #{_lambda_.9} parent=11 // pred_fallthru
        _
      // Predicated region
      $region25: #{_lambda_.9} parent=11 // pred_check
        %p215 = pneg %p123
      $region26: #{_lambda_.9} parent=11 // pred_check_branch
        %217 = sbr.rel (%p215) target = $region28
      $region27: #{_lambda_.9} parent=11 // pred_region
        _
      $region28: #{_lambda_.9} parent=11 // pred_fallthru
        _
      // Predicated region
      $region29: #{_lambda_.9} parent=11 // pred_check
        %p218 = pneg %p144
      $region30: #{_lambda_.9} parent=11 // pred_check_branch
        %220 = sbr.rel (%p218) target = $region32
      $region31: #{_lambda_.9} parent=11 // pred_region
        _
      $region32: #{_lambda_.9} parent=11 // pred_fallthru
        _
      // Predicated region
      $region33: #{_lambda_.9} parent=11 // pred_check
        %p221 = pneg %p165
      $region34: #{_lambda_.9} parent=11 // pred_check_branch
        %223 = sbr.rel (%p221) target = $region36
      $region35: #{_lambda_.9} parent=11 // pred_region
        _
      $region36: #{_lambda_.9} parent=11 // pred_fallthru
        _
    $region12: #{_lambda_.9} parent=5 // pred_fallthru
      _
    %p224 = scmp.lt.s32.totalorder %s13, 4
    // Predicated region
    $region37: #{_lambda_.9} parent=5 // pred_check
      %p225 = pneg %p224
    $region38: #{_lambda_.9} parent=5 // pred_check_branch
      %227 = sbr.rel (%p225) target = $region40
    $region39: #{_lambda_.9} parent=5 // pred_region
      // Predicated region
      $region41: #{_lambda_.9} parent=39 // pred_check
        %p228 = pneg %p33
      $region42: #{_lambda_.9} parent=39 // pred_check_branch
        %230 = sbr.rel (%p228) target = $region44
      $region43: #{_lambda_.9} parent=39 // pred_region
        %p231 = scmp.lt.s32.totalorder %s13, 3
        %s232 = scalar_select %p231, %s13, 3
        %s233 = smul.addr %s232, 4
        %s234 = smul.addr %s233, 4
        %s235 = scalar_lea.vmem %s0, %s234
      $region44: #{_lambda_.9} parent=39 // pred_fallthru
        _
    $region40: #{_lambda_.9} parent=5 // pred_fallthru
      _
    %p236 = scmp.le.s32.totalorder 1, %s13
    %p237 = scmp.lt.s32.totalorder %s13, 5
    %p238 = pnand %p236, %p237
    %p239 = pneg %p238
    // Predicated region
    $region45: #{_lambda_.9} parent=5 // pred_check
      _
    $region46: #{_lambda_.9} parent=5 // pred_check_branch
      %241 = sbr.rel (%p238) target = $region48
    $region47: #{_lambda_.9} parent=5 // pred_region
      %s242 = ssub.s32 %s13, 1
      %p243 = scmp.lt.s32.totalorder %s18, 3
      %s244 = scalar_select %p243, %s18, 3
      %s245 = smul.addr %s244, 4
      %s246 = smul.addr %s245, 4
      %s247 = scalar_lea.vmem %s0, %s246
      %p248 = pneg %p39
      %p249 = pneg %p36
      %p250 = pneg %p60
      %p251 = pneg %p57
      %p252 = pneg %p81
      %p253 = pneg %p78
      %p254 = pneg %p102
      %p255 = pneg %p99
      %p256 = pneg %p123
      %p257 = pneg %p120
      %p258 = pneg %p144
      %p259 = pneg %p141
      %p260 = pneg %p165
      %p261 = pneg %p162
      %p262 = pneg %p191
      %p263 = pneg %p188
      %p264 = scmp.lt.s32.totalorder %s18, 3
      %s265 = scalar_select %p264, %s18, 3
      %s266 = smul.addr %s265, 4
      %s267 = smul.addr %s266, 4
      %s268 = scalar_lea.vmem %s7, %s267
      %p269 = scmp.lt.s32.totalorder %s18, 3
      %s270 = scalar_select %p269, %s18, 3
      %s271 = smul.addr %s270, 4
      %s272 = smul.addr %s271, 4
      %s273 = scalar_lea.vmem %s0, %s272
      %p274 = scmp.lt.s32.totalorder %s18, 3
      %s275 = scalar_select %p274, %s18, 3
      %s276 = smul.addr %s275, 4
      %s277 = smul.addr %s276, 4
      %s278 = scalar_lea.vmem %s7, %s277
      %v280 = vld [vmem:[%s273] sm:$0xff]
      %v281 = vld [vmem:[%s273 + $0x8] sm:$0x11]
      %v282 = vld [vmem:[%s1] sm:$0xf]
      %v283 = vld [vmem:[%s1 + $0x4] sm:$0xf]
      %v286 = vunpack.c.l.b16 %v282
      %v287 = vunpack.c.l.b16 %v283
      %v288 = vpack.c.b16 %v287, %v286
      %v291 = vunpack.c.l.b16 %v280
      %v292 = vunpack.c.h.b16 %v280
      %v293 = vunpack.c.l.b16 %v281
      %v294 = vunpack.c.h.b16 %v281
      %v295 = vpack.c.b16 %v293, %v291
      %v296 = vpack.c.b16 %v294, %v292
      %vm297 = vcmask 72704
      %v299 = vsel %vm297, %v288, 0
      %vm301 = vcmask 1043456
      %vm302 = vcmask 1044480
      %v303 = vsel %vm301, 4294967295, 65535
      %v304 = vsel %vm302, %v303, 0
      %v306 = vand.u32 %v295, %v304
      %v309 = vand.u32 %v296, %v304
      %311 = vmatprep.subr.bf16.mxu0 0
      %312 = vmatpush1.bf16.msra.mxu0 0
      %313 = vmatprep.subr.bf16.mxu0 0
      %314 = vmatpush1.bf16.msra.mxu0 0
      %315 = vmatprep.subr.bf16.mxu0 0
      %316 = vmatpush1.bf16.msra.mxu0 0
      %317 = vmatprep.subr.bf16.mxu0 0
      %318 = vmatpush1.bf16.msra.mxu0 0
      %319 = vmatprep.subr.bf16.mxu0 0
      %320 = vmatpush1.bf16.msra.mxu0 0
      %321 = vmatprep.subr.bf16.mxu0 0
      %322 = vmatpush1.bf16.msra.mxu0 0
      %323 = vmatprep.subr.bf16.mxu0 0
      %324 = vmatpush1.bf16.msra.mxu0 0
      %325 = vmatprep.subr.bf16.mxu0 %v309
      %326 = vmatpush1.bf16.msra.mxu0 %v306
      %327 = vmatprep.subr.bf16.mxu0 0
      %328 = vmatpush2.bf16.msra.mxu0 0
      %329 = vmatprep.subr.bf16.mxu0 0
      %330 = vmatpush2.bf16.msra.mxu0 0
      %331 = vmatprep.subr.bf16.mxu0 0
      %332 = vmatpush2.bf16.msra.mxu0 0
      %333 = vmatprep.subr.bf16.mxu0 0
      %334 = vmatpush2.bf16.msra.mxu0 0
      %335 = vmatprep.subr.bf16.mxu0 0
      %336 = vmatpush2.bf16.msra.mxu0 0
      %337 = vmatprep.subr.bf16.mxu0 0
      %338 = vmatpush2.bf16.msra.mxu0 0
      %339 = vmatprep.subr.bf16.mxu0 0
      %340 = vmatpush2.bf16.msra.mxu0 0
      %341 = vmatprep.subr.bf16.mxu0 0
      %342 = vmatpush2.bf16.msra.mxu0 0
      %343 = vmatprep.mubr.bf16.mxu0 0
      %344 = vmatmul.mubr.bf16.gmra.mxu0 %v299
      %v345 = vpop.f32.mrf.mxu0
      %v346 = vadd.f32 0.0, %v345
      %v347 = vpop.f32.mrf.mxu0
      %v348 = vadd.f32 0.0, %v347
      %v349 = vpop.f32.mrf.mxu0
      %v350 = vadd.f32 0.0, %v349
      %v351 = vpop.f32.mrf.mxu0
      %v352 = vadd.f32 0.0, %v351
      %353 = vdwg.mxu0
      %v354 = vld [vmem:[%s2] sm:$0xff]
      %v355 = vld [vmem:[%s2 + $0x8] sm:$0xff]
      %357 = vset.pattern.permute.xlu0 0
      %358 = vperm.xlu0 %357, %v354
      %v359 = vpop.permute.xlu0 %358
      %362 = vset.pattern.permute.xlu0 0
      %363 = vperm.xlu0 %362, %v355
      %v364 = vpop.permute.xlu0 %363
      %v366 = vmul.f32 %v346, %v359
      %v367 = vmul.f32 %v348, %v359
      %v368 = vmul.f32 %v350, %v364
      %v369 = vmul.f32 %v352, %v364
      %v370 = vld [vmem:[%s3] sm:$0xff]
      %v371 = vld [vmem:[%s3 + $0x8] sm:$0xff]
      %373 = vset.pattern.permute.xlu0 0
      %374 = vperm.xlu0 %373, %v370
      %v375 = vpop.permute.xlu0 %374
      %378 = vset.pattern.permute.xlu0 0
      %379 = vperm.xlu0 %378, %v371
      %v380 = vpop.permute.xlu0 %379
      %v382 = vadd.f32 %v366, %v375
      %v383 = vadd.f32 %v367, %v375
      %v384 = vadd.f32 %v368, %v380
      %v385 = vadd.f32 %v369, %v380
      %v386 = vmax.f32 %v382, 0.0
      %v387 = vmax.f32 %v383, 0.0
      %v388 = vmax.f32 %v384, 0.0
      %v389 = vmax.f32 %v385, 0.0
      %v390 = vpack.c.bf16 %v388, %v386
      %v391 = vpack.c.bf16 %v389, %v387
      %vm392 = vcmask 519168
      %393 = vst.msk [vmem:[#allocation2] sm:$0xf] %vm392, 0
      %394 = vst.msk [vmem:[#allocation2 + $0xc] sm:$0xf] %vm392, 0
      %vm395 = vcmask 1043968
      %396 = vst.msk [vmem:[#allocation2 + $0x8] sm:$0xf] %vm395, 0
      %397 = vst.msk [vmem:[#allocation2 + $0x14] sm:$0xf] %vm395, 0
      %v400 = vunpack.c.l.b16 %v390
      %v401 = vunpack.c.l.b16 %v391
      %v402 = vunpack.c.h.b16 %v390
      %v403 = vunpack.c.h.b16 %v391
      %v404 = vpack.c.b16 %v401, %v400
      %v405 = vpack.c.b16 %v403, %v402
      %406 = vrot.lane.b32.xlu0 %v404, 64
      %v407 = vpop.permute.xlu0 %406
      %408 = vrot.lane.b32.xlu0 %v405, 64
      %v409 = vpop.permute.xlu0 %408
      %v410 = vrot.slane %v407, 4
      %v411 = vrot.slane %v409, 4
      %vm412 = vcmask 523264
      %v413 = vsel %vm412, %v410, %v407
      %v414 = vsel %vm412, %v411, %v409
      %vm419 = vcmask 1047556
      %vm420 = vmor %vm419, %vm395
      %421 = vst.msk [vmem:[#allocation2] sm:$0xff] %vm420, %v413
      %422 = vst.msk [vmem:[#allocation2 + $0x8] sm:$0xf] %vm392, %v410
      %423 = vst.msk [vmem:[#allocation2 + $0xc] sm:$0xff] %vm420, %v414
      %424 = vst.msk [vmem:[#allocation2 + $0x14] sm:$0xf] %vm392, %v411
      %v425 = vld [vmem:[#allocation2] sm:$0xff]
      %v426 = vld [vmem:[#allocation2 + $0xc] sm:$0xff]
      %v427 = vld [vmem:[%s4] sm:$0xf]
      %v428 = vld [vmem:[%s4 + $0x4] sm:$0xf]
      %v429 = vld [vmem:[#allocation2] sm:$0xff]
      %v430 = vld [vmem:[#allocation2 + $0x8] sm:$0xf]
      %v431 = vld [vmem:[#allocation2 + $0xc] sm:$0xff]
      %v432 = vld [vmem:[#allocation2 + $0x14] sm:$0xf]
      %s433 = scalar_lea.vmem %s4, 8
      %v434 = vld [vmem:[%s433] sm:$0xf]
      %v435 = vld [vmem:[%s433 + $0x4] sm:$0xf]
      %v438 = vunpack.c.l.b16 %v434
      %v439 = vunpack.c.l.b16 %v435
      %v440 = vpack.c.b16 %v439, %v438
      %v445 = vunpack.c.l.b16 %v429
      %v446 = vunpack.c.h.b16 %v429
      %v447 = vunpack.c.l.b16 %v430
      %v448 = vunpack.c.l.b16 %v431
      %v449 = vunpack.c.h.b16 %v431
      %v450 = vunpack.c.l.b16 %v432
      %v451 = vpack.c.b16 %v448, %v445
      %v452 = vpack.c.b16 %v449, %v446
      %v453 = vpack.c.b16 %v450, %v447
      %454 = vrot.lane.b32.xlu0 %v451, 112
      %v455 = vpop.permute.xlu0 %454
      %456 = vrot.lane.b32.xlu0 %v452, 112
      %v457 = vpop.permute.xlu0 %456
      %458 = vrot.lane.b32.xlu0 %v453, 112
      %v459 = vpop.permute.xlu0 %458
      %vm460 = vcmask 916480
      %v461 = vsel %vm460, %v455, %v457
      %v462 = vsel %vm460, %v457, %v459
      %vm465 = vcmask 130048
      %v467 = vsel %vm465, %v440, 0
      %469 = vmatprep.subr.bf16.mxu0 0
      %470 = vmatpush1.bf16.msra.mxu0 0
      %471 = vmatprep.subr.bf16.mxu0 0
      %472 = vmatpush1.bf16.msra.mxu0 0
      %473 = vmatprep.subr.bf16.mxu0 0
      %474 = vmatpush1.bf16.msra.mxu0 0
      %475 = vmatprep.subr.bf16.mxu0 0
      %476 = vmatpush1.bf16.msra.mxu0 0
      %477 = vmatprep.subr.bf16.mxu0 0
      %478 = vmatpush1.bf16.msra.mxu0 0
      %479 = vmatprep.subr.bf16.mxu0 0
      %480 = vmatpush1.bf16.msra.mxu0 0
      %481 = vmatprep.subr.bf16.mxu0 0
      %482 = vmatpush1.bf16.msra.mxu0 0
      %483 = vmatprep.subr.bf16.mxu0 %v462
      %484 = vmatpush1.bf16.msra.mxu0 %v461
      %485 = vmatprep.subr.bf16.mxu0 0
      %486 = vmatpush2.bf16.msra.mxu0 0
      %487 = vmatprep.subr.bf16.mxu0 0
      %488 = vmatpush2.bf16.msra.mxu0 0
      %489 = vmatprep.subr.bf16.mxu0 0
      %490 = vmatpush2.bf16.msra.mxu0 0
      %491 = vmatprep.subr.bf16.mxu0 0
      %492 = vmatpush2.bf16.msra.mxu0 0
      %493 = vmatprep.subr.bf16.mxu0 0
      %494 = vmatpush2.bf16.msra.mxu0 0
      %495 = vmatprep.subr.bf16.mxu0 0
      %496 = vmatpush2.bf16.msra.mxu0 0
      %497 = vmatprep.subr.bf16.mxu0 0
      %498 = vmatpush2.bf16.msra.mxu0 0
      %499 = vmatprep.subr.bf16.mxu0 0
      %500 = vmatpush2.bf16.msra.mxu0 0
      %501 = vmatprep.mubr.bf16.mxu0 0
      %502 = vmatmul.mubr.bf16.gmra.mxu0 %v467
      %v503 = vpop.f32.mrf.mxu0
      %v504 = vadd.f32 0.0, %v503
      %v505 = vpop.f32.mrf.mxu0
      %v506 = vadd.f32 0.0, %v505
      %v507 = vpop.f32.mrf.mxu0
      %v508 = vadd.f32 0.0, %v507
      %v509 = vpop.f32.mrf.mxu0
      %v510 = vadd.f32 0.0, %v509
      %511 = vdwg.mxu0
      %v514 = vunpack.c.l.b16 %v427
      %v515 = vunpack.c.l.b16 %v428
      %v516 = vpack.c.b16 %v515, %v514
      %v519 = vunpack.c.l.b16 %v425
      %v520 = vunpack.c.h.b16 %v425
      %v521 = vunpack.c.l.b16 %v426
      %v522 = vunpack.c.h.b16 %v426
      %v523 = vpack.c.b16 %v521, %v519
      %v524 = vpack.c.b16 %v522, %v520
      %v528 = vsel %vm465, %v516, 0
      %530 = vmatprep.subr.bf16.mxu0 0
      %531 = vmatpush1.bf16.msra.mxu0 0
      %532 = vmatprep.subr.bf16.mxu0 0
      %533 = vmatpush1.bf16.msra.mxu0 0
      %534 = vmatprep.subr.bf16.mxu0 0
      %535 = vmatpush1.bf16.msra.mxu0 0
      %536 = vmatprep.subr.bf16.mxu0 0
      %537 = vmatpush1.bf16.msra.mxu0 0
      %538 = vmatprep.subr.bf16.mxu0 0
      %539 = vmatpush1.bf16.msra.mxu0 0
      %540 = vmatprep.subr.bf16.mxu0 0
      %541 = vmatpush1.bf16.msra.mxu0 0
      %542 = vmatprep.subr.bf16.mxu0 0
      %543 = vmatpush1.bf16.msra.mxu0 0
      %544 = vmatprep.subr.bf16.mxu0 %v524
      %545 = vmatpush1.bf16.msra.mxu0 %v523
      %546 = vmatprep.subr.bf16.mxu0 0
      %547 = vmatpush2.bf16.msra.mxu0 0
      %548 = vmatprep.subr.bf16.mxu0 0
      %549 = vmatpush2.bf16.msra.mxu0 0
      %550 = vmatprep.subr.bf16.mxu0 0
      %551 = vmatpush2.bf16.msra.mxu0 0
      %552 = vmatprep.subr.bf16.mxu0 0
      %553 = vmatpush2.bf16.msra.mxu0 0
      %554 = vmatprep.subr.bf16.mxu0 0
      %555 = vmatpush2.bf16.msra.mxu0 0
      %556 = vmatprep.subr.bf16.mxu0 0
      %557 = vmatpush2.bf16.msra.mxu0 0
      %558 = vmatprep.subr.bf16.mxu0 0
      %559 = vmatpush2.bf16.msra.mxu0 0
      %560 = vmatprep.subr.bf16.mxu0 0
      %561 = vmatpush2.bf16.msra.mxu0 0
      %562 = vmatprep.mubr.bf16.mxu0 0
      %563 = vmatmul.mubr.bf16.gmra.mxu0 %v528
      %v564 = vpop.f32.mrf.mxu0
      %v565 = vadd.f32 %v504, %v564
      %v566 = vpop.f32.mrf.mxu0
      %v567 = vadd.f32 %v506, %v566
      %v568 = vpop.f32.mrf.mxu0
      %v569 = vadd.f32 %v508, %v568
      %v570 = vpop.f32.mrf.mxu0
      %v571 = vadd.f32 %v510, %v570
      %572 = vdwg.mxu0
      %s573 = scalar_lea.vmem %s4, 16
      %v574 = vld [vmem:[%s573] sm:$0xf]
      %v575 = vld [vmem:[%s573 + $0x4] sm:$0xf]
      %v578 = vunpack.c.l.b16 %v574
      %v579 = vunpack.c.l.b16 %v575
      %v580 = vpack.c.b16 %v579, %v578
      %581 = vrot.lane.b32.xlu0 %v451, 96
      %v582 = vpop.permute.xlu0 %581
      %583 = vrot.lane.b32.xlu0 %v452, 96
      %v584 = vpop.permute.xlu0 %583
      %585 = vrot.lane.b32.xlu0 %v453, 96
      %v586 = vpop.permute.xlu0 %585
      %vm587 = vcmask 785408
      %v588 = vsel %vm587, %v582, %v584
      %v589 = vsel %vm587, %v584, %v586
      %v593 = vsel %vm465, %v580, 0
      %595 = vmatprep.subr.bf16.mxu0 0
      %596 = vmatpush1.bf16.msra.mxu0 0
      %597 = vmatprep.subr.bf16.mxu0 0
      %598 = vmatpush1.bf16.msra.mxu0 0
      %599 = vmatprep.subr.bf16.mxu0 0
      %600 = vmatpush1.bf16.msra.mxu0 0
      %601 = vmatprep.subr.bf16.mxu0 0
      %602 = vmatpush1.bf16.msra.mxu0 0
      %603 = vmatprep.subr.bf16.mxu0 0
      %604 = vmatpush1.bf16.msra.mxu0 0
      %605 = vmatprep.subr.bf16.mxu0 0
      %606 = vmatpush1.bf16.msra.mxu0 0
      %607 = vmatprep.subr.bf16.mxu0 0
      %608 = vmatpush1.bf16.msra.mxu0 0
      %609 = vmatprep.subr.bf16.mxu0 %v589
      %610 = vmatpush1.bf16.msra.mxu0 %v588
      %611 = vmatprep.subr.bf16.mxu0 0
      %612 = vmatpush2.bf16.msra.mxu0 0
      %613 = vmatprep.subr.bf16.mxu0 0
      %614 = vmatpush2.bf16.msra.mxu0 0
      %615 = vmatprep.subr.bf16.mxu0 0
      %616 = vmatpush2.bf16.msra.mxu0 0
      %617 = vmatprep.subr.bf16.mxu0 0
      %618 = vmatpush2.bf16.msra.mxu0 0
      %619 = vmatprep.subr.bf16.mxu0 0
      %620 = vmatpush2.bf16.msra.mxu0 0
      %621 = vmatprep.subr.bf16.mxu0 0
      %622 = vmatpush2.bf16.msra.mxu0 0
      %623 = vmatprep.subr.bf16.mxu0 0
      %624 = vmatpush2.bf16.msra.mxu0 0
      %625 = vmatprep.subr.bf16.mxu0 0
      %626 = vmatpush2.bf16.msra.mxu0 0
      %627 = vmatprep.mubr.bf16.mxu0 0
      %628 = vmatmul.mubr.bf16.gmra.mxu0 %v593
      %v629 = vpop.f32.mrf.mxu0
      %v630 = vadd.f32 0.0, %v629
      %v631 = vpop.f32.mrf.mxu0
      %v632 = vadd.f32 0.0, %v631
      %v633 = vpop.f32.mrf.mxu0
      %v634 = vadd.f32 0.0, %v633
      %v635 = vpop.f32.mrf.mxu0
      %v636 = vadd.f32 0.0, %v635
      %637 = vdwg.mxu0
      %v638 = vadd.f32 %v565, %v630
      %v639 = vadd.f32 %v567, %v632
      %v640 = vadd.f32 %v569, %v634
      %v641 = vadd.f32 %v571, %v636
      %s642 = scalar_lea.vmem %s4, 24
      %v643 = vld [vmem:[%s642] sm:$0xf]
      %v644 = vld [vmem:[%s642 + $0x4] sm:$0xf]
      %v647 = vunpack.c.l.b16 %v643
      %v648 = vunpack.c.l.b16 %v644
      %v649 = vpack.c.b16 %v648, %v647
      %650 = vrot.lane.b32.xlu0 %v451, 80
      %v651 = vpop.permute.xlu0 %650
      %652 = vrot.lane.b32.xlu0 %v452, 80
      %v653 = vpop.permute.xlu0 %652
      %654 = vrot.lane.b32.xlu0 %v453, 80
      %v655 = vpop.permute.xlu0 %654
      %vm656 = vcmask 654336
      %v657 = vsel %vm656, %v651, %v653
      %v658 = vsel %vm656, %v653, %v655
      %v662 = vsel %vm465, %v649, 0
      %664 = vmatprep.subr.bf16.mxu0 0
      %665 = vmatpush1.bf16.msra.mxu0 0
      %666 = vmatprep.subr.bf16.mxu0 0
      %667 = vmatpush1.bf16.msra.mxu0 0
      %668 = vmatprep.subr.bf16.mxu0 0
      %669 = vmatpush1.bf16.msra.mxu0 0
      %670 = vmatprep.subr.bf16.mxu0 0
      %671 = vmatpush1.bf16.msra.mxu0 0
      %672 = vmatprep.subr.bf16.mxu0 0
      %673 = vmatpush1.bf16.msra.mxu0 0
      %674 = vmatprep.subr.bf16.mxu0 0
      %675 = vmatpush1.bf16.msra.mxu0 0
      %676 = vmatprep.subr.bf16.mxu0 0
      %677 = vmatpush1.bf16.msra.mxu0 0
      %678 = vmatprep.subr.bf16.mxu0 %v658
      %679 = vmatpush1.bf16.msra.mxu0 %v657
      %680 = vmatprep.subr.bf16.mxu0 0
      %681 = vmatpush2.bf16.msra.mxu0 0
      %682 = vmatprep.subr.bf16.mxu0 0
      %683 = vmatpush2.bf16.msra.mxu0 0
      %684 = vmatprep.subr.bf16.mxu0 0
      %685 = vmatpush2.bf16.msra.mxu0 0
      %686 = vmatprep.subr.bf16.mxu0 0
      %687 = vmatpush2.bf16.msra.mxu0 0
      %688 = vmatprep.subr.bf16.mxu0 0
      %689 = vmatpush2.bf16.msra.mxu0 0
      %690 = vmatprep.subr.bf16.mxu0 0
      %691 = vmatpush2.bf16.msra.mxu0 0
      %692 = vmatprep.subr.bf16.mxu0 0
      %693 = vmatpush2.bf16.msra.mxu0 0
      %694 = vmatprep.subr.bf16.mxu0 0
      %695 = vmatpush2.bf16.msra.mxu0 0
      %696 = vmatprep.mubr.bf16.mxu0 0
      %697 = vmatmul.mubr.bf16.gmra.mxu0 %v662
      %v698 = vpop.f32.mrf.mxu0
      %v699 = vadd.f32 0.0, %v698
      %v700 = vpop.f32.mrf.mxu0
      %v701 = vadd.f32 0.0, %v700
      %v702 = vpop.f32.mrf.mxu0
      %v703 = vadd.f32 0.0, %v702
      %v704 = vpop.f32.mrf.mxu0
      %v705 = vadd.f32 0.0, %v704
      %706 = vdwg.mxu0
      %v707 = vadd.f32 %v638, %v699
      %v708 = vadd.f32 %v639, %v701
      %v709 = vadd.f32 %v640, %v703
      %v710 = vadd.f32 %v641, %v705
      %s711 = scalar_lea.vmem %s4, 32
      %v712 = vld [vmem:[%s711] sm:$0xf]
      %v713 = vld [vmem:[%s711 + $0x4] sm:$0xf]
      %v716 = vunpack.c.l.b16 %v712
      %v717 = vunpack.c.l.b16 %v713
      %v718 = vpack.c.b16 %v717, %v716
      %719 = vrot.lane.b32.xlu0 %v451, 64
      %v720 = vpop.permute.xlu0 %719
      %721 = vrot.lane.b32.xlu0 %v452, 64
      %v722 = vpop.permute.xlu0 %721
      %723 = vrot.lane.b32.xlu0 %v453, 64
      %v724 = vpop.permute.xlu0 %723
      %v725 = vsel %vm412, %v720, %v722
      %v726 = vsel %vm412, %v722, %v724
      %v730 = vsel %vm465, %v718, 0
      %732 = vmatprep.subr.bf16.mxu0 0
      %733 = vmatpush1.bf16.msra.mxu0 0
      %734 = vmatprep.subr.bf16.mxu0 0
      %735 = vmatpush1.bf16.msra.mxu0 0
      %736 = vmatprep.subr.bf16.mxu0 0
      %737 = vmatpush1.bf16.msra.mxu0 0
      %738 = vmatprep.subr.bf16.mxu0 0
      %739 = vmatpush1.bf16.msra.mxu0 0
      %740 = vmatprep.subr.bf16.mxu0 0
      %741 = vmatpush1.bf16.msra.mxu0 0
      %742 = vmatprep.subr.bf16.mxu0 0
      %743 = vmatpush1.bf16.msra.mxu0 0
      %744 = vmatprep.subr.bf16.mxu0 0
      %745 = vmatpush1.bf16.msra.mxu0 0
      %746 = vmatprep.subr.bf16.mxu0 %v726
      %747 = vmatpush1.bf16.msra.mxu0 %v725
      %748 = vmatprep.subr.bf16.mxu0 0
      %749 = vmatpush2.bf16.msra.mxu0 0
      %750 = vmatprep.subr.bf16.mxu0 0
      %751 = vmatpush2.bf16.msra.mxu0 0
      %752 = vmatprep.subr.bf16.mxu0 0
      %753 = vmatpush2.bf16.msra.mxu0 0
      %754 = vmatprep.subr.bf16.mxu0 0
      %755 = vmatpush2.bf16.msra.mxu0 0
      %756 = vmatprep.subr.bf16.mxu0 0
      %757 = vmatpush2.bf16.msra.mxu0 0
      %758 = vmatprep.subr.bf16.mxu0 0
      %759 = vmatpush2.bf16.msra.mxu0 0
      %760 = vmatprep.subr.bf16.mxu0 0
      %761 = vmatpush2.bf16.msra.mxu0 0
      %762 = vmatprep.subr.bf16.mxu0 0
      %763 = vmatpush2.bf16.msra.mxu0 0
      %764 = vmatprep.mubr.bf16.mxu0 0
      %765 = vmatmul.mubr.bf16.gmra.mxu0 %v730
      %v766 = vpop.f32.mrf.mxu0
      %v767 = vadd.f32 0.0, %v766
      %v768 = vpop.f32.mrf.mxu0
      %v769 = vadd.f32 0.0, %v768
      %v770 = vpop.f32.mrf.mxu0
      %v771 = vadd.f32 0.0, %v770
      %v772 = vpop.f32.mrf.mxu0
      %v773 = vadd.f32 0.0, %v772
      %774 = vdwg.mxu0
      %v775 = vadd.f32 %v707, %v767
      %v776 = vadd.f32 %v708, %v769
      %v777 = vadd.f32 %v709, %v771
      %v778 = vadd.f32 %v710, %v773
      %s779 = scalar_lea.vmem %s4, 40
      %v780 = vld [vmem:[%s779] sm:$0xf]
      %v781 = vld [vmem:[%s779 + $0x4] sm:$0xf]
      %v784 = vunpack.c.l.b16 %v780
      %v785 = vunpack.c.l.b16 %v781
      %v786 = vpack.c.b16 %v785, %v784
      %787 = vrot.lane.b32.xlu0 %v451, 48
      %v788 = vpop.permute.xlu0 %787
      %789 = vrot.lane.b32.xlu0 %v452, 48
      %v790 = vpop.permute.xlu0 %789
      %791 = vrot.lane.b32.xlu0 %v453, 48
      %v792 = vpop.permute.xlu0 %791
      %vm793 = vcmask 392192
      %v794 = vsel %vm793, %v788, %v790
      %v795 = vsel %vm793, %v790, %v792
      %v799 = vsel %vm465, %v786, 0
      %801 = vmatprep.subr.bf16.mxu0 0
      %802 = vmatpush1.bf16.msra.mxu0 0
      %803 = vmatprep.subr.bf16.mxu0 0
      %804 = vmatpush1.bf16.msra.mxu0 0
      %805 = vmatprep.subr.bf16.mxu0 0
      %806 = vmatpush1.bf16.msra.mxu0 0
      %807 = vmatprep.subr.bf16.mxu0 0
      %808 = vmatpush1.bf16.msra.mxu0 0
      %809 = vmatprep.subr.bf16.mxu0 0
      %810 = vmatpush1.bf16.msra.mxu0 0
      %811 = vmatprep.subr.bf16.mxu0 0
      %812 = vmatpush1.bf16.msra.mxu0 0
      %813 = vmatprep.subr.bf16.mxu0 0
      %814 = vmatpush1.bf16.msra.mxu0 0
      %815 = vmatprep.subr.bf16.mxu0 %v795
      %816 = vmatpush1.bf16.msra.mxu0 %v794
      %817 = vmatprep.subr.bf16.mxu0 0
      %818 = vmatpush2.bf16.msra.mxu0 0
      %819 = vmatprep.subr.bf16.mxu0 0
      %820 = vmatpush2.bf16.msra.mxu0 0
      %821 = vmatprep.subr.bf16.mxu0 0
      %822 = vmatpush2.bf16.msra.mxu0 0
      %823 = vmatprep.subr.bf16.mxu0 0
      %824 = vmatpush2.bf16.msra.mxu0 0
      %825 = vmatprep.subr.bf16.mxu0 0
      %826 = vmatpush2.bf16.msra.mxu0 0
      %827 = vmatprep.subr.bf16.mxu0 0
      %828 = vmatpush2.bf16.msra.mxu0 0
      %829 = vmatprep.subr.bf16.mxu0 0
      %830 = vmatpush2.bf16.msra.mxu0 0
      %831 = vmatprep.subr.bf16.mxu0 0
      %832 = vmatpush2.bf16.msra.mxu0 0
      %833 = vmatprep.mubr.bf16.mxu0 0
      %834 = vmatmul.mubr.bf16.gmra.mxu0 %v799
      %v835 = vpop.f32.mrf.mxu0
      %v836 = vadd.f32 0.0, %v835
      %v837 = vpop.f32.mrf.mxu0
      %v838 = vadd.f32 0.0, %v837
      %v839 = vpop.f32.mrf.mxu0
      %v840 = vadd.f32 0.0, %v839
      %v841 = vpop.f32.mrf.mxu0
      %v842 = vadd.f32 0.0, %v841
      %843 = vdwg.mxu0
      %v844 = vadd.f32 %v775, %v836
      %v845 = vadd.f32 %v776, %v838
      %v846 = vadd.f32 %v777, %v840
      %v847 = vadd.f32 %v778, %v842
      %s848 = scalar_lea.vmem %s4, 48
      %v849 = vld [vmem:[%s848] sm:$0xf]
      %v850 = vld [vmem:[%s848 + $0x4] sm:$0xf]
      %v853 = vunpack.c.l.b16 %v849
      %v854 = vunpack.c.l.b16 %v850
      %v855 = vpack.c.b16 %v854, %v853
      %856 = vrot.lane.b32.xlu0 %v451, 32
      %v857 = vpop.permute.xlu0 %856
      %858 = vrot.lane.b32.xlu0 %v452, 32
      %v859 = vpop.permute.xlu0 %858
      %860 = vrot.lane.b32.xlu0 %v453, 32
      %v861 = vpop.permute.xlu0 %860
      %vm862 = vcmask 261120
      %v863 = vsel %vm862, %v857, %v859
      %v864 = vsel %vm862, %v859, %v861
      %v868 = vsel %vm465, %v855, 0
      %870 = vmatprep.subr.bf16.mxu0 0
      %871 = vmatpush1.bf16.msra.mxu0 0
      %872 = vmatprep.subr.bf16.mxu0 0
      %873 = vmatpush1.bf16.msra.mxu0 0
      %874 = vmatprep.subr.bf16.mxu0 0
      %875 = vmatpush1.bf16.msra.mxu0 0
      %876 = vmatprep.subr.bf16.mxu0 0
      %877 = vmatpush1.bf16.msra.mxu0 0
      %878 = vmatprep.subr.bf16.mxu0 0
      %879 = vmatpush1.bf16.msra.mxu0 0
      %880 = vmatprep.subr.bf16.mxu0 0
      %881 = vmatpush1.bf16.msra.mxu0 0
      %882 = vmatprep.subr.bf16.mxu0 0
      %883 = vmatpush1.bf16.msra.mxu0 0
      %884 = vmatprep.subr.bf16.mxu0 %v864
      %885 = vmatpush1.bf16.msra.mxu0 %v863
      %886 = vmatprep.subr.bf16.mxu0 0
      %887 = vmatpush2.bf16.msra.mxu0 0
      %888 = vmatprep.subr.bf16.mxu0 0
      %889 = vmatpush2.bf16.msra.mxu0 0
      %890 = vmatprep.subr.bf16.mxu0 0
      %891 = vmatpush2.bf16.msra.mxu0 0
      %892 = vmatprep.subr.bf16.mxu0 0
      %893 = vmatpush2.bf16.msra.mxu0 0
      %894 = vmatprep.subr.bf16.mxu0 0
      %895 = vmatpush2.bf16.msra.mxu0 0
      %896 = vmatprep.subr.bf16.mxu0 0
      %897 = vmatpush2.bf16.msra.mxu0 0
      %898 = vmatprep.subr.bf16.mxu0 0
      %899 = vmatpush2.bf16.msra.mxu0 0
      %900 = vmatprep.subr.bf16.mxu0 0
      %901 = vmatpush2.bf16.msra.mxu0 0
      %902 = vmatprep.mubr.bf16.mxu0 0
      %903 = vmatmul.mubr.bf16.gmra.mxu0 %v868
      %v904 = vpop.f32.mrf.mxu0
      %v905 = vadd.f32 0.0, %v904
      %v906 = vpop.f32.mrf.mxu0
      %v907 = vadd.f32 0.0, %v906
      %v908 = vpop.f32.mrf.mxu0
      %v909 = vadd.f32 0.0, %v908
      %v910 = vpop.f32.mrf.mxu0
      %v911 = vadd.f32 0.0, %v910
      %912 = vdwg.mxu0
      %v913 = vadd.f32 %v844, %v905
      %v914 = vadd.f32 %v845, %v907
      %v915 = vadd.f32 %v846, %v909
      %v916 = vadd.f32 %v847, %v911
      %s917 = scalar_lea.vmem %s4, 56
      %v918 = vld [vmem:[%s917] sm:$0xf]
      %v919 = vld [vmem:[%s917 + $0x4] sm:$0xf]
      %v922 = vunpack.c.l.b16 %v918
      %v923 = vunpack.c.l.b16 %v919
      %v924 = vpack.c.b16 %v923, %v922
      %925 = vrot.lane.b32.xlu0 %v451, 16
      %v926 = vpop.permute.xlu0 %925
      %927 = vrot.lane.b32.xlu0 %v452, 16
      %v928 = vpop.permute.xlu0 %927
      %929 = vrot.lane.b32.xlu0 %v453, 16
      %v930 = vpop.permute.xlu0 %929
      %vm931 = vcmask 130048
      %v932 = vsel %vm931, %v926, %v928
      %v933 = vsel %vm931, %v928, %v930
      %v937 = vsel %vm465, %v924, 0
      %939 = vmatprep.subr.bf16.mxu0 0
      %940 = vmatpush1.bf16.msra.mxu0 0
      %941 = vmatprep.subr.bf16.mxu0 0
      %942 = vmatpush1.bf16.msra.mxu0 0
      %943 = vmatprep.subr.bf16.mxu0 0
      %944 = vmatpush1.bf16.msra.mxu0 0
      %945 = vmatprep.subr.bf16.mxu0 0
      %946 = vmatpush1.bf16.msra.mxu0 0
      %947 = vmatprep.subr.bf16.mxu0 0
      %948 = vmatpush1.bf16.msra.mxu0 0
      %949 = vmatprep.subr.bf16.mxu0 0
      %950 = vmatpush1.bf16.msra.mxu0 0
      %951 = vmatprep.subr.bf16.mxu0 0
      %952 = vmatpush1.bf16.msra.mxu0 0
      %953 = vmatprep.subr.bf16.mxu0 %v933
      %954 = vmatpush1.bf16.msra.mxu0 %v932
      %955 = vmatprep.subr.bf16.mxu0 0
      %956 = vmatpush2.bf16.msra.mxu0 0
      %957 = vmatprep.subr.bf16.mxu0 0
      %958 = vmatpush2.bf16.msra.mxu0 0
      %959 = vmatprep.subr.bf16.mxu0 0
      %960 = vmatpush2.bf16.msra.mxu0 0
      %961 = vmatprep.subr.bf16.mxu0 0
      %962 = vmatpush2.bf16.msra.mxu0 0
      %963 = vmatprep.subr.bf16.mxu0 0
      %964 = vmatpush2.bf16.msra.mxu0 0
      %965 = vmatprep.subr.bf16.mxu0 0
      %966 = vmatpush2.bf16.msra.mxu0 0
      %967 = vmatprep.subr.bf16.mxu0 0
      %968 = vmatpush2.bf16.msra.mxu0 0
      %969 = vmatprep.subr.bf16.mxu0 0
      %970 = vmatpush2.bf16.msra.mxu0 0
      %971 = vmatprep.mubr.bf16.mxu0 0
      %972 = vmatmul.mubr.bf16.gmra.mxu0 %v937
      %v973 = vpop.f32.mrf.mxu0
      %v974 = vadd.f32 0.0, %v973
      %v975 = vpop.f32.mrf.mxu0
      %v976 = vadd.f32 0.0, %v975
      %v977 = vpop.f32.mrf.mxu0
      %v978 = vadd.f32 0.0, %v977
      %v979 = vpop.f32.mrf.mxu0
      %v980 = vadd.f32 0.0, %v979
      %981 = vdwg.mxu0
      %v982 = vadd.f32 %v913, %v974
      %v983 = vadd.f32 %v914, %v976
      %v984 = vadd.f32 %v915, %v978
      %v985 = vadd.f32 %v916, %v980
      %v986 = vld [vmem:[#allocation2 + $0x4] sm:$0xff]
      %v987 = vld [vmem:[#allocation2 + $0x10] sm:$0xff]
      %s988 = scalar_lea.vmem %s4, 64
      %v989 = vld [vmem:[%s988] sm:$0xf]
      %v990 = vld [vmem:[%s988 + $0x4] sm:$0xf]
      %v993 = vunpack.c.l.b16 %v989
      %v994 = vunpack.c.l.b16 %v990
      %v995 = vpack.c.b16 %v994, %v993
      %v998 = vunpack.c.l.b16 %v986
      %v999 = vunpack.c.h.b16 %v986
      %v1000 = vunpack.c.l.b16 %v987
      %v1001 = vunpack.c.h.b16 %v987
      %v1002 = vpack.c.b16 %v1000, %v998
      %v1003 = vpack.c.b16 %v1001, %v999
      %v1007 = vsel %vm465, %v995, 0
      %1009 = vmatprep.subr.bf16.mxu0 0
      %1010 = vmatpush1.bf16.msra.mxu0 0
      %1011 = vmatprep.subr.bf16.mxu0 0
      %1012 = vmatpush1.bf16.msra.mxu0 0
      %1013 = vmatprep.subr.bf16.mxu0 0
      %1014 = vmatpush1.bf16.msra.mxu0 0
      %1015 = vmatprep.subr.bf16.mxu0 0
      %1016 = vmatpush1.bf16.msra.mxu0 0
      %1017 = vmatprep.subr.bf16.mxu0 0
      %1018 = vmatpush1.bf16.msra.mxu0 0
      %1019 = vmatprep.subr.bf16.mxu0 0
      %1020 = vmatpush1.bf16.msra.mxu0 0
      %1021 = vmatprep.subr.bf16.mxu0 0
      %1022 = vmatpush1.bf16.msra.mxu0 0
      %1023 = vmatprep.subr.bf16.mxu0 %v1003
      %1024 = vmatpush1.bf16.msra.mxu0 %v1002
      %1025 = vmatprep.subr.bf16.mxu0 0
      %1026 = vmatpush2.bf16.msra.mxu0 0
      %1027 = vmatprep.subr.bf16.mxu0 0
      %1028 = vmatpush2.bf16.msra.mxu0 0
      %1029 = vmatprep.subr.bf16.mxu0 0
      %1030 = vmatpush2.bf16.msra.mxu0 0
      %1031 = vmatprep.subr.bf16.mxu0 0
      %1032 = vmatpush2.bf16.msra.mxu0 0
      %1033 = vmatprep.subr.bf16.mxu0 0
      %1034 = vmatpush2.bf16.msra.mxu0 0
      %1035 = vmatprep.subr.bf16.mxu0 0
      %1036 = vmatpush2.bf16.msra.mxu0 0
      %1037 = vmatprep.subr.bf16.mxu0 0
      %1038 = vmatpush2.bf16.msra.mxu0 0
      %1039 = vmatprep.subr.bf16.mxu0 0
      %1040 = vmatpush2.bf16.msra.mxu0 0
      %1041 = vmatprep.mubr.bf16.mxu0 0
      %1042 = vmatmul.mubr.bf16.gmra.mxu0 %v1007
      %v1043 = vpop.f32.mrf.mxu0
      %v1044 = vadd.f32 0.0, %v1043
      %v1045 = vpop.f32.mrf.mxu0
      %v1046 = vadd.f32 0.0, %v1045
      %v1047 = vpop.f32.mrf.mxu0
      %v1048 = vadd.f32 0.0, %v1047
      %v1049 = vpop.f32.mrf.mxu0
      %v1050 = vadd.f32 0.0, %v1049
      %1051 = vdwg.mxu0
      %v1052 = vadd.f32 %v982, %v1044
      %v1053 = vadd.f32 %v983, %v1046
      %v1054 = vadd.f32 %v984, %v1048
      %v1055 = vadd.f32 %v985, %v1050
      %v1056 = vld [vmem:[%s5] sm:$0xff]
      %v1057 = vld [vmem:[%s5 + $0x8] sm:$0xff]
      %1059 = vset.pattern.permute.xlu0 0
      %1060 = vperm.xlu0 %1059, %v1056
      %v1061 = vpop.permute.xlu0 %1060
      %1064 = vset.pattern.permute.xlu0 0
      %1065 = vperm.xlu0 %1064, %v1057
      %v1066 = vpop.permute.xlu0 %1065
      %v1068 = vmul.f32 %v1052, %v1061
      %v1069 = vmul.f32 %v1053, %v1061
      %v1070 = vmul.f32 %v1054, %v1066
      %v1071 = vmul.f32 %v1055, %v1066
      %v1072 = vld [vmem:[%s6] sm:$0xff]
      %v1073 = vld [vmem:[%s6 + $0x8] sm:$0xff]
      %1075 = vset.pattern.permute.xlu0 0
      %1076 = vperm.xlu0 %1075, %v1072
      %v1077 = vpop.permute.xlu0 %1076
      %1080 = vset.pattern.permute.xlu0 0
      %1081 = vperm.xlu0 %1080, %v1073
      %v1082 = vpop.permute.xlu0 %1081
      %v1084 = vadd.f32 %v1068, %v1077
      %v1085 = vadd.f32 %v1069, %v1077
      %v1086 = vadd.f32 %v1070, %v1082
      %v1087 = vadd.f32 %v1071, %v1082
      %v1088 = vmax.f32 %v1084, 0.0
      %v1089 = vmax.f32 %v1085, 0.0
      %v1090 = vmax.f32 %v1086, 0.0
      %v1091 = vmax.f32 %v1087, 0.0
      %v1092 = vpack.c.bf16 %v1090, %v1088
      %v1093 = vpack.c.bf16 %v1091, %v1089
      %v1096 = vunpack.c.l.b16 %v1092
      %v1097 = vunpack.c.l.b16 %v1093
      %v1098 = vunpack.c.h.b16 %v1092
      %v1099 = vunpack.c.h.b16 %v1093
      %v1100 = vpack.c.b16 %v1097, %v1096
      %v1101 = vpack.c.b16 %v1099, %v1098
      %1104 = vst [vmem:[%s278] sm:$0xff] %v1100
      %1105 = vst [vmem:[%s278 + $0x8] sm:$0xff] %v1101
      %p1106 = scmp.lt.s32.totalorder %s18, 3
      %s1107 = scalar_select %p1106, %s18, 3
      %s1108 = smul.addr %s1107, 4
      %s1109 = smul.addr %s1108, 4
      %s1110 = scalar_lea.vmem %s7, %s1109
      // Predicated region
      $region49: #{_lambda_.9} parent=47 // pred_check
        %p1111 = pneg %p188
      $region50: #{_lambda_.9} parent=47 // pred_check_branch
        %1113 = sbr.rel (%p1111) target = $region52
      $region51: #{_lambda_.9} parent=47 // pred_region
        _
      $region52: #{_lambda_.9} parent=47 // pred_fallthru
        _
    $region48: #{_lambda_.9} parent=5 // pred_fallthru
      _
    %p1114 = scmp.le.s32.totalorder 2, %s13
    // Predicated region
    $region53: #{_lambda_.9} parent=5 // pred_check
      %p1115 = pneg %p1114
    $region54: #{_lambda_.9} parent=5 // pred_check_branch
      %1117 = sbr.rel (%p1115) target = $region56
    $region55: #{_lambda_.9} parent=5 // pred_region
      %s1118 = ssub.s32 %s13, 2
      // Predicated region
      $region57: #{_lambda_.9} parent=55 // pred_check
        %p1119 = pneg %p194
      $region58: #{_lambda_.9} parent=55 // pred_check_branch
        %1121 = sbr.rel (%p1119) target = $region60
      $region59: #{_lambda_.9} parent=55 // pred_region
        %p1122 = scmp.lt.s32.totalorder %s19, 3
        %s1123 = scalar_select %p1122, %s19, 3
        %s1124 = smul.addr %s1123, 4
        %s1125 = smul.addr %s1124, 4
        %s1126 = scalar_lea.vmem %s7, %s1125
      $region60: #{_lambda_.9} parent=55 // pred_fallthru
        _
    $region56: #{_lambda_.9} parent=5 // pred_fallthru
      _
  $region6: #{_lambda_.9} parent=0 // loop_footer
    %s17 = sadd.s32 1, %s13
  $region7: #{_lambda_.9} parent=0 // loop_footer_branch
    %12 = sbr.rel target = $region3
  $region8: #{_lambda_.9} parent=0 // loop_exit
    _

// kernel: _lambda_.10
$region0: #{_lambda_.10}
  #allocation0 [shape = 'u32[]', space=smem, size = 0x4, offset = 0x4, fixed_abs, tag = 'smem constant byte address 0x4 - core index']
  #allocation1 [shape = 'u32[144,128]{1,0:T(1,128)}', space=vmem, size = 0x12000, scoped, tag = 'internal scratch']
  %s0 = inlined_call_operand.vmem [shape: bf16[4,256,16], index: 0, kind: input, shape index: {}]
  %s1 = inlined_call_operand.vmem [shape: bf16[3,16,16], index: 1, kind: input, shape index: {}]
  %s2 = inlined_call_operand.vmem [shape: bf16[4,768,16], index: 2, kind: output, shape index: {}]
  %s3 = sld [smem:[#allocation0]]
  $region41: #{_lambda_.10} parent=0
    _
  %s5 = ssub.s32 1, %s3
  %s6 = scalar_select 0, %s5, %s3
  loop: start=0, step=1, limit=6
  $region2: #{_lambda_.10} parent=0 // loop_pre_header
    _
  $region3: #{_lambda_.10} parent=0 // loop_header
    %s8 = sphi 0, %s12
    %p9 = scmp.ge.s32.totalorder %s8, 6
    %s18 = sphi 0, %s20
    %s21 = sphi 0, %s18
    %s22 = sphi 0, %s21
    %s38 = sphi 0, %s22
    %s42 = sphi 0, %s42
    %s44 = sphi 0, %s42
    %s45 = sphi 0, %s44
    %s59 = sphi 0, %s45
    %s65 = sphi 0, %s67
    %s68 = sphi 0, %s65
    %s69 = sphi 0, %s68
    %s85 = sphi 0, %s69
  $region4: #{_lambda_.10} parent=0 // loop_header_branch
    %11 = sbr.rel (%p9) target = $region8
  $region5: #{_lambda_.10} parent=0 // loop_body
    %s13 = ssub.s32 %s8, 1
    %s14 = ssub.s32 %s8, 2
    %s15 = sadd.s32 %s8, 1
    %s16 = ssub.s32 %s8, %s15
    %p17 = scmp.eq.s32.totalorder %s16, 0
    %s19 = sadd.s32 %s18, 1
    %s20 = scalar_select %p17, %s18, %s19
    %p23 = pneg %p17
    %p24 = scmp.eq.s32.totalorder %s8, 3
    %p25 = por %p23, %p24
    %p26 = scmp.ne.s32.totalorder %s18, %s21
    %p27 = scmp.eq.s32.totalorder %s8, 0
    %p28 = por %p26, %p27
    %p29 = scmp.ne.s32.totalorder %s18, %s21
    %p30 = scmp.eq.s32.totalorder %s13, 3
    %p31 = por %p29, %p30
    %p32 = scmp.ne.s32.totalorder %s21, %s22
    %p33 = scmp.eq.s32.totalorder %s13, 0
    %p34 = por %p32, %p33
    %p35 = scmp.ne.s32.totalorder %s21, %s22
    %p36 = scmp.eq.s32.totalorder %s14, 3
    %p37 = por %p35, %p36
    %p39 = scmp.ne.s32.totalorder %s22, %s38
    %p40 = scmp.eq.s32.totalorder %s14, 0
    %p41 = por %p39, %p40
    %s43 = sadd.s32 %s42, 1
    %p46 = scmp.eq.s32.totalorder %s8, 3
    %p47 = scmp.ne.s32.totalorder %s42, %s44
    %p48 = scmp.eq.s32.totalorder %s8, 0
    %p49 = por %p47, %p48
    %p50 = scmp.ne.s32.totalorder %s42, %s44
    %p51 = scmp.eq.s32.totalorder %s13, 3
    %p52 = por %p50, %p51
    %p53 = scmp.ne.s32.totalorder %s44, %s45
    %p54 = scmp.eq.s32.totalorder %s13, 0
    %p55 = por %p53, %p54
    %p56 = scmp.ne.s32.totalorder %s44, %s45
    %p57 = scmp.eq.s32.totalorder %s14, 3
    %p58 = por %p56, %p57
    %p60 = scmp.ne.s32.totalorder %s45, %s59
    %p61 = scmp.eq.s32.totalorder %s14, 0
    %p62 = por %p60, %p61
    %s63 = ssub.s32 %s8, %s15
    %p64 = scmp.eq.s32.totalorder %s63, 0
    %s66 = sadd.s32 %s65, 1
    %s67 = scalar_select %p64, %s65, %s66
    %p70 = pneg %p64
    %p71 = scmp.eq.s32.totalorder %s8, 3
    %p72 = por %p70, %p71
    %p73 = scmp.ne.s32.totalorder %s65, %s68
    %p74 = scmp.eq.s32.totalorder %s8, 0
    %p75 = por %p73, %p74
    %p76 = scmp.ne.s32.totalorder %s65, %s68
    %p77 = scmp.eq.s32.totalorder %s13, 3
    %p78 = por %p76, %p77
    %p79 = scmp.ne.s32.totalorder %s68, %s69
    %p80 = scmp.eq.s32.totalorder %s13, 0
    %p81 = por %p79, %p80
    %p82 = scmp.ne.s32.totalorder %s68, %s69
    %p83 = scmp.eq.s32.totalorder %s14, 3
    %p84 = por %p82, %p83
    %p86 = scmp.ne.s32.totalorder %s69, %s85
    %p87 = scmp.eq.s32.totalorder %s14, 0
    %p88 = por %p86, %p87
    %p89 = scmp.le.s32.totalorder 1, %s8
    %p90 = scmp.lt.s32.totalorder %s8, 5
    %p91 = pnand %p89, %p90
    %p92 = pneg %p91
    // Predicated region
    $region9: #{_lambda_.10} parent=5 // pred_check
      _
    $region10: #{_lambda_.10} parent=5 // pred_check_branch
      %94 = sbr.rel (%p91) target = $region12
    $region11: #{_lambda_.10} parent=5 // pred_region
      %s95 = ssub.s32 %s8, 1
      // Predicated region
      $region13: #{_lambda_.10} parent=11 // pred_check
        %p96 = pneg %p55
      $region14: #{_lambda_.10} parent=11 // pred_check_branch
        %98 = sbr.rel (%p96) target = $region16
      $region15: #{_lambda_.10} parent=11 // pred_region
        _
      $region16: #{_lambda_.10} parent=11 // pred_fallthru
        _
    $region12: #{_lambda_.10} parent=5 // pred_fallthru
      _
    %p99 = scmp.lt.s32.totalorder %s8, 4
    // Predicated region
    $region17: #{_lambda_.10} parent=5 // pred_check
      %p100 = pneg %p99
    $region18: #{_lambda_.10} parent=5 // pred_check_branch
      %102 = sbr.rel (%p100) target = $region20
    $region19: #{_lambda_.10} parent=5 // pred_region
      // Predicated region
      $region21: #{_lambda_.10} parent=19 // pred_check
        %p103 = pneg %p28
      $region22: #{_lambda_.10} parent=19 // pred_check_branch
        %105 = sbr.rel (%p103) target = $region24
      $region23: #{_lambda_.10} parent=19 // pred_region
        %p106 = scmp.lt.s32.totalorder %s8, 3
        %s107 = scalar_select %p106, %s8, 3
        %s108 = smul.addr %s107, 32
        %s109 = smul.addr %s108, 4
        %s110 = scalar_lea.vmem %s0, %s109
      $region24: #{_lambda_.10} parent=19 // pred_fallthru
        _
    $region20: #{_lambda_.10} parent=5 // pred_fallthru
      _
    %p111 = scmp.le.s32.totalorder 1, %s8
    %p112 = scmp.lt.s32.totalorder %s8, 5
    %p113 = pnand %p111, %p112
    %p114 = pneg %p113
    // Predicated region
    $region25: #{_lambda_.10} parent=5 // pred_check
      _
    $region26: #{_lambda_.10} parent=5 // pred_check_branch
      %116 = sbr.rel (%p113) target = $region28
    $region27: #{_lambda_.10} parent=5 // pred_region
      %s117 = ssub.s32 %s8, 1
      %p118 = scmp.lt.s32.totalorder %s13, 3
      %s119 = scalar_select %p118, %s13, 3
      %s120 = smul.addr %s119, 32
      %s121 = smul.addr %s120, 4
      %s122 = scalar_lea.vmem %s0, %s121
      %p123 = pneg %p34
      %p124 = pneg %p31
      %p125 = pneg %p55
      %p126 = pneg %p52
      %p127 = pneg %p81
      %p128 = pneg %p78
      %p129 = scmp.lt.s32.totalorder %s13, 3
      %s130 = scalar_select %p129, %s13, 3
      %s131 = smul.addr %s130, 96
      %s132 = smul.addr %s131, 4
      %s133 = scalar_lea.vmem %s2, %s132
      %p134 = scmp.lt.s32.totalorder %s13, 3
      %s135 = scalar_select %p134, %s13, 3
      %s136 = smul.addr %s135, 32
      %s137 = smul.addr %s136, 4
      %s138 = scalar_lea.vmem %s0, %s137
      %p139 = scmp.lt.s32.totalorder %s13, 3
      %s140 = scalar_select %p139, %s13, 3
      %s141 = smul.addr %s140, 96
      %s142 = smul.addr %s141, 4
      %s143 = scalar_lea.vmem %s2, %s142
      %v145 = vld [vmem:[%s138] sm:$0xf]
      %v146 = vld [vmem:[%s138 + $0x4] sm:$0xf]
      %v147 = vld [vmem:[%s138 + $0x8] sm:$0xf]
      %v148 = vld [vmem:[%s138 + $0xc] sm:$0xf]
      %v149 = vld [vmem:[%s138 + $0x10] sm:$0xf]
      %v150 = vld [vmem:[%s138 + $0x14] sm:$0xf]
      %v151 = vld [vmem:[%s138 + $0x18] sm:$0xf]
      %v152 = vld [vmem:[%s138 + $0x1c] sm:$0xf]
      %v153 = vld [vmem:[%s138 + $0x20] sm:$0xf]
      %v154 = vld [vmem:[%s138 + $0x24] sm:$0xf]
      %v155 = vld [vmem:[%s138 + $0x28] sm:$0xf]
      %v156 = vld [vmem:[%s138 + $0x2c] sm:$0xf]
      %v157 = vld [vmem:[%s138 + $0x30] sm:$0xf]
      %v158 = vld [vmem:[%s138 + $0x34] sm:$0xf]
      %v159 = vld [vmem:[%s138 + $0x38] sm:$0xf]
      %v160 = vld [vmem:[%s138 + $0x3c] sm:$0xf]
      %v161 = vld [vmem:[%s138 + $0x40] sm:$0xf]
      %v162 = vld [vmem:[%s138 + $0x44] sm:$0xf]
      %v163 = vld [vmem:[%s138 + $0x48] sm:$0xf]
      %v164 = vld [vmem:[%s138 + $0x4c] sm:$0xf]
      %v165 = vld [vmem:[%s138 + $0x50] sm:$0xf]
      %v166 = vld [vmem:[%s138 + $0x54] sm:$0xf]
      %v167 = vld [vmem:[%s138 + $0x58] sm:$0xf]
      %v168 = vld [vmem:[%s138 + $0x5c] sm:$0xf]
      %v169 = vld [vmem:[%s138 + $0x60] sm:$0xf]
      %v170 = vld [vmem:[%s138 + $0x64] sm:$0xf]
      %v171 = vld [vmem:[%s138 + $0x68] sm:$0xf]
      %v172 = vld [vmem:[%s138 + $0x6c] sm:$0xf]
      %v173 = vld [vmem:[%s138 + $0x70] sm:$0xf]
      %v174 = vld [vmem:[%s138 + $0x74] sm:$0xf]
      %v175 = vld [vmem:[%s138 + $0x78] sm:$0xf]
      %v176 = vld [vmem:[%s138 + $0x7c] sm:$0xf]
      %v177 = vld [vmem:[%s1] sm:$0xf]
      %v178 = vld [vmem:[%s1 + $0x4] sm:$0xf]
      %v211 = vunpack.c.l.b16 %v145
      %v212 = vunpack.c.l.b16 %v146
      %v213 = vunpack.c.l.b16 %v147
      %v214 = vunpack.c.l.b16 %v148
      %v215 = vunpack.c.l.b16 %v149
      %v216 = vunpack.c.l.b16 %v150
      %v217 = vunpack.c.l.b16 %v151
      %v218 = vunpack.c.l.b16 %v152
      %v219 = vunpack.c.l.b16 %v153
      %v220 = vunpack.c.l.b16 %v154
      %v221 = vunpack.c.l.b16 %v155
      %v222 = vunpack.c.l.b16 %v156
      %v223 = vunpack.c.l.b16 %v157
      %v224 = vunpack.c.l.b16 %v158
      %v225 = vunpack.c.l.b16 %v159
      %v226 = vunpack.c.l.b16 %v160
      %v227 = vunpack.c.l.b16 %v161
      %v228 = vunpack.c.l.b16 %v162
      %v229 = vunpack.c.l.b16 %v163
      %v230 = vunpack.c.l.b16 %v164
      %v231 = vunpack.c.l.b16 %v165
      %v232 = vunpack.c.l.b16 %v166
      %v233 = vunpack.c.l.b16 %v167
      %v234 = vunpack.c.l.b16 %v168
      %v235 = vunpack.c.l.b16 %v169
      %v236 = vunpack.c.l.b16 %v170
      %v237 = vunpack.c.l.b16 %v171
      %v238 = vunpack.c.l.b16 %v172
      %v239 = vunpack.c.l.b16 %v173
      %v240 = vunpack.c.l.b16 %v174
      %v241 = vunpack.c.l.b16 %v175
      %v242 = vunpack.c.l.b16 %v176
      %v243 = vpack.c.b16 %v212, %v211
      %v244 = vpack.c.b16 %v214, %v213
      %v245 = vpack.c.b16 %v216, %v215
      %v246 = vpack.c.b16 %v218, %v217
      %v247 = vpack.c.b16 %v220, %v219
      %v248 = vpack.c.b16 %v222, %v221
      %v249 = vpack.c.b16 %v224, %v223
      %v250 = vpack.c.b16 %v226, %v225
      %v251 = vpack.c.b16 %v228, %v227
      %v252 = vpack.c.b16 %v230, %v229
      %v253 = vpack.c.b16 %v232, %v231
      %v254 = vpack.c.b16 %v234, %v233
      %v255 = vpack.c.b16 %v236, %v235
      %v256 = vpack.c.b16 %v238, %v237
      %v257 = vpack.c.b16 %v240, %v239
      %v258 = vpack.c.b16 %v242, %v241
      %v261 = vunpack.c.l.b16 %v177
      %v262 = vunpack.c.l.b16 %v178
      %v263 = vpack.c.b16 %v262, %v261
      %vm265 = vcmask 130048
      %v267 = vsel %vm265, %v243, 0
      %v270 = vsel %vm265, %v244, 0
      %v273 = vsel %vm265, %v245, 0
      %v276 = vsel %vm265, %v246, 0
      %v279 = vsel %vm265, %v247, 0
      %v282 = vsel %vm265, %v248, 0
      %v285 = vsel %vm265, %v249, 0
      %v288 = vsel %vm265, %v250, 0
      %v291 = vsel %vm265, %v251, 0
      %v294 = vsel %vm265, %v252, 0
      %v297 = vsel %vm265, %v253, 0
      %v300 = vsel %vm265, %v254, 0
      %v303 = vsel %vm265, %v255, 0
      %v306 = vsel %vm265, %v256, 0
      %v309 = vsel %vm265, %v257, 0
      %v312 = vsel %vm265, %v258, 0
      %314 = vmatprep.subr.bf16.mxu0 0
      %315 = vmatpush1.bf16.msra.mxu0 0
      %316 = vmatprep.subr.bf16.mxu0 0
      %317 = vmatpush1.bf16.msra.mxu0 0
      %318 = vmatprep.subr.bf16.mxu0 0
      %319 = vmatpush1.bf16.msra.mxu0 0
      %320 = vmatprep.subr.bf16.mxu0 0
      %321 = vmatpush1.bf16.msra.mxu0 0
      %322 = vmatprep.subr.bf16.mxu0 0
      %323 = vmatpush1.bf16.msra.mxu0 0
      %324 = vmatprep.subr.bf16.mxu0 0
      %325 = vmatpush1.bf16.msra.mxu0 0
      %326 = vmatprep.subr.bf16.mxu0 0
      %327 = vmatpush1.bf16.msra.mxu0 0
      %328 = vmatprep.subr.bf16.mxu0 0
      %329 = vmatpush1.bf16.msra.mxu0 %v263
      %330 = vmatprep.subr.bf16.mxu0 0
      %331 = vmatpush2.bf16.msra.mxu0 0
      %332 = vmatprep.subr.bf16.mxu0 0
      %333 = vmatpush2.bf16.msra.mxu0 0
      %334 = vmatprep.subr.bf16.mxu0 0
      %335 = vmatpush2.bf16.msra.mxu0 0
      %336 = vmatprep.subr.bf16.mxu0 0
      %337 = vmatpush2.bf16.msra.mxu0 0
      %338 = vmatprep.subr.bf16.mxu0 0
      %339 = vmatpush2.bf16.msra.mxu0 0
      %340 = vmatprep.subr.bf16.mxu0 0
      %341 = vmatpush2.bf16.msra.mxu0 0
      %342 = vmatprep.subr.bf16.mxu0 0
      %343 = vmatpush2.bf16.msra.mxu0 0
      %344 = vmatprep.subr.bf16.mxu0 0
      %345 = vmatpush2.bf16.msra.mxu0 0
      %346 = vmatprep.mubr.bf16.mxu0 0
      %347 = vmatmul.mubr.bf16.gmra.mxu0 %v267
      %v348 = vpop.f32.mrf.mxu0
      %v349 = vadd.f32 0.0, %v348
      %v350 = vpop.f32.mrf.mxu0
      %v351 = vpop.f32.mrf.mxu0
      %v352 = vadd.f32 0.0, %v351
      %v353 = vpop.f32.mrf.mxu0
      %354 = vmatprep.mubr.bf16.mxu0 0
      %355 = vmatmul.mubr.bf16.gmra.mxu0 %v270
      %v356 = vpop.f32.mrf.mxu0
      %v357 = vadd.f32 0.0, %v356
      %v358 = vpop.f32.mrf.mxu0
      %v359 = vpop.f32.mrf.mxu0
      %v360 = vadd.f32 0.0, %v359
      %v361 = vpop.f32.mrf.mxu0
      %362 = vmatprep.mubr.bf16.mxu0 0
      %363 = vmatmul.mubr.bf16.gmra.mxu0 %v273
      %v364 = vpop.f32.mrf.mxu0
      %v365 = vadd.f32 0.0, %v364
      %v366 = vpop.f32.mrf.mxu0
      %v367 = vpop.f32.mrf.mxu0
      %v368 = vadd.f32 0.0, %v367
      %v369 = vpop.f32.mrf.mxu0
      %370 = vmatprep.mubr.bf16.mxu0 0
      %371 = vmatmul.mubr.bf16.gmra.mxu0 %v276
      %v372 = vpop.f32.mrf.mxu0
      %v373 = vadd.f32 0.0, %v372
      %v374 = vpop.f32.mrf.mxu0
      %v375 = vpop.f32.mrf.mxu0
      %v376 = vadd.f32 0.0, %v375
      %v377 = vpop.f32.mrf.mxu0
      %378 = vmatprep.mubr.bf16.mxu0 0
      %379 = vmatmul.mubr.bf16.gmra.mxu0 %v279
      %v380 = vpop.f32.mrf.mxu0
      %v381 = vadd.f32 0.0, %v380
      %v382 = vpop.f32.mrf.mxu0
      %v383 = vpop.f32.mrf.mxu0
      %v384 = vadd.f32 0.0, %v383
      %v385 = vpop.f32.mrf.mxu0
      %386 = vmatprep.mubr.bf16.mxu0 0
      %387 = vmatmul.mubr.bf16.gmra.mxu0 %v282
      %v388 = vpop.f32.mrf.mxu0
      %v389 = vadd.f32 0.0, %v388
      %v390 = vpop.f32.mrf.mxu0
      %v391 = vpop.f32.mrf.mxu0
      %v392 = vadd.f32 0.0, %v391
      %v393 = vpop.f32.mrf.mxu0
      %394 = vmatprep.mubr.bf16.mxu0 0
      %395 = vmatmul.mubr.bf16.gmra.mxu0 %v285
      %v396 = vpop.f32.mrf.mxu0
      %v397 = vadd.f32 0.0, %v396
      %v398 = vpop.f32.mrf.mxu0
      %v399 = vpop.f32.mrf.mxu0
      %v400 = vadd.f32 0.0, %v399
      %v401 = vpop.f32.mrf.mxu0
      %402 = vmatprep.mubr.bf16.mxu0 0
      %403 = vmatmul.mubr.bf16.gmra.mxu0 %v288
      %v404 = vpop.f32.mrf.mxu0
      %v405 = vadd.f32 0.0, %v404
      %v406 = vpop.f32.mrf.mxu0
      %v407 = vpop.f32.mrf.mxu0
      %v408 = vadd.f32 0.0, %v407
      %v409 = vpop.f32.mrf.mxu0
      %410 = vmatprep.mubr.bf16.mxu0 0
      %411 = vmatmul.mubr.bf16.gmra.mxu0 %v291
      %v412 = vpop.f32.mrf.mxu0
      %v413 = vadd.f32 0.0, %v412
      %v414 = vpop.f32.mrf.mxu0
      %v415 = vpop.f32.mrf.mxu0
      %v416 = vadd.f32 0.0, %v415
      %v417 = vpop.f32.mrf.mxu0
      %418 = vmatprep.mubr.bf16.mxu0 0
      %419 = vmatmul.mubr.bf16.gmra.mxu0 %v294
      %v420 = vpop.f32.mrf.mxu0
      %v421 = vadd.f32 0.0, %v420
      %v422 = vpop.f32.mrf.mxu0
      %v423 = vpop.f32.mrf.mxu0
      %v424 = vadd.f32 0.0, %v423
      %v425 = vpop.f32.mrf.mxu0
      %426 = vmatprep.mubr.bf16.mxu0 0
      %427 = vmatmul.mubr.bf16.gmra.mxu0 %v297
      %v428 = vpop.f32.mrf.mxu0
      %v429 = vadd.f32 0.0, %v428
      %v430 = vpop.f32.mrf.mxu0
      %v431 = vpop.f32.mrf.mxu0
      %v432 = vadd.f32 0.0, %v431
      %v433 = vpop.f32.mrf.mxu0
      %434 = vmatprep.mubr.bf16.mxu0 0
      %435 = vmatmul.mubr.bf16.gmra.mxu0 %v300
      %v436 = vpop.f32.mrf.mxu0
      %v437 = vadd.f32 0.0, %v436
      %v438 = vpop.f32.mrf.mxu0
      %v439 = vpop.f32.mrf.mxu0
      %v440 = vadd.f32 0.0, %v439
      %v441 = vpop.f32.mrf.mxu0
      %442 = vmatprep.mubr.bf16.mxu0 0
      %443 = vmatmul.mubr.bf16.gmra.mxu0 %v303
      %v444 = vpop.f32.mrf.mxu0
      %v445 = vadd.f32 0.0, %v444
      %v446 = vpop.f32.mrf.mxu0
      %v447 = vpop.f32.mrf.mxu0
      %v448 = vadd.f32 0.0, %v447
      %v449 = vpop.f32.mrf.mxu0
      %450 = vmatprep.mubr.bf16.mxu0 0
      %451 = vmatmul.mubr.bf16.gmra.mxu0 %v306
      %v452 = vpop.f32.mrf.mxu0
      %v453 = vadd.f32 0.0, %v452
      %v454 = vpop.f32.mrf.mxu0
      %v455 = vpop.f32.mrf.mxu0
      %v456 = vadd.f32 0.0, %v455
      %v457 = vpop.f32.mrf.mxu0
      %458 = vmatprep.mubr.bf16.mxu0 0
      %459 = vmatmul.mubr.bf16.gmra.mxu0 %v309
      %v460 = vpop.f32.mrf.mxu0
      %v461 = vadd.f32 0.0, %v460
      %v462 = vpop.f32.mrf.mxu0
      %v463 = vpop.f32.mrf.mxu0
      %v464 = vadd.f32 0.0, %v463
      %v465 = vpop.f32.mrf.mxu0
      %466 = vmatprep.mubr.bf16.mxu0 0
      %467 = vmatmul.mubr.bf16.gmra.mxu0 %v312
      %v468 = vpop.f32.mrf.mxu0
      %v469 = vadd.f32 0.0, %v468
      %v470 = vpop.f32.mrf.mxu0
      %v471 = vpop.f32.mrf.mxu0
      %v472 = vadd.f32 0.0, %v471
      %v473 = vpop.f32.mrf.mxu0
      %474 = vdwg.mxu0
      %v475 = vpack.c.bf16 %v352, %v349
      %v476 = vpack.c.bf16 %v360, %v357
      %v477 = vpack.c.bf16 %v368, %v365
      %v478 = vpack.c.bf16 %v376, %v373
      %v479 = vpack.c.bf16 %v384, %v381
      %v480 = vpack.c.bf16 %v392, %v389
      %v481 = vpack.c.bf16 %v400, %v397
      %v482 = vpack.c.bf16 %v408, %v405
      %v483 = vpack.c.bf16 %v416, %v413
      %v484 = vpack.c.bf16 %v424, %v421
      %v485 = vpack.c.bf16 %v432, %v429
      %v486 = vpack.c.bf16 %v440, %v437
      %v487 = vpack.c.bf16 %v448, %v445
      %v488 = vpack.c.bf16 %v456, %v453
      %v489 = vpack.c.bf16 %v464, %v461
      %v490 = vpack.c.bf16 %v472, %v469
      %v507 = vunpack.c.l.b16 %v475
      %v508 = vunpack.c.h.b16 %v475
      %v509 = vunpack.c.l.b16 %v476
      %v510 = vunpack.c.h.b16 %v476
      %v511 = vunpack.c.l.b16 %v477
      %v512 = vunpack.c.h.b16 %v477
      %v513 = vunpack.c.l.b16 %v478
      %v514 = vunpack.c.h.b16 %v478
      %v515 = vunpack.c.l.b16 %v479
      %v516 = vunpack.c.h.b16 %v479
      %v517 = vunpack.c.l.b16 %v480
      %v518 = vunpack.c.h.b16 %v480
      %v519 = vunpack.c.l.b16 %v481
      %v520 = vunpack.c.h.b16 %v481
      %v521 = vunpack.c.l.b16 %v482
      %v522 = vunpack.c.h.b16 %v482
      %v523 = vunpack.c.l.b16 %v483
      %v524 = vunpack.c.h.b16 %v483
      %v525 = vunpack.c.l.b16 %v484
      %v526 = vunpack.c.h.b16 %v484
      %v527 = vunpack.c.l.b16 %v485
      %v528 = vunpack.c.h.b16 %v485
      %v529 = vunpack.c.l.b16 %v486
      %v530 = vunpack.c.h.b16 %v486
      %v531 = vunpack.c.l.b16 %v487
      %v532 = vunpack.c.h.b16 %v487
      %v533 = vunpack.c.l.b16 %v488
      %v534 = vunpack.c.h.b16 %v488
      %v535 = vunpack.c.l.b16 %v489
      %v536 = vunpack.c.h.b16 %v489
      %v537 = vunpack.c.l.b16 %v490
      %v538 = vunpack.c.h.b16 %v490
      %v539 = vpack.c.b16 %v507, %v507
      %v540 = vpack.c.b16 %v508, %v508
      %v541 = vpack.c.b16 %v509, %v509
      %v542 = vpack.c.b16 %v510, %v510
      %v543 = vpack.c.b16 %v511, %v511
      %v544 = vpack.c.b16 %v512, %v512
      %v545 = vpack.c.b16 %v513, %v513
      %v546 = vpack.c.b16 %v514, %v514
      %v547 = vpack.c.b16 %v515, %v515
      %v548 = vpack.c.b16 %v516, %v516
      %v549 = vpack.c.b16 %v517, %v517
      %v550 = vpack.c.b16 %v518, %v518
      %v551 = vpack.c.b16 %v519, %v519
      %v552 = vpack.c.b16 %v520, %v520
      %v553 = vpack.c.b16 %v521, %v521
      %v554 = vpack.c.b16 %v522, %v522
      %v555 = vpack.c.b16 %v523, %v523
      %v556 = vpack.c.b16 %v524, %v524
      %v557 = vpack.c.b16 %v525, %v525
      %v558 = vpack.c.b16 %v526, %v526
      %v559 = vpack.c.b16 %v527, %v527
      %v560 = vpack.c.b16 %v528, %v528
      %v561 = vpack.c.b16 %v529, %v529
      %v562 = vpack.c.b16 %v530, %v530
      %v563 = vpack.c.b16 %v531, %v531
      %v564 = vpack.c.b16 %v532, %v532
      %v565 = vpack.c.b16 %v533, %v533
      %v566 = vpack.c.b16 %v534, %v534
      %v567 = vpack.c.b16 %v535, %v535
      %v568 = vpack.c.b16 %v536, %v536
      %v569 = vpack.c.b16 %v537, %v537
      %v570 = vpack.c.b16 %v538, %v538
      %vm603 = vcmask 125952
      %604 = vst.msk [vmem:[%s143] sm:$0xf] %vm603, %v539
      %605 = vst.msk [vmem:[%s143 + $0x4] sm:$0xf] %vm603, %v540
      %606 = vst.msk [vmem:[%s143 + $0x8] sm:$0xf] %vm603, %v541
      %607 = vst.msk [vmem:[%s143 + $0xc] sm:$0xf] %vm603, %v542
      %608 = vst.msk [vmem:[%s143 + $0x10] sm:$0xf] %vm603, %v543
      %609 = vst.msk [vmem:[%s143 + $0x14] sm:$0xf] %vm603, %v544
      %610 = vst.msk [vmem:[%s143 + $0x18] sm:$0xf] %vm603, %v545
      %611 = vst.msk [vmem:[%s143 + $0x1c] sm:$0xf] %vm603, %v546
      %612 = vst.msk [vmem:[%s143 + $0x20] sm:$0xf] %vm603, %v547
      %613 = vst.msk [vmem:[%s143 + $0x24] sm:$0xf] %vm603, %v548
      %614 = vst.msk [vmem:[%s143 + $0x28] sm:$0xf] %vm603, %v549
      %615 = vst.msk [vmem:[%s143 + $0x2c] sm:$0xf] %vm603, %v550
      %616 = vst.msk [vmem:[%s143 + $0x30] sm:$0xf] %vm603, %v551
      %617 = vst.msk [vmem:[%s143 + $0x34] sm:$0xf] %vm603, %v552
      %618 = vst.msk [vmem:[%s143 + $0x38] sm:$0xf] %vm603, %v553
      %619 = vst.msk [vmem:[%s143 + $0x3c] sm:$0xf] %vm603, %v554
      %620 = vst.msk [vmem:[%s143 + $0x40] sm:$0xf] %vm603, %v555
      %621 = vst.msk [vmem:[%s143 + $0x44] sm:$0xf] %vm603, %v556
      %622 = vst.msk [vmem:[%s143 + $0x48] sm:$0xf] %vm603, %v557
      %623 = vst.msk [vmem:[%s143 + $0x4c] sm:$0xf] %vm603, %v558
      %624 = vst.msk [vmem:[%s143 + $0x50] sm:$0xf] %vm603, %v559
      %625 = vst.msk [vmem:[%s143 + $0x54] sm:$0xf] %vm603, %v560
      %626 = vst.msk [vmem:[%s143 + $0x58] sm:$0xf] %vm603, %v561
      %627 = vst.msk [vmem:[%s143 + $0x5c] sm:$0xf] %vm603, %v562
      %628 = vst.msk [vmem:[%s143 + $0x60] sm:$0xf] %vm603, %v563
      %629 = vst.msk [vmem:[%s143 + $0x64] sm:$0xf] %vm603, %v564
      %630 = vst.msk [vmem:[%s143 + $0x68] sm:$0xf] %vm603, %v565
      %631 = vst.msk [vmem:[%s143 + $0x6c] sm:$0xf] %vm603, %v566
      %632 = vst.msk [vmem:[%s143 + $0x70] sm:$0xf] %vm603, %v567
      %633 = vst.msk [vmem:[%s143 + $0x74] sm:$0xf] %vm603, %v568
      %634 = vst.msk [vmem:[%s143 + $0x78] sm:$0xf] %vm603, %v569
      %635 = vst.msk [vmem:[%s143 + $0x7c] sm:$0xf] %vm603, %v570
      %s636 = scalar_lea.vmem %s1, 8
      %v637 = vld [vmem:[%s636] sm:$0xf]
      %v638 = vld [vmem:[%s636 + $0x4] sm:$0xf]
      %v641 = vunpack.c.l.b16 %v637
      %v642 = vunpack.c.l.b16 %v638
      %v643 = vpack.c.b16 %v642, %v641
      %645 = vmatprep.subr.bf16.mxu0 0
      %646 = vmatpush1.bf16.msra.mxu0 0
      %647 = vmatprep.subr.bf16.mxu0 0
      %648 = vmatpush1.bf16.msra.mxu0 0
      %649 = vmatprep.subr.bf16.mxu0 0
      %650 = vmatpush1.bf16.msra.mxu0 0
      %651 = vmatprep.subr.bf16.mxu0 0
      %652 = vmatpush1.bf16.msra.mxu0 0
      %653 = vmatprep.subr.bf16.mxu0 0
      %654 = vmatpush1.bf16.msra.mxu0 0
      %655 = vmatprep.subr.bf16.mxu0 0
      %656 = vmatpush1.bf16.msra.mxu0 0
      %657 = vmatprep.subr.bf16.mxu0 0
      %658 = vmatpush1.bf16.msra.mxu0 0
      %659 = vmatprep.subr.bf16.mxu0 0
      %660 = vmatpush1.bf16.msra.mxu0 %v643
      %661 = vmatprep.subr.bf16.mxu0 0
      %662 = vmatpush2.bf16.msra.mxu0 0
      %663 = vmatprep.subr.bf16.mxu0 0
      %664 = vmatpush2.bf16.msra.mxu0 0
      %665 = vmatprep.subr.bf16.mxu0 0
      %666 = vmatpush2.bf16.msra.mxu0 0
      %667 = vmatprep.subr.bf16.mxu0 0
      %668 = vmatpush2.bf16.msra.mxu0 0
      %669 = vmatprep.subr.bf16.mxu0 0
      %670 = vmatpush2.bf16.msra.mxu0 0
      %671 = vmatprep.subr.bf16.mxu0 0
      %672 = vmatpush2.bf16.msra.mxu0 0
      %673 = vmatprep.subr.bf16.mxu0 0
      %674 = vmatpush2.bf16.msra.mxu0 0
      %675 = vmatprep.subr.bf16.mxu0 0
      %676 = vmatpush2.bf16.msra.mxu0 0
      %677 = vmatprep.mubr.bf16.mxu0 0
      %678 = vmatmul.mubr.bf16.gmra.mxu0 %v267
      %v679 = vpop.f32.mrf.mxu0
      %v680 = vadd.f32 0.0, %v679
      %v681 = vpop.f32.mrf.mxu0
      %v682 = vpop.f32.mrf.mxu0
      %v683 = vadd.f32 0.0, %v682
      %v684 = vpop.f32.mrf.mxu0
      %685 = vmatprep.mubr.bf16.mxu0 0
      %686 = vmatmul.mubr.bf16.gmra.mxu0 %v270
      %v687 = vpop.f32.mrf.mxu0
      %v688 = vadd.f32 0.0, %v687
      %v689 = vpop.f32.mrf.mxu0
      %v690 = vpop.f32.mrf.mxu0
      %v691 = vadd.f32 0.0, %v690
      %v692 = vpop.f32.mrf.mxu0
      %693 = vmatprep.mubr.bf16.mxu0 0
      %694 = vmatmul.mubr.bf16.gmra.mxu0 %v273
      %v695 = vpop.f32.mrf.mxu0
      %v696 = vadd.f32 0.0, %v695
      %v697 = vpop.f32.mrf.mxu0
      %v698 = vpop.f32.mrf.mxu0
      %v699 = vadd.f32 0.0, %v698
      %v700 = vpop.f32.mrf.mxu0
      %701 = vmatprep.mubr.bf16.mxu0 0
      %702 = vmatmul.mubr.bf16.gmra.mxu0 %v276
      %v703 = vpop.f32.mrf.mxu0
      %v704 = vadd.f32 0.0, %v703
      %v705 = vpop.f32.mrf.mxu0
      %v706 = vpop.f32.mrf.mxu0
      %v707 = vadd.f32 0.0, %v706
      %v708 = vpop.f32.mrf.mxu0
      %709 = vmatprep.mubr.bf16.mxu0 0
      %710 = vmatmul.mubr.bf16.gmra.mxu0 %v279
      %v711 = vpop.f32.mrf.mxu0
      %v712 = vadd.f32 0.0, %v711
      %v713 = vpop.f32.mrf.mxu0
      %v714 = vpop.f32.mrf.mxu0
      %v715 = vadd.f32 0.0, %v714
      %v716 = vpop.f32.mrf.mxu0
      %717 = vmatprep.mubr.bf16.mxu0 0
      %718 = vmatmul.mubr.bf16.gmra.mxu0 %v282
      %v719 = vpop.f32.mrf.mxu0
      %v720 = vadd.f32 0.0, %v719
      %v721 = vpop.f32.mrf.mxu0
      %v722 = vpop.f32.mrf.mxu0
      %v723 = vadd.f32 0.0, %v722
      %v724 = vpop.f32.mrf.mxu0
      %725 = vmatprep.mubr.bf16.mxu0 0
      %726 = vmatmul.mubr.bf16.gmra.mxu0 %v285
      %v727 = vpop.f32.mrf.mxu0
      %v728 = vadd.f32 0.0, %v727
      %v729 = vpop.f32.mrf.mxu0
      %v730 = vpop.f32.mrf.mxu0
      %v731 = vadd.f32 0.0, %v730
      %v732 = vpop.f32.mrf.mxu0
      %733 = vmatprep.mubr.bf16.mxu0 0
      %734 = vmatmul.mubr.bf16.gmra.mxu0 %v288
      %v735 = vpop.f32.mrf.mxu0
      %v736 = vadd.f32 0.0, %v735
      %v737 = vpop.f32.mrf.mxu0
      %v738 = vpop.f32.mrf.mxu0
      %v739 = vadd.f32 0.0, %v738
      %v740 = vpop.f32.mrf.mxu0
      %741 = vmatprep.mubr.bf16.mxu0 0
      %742 = vmatmul.mubr.bf16.gmra.mxu0 %v291
      %v743 = vpop.f32.mrf.mxu0
      %v744 = vadd.f32 0.0, %v743
      %v745 = vpop.f32.mrf.mxu0
      %v746 = vpop.f32.mrf.mxu0
      %v747 = vadd.f32 0.0, %v746
      %v748 = vpop.f32.mrf.mxu0
      %749 = vmatprep.mubr.bf16.mxu0 0
      %750 = vmatmul.mubr.bf16.gmra.mxu0 %v294
      %v751 = vpop.f32.mrf.mxu0
      %v752 = vadd.f32 0.0, %v751
      %v753 = vpop.f32.mrf.mxu0
      %v754 = vpop.f32.mrf.mxu0
      %v755 = vadd.f32 0.0, %v754
      %v756 = vpop.f32.mrf.mxu0
      %757 = vmatprep.mubr.bf16.mxu0 0
      %758 = vmatmul.mubr.bf16.gmra.mxu0 %v297
      %v759 = vpop.f32.mrf.mxu0
      %v760 = vadd.f32 0.0, %v759
      %v761 = vpop.f32.mrf.mxu0
      %v762 = vpop.f32.mrf.mxu0
      %v763 = vadd.f32 0.0, %v762
      %v764 = vpop.f32.mrf.mxu0
      %765 = vmatprep.mubr.bf16.mxu0 0
      %766 = vmatmul.mubr.bf16.gmra.mxu0 %v300
      %v767 = vpop.f32.mrf.mxu0
      %v768 = vadd.f32 0.0, %v767
      %v769 = vpop.f32.mrf.mxu0
      %v770 = vpop.f32.mrf.mxu0
      %v771 = vadd.f32 0.0, %v770
      %v772 = vpop.f32.mrf.mxu0
      %773 = vmatprep.mubr.bf16.mxu0 0
      %774 = vmatmul.mubr.bf16.gmra.mxu0 %v303
      %v775 = vpop.f32.mrf.mxu0
      %v776 = vadd.f32 0.0, %v775
      %v777 = vpop.f32.mrf.mxu0
      %v778 = vpop.f32.mrf.mxu0
      %v779 = vadd.f32 0.0, %v778
      %v780 = vpop.f32.mrf.mxu0
      %781 = vmatprep.mubr.bf16.mxu0 0
      %782 = vmatmul.mubr.bf16.gmra.mxu0 %v306
      %v783 = vpop.f32.mrf.mxu0
      %v784 = vadd.f32 0.0, %v783
      %v785 = vpop.f32.mrf.mxu0
      %v786 = vpop.f32.mrf.mxu0
      %v787 = vadd.f32 0.0, %v786
      %v788 = vpop.f32.mrf.mxu0
      %789 = vmatprep.mubr.bf16.mxu0 0
      %790 = vmatmul.mubr.bf16.gmra.mxu0 %v309
      %v791 = vpop.f32.mrf.mxu0
      %v792 = vadd.f32 0.0, %v791
      %v793 = vpop.f32.mrf.mxu0
      %v794 = vpop.f32.mrf.mxu0
      %v795 = vadd.f32 0.0, %v794
      %v796 = vpop.f32.mrf.mxu0
      %797 = vmatprep.mubr.bf16.mxu0 0
      %798 = vmatmul.mubr.bf16.gmra.mxu0 %v312
      %v799 = vpop.f32.mrf.mxu0
      %v800 = vadd.f32 0.0, %v799
      %v801 = vpop.f32.mrf.mxu0
      %v802 = vpop.f32.mrf.mxu0
      %v803 = vadd.f32 0.0, %v802
      %v804 = vpop.f32.mrf.mxu0
      %805 = vdwg.mxu0
      %v806 = vpack.c.bf16 %v683, %v680
      %v807 = vpack.c.bf16 %v691, %v688
      %v808 = vpack.c.bf16 %v699, %v696
      %v809 = vpack.c.bf16 %v707, %v704
      %v810 = vpack.c.bf16 %v715, %v712
      %v811 = vpack.c.bf16 %v723, %v720
      %v812 = vpack.c.bf16 %v731, %v728
      %v813 = vpack.c.bf16 %v739, %v736
      %v814 = vpack.c.bf16 %v747, %v744
      %v815 = vpack.c.bf16 %v755, %v752
      %v816 = vpack.c.bf16 %v763, %v760
      %v817 = vpack.c.bf16 %v771, %v768
      %v818 = vpack.c.bf16 %v779, %v776
      %v819 = vpack.c.bf16 %v787, %v784
      %v820 = vpack.c.bf16 %v795, %v792
      %v821 = vpack.c.bf16 %v803, %v800
      %v838 = vunpack.c.l.b16 %v806
      %v839 = vunpack.c.h.b16 %v806
      %v840 = vunpack.c.l.b16 %v807
      %v841 = vunpack.c.h.b16 %v807
      %v842 = vunpack.c.l.b16 %v808
      %v843 = vunpack.c.h.b16 %v808
      %v844 = vunpack.c.l.b16 %v809
      %v845 = vunpack.c.h.b16 %v809
      %v846 = vunpack.c.l.b16 %v810
      %v847 = vunpack.c.h.b16 %v810
      %v848 = vunpack.c.l.b16 %v811
      %v849 = vunpack.c.h.b16 %v811
      %v850 = vunpack.c.l.b16 %v812
      %v851 = vunpack.c.h.b16 %v812
      %v852 = vunpack.c.l.b16 %v813
      %v853 = vunpack.c.h.b16 %v813
      %v854 = vunpack.c.l.b16 %v814
      %v855 = vunpack.c.h.b16 %v814
      %v856 = vunpack.c.l.b16 %v815
      %v857 = vunpack.c.h.b16 %v815
      %v858 = vunpack.c.l.b16 %v816
      %v859 = vunpack.c.h.b16 %v816
      %v860 = vunpack.c.l.b16 %v817
      %v861 = vunpack.c.h.b16 %v817
      %v862 = vunpack.c.l.b16 %v818
      %v863 = vunpack.c.h.b16 %v818
      %v864 = vunpack.c.l.b16 %v819
      %v865 = vunpack.c.h.b16 %v819
      %v866 = vunpack.c.l.b16 %v820
      %v867 = vunpack.c.h.b16 %v820
      %v868 = vunpack.c.l.b16 %v821
      %v869 = vunpack.c.h.b16 %v821
      %v870 = vpack.c.b16 %v838, %v838
      %v871 = vpack.c.b16 %v839, %v839
      %v872 = vpack.c.b16 %v840, %v840
      %v873 = vpack.c.b16 %v841, %v841
      %v874 = vpack.c.b16 %v842, %v842
      %v875 = vpack.c.b16 %v843, %v843
      %v876 = vpack.c.b16 %v844, %v844
      %v877 = vpack.c.b16 %v845, %v845
      %v878 = vpack.c.b16 %v846, %v846
      %v879 = vpack.c.b16 %v847, %v847
      %v880 = vpack.c.b16 %v848, %v848
      %v881 = vpack.c.b16 %v849, %v849
      %v882 = vpack.c.b16 %v850, %v850
      %v883 = vpack.c.b16 %v851, %v851
      %v884 = vpack.c.b16 %v852, %v852
      %v885 = vpack.c.b16 %v853, %v853
      %v886 = vpack.c.b16 %v854, %v854
      %v887 = vpack.c.b16 %v855, %v855
      %v888 = vpack.c.b16 %v856, %v856
      %v889 = vpack.c.b16 %v857, %v857
      %v890 = vpack.c.b16 %v858, %v858
      %v891 = vpack.c.b16 %v859, %v859
      %v892 = vpack.c.b16 %v860, %v860
      %v893 = vpack.c.b16 %v861, %v861
      %v894 = vpack.c.b16 %v862, %v862
      %v895 = vpack.c.b16 %v863, %v863
      %v896 = vpack.c.b16 %v864, %v864
      %v897 = vpack.c.b16 %v865, %v865
      %v898 = vpack.c.b16 %v866, %v866
      %v899 = vpack.c.b16 %v867, %v867
      %v900 = vpack.c.b16 %v868, %v868
      %v901 = vpack.c.b16 %v869, %v869
      %934 = vst.msk [vmem:[%s143 + $0x80] sm:$0xf] %vm603, %v870
      %935 = vst.msk [vmem:[%s143 + $0x84] sm:$0xf] %vm603, %v871
      %936 = vst.msk [vmem:[%s143 + $0x88] sm:$0xf] %vm603, %v872
      %937 = vst.msk [vmem:[%s143 + $0x8c] sm:$0xf] %vm603, %v873
      %938 = vst.msk [vmem:[%s143 + $0x90] sm:$0xf] %vm603, %v874
      %939 = vst.msk [vmem:[%s143 + $0x94] sm:$0xf] %vm603, %v875
      %940 = vst.msk [vmem:[%s143 + $0x98] sm:$0xf] %vm603, %v876
      %941 = vst.msk [vmem:[%s143 + $0x9c] sm:$0xf] %vm603, %v877
      %942 = vst.msk [vmem:[%s143 + $0xa0] sm:$0xf] %vm603, %v878
      %943 = vst.msk [vmem:[%s143 + $0xa4] sm:$0xf] %vm603, %v879
      %944 = vst.msk [vmem:[%s143 + $0xa8] sm:$0xf] %vm603, %v880
      %945 = vst.msk [vmem:[%s143 + $0xac] sm:$0xf] %vm603, %v881
      %946 = vst.msk [vmem:[%s143 + $0xb0] sm:$0xf] %vm603, %v882
      %947 = vst.msk [vmem:[%s143 + $0xb4] sm:$0xf] %vm603, %v883
      %948 = vst.msk [vmem:[%s143 + $0xb8] sm:$0xf] %vm603, %v884
      %949 = vst.msk [vmem:[%s143 + $0xbc] sm:$0xf] %vm603, %v885
      %950 = vst.msk [vmem:[%s143 + $0xc0] sm:$0xf] %vm603, %v886
      %951 = vst.msk [vmem:[%s143 + $0xc4] sm:$0xf] %vm603, %v887
      %952 = vst.msk [vmem:[%s143 + $0xc8] sm:$0xf] %vm603, %v888
      %953 = vst.msk [vmem:[%s143 + $0xcc] sm:$0xf] %vm603, %v889
      %954 = vst.msk [vmem:[%s143 + $0xd0] sm:$0xf] %vm603, %v890
      %955 = vst.msk [vmem:[%s143 + $0xd4] sm:$0xf] %vm603, %v891
      %956 = vst.msk [vmem:[%s143 + $0xd8] sm:$0xf] %vm603, %v892
      %957 = vst.msk [vmem:[%s143 + $0xdc] sm:$0xf] %vm603, %v893
      %958 = vst.msk [vmem:[%s143 + $0xe0] sm:$0xf] %vm603, %v894
      %959 = vst.msk [vmem:[%s143 + $0xe4] sm:$0xf] %vm603, %v895
      %960 = vst.msk [vmem:[%s143 + $0xe8] sm:$0xf] %vm603, %v896
      %961 = vst.msk [vmem:[%s143 + $0xec] sm:$0xf] %vm603, %v897
      %962 = vst.msk [vmem:[%s143 + $0xf0] sm:$0xf] %vm603, %v898
      %963 = vst.msk [vmem:[%s143 + $0xf4] sm:$0xf] %vm603, %v899
      %964 = vst.msk [vmem:[%s143 + $0xf8] sm:$0xf] %vm603, %v900
      %965 = vst.msk [vmem:[%s143 + $0xfc] sm:$0xf] %vm603, %v901
      %s966 = scalar_lea.vmem %s1, 16
      %v967 = vld [vmem:[%s966] sm:$0xf]
      %v968 = vld [vmem:[%s966 + $0x4] sm:$0xf]
      %v971 = vunpack.c.l.b16 %v967
      %v972 = vunpack.c.l.b16 %v968
      %v973 = vpack.c.b16 %v972, %v971
      %975 = vmatprep.subr.bf16.mxu0 0
      %976 = vmatpush1.bf16.msra.mxu0 0
      %977 = vmatprep.subr.bf16.mxu0 0
      %978 = vmatpush1.bf16.msra.mxu0 0
      %979 = vmatprep.subr.bf16.mxu0 0
      %980 = vmatpush1.bf16.msra.mxu0 0
      %981 = vmatprep.subr.bf16.mxu0 0
      %982 = vmatpush1.bf16.msra.mxu0 0
      %983 = vmatprep.subr.bf16.mxu0 0
      %984 = vmatpush1.bf16.msra.mxu0 0
      %985 = vmatprep.subr.bf16.mxu0 0
      %986 = vmatpush1.bf16.msra.mxu0 0
      %987 = vmatprep.subr.bf16.mxu0 0
      %988 = vmatpush1.bf16.msra.mxu0 0
      %989 = vmatprep.subr.bf16.mxu0 0
      %990 = vmatpush1.bf16.msra.mxu0 %v973
      %991 = vmatprep.subr.bf16.mxu0 0
      %992 = vmatpush2.bf16.msra.mxu0 0
      %993 = vmatprep.subr.bf16.mxu0 0
      %994 = vmatpush2.bf16.msra.mxu0 0
      %995 = vmatprep.subr.bf16.mxu0 0
      %996 = vmatpush2.bf16.msra.mxu0 0
      %997 = vmatprep.subr.bf16.mxu0 0
      %998 = vmatpush2.bf16.msra.mxu0 0
      %999 = vmatprep.subr.bf16.mxu0 0
      %1000 = vmatpush2.bf16.msra.mxu0 0
      %1001 = vmatprep.subr.bf16.mxu0 0
      %1002 = vmatpush2.bf16.msra.mxu0 0
      %1003 = vmatprep.subr.bf16.mxu0 0
      %1004 = vmatpush2.bf16.msra.mxu0 0
      %1005 = vmatprep.subr.bf16.mxu0 0
      %1006 = vmatpush2.bf16.msra.mxu0 0
      %1007 = vmatprep.mubr.bf16.mxu0 0
      %1008 = vmatmul.mubr.bf16.gmra.mxu0 %v267
      %v1009 = vpop.f32.mrf.mxu0
      %v1010 = vadd.f32 0.0, %v1009
      %v1011 = vpop.f32.mrf.mxu0
      %v1012 = vpop.f32.mrf.mxu0
      %v1013 = vadd.f32 0.0, %v1012
      %v1014 = vpop.f32.mrf.mxu0
      %1015 = vmatprep.mubr.bf16.mxu0 0
      %1016 = vmatmul.mubr.bf16.gmra.mxu0 %v270
      %v1017 = vpop.f32.mrf.mxu0
      %v1018 = vadd.f32 0.0, %v1017
      %v1019 = vpop.f32.mrf.mxu0
      %v1020 = vpop.f32.mrf.mxu0
      %v1021 = vadd.f32 0.0, %v1020
      %v1022 = vpop.f32.mrf.mxu0
      %1023 = vmatprep.mubr.bf16.mxu0 0
      %1024 = vmatmul.mubr.bf16.gmra.mxu0 %v273
      %v1025 = vpop.f32.mrf.mxu0
      %v1026 = vadd.f32 0.0, %v1025
      %v1027 = vpop.f32.mrf.mxu0
      %v1028 = vpop.f32.mrf.mxu0
      %v1029 = vadd.f32 0.0, %v1028
      %v1030 = vpop.f32.mrf.mxu0
      %1031 = vmatprep.mubr.bf16.mxu0 0
      %1032 = vmatmul.mubr.bf16.gmra.mxu0 %v276
      %v1033 = vpop.f32.mrf.mxu0
      %v1034 = vadd.f32 0.0, %v1033
      %v1035 = vpop.f32.mrf.mxu0
      %v1036 = vpop.f32.mrf.mxu0
      %v1037 = vadd.f32 0.0, %v1036
      %v1038 = vpop.f32.mrf.mxu0
      %1039 = vmatprep.mubr.bf16.mxu0 0
      %1040 = vmatmul.mubr.bf16.gmra.mxu0 %v279
      %v1041 = vpop.f32.mrf.mxu0
      %v1042 = vadd.f32 0.0, %v1041
      %v1043 = vpop.f32.mrf.mxu0
      %v1044 = vpop.f32.mrf.mxu0
      %v1045 = vadd.f32 0.0, %v1044
      %v1046 = vpop.f32.mrf.mxu0
      %1047 = vmatprep.mubr.bf16.mxu0 0
      %1048 = vmatmul.mubr.bf16.gmra.mxu0 %v282
      %v1049 = vpop.f32.mrf.mxu0
      %v1050 = vadd.f32 0.0, %v1049
      %v1051 = vpop.f32.mrf.mxu0
      %v1052 = vpop.f32.mrf.mxu0
      %v1053 = vadd.f32 0.0, %v1052
      %v1054 = vpop.f32.mrf.mxu0
      %1055 = vmatprep.mubr.bf16.mxu0 0
      %1056 = vmatmul.mubr.bf16.gmra.mxu0 %v285
      %v1057 = vpop.f32.mrf.mxu0
      %v1058 = vadd.f32 0.0, %v1057
      %v1059 = vpop.f32.mrf.mxu0
      %v1060 = vpop.f32.mrf.mxu0
      %v1061 = vadd.f32 0.0, %v1060
      %v1062 = vpop.f32.mrf.mxu0
      %1063 = vmatprep.mubr.bf16.mxu0 0
      %1064 = vmatmul.mubr.bf16.gmra.mxu0 %v288
      %v1065 = vpop.f32.mrf.mxu0
      %v1066 = vadd.f32 0.0, %v1065
      %v1067 = vpop.f32.mrf.mxu0
      %v1068 = vpop.f32.mrf.mxu0
      %v1069 = vadd.f32 0.0, %v1068
      %v1070 = vpop.f32.mrf.mxu0
      %1071 = vmatprep.mubr.bf16.mxu0 0
      %1072 = vmatmul.mubr.bf16.gmra.mxu0 %v291
      %v1073 = vpop.f32.mrf.mxu0
      %v1074 = vadd.f32 0.0, %v1073
      %v1075 = vpop.f32.mrf.mxu0
      %v1076 = vpop.f32.mrf.mxu0
      %v1077 = vadd.f32 0.0, %v1076
      %v1078 = vpop.f32.mrf.mxu0
      %1079 = vmatprep.mubr.bf16.mxu0 0
      %1080 = vmatmul.mubr.bf16.gmra.mxu0 %v294
      %v1081 = vpop.f32.mrf.mxu0
      %v1082 = vadd.f32 0.0, %v1081
      %v1083 = vpop.f32.mrf.mxu0
      %v1084 = vpop.f32.mrf.mxu0
      %v1085 = vadd.f32 0.0, %v1084
      %v1086 = vpop.f32.mrf.mxu0
      %1087 = vmatprep.mubr.bf16.mxu0 0
      %1088 = vmatmul.mubr.bf16.gmra.mxu0 %v297
      %v1089 = vpop.f32.mrf.mxu0
      %v1090 = vadd.f32 0.0, %v1089
      %v1091 = vpop.f32.mrf.mxu0
      %v1092 = vpop.f32.mrf.mxu0
      %v1093 = vadd.f32 0.0, %v1092
      %v1094 = vpop.f32.mrf.mxu0
      %1095 = vmatprep.mubr.bf16.mxu0 0
      %1096 = vmatmul.mubr.bf16.gmra.mxu0 %v300
      %v1097 = vpop.f32.mrf.mxu0
      %v1098 = vadd.f32 0.0, %v1097
      %v1099 = vpop.f32.mrf.mxu0
      %v1100 = vpop.f32.mrf.mxu0
      %v1101 = vadd.f32 0.0, %v1100
      %v1102 = vpop.f32.mrf.mxu0
      %1103 = vmatprep.mubr.bf16.mxu0 0
      %1104 = vmatmul.mubr.bf16.gmra.mxu0 %v303
      %v1105 = vpop.f32.mrf.mxu0
      %v1106 = vadd.f32 0.0, %v1105
      %v1107 = vpop.f32.mrf.mxu0
      %v1108 = vpop.f32.mrf.mxu0
      %v1109 = vadd.f32 0.0, %v1108
      %v1110 = vpop.f32.mrf.mxu0
      %1111 = vmatprep.mubr.bf16.mxu0 0
      %1112 = vmatmul.mubr.bf16.gmra.mxu0 %v306
      %v1113 = vpop.f32.mrf.mxu0
      %v1114 = vadd.f32 0.0, %v1113
      %v1115 = vpop.f32.mrf.mxu0
      %v1116 = vpop.f32.mrf.mxu0
      %v1117 = vadd.f32 0.0, %v1116
      %v1118 = vpop.f32.mrf.mxu0
      %1119 = vmatprep.mubr.bf16.mxu0 0
      %1120 = vmatmul.mubr.bf16.gmra.mxu0 %v309
      %v1121 = vpop.f32.mrf.mxu0
      %v1122 = vadd.f32 0.0, %v1121
      %v1123 = vpop.f32.mrf.mxu0
      %v1124 = vpop.f32.mrf.mxu0
      %v1125 = vadd.f32 0.0, %v1124
      %v1126 = vpop.f32.mrf.mxu0
      %1127 = vmatprep.mubr.bf16.mxu0 0
      %1128 = vmatmul.mubr.bf16.gmra.mxu0 %v312
      %v1129 = vpop.f32.mrf.mxu0
      %v1130 = vadd.f32 0.0, %v1129
      %v1131 = vpop.f32.mrf.mxu0
      %v1132 = vpop.f32.mrf.mxu0
      %v1133 = vadd.f32 0.0, %v1132
      %v1134 = vpop.f32.mrf.mxu0
      %1135 = vdwg.mxu0
      %v1136 = vpack.c.bf16 %v1013, %v1010
      %v1137 = vpack.c.bf16 %v1021, %v1018
      %v1138 = vpack.c.bf16 %v1029, %v1026
      %v1139 = vpack.c.bf16 %v1037, %v1034
      %v1140 = vpack.c.bf16 %v1045, %v1042
      %v1141 = vpack.c.bf16 %v1053, %v1050
      %v1142 = vpack.c.bf16 %v1061, %v1058
      %v1143 = vpack.c.bf16 %v1069, %v1066
      %v1144 = vpack.c.bf16 %v1077, %v1074
      %v1145 = vpack.c.bf16 %v1085, %v1082
      %v1146 = vpack.c.bf16 %v1093, %v1090
      %v1147 = vpack.c.bf16 %v1101, %v1098
      %v1148 = vpack.c.bf16 %v1109, %v1106
      %v1149 = vpack.c.bf16 %v1117, %v1114
      %v1150 = vpack.c.bf16 %v1125, %v1122
      %v1151 = vpack.c.bf16 %v1133, %v1130
      %v1168 = vunpack.c.l.b16 %v1136
      %v1169 = vunpack.c.h.b16 %v1136
      %v1170 = vunpack.c.l.b16 %v1137
      %v1171 = vunpack.c.h.b16 %v1137
      %v1172 = vunpack.c.l.b16 %v1138
      %v1173 = vunpack.c.h.b16 %v1138
      %v1174 = vunpack.c.l.b16 %v1139
      %v1175 = vunpack.c.h.b16 %v1139
      %v1176 = vunpack.c.l.b16 %v1140
      %v1177 = vunpack.c.h.b16 %v1140
      %v1178 = vunpack.c.l.b16 %v1141
      %v1179 = vunpack.c.h.b16 %v1141
      %v1180 = vunpack.c.l.b16 %v1142
      %v1181 = vunpack.c.h.b16 %v1142
      %v1182 = vunpack.c.l.b16 %v1143
      %v1183 = vunpack.c.h.b16 %v1143
      %v1184 = vunpack.c.l.b16 %v1144
      %v1185 = vunpack.c.h.b16 %v1144
      %v1186 = vunpack.c.l.b16 %v1145
      %v1187 = vunpack.c.h.b16 %v1145
      %v1188 = vunpack.c.l.b16 %v1146
      %v1189 = vunpack.c.h.b16 %v1146
      %v1190 = vunpack.c.l.b16 %v1147
      %v1191 = vunpack.c.h.b16 %v1147
      %v1192 = vunpack.c.l.b16 %v1148
      %v1193 = vunpack.c.h.b16 %v1148
      %v1194 = vunpack.c.l.b16 %v1149
      %v1195 = vunpack.c.h.b16 %v1149
      %v1196 = vunpack.c.l.b16 %v1150
      %v1197 = vunpack.c.h.b16 %v1150
      %v1198 = vunpack.c.l.b16 %v1151
      %v1199 = vunpack.c.h.b16 %v1151
      %v1200 = vpack.c.b16 %v1168, %v1168
      %v1201 = vpack.c.b16 %v1169, %v1169
      %v1202 = vpack.c.b16 %v1170, %v1170
      %v1203 = vpack.c.b16 %v1171, %v1171
      %v1204 = vpack.c.b16 %v1172, %v1172
      %v1205 = vpack.c.b16 %v1173, %v1173
      %v1206 = vpack.c.b16 %v1174, %v1174
      %v1207 = vpack.c.b16 %v1175, %v1175
      %v1208 = vpack.c.b16 %v1176, %v1176
      %v1209 = vpack.c.b16 %v1177, %v1177
      %v1210 = vpack.c.b16 %v1178, %v1178
      %v1211 = vpack.c.b16 %v1179, %v1179
      %v1212 = vpack.c.b16 %v1180, %v1180
      %v1213 = vpack.c.b16 %v1181, %v1181
      %v1214 = vpack.c.b16 %v1182, %v1182
      %v1215 = vpack.c.b16 %v1183, %v1183
      %v1216 = vpack.c.b16 %v1184, %v1184
      %v1217 = vpack.c.b16 %v1185, %v1185
      %v1218 = vpack.c.b16 %v1186, %v1186
      %v1219 = vpack.c.b16 %v1187, %v1187
      %v1220 = vpack.c.b16 %v1188, %v1188
      %v1221 = vpack.c.b16 %v1189, %v1189
      %v1222 = vpack.c.b16 %v1190, %v1190
      %v1223 = vpack.c.b16 %v1191, %v1191
      %v1224 = vpack.c.b16 %v1192, %v1192
      %v1225 = vpack.c.b16 %v1193, %v1193
      %v1226 = vpack.c.b16 %v1194, %v1194
      %v1227 = vpack.c.b16 %v1195, %v1195
      %v1228 = vpack.c.b16 %v1196, %v1196
      %v1229 = vpack.c.b16 %v1197, %v1197
      %v1230 = vpack.c.b16 %v1198, %v1198
      %v1231 = vpack.c.b16 %v1199, %v1199
      %1264 = vst.msk [vmem:[%s143 + $0x100] sm:$0xf] %vm603, %v1200
      %1265 = vst.msk [vmem:[%s143 + $0x104] sm:$0xf] %vm603, %v1201
      %1266 = vst.msk [vmem:[%s143 + $0x108] sm:$0xf] %vm603, %v1202
      %1267 = vst.msk [vmem:[%s143 + $0x10c] sm:$0xf] %vm603, %v1203
      %1268 = vst.msk [vmem:[%s143 + $0x110] sm:$0xf] %vm603, %v1204
      %1269 = vst.msk [vmem:[%s143 + $0x114] sm:$0xf] %vm603, %v1205
      %1270 = vst.msk [vmem:[%s143 + $0x118] sm:$0xf] %vm603, %v1206
      %1271 = vst.msk [vmem:[%s143 + $0x11c] sm:$0xf] %vm603, %v1207
      %1272 = vst.msk [vmem:[%s143 + $0x120] sm:$0xf] %vm603, %v1208
      %1273 = vst.msk [vmem:[%s143 + $0x124] sm:$0xf] %vm603, %v1209
      %1274 = vst.msk [vmem:[%s143 + $0x128] sm:$0xf] %vm603, %v1210
      %1275 = vst.msk [vmem:[%s143 + $0x12c] sm:$0xf] %vm603, %v1211
      %1276 = vst.msk [vmem:[%s143 + $0x130] sm:$0xf] %vm603, %v1212
      %1277 = vst.msk [vmem:[%s143 + $0x134] sm:$0xf] %vm603, %v1213
      %1278 = vst.msk [vmem:[%s143 + $0x138] sm:$0xf] %vm603, %v1214
      %1279 = vst.msk [vmem:[%s143 + $0x13c] sm:$0xf] %vm603, %v1215
      %1280 = vst.msk [vmem:[%s143 + $0x140] sm:$0xf] %vm603, %v1216
      %1281 = vst.msk [vmem:[%s143 + $0x144] sm:$0xf] %vm603, %v1217
      %1282 = vst.msk [vmem:[%s143 + $0x148] sm:$0xf] %vm603, %v1218
      %1283 = vst.msk [vmem:[%s143 + $0x14c] sm:$0xf] %vm603, %v1219
      %1284 = vst.msk [vmem:[%s143 + $0x150] sm:$0xf] %vm603, %v1220
      %1285 = vst.msk [vmem:[%s143 + $0x154] sm:$0xf] %vm603, %v1221
      %1286 = vst.msk [vmem:[%s143 + $0x158] sm:$0xf] %vm603, %v1222
      %1287 = vst.msk [vmem:[%s143 + $0x15c] sm:$0xf] %vm603, %v1223
      %1288 = vst.msk [vmem:[%s143 + $0x160] sm:$0xf] %vm603, %v1224
      %1289 = vst.msk [vmem:[%s143 + $0x164] sm:$0xf] %vm603, %v1225
      %1290 = vst.msk [vmem:[%s143 + $0x168] sm:$0xf] %vm603, %v1226
      %1291 = vst.msk [vmem:[%s143 + $0x16c] sm:$0xf] %vm603, %v1227
      %1292 = vst.msk [vmem:[%s143 + $0x170] sm:$0xf] %vm603, %v1228
      %1293 = vst.msk [vmem:[%s143 + $0x174] sm:$0xf] %vm603, %v1229
      %1294 = vst.msk [vmem:[%s143 + $0x178] sm:$0xf] %vm603, %v1230
      %1295 = vst.msk [vmem:[%s143 + $0x17c] sm:$0xf] %vm603, %v1231
      %p1296 = scmp.lt.s32.totalorder %s13, 3
      %s1297 = scalar_select %p1296, %s13, 3
      %s1298 = smul.addr %s1297, 96
      %s1299 = smul.addr %s1298, 4
      %s1300 = scalar_lea.vmem %s2, %s1299
      // Predicated region
      $region29: #{_lambda_.10} parent=27 // pred_check
        %p1301 = pneg %p78
      $region30: #{_lambda_.10} parent=27 // pred_check_branch
        %1303 = sbr.rel (%p1301) target = $region32
      $region31: #{_lambda_.10} parent=27 // pred_region
        _
      $region32: #{_lambda_.10} parent=27 // pred_fallthru
        _
    $region28: #{_lambda_.10} parent=5 // pred_fallthru
      _
    %p1304 = scmp.le.s32.totalorder 2, %s8
    // Predicated region
    $region33: #{_lambda_.10} parent=5 // pred_check
      %p1305 = pneg %p1304
    $region34: #{_lambda_.10} parent=5 // pred_check_branch
      %1307 = sbr.rel (%p1305) target = $region36
    $region35: #{_lambda_.10} parent=5 // pred_region
      %s1308 = ssub.s32 %s8, 2
      // Predicated region
      $region37: #{_lambda_.10} parent=35 // pred_check
        %p1309 = pneg %p84
      $region38: #{_lambda_.10} parent=35 // pred_check_branch
        %1311 = sbr.rel (%p1309) target = $region40
      $region39: #{_lambda_.10} parent=35 // pred_region
        %p1312 = scmp.lt.s32.totalorder %s14, 3
        %s1313 = scalar_select %p1312, %s14, 3
        %s1314 = smul.addr %s1313, 96
        %s1315 = smul.addr %s1314, 4
        %s1316 = scalar_lea.vmem %s2, %s1315
      $region40: #{_lambda_.10} parent=35 // pred_fallthru
        _
    $region36: #{_lambda_.10} parent=5 // pred_fallthru
      _
  $region6: #{_lambda_.10} parent=0 // loop_footer
    %s12 = sadd.s32 1, %s8
  $region7: #{_lambda_.10} parent=0 // loop_footer_branch
    %7 = sbr.rel target = $region3
  $region8: #{_lambda_.10} parent=0 // loop_exit
    _

// kernel: _lambda_.11
$region0: #{_lambda_.11}
  #allocation0 [shape = 'u32[]', space=smem, size = 0x4, offset = 0x4, fixed_abs, tag = 'smem constant byte address 0x4 - core index']
  #allocation1 [shape = 'u32[144,128]{1,0:T(1,128)}', space=vmem, size = 0x12000, scoped, tag = 'internal scratch']
  #allocation2 [shape = 'bf16[16,384]{1,0:T(8,128)(2,1)}', space=vmem, size = 0x3000, scoped, tag = 'scratch operand']
  %s0 = inlined_call_operand.vmem [shape: bf16[4,48,256], index: 0, kind: input, shape index: {}]
  %s1 = inlined_call_operand.vmem [shape: bf16[16,48], index: 1, kind: input, shape index: {}]
  %s2 = inlined_call_operand.vmem [shape: f32[16,1], index: 2, kind: input, shape index: {}]
  %s3 = inlined_call_operand.vmem [shape: f32[16,1], index: 3, kind: input, shape index: {}]
  %s4 = inlined_call_operand.vmem [shape: bf16[9,16,16], index: 4, kind: input, shape index: {}]
  %s5 = inlined_call_operand.vmem [shape: f32[16,1], index: 5, kind: input, shape index: {}]
  %s6 = inlined_call_operand.vmem [shape: f32[16,1], index: 6, kind: input, shape index: {}]
  %s7 = inlined_call_operand.vmem [shape: bf16[4,16,256], index: 7, kind: input, shape index: {}]
  %s8 = inlined_call_operand.vmem [shape: bf16[4,16,256], index: 8, kind: output, shape index: {}]
  %s9 = sld [smem:[#allocation0]]
  $region65: #{_lambda_.11} parent=0
    _
  %s11 = ssub.s32 1, %s9
  %s12 = scalar_select 0, %s11, %s9
  loop: start=0, step=1, limit=6
  $region2: #{_lambda_.11} parent=0 // loop_pre_header
    _
  $region3: #{_lambda_.11} parent=0 // loop_header
    %s14 = sphi 0, %s18
    %p15 = scmp.ge.s32.totalorder %s14, 6
    %s24 = sphi 0, %s26
    %s27 = sphi 0, %s24
    %s28 = sphi 0, %s27
    %s44 = sphi 0, %s28
    %s48 = sphi 0, %s48
    %s50 = sphi 0, %s48
    %s51 = sphi 0, %s50
    %s65 = sphi 0, %s51
    %s69 = sphi 0, %s69
    %s71 = sphi 0, %s69
    %s72 = sphi 0, %s71
    %s86 = sphi 0, %s72
    %s90 = sphi 0, %s90
    %s92 = sphi 0, %s90
    %s93 = sphi 0, %s92
    %s107 = sphi 0, %s93
    %s111 = sphi 0, %s111
    %s113 = sphi 0, %s111
    %s114 = sphi 0, %s113
    %s128 = sphi 0, %s114
    %s132 = sphi 0, %s132
    %s134 = sphi 0, %s132
    %s135 = sphi 0, %s134
    %s149 = sphi 0, %s135
    %s153 = sphi 0, %s153
    %s155 = sphi 0, %s153
    %s156 = sphi 0, %s155
    %s170 = sphi 0, %s156
    %s176 = sphi 0, %s178
    %s179 = sphi 0, %s176
    %s180 = sphi 0, %s179
    %s196 = sphi 0, %s180
    %s202 = sphi 0, %s204
    %s205 = sphi 0, %s202
    %s206 = sphi 0, %s205
    %s222 = sphi 0, %s206
  $region4: #{_lambda_.11} parent=0 // loop_header_branch
    %17 = sbr.rel (%p15) target = $region8
  $region5: #{_lambda_.11} parent=0 // loop_body
    %s19 = ssub.s32 %s14, 1
    %s20 = ssub.s32 %s14, 2
    %s21 = sadd.s32 %s14, 1
    %s22 = ssub.s32 %s14, %s21
    %p23 = scmp.eq.s32.totalorder %s22, 0
    %s25 = sadd.s32 %s24, 1
    %s26 = scalar_select %p23, %s24, %s25
    %p29 = pneg %p23
    %p30 = scmp.eq.s32.totalorder %s14, 3
    %p31 = por %p29, %p30
    %p32 = scmp.ne.s32.totalorder %s24, %s27
    %p33 = scmp.eq.s32.totalorder %s14, 0
    %p34 = por %p32, %p33
    %p35 = scmp.ne.s32.totalorder %s24, %s27
    %p36 = scmp.eq.s32.totalorder %s19, 3
    %p37 = por %p35, %p36
    %p38 = scmp.ne.s32.totalorder %s27, %s28
    %p39 = scmp.eq.s32.totalorder %s19, 0
    %p40 = por %p38, %p39
    %p41 = scmp.ne.s32.totalorder %s27, %s28
    %p42 = scmp.eq.s32.totalorder %s20, 3
    %p43 = por %p41, %p42
    %p45 = scmp.ne.s32.totalorder %s28, %s44
    %p46 = scmp.eq.s32.totalorder %s20, 0
    %p47 = por %p45, %p46
    %s49 = sadd.s32 %s48, 1
    %p52 = scmp.eq.s32.totalorder %s14, 3
    %p53 = scmp.ne.s32.totalorder %s48, %s50
    %p54 = scmp.eq.s32.totalorder %s14, 0
    %p55 = por %p53, %p54
    %p56 = scmp.ne.s32.totalorder %s48, %s50
    %p57 = scmp.eq.s32.totalorder %s19, 3
    %p58 = por %p56, %p57
    %p59 = scmp.ne.s32.totalorder %s50, %s51
    %p60 = scmp.eq.s32.totalorder %s19, 0
    %p61 = por %p59, %p60
    %p62 = scmp.ne.s32.totalorder %s50, %s51
    %p63 = scmp.eq.s32.totalorder %s20, 3
    %p64 = por %p62, %p63
    %p66 = scmp.ne.s32.totalorder %s51, %s65
    %p67 = scmp.eq.s32.totalorder %s20, 0
    %p68 = por %p66, %p67
    %s70 = sadd.s32 %s69, 1
    %p73 = scmp.eq.s32.totalorder %s14, 3
    %p74 = scmp.ne.s32.totalorder %s69, %s71
    %p75 = scmp.eq.s32.totalorder %s14, 0
    %p76 = por %p74, %p75
    %p77 = scmp.ne.s32.totalorder %s69, %s71
    %p78 = scmp.eq.s32.totalorder %s19, 3
    %p79 = por %p77, %p78
    %p80 = scmp.ne.s32.totalorder %s71, %s72
    %p81 = scmp.eq.s32.totalorder %s19, 0
    %p82 = por %p80, %p81
    %p83 = scmp.ne.s32.totalorder %s71, %s72
    %p84 = scmp.eq.s32.totalorder %s20, 3
    %p85 = por %p83, %p84
    %p87 = scmp.ne.s32.totalorder %s72, %s86
    %p88 = scmp.eq.s32.totalorder %s20, 0
    %p89 = por %p87, %p88
    %s91 = sadd.s32 %s90, 1
    %p94 = scmp.eq.s32.totalorder %s14, 3
    %p95 = scmp.ne.s32.totalorder %s90, %s92
    %p96 = scmp.eq.s32.totalorder %s14, 0
    %p97 = por %p95, %p96
    %p98 = scmp.ne.s32.totalorder %s90, %s92
    %p99 = scmp.eq.s32.totalorder %s19, 3
    %p100 = por %p98, %p99
    %p101 = scmp.ne.s32.totalorder %s92, %s93
    %p102 = scmp.eq.s32.totalorder %s19, 0
    %p103 = por %p101, %p102
    %p104 = scmp.ne.s32.totalorder %s92, %s93
    %p105 = scmp.eq.s32.totalorder %s20, 3
    %p106 = por %p104, %p105
    %p108 = scmp.ne.s32.totalorder %s93, %s107
    %p109 = scmp.eq.s32.totalorder %s20, 0
    %p110 = por %p108, %p109
    %s112 = sadd.s32 %s111, 1
    %p115 = scmp.eq.s32.totalorder %s14, 3
    %p116 = scmp.ne.s32.totalorder %s111, %s113
    %p117 = scmp.eq.s32.totalorder %s14, 0
    %p118 = por %p116, %p117
    %p119 = scmp.ne.s32.totalorder %s111, %s113
    %p120 = scmp.eq.s32.totalorder %s19, 3
    %p121 = por %p119, %p120
    %p122 = scmp.ne.s32.totalorder %s113, %s114
    %p123 = scmp.eq.s32.totalorder %s19, 0
    %p124 = por %p122, %p123
    %p125 = scmp.ne.s32.totalorder %s113, %s114
    %p126 = scmp.eq.s32.totalorder %s20, 3
    %p127 = por %p125, %p126
    %p129 = scmp.ne.s32.totalorder %s114, %s128
    %p130 = scmp.eq.s32.totalorder %s20, 0
    %p131 = por %p129, %p130
    %s133 = sadd.s32 %s132, 1
    %p136 = scmp.eq.s32.totalorder %s14, 3
    %p137 = scmp.ne.s32.totalorder %s132, %s134
    %p138 = scmp.eq.s32.totalorder %s14, 0
    %p139 = por %p137, %p138
    %p140 = scmp.ne.s32.totalorder %s132, %s134
    %p141 = scmp.eq.s32.totalorder %s19, 3
    %p142 = por %p140, %p141
    %p143 = scmp.ne.s32.totalorder %s134, %s135
    %p144 = scmp.eq.s32.totalorder %s19, 0
    %p145 = por %p143, %p144
    %p146 = scmp.ne.s32.totalorder %s134, %s135
    %p147 = scmp.eq.s32.totalorder %s20, 3
    %p148 = por %p146, %p147
    %p150 = scmp.ne.s32.totalorder %s135, %s149
    %p151 = scmp.eq.s32.totalorder %s20, 0
    %p152 = por %p150, %p151
    %s154 = sadd.s32 %s153, 1
    %p157 = scmp.eq.s32.totalorder %s14, 3
    %p158 = scmp.ne.s32.totalorder %s153, %s155
    %p159 = scmp.eq.s32.totalorder %s14, 0
    %p160 = por %p158, %p159
    %p161 = scmp.ne.s32.totalorder %s153, %s155
    %p162 = scmp.eq.s32.totalorder %s19, 3
    %p163 = por %p161, %p162
    %p164 = scmp.ne.s32.totalorder %s155, %s156
    %p165 = scmp.eq.s32.totalorder %s19, 0
    %p166 = por %p164, %p165
    %p167 = scmp.ne.s32.totalorder %s155, %s156
    %p168 = scmp.eq.s32.totalorder %s20, 3
    %p169 = por %p167, %p168
    %p171 = scmp.ne.s32.totalorder %s156, %s170
    %p172 = scmp.eq.s32.totalorder %s20, 0
    %p173 = por %p171, %p172
    %s174 = ssub.s32 %s14, %s21
    %p175 = scmp.eq.s32.totalorder %s174, 0
    %s177 = sadd.s32 %s176, 1
    %s178 = scalar_select %p175, %s176, %s177
    %p181 = pneg %p175
    %p182 = scmp.eq.s32.totalorder %s14, 3
    %p183 = por %p181, %p182
    %p184 = scmp.ne.s32.totalorder %s176, %s179
    %p185 = scmp.eq.s32.totalorder %s14, 0
    %p186 = por %p184, %p185
    %p187 = scmp.ne.s32.totalorder %s176, %s179
    %p188 = scmp.eq.s32.totalorder %s19, 3
    %p189 = por %p187, %p188
    %p190 = scmp.ne.s32.totalorder %s179, %s180
    %p191 = scmp.eq.s32.totalorder %s19, 0
    %p192 = por %p190, %p191
    %p193 = scmp.ne.s32.totalorder %s179, %s180
    %p194 = scmp.eq.s32.totalorder %s20, 3
    %p195 = por %p193, %p194
    %p197 = scmp.ne.s32.totalorder %s180, %s196
    %p198 = scmp.eq.s32.totalorder %s20, 0
    %p199 = por %p197, %p198
    %s200 = ssub.s32 %s14, %s21
    %p201 = scmp.eq.s32.totalorder %s200, 0
    %s203 = sadd.s32 %s202, 1
    %s204 = scalar_select %p201, %s202, %s203
    %p207 = pneg %p201
    %p208 = scmp.eq.s32.totalorder %s14, 3
    %p209 = por %p207, %p208
    %p210 = scmp.ne.s32.totalorder %s202, %s205
    %p211 = scmp.eq.s32.totalorder %s14, 0
    %p212 = por %p210, %p211
    %p213 = scmp.ne.s32.totalorder %s202, %s205
    %p214 = scmp.eq.s32.totalorder %s19, 3
    %p215 = por %p213, %p214
    %p216 = scmp.ne.s32.totalorder %s205, %s206
    %p217 = scmp.eq.s32.totalorder %s19, 0
    %p218 = por %p216, %p217
    %p219 = scmp.ne.s32.totalorder %s205, %s206
    %p220 = scmp.eq.s32.totalorder %s20, 3
    %p221 = por %p219, %p220
    %p223 = scmp.ne.s32.totalorder %s206, %s222
    %p224 = scmp.eq.s32.totalorder %s20, 0
    %p225 = por %p223, %p224
    %p226 = scmp.le.s32.totalorder 1, %s14
    %p227 = scmp.lt.s32.totalorder %s14, 5
    %p228 = pnand %p226, %p227
    %p229 = pneg %p228
    // Predicated region
    $region9: #{_lambda_.11} parent=5 // pred_check
      _
    $region10: #{_lambda_.11} parent=5 // pred_check_branch
      %231 = sbr.rel (%p228) target = $region12
    $region11: #{_lambda_.11} parent=5 // pred_region
      %s232 = ssub.s32 %s14, 1
      // Predicated region
      $region13: #{_lambda_.11} parent=11 // pred_check
        %p233 = pneg %p61
      $region14: #{_lambda_.11} parent=11 // pred_check_branch
        %235 = sbr.rel (%p233) target = $region16
      $region15: #{_lambda_.11} parent=11 // pred_region
        _
      $region16: #{_lambda_.11} parent=11 // pred_fallthru
        _
      // Predicated region
      $region17: #{_lambda_.11} parent=11 // pred_check
        %p236 = pneg %p82
      $region18: #{_lambda_.11} parent=11 // pred_check_branch
        %238 = sbr.rel (%p236) target = $region20
      $region19: #{_lambda_.11} parent=11 // pred_region
        _
      $region20: #{_lambda_.11} parent=11 // pred_fallthru
        _
      // Predicated region
      $region21: #{_lambda_.11} parent=11 // pred_check
        %p239 = pneg %p103
      $region22: #{_lambda_.11} parent=11 // pred_check_branch
        %241 = sbr.rel (%p239) target = $region24
      $region23: #{_lambda_.11} parent=11 // pred_region
        _
      $region24: #{_lambda_.11} parent=11 // pred_fallthru
        _
      // Predicated region
      $region25: #{_lambda_.11} parent=11 // pred_check
        %p242 = pneg %p124
      $region26: #{_lambda_.11} parent=11 // pred_check_branch
        %244 = sbr.rel (%p242) target = $region28
      $region27: #{_lambda_.11} parent=11 // pred_region
        _
      $region28: #{_lambda_.11} parent=11 // pred_fallthru
        _
      // Predicated region
      $region29: #{_lambda_.11} parent=11 // pred_check
        %p245 = pneg %p145
      $region30: #{_lambda_.11} parent=11 // pred_check_branch
        %247 = sbr.rel (%p245) target = $region32
      $region31: #{_lambda_.11} parent=11 // pred_region
        _
      $region32: #{_lambda_.11} parent=11 // pred_fallthru
        _
      // Predicated region
      $region33: #{_lambda_.11} parent=11 // pred_check
        %p248 = pneg %p166
      $region34: #{_lambda_.11} parent=11 // pred_check_branch
        %250 = sbr.rel (%p248) target = $region36
      $region35: #{_lambda_.11} parent=11 // pred_region
        _
      $region36: #{_lambda_.11} parent=11 // pred_fallthru
        _
    $region12: #{_lambda_.11} parent=5 // pred_fallthru
      _
    %p251 = scmp.lt.s32.totalorder %s14, 4
    // Predicated region
    $region37: #{_lambda_.11} parent=5 // pred_check
      %p252 = pneg %p251
    $region38: #{_lambda_.11} parent=5 // pred_check_branch
      %254 = sbr.rel (%p252) target = $region40
    $region39: #{_lambda_.11} parent=5 // pred_region
      // Predicated region
      $region41: #{_lambda_.11} parent=39 // pred_check
        %p255 = pneg %p34
      $region42: #{_lambda_.11} parent=39 // pred_check_branch
        %257 = sbr.rel (%p255) target = $region44
      $region43: #{_lambda_.11} parent=39 // pred_region
        %p258 = scmp.lt.s32.totalorder %s14, 3
        %s259 = scalar_select %p258, %s14, 3
        %s260 = smul.addr %s259, 12
        %s261 = smul.addr %s260, 4
        %s262 = scalar_lea.vmem %s0, %s261
      $region44: #{_lambda_.11} parent=39 // pred_fallthru
        _
      // Predicated region
      $region45: #{_lambda_.11} parent=39 // pred_check
        %p263 = pneg %p186
      $region46: #{_lambda_.11} parent=39 // pred_check_branch
        %265 = sbr.rel (%p263) target = $region48
      $region47: #{_lambda_.11} parent=39 // pred_region
        %p266 = scmp.lt.s32.totalorder %s14, 3
        %s267 = scalar_select %p266, %s14, 3
        %s268 = smul.addr %s267, 4
        %s269 = smul.addr %s268, 4
        %s270 = scalar_lea.vmem %s7, %s269
      $region48: #{_lambda_.11} parent=39 // pred_fallthru
        _
    $region40: #{_lambda_.11} parent=5 // pred_fallthru
      _
    %p271 = scmp.le.s32.totalorder 1, %s14
    %p272 = scmp.lt.s32.totalorder %s14, 5
    %p273 = pnand %p271, %p272
    %p274 = pneg %p273
    // Predicated region
    $region49: #{_lambda_.11} parent=5 // pred_check
      _
    $region50: #{_lambda_.11} parent=5 // pred_check_branch
      %276 = sbr.rel (%p273) target = $region52
    $region51: #{_lambda_.11} parent=5 // pred_region
      %s277 = ssub.s32 %s14, 1
      %p278 = scmp.lt.s32.totalorder %s19, 3
      %s279 = scalar_select %p278, %s19, 3
      %s280 = smul.addr %s279, 12
      %s281 = smul.addr %s280, 4
      %s282 = scalar_lea.vmem %s0, %s281
      %p283 = pneg %p40
      %p284 = pneg %p37
      %p285 = pneg %p61
      %p286 = pneg %p58
      %p287 = pneg %p82
      %p288 = pneg %p79
      %p289 = pneg %p103
      %p290 = pneg %p100
      %p291 = pneg %p124
      %p292 = pneg %p121
      %p293 = pneg %p145
      %p294 = pneg %p142
      %p295 = pneg %p166
      %p296 = pneg %p163
      %p297 = scmp.lt.s32.totalorder %s19, 3
      %s298 = scalar_select %p297, %s19, 3
      %s299 = smul.addr %s298, 4
      %s300 = smul.addr %s299, 4
      %s301 = scalar_lea.vmem %s7, %s300
      %p302 = pneg %p192
      %p303 = pneg %p189
      %p304 = pneg %p218
      %p305 = pneg %p215
      %p306 = scmp.lt.s32.totalorder %s19, 3
      %s307 = scalar_select %p306, %s19, 3
      %s308 = smul.addr %s307, 4
      %s309 = smul.addr %s308, 4
      %s310 = scalar_lea.vmem %s8, %s309
      %p311 = scmp.lt.s32.totalorder %s19, 3
      %s312 = scalar_select %p311, %s19, 3
      %s313 = smul.addr %s312, 12
      %s314 = smul.addr %s313, 4
      %s315 = scalar_lea.vmem %s0, %s314
      %p316 = scmp.lt.s32.totalorder %s19, 3
      %s317 = scalar_select %p316, %s19, 3
      %s318 = smul.addr %s317, 4
      %s319 = smul.addr %s318, 4
      %s320 = scalar_lea.vmem %s7, %s319
      %p321 = scmp.lt.s32.totalorder %s19, 3
      %s322 = scalar_select %p321, %s19, 3
      %s323 = smul.addr %s322, 4
      %s324 = smul.addr %s323, 4
      %s325 = scalar_lea.vmem %s8, %s324
      %v327 = vld [vmem:[%s315] sm:$0xff]
      %v328 = vld [vmem:[%s315 + $0x8] sm:$0xff]
      %v329 = vld [vmem:[%s315 + $0x10] sm:$0xff]
      %v330 = vld [vmem:[%s315 + $0x18] sm:$0xff]
      %v331 = vld [vmem:[%s315 + $0x20] sm:$0xff]
      %v332 = vld [vmem:[%s315 + $0x28] sm:$0xff]
      %v333 = vld [vmem:[%s1] sm:$0xf]
      %v334 = vld [vmem:[%s1 + $0x4] sm:$0xf]
      %v337 = vunpack.c.l.b16 %v333
      %v338 = vunpack.c.l.b16 %v334
      %v339 = vpack.c.b16 %v338, %v337
      %v346 = vunpack.c.l.b16 %v327
      %v347 = vunpack.c.h.b16 %v327
      %v348 = vunpack.c.l.b16 %v328
      %v349 = vunpack.c.h.b16 %v328
      %v350 = vunpack.c.l.b16 %v329
      %v351 = vunpack.c.h.b16 %v329
      %v352 = vunpack.c.l.b16 %v330
      %v353 = vunpack.c.h.b16 %v330
      %v354 = vunpack.c.l.b16 %v331
      %v355 = vunpack.c.h.b16 %v331
      %v356 = vunpack.c.l.b16 %v332
      %v357 = vunpack.c.h.b16 %v332
      %v358 = vpack.c.b16 %v348, %v346
      %v359 = vpack.c.b16 %v349, %v347
      %v360 = vpack.c.b16 %v352, %v350
      %v361 = vpack.c.b16 %v353, %v351
      %v362 = vpack.c.b16 %v356, %v354
      %v363 = vpack.c.b16 %v357, %v355
      %vm370 = vcmask 392192
      %v372 = vsel %vm370, %v339, 0
      %374 = vmatprep.subr.bf16.mxu0 0
      %375 = vmatpush1.bf16.msra.mxu0 0
      %376 = vmatprep.subr.bf16.mxu0 0
      %377 = vmatpush1.bf16.msra.mxu0 0
      %378 = vmatprep.subr.bf16.mxu0 0
      %379 = vmatpush1.bf16.msra.mxu0 0
      %380 = vmatprep.subr.bf16.mxu0 0
      %381 = vmatpush1.bf16.msra.mxu0 0
      %382 = vmatprep.subr.bf16.mxu0 0
      %383 = vmatpush1.bf16.msra.mxu0 0
      %384 = vmatprep.subr.bf16.mxu0 %v363
      %385 = vmatpush1.bf16.msra.mxu0 %v362
      %386 = vmatprep.subr.bf16.mxu0 %v361
      %387 = vmatpush1.bf16.msra.mxu0 %v360
      %388 = vmatprep.subr.bf16.mxu0 %v359
      %389 = vmatpush1.bf16.msra.mxu0 %v358
      %390 = vmatprep.subr.bf16.mxu0 0
      %391 = vmatpush2.bf16.msra.mxu0 0
      %392 = vmatprep.subr.bf16.mxu0 0
      %393 = vmatpush2.bf16.msra.mxu0 0
      %394 = vmatprep.subr.bf16.mxu0 0
      %395 = vmatpush2.bf16.msra.mxu0 0
      %396 = vmatprep.subr.bf16.mxu0 0
      %397 = vmatpush2.bf16.msra.mxu0 0
      %398 = vmatprep.subr.bf16.mxu0 0
      %399 = vmatpush2.bf16.msra.mxu0 0
      %400 = vmatprep.subr.bf16.mxu0 0
      %401 = vmatpush2.bf16.msra.mxu0 0
      %402 = vmatprep.subr.bf16.mxu0 0
      %403 = vmatpush2.bf16.msra.mxu0 0
      %404 = vmatprep.subr.bf16.mxu0 0
      %405 = vmatpush2.bf16.msra.mxu0 0
      %406 = vmatprep.mubr.bf16.mxu0 0
      %407 = vmatmul.mubr.bf16.gmra.mxu0 %v372
      %v408 = vpop.f32.mrf.mxu0
      %v409 = vadd.f32 0.0, %v408
      %v410 = vpop.f32.mrf.mxu0
      %v411 = vadd.f32 0.0, %v410
      %v412 = vpop.f32.mrf.mxu0
      %v413 = vadd.f32 0.0, %v412
      %v414 = vpop.f32.mrf.mxu0
      %v415 = vadd.f32 0.0, %v414
      %416 = vdwg.mxu0
      %v417 = vld [vmem:[%s2] sm:$0xff]
      %v418 = vld [vmem:[%s2 + $0x8] sm:$0xff]
      %420 = vset.pattern.permute.xlu0 0
      %421 = vperm.xlu0 %420, %v417
      %v422 = vpop.permute.xlu0 %421
      %425 = vset.pattern.permute.xlu0 0
      %426 = vperm.xlu0 %425, %v418
      %v427 = vpop.permute.xlu0 %426
      %v429 = vmul.f32 %v409, %v422
      %v430 = vmul.f32 %v411, %v422
      %v431 = vmul.f32 %v413, %v427
      %v432 = vmul.f32 %v415, %v427
      %v433 = vld [vmem:[%s3] sm:$0xff]
      %v434 = vld [vmem:[%s3 + $0x8] sm:$0xff]
      %436 = vset.pattern.permute.xlu0 0
      %437 = vperm.xlu0 %436, %v433
      %v438 = vpop.permute.xlu0 %437
      %441 = vset.pattern.permute.xlu0 0
      %442 = vperm.xlu0 %441, %v434
      %v443 = vpop.permute.xlu0 %442
      %v445 = vadd.f32 %v429, %v438
      %v446 = vadd.f32 %v430, %v438
      %v447 = vadd.f32 %v431, %v443
      %v448 = vadd.f32 %v432, %v443
      %v449 = vmax.f32 %v445, 0.0
      %v450 = vmax.f32 %v446, 0.0
      %v451 = vmax.f32 %v447, 0.0
      %v452 = vmax.f32 %v448, 0.0
      %v453 = vpack.c.bf16 %v451, %v449
      %v454 = vpack.c.bf16 %v452, %v450
      %vm455 = vcmask 519168
      %456 = vst.msk [vmem:[#allocation2] sm:$0xf] %vm455, 0
      %457 = vst.msk [vmem:[#allocation2 + $0xc] sm:$0xf] %vm455, 0
      %vm458 = vcmask 1043968
      %459 = vst.msk [vmem:[#allocation2 + $0x8] sm:$0xf] %vm458, 0
      %460 = vst.msk [vmem:[#allocation2 + $0x14] sm:$0xf] %vm458, 0
      %v463 = vunpack.c.l.b16 %v453
      %v464 = vunpack.c.l.b16 %v454
      %v465 = vunpack.c.h.b16 %v453
      %v466 = vunpack.c.h.b16 %v454
      %v467 = vpack.c.b16 %v464, %v463
      %v468 = vpack.c.b16 %v466, %v465
      %469 = vrot.lane.b32.xlu0 %v467, 64
      %v470 = vpop.permute.xlu0 %469
      %471 = vrot.lane.b32.xlu0 %v468, 64
      %v472 = vpop.permute.xlu0 %471
      %v473 = vrot.slane %v470, 4
      %v474 = vrot.slane %v472, 4
      %vm475 = vcmask 523264
      %v476 = vsel %vm475, %v473, %v470
      %v477 = vsel %vm475, %v474, %v472
      %vm482 = vcmask 1047556
      %vm483 = vmor %vm482, %vm458
      %484 = vst.msk [vmem:[#allocation2] sm:$0xff] %vm483, %v476
      %485 = vst.msk [vmem:[#allocation2 + $0x8] sm:$0xf] %vm455, %v473
      %486 = vst.msk [vmem:[#allocation2 + $0xc] sm:$0xff] %vm483, %v477
      %487 = vst.msk [vmem:[#allocation2 + $0x14] sm:$0xf] %vm455, %v474
      %v488 = vld [vmem:[#allocation2] sm:$0xff]
      %v489 = vld [vmem:[#allocation2 + $0xc] sm:$0xff]
      %v490 = vld [vmem:[%s4] sm:$0xf]
      %v491 = vld [vmem:[%s4 + $0x4] sm:$0xf]
      %v492 = vld [vmem:[#allocation2] sm:$0xff]
      %v493 = vld [vmem:[#allocation2 + $0x8] sm:$0xf]
      %v494 = vld [vmem:[#allocation2 + $0xc] sm:$0xff]
      %v495 = vld [vmem:[#allocation2 + $0x14] sm:$0xf]
      %s496 = scalar_lea.vmem %s4, 8
      %v497 = vld [vmem:[%s496] sm:$0xf]
      %v498 = vld [vmem:[%s496 + $0x4] sm:$0xf]
      %v501 = vunpack.c.l.b16 %v497
      %v502 = vunpack.c.l.b16 %v498
      %v503 = vpack.c.b16 %v502, %v501
      %v508 = vunpack.c.l.b16 %v492
      %v509 = vunpack.c.h.b16 %v492
      %v510 = vunpack.c.l.b16 %v493
      %v511 = vunpack.c.l.b16 %v494
      %v512 = vunpack.c.h.b16 %v494
      %v513 = vunpack.c.l.b16 %v495
      %v514 = vpack.c.b16 %v511, %v508
      %v515 = vpack.c.b16 %v512, %v509
      %v516 = vpack.c.b16 %v513, %v510
      %517 = vrot.lane.b32.xlu0 %v514, 112
      %v518 = vpop.permute.xlu0 %517
      %519 = vrot.lane.b32.xlu0 %v515, 112
      %v520 = vpop.permute.xlu0 %519
      %521 = vrot.lane.b32.xlu0 %v516, 112
      %v522 = vpop.permute.xlu0 %521
      %vm523 = vcmask 916480
      %v524 = vsel %vm523, %v518, %v520
      %v525 = vsel %vm523, %v520, %v522
      %vm528 = vcmask 130048
      %v530 = vsel %vm528, %v503, 0
      %532 = vmatprep.subr.bf16.mxu0 0
      %533 = vmatpush1.bf16.msra.mxu0 0
      %534 = vmatprep.subr.bf16.mxu0 0
      %535 = vmatpush1.bf16.msra.mxu0 0
      %536 = vmatprep.subr.bf16.mxu0 0
      %537 = vmatpush1.bf16.msra.mxu0 0
      %538 = vmatprep.subr.bf16.mxu0 0
      %539 = vmatpush1.bf16.msra.mxu0 0
      %540 = vmatprep.subr.bf16.mxu0 0
      %541 = vmatpush1.bf16.msra.mxu0 0
      %542 = vmatprep.subr.bf16.mxu0 0
      %543 = vmatpush1.bf16.msra.mxu0 0
      %544 = vmatprep.subr.bf16.mxu0 0
      %545 = vmatpush1.bf16.msra.mxu0 0
      %546 = vmatprep.subr.bf16.mxu0 %v525
      %547 = vmatpush1.bf16.msra.mxu0 %v524
      %548 = vmatprep.subr.bf16.mxu0 0
      %549 = vmatpush2.bf16.msra.mxu0 0
      %550 = vmatprep.subr.bf16.mxu0 0
      %551 = vmatpush2.bf16.msra.mxu0 0
      %552 = vmatprep.subr.bf16.mxu0 0
      %553 = vmatpush2.bf16.msra.mxu0 0
      %554 = vmatprep.subr.bf16.mxu0 0
      %555 = vmatpush2.bf16.msra.mxu0 0
      %556 = vmatprep.subr.bf16.mxu0 0
      %557 = vmatpush2.bf16.msra.mxu0 0
      %558 = vmatprep.subr.bf16.mxu0 0
      %559 = vmatpush2.bf16.msra.mxu0 0
      %560 = vmatprep.subr.bf16.mxu0 0
      %561 = vmatpush2.bf16.msra.mxu0 0
      %562 = vmatprep.subr.bf16.mxu0 0
      %563 = vmatpush2.bf16.msra.mxu0 0
      %564 = vmatprep.mubr.bf16.mxu0 0
      %565 = vmatmul.mubr.bf16.gmra.mxu0 %v530
      %v566 = vpop.f32.mrf.mxu0
      %v567 = vadd.f32 0.0, %v566
      %v568 = vpop.f32.mrf.mxu0
      %v569 = vadd.f32 0.0, %v568
      %v570 = vpop.f32.mrf.mxu0
      %v571 = vadd.f32 0.0, %v570
      %v572 = vpop.f32.mrf.mxu0
      %v573 = vadd.f32 0.0, %v572
      %574 = vdwg.mxu0
      %v577 = vunpack.c.l.b16 %v490
      %v578 = vunpack.c.l.b16 %v491
      %v579 = vpack.c.b16 %v578, %v577
      %v582 = vunpack.c.l.b16 %v488
      %v583 = vunpack.c.h.b16 %v488
      %v584 = vunpack.c.l.b16 %v489
      %v585 = vunpack.c.h.b16 %v489
      %v586 = vpack.c.b16 %v584, %v582
      %v587 = vpack.c.b16 %v585, %v583
      %v591 = vsel %vm528, %v579, 0
      %593 = vmatprep.subr.bf16.mxu0 0
      %594 = vmatpush1.bf16.msra.mxu0 0
      %595 = vmatprep.subr.bf16.mxu0 0
      %596 = vmatpush1.bf16.msra.mxu0 0
      %597 = vmatprep.subr.bf16.mxu0 0
      %598 = vmatpush1.bf16.msra.mxu0 0
      %599 = vmatprep.subr.bf16.mxu0 0
      %600 = vmatpush1.bf16.msra.mxu0 0
      %601 = vmatprep.subr.bf16.mxu0 0
      %602 = vmatpush1.bf16.msra.mxu0 0
      %603 = vmatprep.subr.bf16.mxu0 0
      %604 = vmatpush1.bf16.msra.mxu0 0
      %605 = vmatprep.subr.bf16.mxu0 0
      %606 = vmatpush1.bf16.msra.mxu0 0
      %607 = vmatprep.subr.bf16.mxu0 %v587
      %608 = vmatpush1.bf16.msra.mxu0 %v586
      %609 = vmatprep.subr.bf16.mxu0 0
      %610 = vmatpush2.bf16.msra.mxu0 0
      %611 = vmatprep.subr.bf16.mxu0 0
      %612 = vmatpush2.bf16.msra.mxu0 0
      %613 = vmatprep.subr.bf16.mxu0 0
      %614 = vmatpush2.bf16.msra.mxu0 0
      %615 = vmatprep.subr.bf16.mxu0 0
      %616 = vmatpush2.bf16.msra.mxu0 0
      %617 = vmatprep.subr.bf16.mxu0 0
      %618 = vmatpush2.bf16.msra.mxu0 0
      %619 = vmatprep.subr.bf16.mxu0 0
      %620 = vmatpush2.bf16.msra.mxu0 0
      %621 = vmatprep.subr.bf16.mxu0 0
      %622 = vmatpush2.bf16.msra.mxu0 0
      %623 = vmatprep.subr.bf16.mxu0 0
      %624 = vmatpush2.bf16.msra.mxu0 0
      %625 = vmatprep.mubr.bf16.mxu0 0
      %626 = vmatmul.mubr.bf16.gmra.mxu0 %v591
      %v627 = vpop.f32.mrf.mxu0
      %v628 = vadd.f32 %v567, %v627
      %v629 = vpop.f32.mrf.mxu0
      %v630 = vadd.f32 %v569, %v629
      %v631 = vpop.f32.mrf.mxu0
      %v632 = vadd.f32 %v571, %v631
      %v633 = vpop.f32.mrf.mxu0
      %v634 = vadd.f32 %v573, %v633
      %635 = vdwg.mxu0
      %s636 = scalar_lea.vmem %s4, 16
      %v637 = vld [vmem:[%s636] sm:$0xf]
      %v638 = vld [vmem:[%s636 + $0x4] sm:$0xf]
      %v641 = vunpack.c.l.b16 %v637
      %v642 = vunpack.c.l.b16 %v638
      %v643 = vpack.c.b16 %v642, %v641
      %644 = vrot.lane.b32.xlu0 %v514, 96
      %v645 = vpop.permute.xlu0 %644
      %646 = vrot.lane.b32.xlu0 %v515, 96
      %v647 = vpop.permute.xlu0 %646
      %648 = vrot.lane.b32.xlu0 %v516, 96
      %v649 = vpop.permute.xlu0 %648
      %vm650 = vcmask 785408
      %v651 = vsel %vm650, %v645, %v647
      %v652 = vsel %vm650, %v647, %v649
      %v656 = vsel %vm528, %v643, 0
      %658 = vmatprep.subr.bf16.mxu0 0
      %659 = vmatpush1.bf16.msra.mxu0 0
      %660 = vmatprep.subr.bf16.mxu0 0
      %661 = vmatpush1.bf16.msra.mxu0 0
      %662 = vmatprep.subr.bf16.mxu0 0
      %663 = vmatpush1.bf16.msra.mxu0 0
      %664 = vmatprep.subr.bf16.mxu0 0
      %665 = vmatpush1.bf16.msra.mxu0 0
      %666 = vmatprep.subr.bf16.mxu0 0
      %667 = vmatpush1.bf16.msra.mxu0 0
      %668 = vmatprep.subr.bf16.mxu0 0
      %669 = vmatpush1.bf16.msra.mxu0 0
      %670 = vmatprep.subr.bf16.mxu0 0
      %671 = vmatpush1.bf16.msra.mxu0 0
      %672 = vmatprep.subr.bf16.mxu0 %v652
      %673 = vmatpush1.bf16.msra.mxu0 %v651
      %674 = vmatprep.subr.bf16.mxu0 0
      %675 = vmatpush2.bf16.msra.mxu0 0
      %676 = vmatprep.subr.bf16.mxu0 0
      %677 = vmatpush2.bf16.msra.mxu0 0
      %678 = vmatprep.subr.bf16.mxu0 0
      %679 = vmatpush2.bf16.msra.mxu0 0
      %680 = vmatprep.subr.bf16.mxu0 0
      %681 = vmatpush2.bf16.msra.mxu0 0
      %682 = vmatprep.subr.bf16.mxu0 0
      %683 = vmatpush2.bf16.msra.mxu0 0
      %684 = vmatprep.subr.bf16.mxu0 0
      %685 = vmatpush2.bf16.msra.mxu0 0
      %686 = vmatprep.subr.bf16.mxu0 0
      %687 = vmatpush2.bf16.msra.mxu0 0
      %688 = vmatprep.subr.bf16.mxu0 0
      %689 = vmatpush2.bf16.msra.mxu0 0
      %690 = vmatprep.mubr.bf16.mxu0 0
      %691 = vmatmul.mubr.bf16.gmra.mxu0 %v656
      %v692 = vpop.f32.mrf.mxu0
      %v693 = vadd.f32 0.0, %v692
      %v694 = vpop.f32.mrf.mxu0
      %v695 = vadd.f32 0.0, %v694
      %v696 = vpop.f32.mrf.mxu0
      %v697 = vadd.f32 0.0, %v696
      %v698 = vpop.f32.mrf.mxu0
      %v699 = vadd.f32 0.0, %v698
      %700 = vdwg.mxu0
      %v701 = vadd.f32 %v628, %v693
      %v702 = vadd.f32 %v630, %v695
      %v703 = vadd.f32 %v632, %v697
      %v704 = vadd.f32 %v634, %v699
      %s705 = scalar_lea.vmem %s4, 24
      %v706 = vld [vmem:[%s705] sm:$0xf]
      %v707 = vld [vmem:[%s705 + $0x4] sm:$0xf]
      %v710 = vunpack.c.l.b16 %v706
      %v711 = vunpack.c.l.b16 %v707
      %v712 = vpack.c.b16 %v711, %v710
      %713 = vrot.lane.b32.xlu0 %v514, 80
      %v714 = vpop.permute.xlu0 %713
      %715 = vrot.lane.b32.xlu0 %v515, 80
      %v716 = vpop.permute.xlu0 %715
      %717 = vrot.lane.b32.xlu0 %v516, 80
      %v718 = vpop.permute.xlu0 %717
      %vm719 = vcmask 654336
      %v720 = vsel %vm719, %v714, %v716
      %v721 = vsel %vm719, %v716, %v718
      %v725 = vsel %vm528, %v712, 0
      %727 = vmatprep.subr.bf16.mxu0 0
      %728 = vmatpush1.bf16.msra.mxu0 0
      %729 = vmatprep.subr.bf16.mxu0 0
      %730 = vmatpush1.bf16.msra.mxu0 0
      %731 = vmatprep.subr.bf16.mxu0 0
      %732 = vmatpush1.bf16.msra.mxu0 0
      %733 = vmatprep.subr.bf16.mxu0 0
      %734 = vmatpush1.bf16.msra.mxu0 0
      %735 = vmatprep.subr.bf16.mxu0 0
      %736 = vmatpush1.bf16.msra.mxu0 0
      %737 = vmatprep.subr.bf16.mxu0 0
      %738 = vmatpush1.bf16.msra.mxu0 0
      %739 = vmatprep.subr.bf16.mxu0 0
      %740 = vmatpush1.bf16.msra.mxu0 0
      %741 = vmatprep.subr.bf16.mxu0 %v721
      %742 = vmatpush1.bf16.msra.mxu0 %v720
      %743 = vmatprep.subr.bf16.mxu0 0
      %744 = vmatpush2.bf16.msra.mxu0 0
      %745 = vmatprep.subr.bf16.mxu0 0
      %746 = vmatpush2.bf16.msra.mxu0 0
      %747 = vmatprep.subr.bf16.mxu0 0
      %748 = vmatpush2.bf16.msra.mxu0 0
      %749 = vmatprep.subr.bf16.mxu0 0
      %750 = vmatpush2.bf16.msra.mxu0 0
      %751 = vmatprep.subr.bf16.mxu0 0
      %752 = vmatpush2.bf16.msra.mxu0 0
      %753 = vmatprep.subr.bf16.mxu0 0
      %754 = vmatpush2.bf16.msra.mxu0 0
      %755 = vmatprep.subr.bf16.mxu0 0
      %756 = vmatpush2.bf16.msra.mxu0 0
      %757 = vmatprep.subr.bf16.mxu0 0
      %758 = vmatpush2.bf16.msra.mxu0 0
      %759 = vmatprep.mubr.bf16.mxu0 0
      %760 = vmatmul.mubr.bf16.gmra.mxu0 %v725
      %v761 = vpop.f32.mrf.mxu0
      %v762 = vadd.f32 0.0, %v761
      %v763 = vpop.f32.mrf.mxu0
      %v764 = vadd.f32 0.0, %v763
      %v765 = vpop.f32.mrf.mxu0
      %v766 = vadd.f32 0.0, %v765
      %v767 = vpop.f32.mrf.mxu0
      %v768 = vadd.f32 0.0, %v767
      %769 = vdwg.mxu0
      %v770 = vadd.f32 %v701, %v762
      %v771 = vadd.f32 %v702, %v764
      %v772 = vadd.f32 %v703, %v766
      %v773 = vadd.f32 %v704, %v768
      %s774 = scalar_lea.vmem %s4, 32
      %v775 = vld [vmem:[%s774] sm:$0xf]
      %v776 = vld [vmem:[%s774 + $0x4] sm:$0xf]
      %v779 = vunpack.c.l.b16 %v775
      %v780 = vunpack.c.l.b16 %v776
      %v781 = vpack.c.b16 %v780, %v779
      %782 = vrot.lane.b32.xlu0 %v514, 64
      %v783 = vpop.permute.xlu0 %782
      %784 = vrot.lane.b32.xlu0 %v515, 64
      %v785 = vpop.permute.xlu0 %784
      %786 = vrot.lane.b32.xlu0 %v516, 64
      %v787 = vpop.permute.xlu0 %786
      %v788 = vsel %vm475, %v783, %v785
      %v789 = vsel %vm475, %v785, %v787
      %v793 = vsel %vm528, %v781, 0
      %795 = vmatprep.subr.bf16.mxu0 0
      %796 = vmatpush1.bf16.msra.mxu0 0
      %797 = vmatprep.subr.bf16.mxu0 0
      %798 = vmatpush1.bf16.msra.mxu0 0
      %799 = vmatprep.subr.bf16.mxu0 0
      %800 = vmatpush1.bf16.msra.mxu0 0
      %801 = vmatprep.subr.bf16.mxu0 0
      %802 = vmatpush1.bf16.msra.mxu0 0
      %803 = vmatprep.subr.bf16.mxu0 0
      %804 = vmatpush1.bf16.msra.mxu0 0
      %805 = vmatprep.subr.bf16.mxu0 0
      %806 = vmatpush1.bf16.msra.mxu0 0
      %807 = vmatprep.subr.bf16.mxu0 0
      %808 = vmatpush1.bf16.msra.mxu0 0
      %809 = vmatprep.subr.bf16.mxu0 %v789
      %810 = vmatpush1.bf16.msra.mxu0 %v788
      %811 = vmatprep.subr.bf16.mxu0 0
      %812 = vmatpush2.bf16.msra.mxu0 0
      %813 = vmatprep.subr.bf16.mxu0 0
      %814 = vmatpush2.bf16.msra.mxu0 0
      %815 = vmatprep.subr.bf16.mxu0 0
      %816 = vmatpush2.bf16.msra.mxu0 0
      %817 = vmatprep.subr.bf16.mxu0 0
      %818 = vmatpush2.bf16.msra.mxu0 0
      %819 = vmatprep.subr.bf16.mxu0 0
      %820 = vmatpush2.bf16.msra.mxu0 0
      %821 = vmatprep.subr.bf16.mxu0 0
      %822 = vmatpush2.bf16.msra.mxu0 0
      %823 = vmatprep.subr.bf16.mxu0 0
      %824 = vmatpush2.bf16.msra.mxu0 0
      %825 = vmatprep.subr.bf16.mxu0 0
      %826 = vmatpush2.bf16.msra.mxu0 0
      %827 = vmatprep.mubr.bf16.mxu0 0
      %828 = vmatmul.mubr.bf16.gmra.mxu0 %v793
      %v829 = vpop.f32.mrf.mxu0
      %v830 = vadd.f32 0.0, %v829
      %v831 = vpop.f32.mrf.mxu0
      %v832 = vadd.f32 0.0, %v831
      %v833 = vpop.f32.mrf.mxu0
      %v834 = vadd.f32 0.0, %v833
      %v835 = vpop.f32.mrf.mxu0
      %v836 = vadd.f32 0.0, %v835
      %837 = vdwg.mxu0
      %v838 = vadd.f32 %v770, %v830
      %v839 = vadd.f32 %v771, %v832
      %v840 = vadd.f32 %v772, %v834
      %v841 = vadd.f32 %v773, %v836
      %s842 = scalar_lea.vmem %s4, 40
      %v843 = vld [vmem:[%s842] sm:$0xf]
      %v844 = vld [vmem:[%s842 + $0x4] sm:$0xf]
      %v847 = vunpack.c.l.b16 %v843
      %v848 = vunpack.c.l.b16 %v844
      %v849 = vpack.c.b16 %v848, %v847
      %850 = vrot.lane.b32.xlu0 %v514, 48
      %v851 = vpop.permute.xlu0 %850
      %852 = vrot.lane.b32.xlu0 %v515, 48
      %v853 = vpop.permute.xlu0 %852
      %854 = vrot.lane.b32.xlu0 %v516, 48
      %v855 = vpop.permute.xlu0 %854
      %vm856 = vcmask 392192
      %v857 = vsel %vm856, %v851, %v853
      %v858 = vsel %vm856, %v853, %v855
      %v862 = vsel %vm528, %v849, 0
      %864 = vmatprep.subr.bf16.mxu0 0
      %865 = vmatpush1.bf16.msra.mxu0 0
      %866 = vmatprep.subr.bf16.mxu0 0
      %867 = vmatpush1.bf16.msra.mxu0 0
      %868 = vmatprep.subr.bf16.mxu0 0
      %869 = vmatpush1.bf16.msra.mxu0 0
      %870 = vmatprep.subr.bf16.mxu0 0
      %871 = vmatpush1.bf16.msra.mxu0 0
      %872 = vmatprep.subr.bf16.mxu0 0
      %873 = vmatpush1.bf16.msra.mxu0 0
      %874 = vmatprep.subr.bf16.mxu0 0
      %875 = vmatpush1.bf16.msra.mxu0 0
      %876 = vmatprep.subr.bf16.mxu0 0
      %877 = vmatpush1.bf16.msra.mxu0 0
      %878 = vmatprep.subr.bf16.mxu0 %v858
      %879 = vmatpush1.bf16.msra.mxu0 %v857
      %880 = vmatprep.subr.bf16.mxu0 0
      %881 = vmatpush2.bf16.msra.mxu0 0
      %882 = vmatprep.subr.bf16.mxu0 0
      %883 = vmatpush2.bf16.msra.mxu0 0
      %884 = vmatprep.subr.bf16.mxu0 0
      %885 = vmatpush2.bf16.msra.mxu0 0
      %886 = vmatprep.subr.bf16.mxu0 0
      %887 = vmatpush2.bf16.msra.mxu0 0
      %888 = vmatprep.subr.bf16.mxu0 0
      %889 = vmatpush2.bf16.msra.mxu0 0
      %890 = vmatprep.subr.bf16.mxu0 0
      %891 = vmatpush2.bf16.msra.mxu0 0
      %892 = vmatprep.subr.bf16.mxu0 0
      %893 = vmatpush2.bf16.msra.mxu0 0
      %894 = vmatprep.subr.bf16.mxu0 0
      %895 = vmatpush2.bf16.msra.mxu0 0
      %896 = vmatprep.mubr.bf16.mxu0 0
      %897 = vmatmul.mubr.bf16.gmra.mxu0 %v862
      %v898 = vpop.f32.mrf.mxu0
      %v899 = vadd.f32 0.0, %v898
      %v900 = vpop.f32.mrf.mxu0
      %v901 = vadd.f32 0.0, %v900
      %v902 = vpop.f32.mrf.mxu0
      %v903 = vadd.f32 0.0, %v902
      %v904 = vpop.f32.mrf.mxu0
      %v905 = vadd.f32 0.0, %v904
      %906 = vdwg.mxu0
      %v907 = vadd.f32 %v838, %v899
      %v908 = vadd.f32 %v839, %v901
      %v909 = vadd.f32 %v840, %v903
      %v910 = vadd.f32 %v841, %v905
      %s911 = scalar_lea.vmem %s4, 48
      %v912 = vld [vmem:[%s911] sm:$0xf]
      %v913 = vld [vmem:[%s911 + $0x4] sm:$0xf]
      %v916 = vunpack.c.l.b16 %v912
      %v917 = vunpack.c.l.b16 %v913
      %v918 = vpack.c.b16 %v917, %v916
      %919 = vrot.lane.b32.xlu0 %v514, 32
      %v920 = vpop.permute.xlu0 %919
      %921 = vrot.lane.b32.xlu0 %v515, 32
      %v922 = vpop.permute.xlu0 %921
      %923 = vrot.lane.b32.xlu0 %v516, 32
      %v924 = vpop.permute.xlu0 %923
      %vm925 = vcmask 261120
      %v926 = vsel %vm925, %v920, %v922
      %v927 = vsel %vm925, %v922, %v924
      %v931 = vsel %vm528, %v918, 0
      %933 = vmatprep.subr.bf16.mxu0 0
      %934 = vmatpush1.bf16.msra.mxu0 0
      %935 = vmatprep.subr.bf16.mxu0 0
      %936 = vmatpush1.bf16.msra.mxu0 0
      %937 = vmatprep.subr.bf16.mxu0 0
      %938 = vmatpush1.bf16.msra.mxu0 0
      %939 = vmatprep.subr.bf16.mxu0 0
      %940 = vmatpush1.bf16.msra.mxu0 0
      %941 = vmatprep.subr.bf16.mxu0 0
      %942 = vmatpush1.bf16.msra.mxu0 0
      %943 = vmatprep.subr.bf16.mxu0 0
      %944 = vmatpush1.bf16.msra.mxu0 0
      %945 = vmatprep.subr.bf16.mxu0 0
      %946 = vmatpush1.bf16.msra.mxu0 0
      %947 = vmatprep.subr.bf16.mxu0 %v927
      %948 = vmatpush1.bf16.msra.mxu0 %v926
      %949 = vmatprep.subr.bf16.mxu0 0
      %950 = vmatpush2.bf16.msra.mxu0 0
      %951 = vmatprep.subr.bf16.mxu0 0
      %952 = vmatpush2.bf16.msra.mxu0 0
      %953 = vmatprep.subr.bf16.mxu0 0
      %954 = vmatpush2.bf16.msra.mxu0 0
      %955 = vmatprep.subr.bf16.mxu0 0
      %956 = vmatpush2.bf16.msra.mxu0 0
      %957 = vmatprep.subr.bf16.mxu0 0
      %958 = vmatpush2.bf16.msra.mxu0 0
      %959 = vmatprep.subr.bf16.mxu0 0
      %960 = vmatpush2.bf16.msra.mxu0 0
      %961 = vmatprep.subr.bf16.mxu0 0
      %962 = vmatpush2.bf16.msra.mxu0 0
      %963 = vmatprep.subr.bf16.mxu0 0
      %964 = vmatpush2.bf16.msra.mxu0 0
      %965 = vmatprep.mubr.bf16.mxu0 0
      %966 = vmatmul.mubr.bf16.gmra.mxu0 %v931
      %v967 = vpop.f32.mrf.mxu0
      %v968 = vadd.f32 0.0, %v967
      %v969 = vpop.f32.mrf.mxu0
      %v970 = vadd.f32 0.0, %v969
      %v971 = vpop.f32.mrf.mxu0
      %v972 = vadd.f32 0.0, %v971
      %v973 = vpop.f32.mrf.mxu0
      %v974 = vadd.f32 0.0, %v973
      %975 = vdwg.mxu0
      %v976 = vadd.f32 %v907, %v968
      %v977 = vadd.f32 %v908, %v970
      %v978 = vadd.f32 %v909, %v972
      %v979 = vadd.f32 %v910, %v974
      %s980 = scalar_lea.vmem %s4, 56
      %v981 = vld [vmem:[%s980] sm:$0xf]
      %v982 = vld [vmem:[%s980 + $0x4] sm:$0xf]
      %v985 = vunpack.c.l.b16 %v981
      %v986 = vunpack.c.l.b16 %v982
      %v987 = vpack.c.b16 %v986, %v985
      %988 = vrot.lane.b32.xlu0 %v514, 16
      %v989 = vpop.permute.xlu0 %988
      %990 = vrot.lane.b32.xlu0 %v515, 16
      %v991 = vpop.permute.xlu0 %990
      %992 = vrot.lane.b32.xlu0 %v516, 16
      %v993 = vpop.permute.xlu0 %992
      %vm994 = vcmask 130048
      %v995 = vsel %vm994, %v989, %v991
      %v996 = vsel %vm994, %v991, %v993
      %v1000 = vsel %vm528, %v987, 0
      %1002 = vmatprep.subr.bf16.mxu0 0
      %1003 = vmatpush1.bf16.msra.mxu0 0
      %1004 = vmatprep.subr.bf16.mxu0 0
      %1005 = vmatpush1.bf16.msra.mxu0 0
      %1006 = vmatprep.subr.bf16.mxu0 0
      %1007 = vmatpush1.bf16.msra.mxu0 0
      %1008 = vmatprep.subr.bf16.mxu0 0
      %1009 = vmatpush1.bf16.msra.mxu0 0
      %1010 = vmatprep.subr.bf16.mxu0 0
      %1011 = vmatpush1.bf16.msra.mxu0 0
      %1012 = vmatprep.subr.bf16.mxu0 0
      %1013 = vmatpush1.bf16.msra.mxu0 0
      %1014 = vmatprep.subr.bf16.mxu0 0
      %1015 = vmatpush1.bf16.msra.mxu0 0
      %1016 = vmatprep.subr.bf16.mxu0 %v996
      %1017 = vmatpush1.bf16.msra.mxu0 %v995
      %1018 = vmatprep.subr.bf16.mxu0 0
      %1019 = vmatpush2.bf16.msra.mxu0 0
      %1020 = vmatprep.subr.bf16.mxu0 0
      %1021 = vmatpush2.bf16.msra.mxu0 0
      %1022 = vmatprep.subr.bf16.mxu0 0
      %1023 = vmatpush2.bf16.msra.mxu0 0
      %1024 = vmatprep.subr.bf16.mxu0 0
      %1025 = vmatpush2.bf16.msra.mxu0 0
      %1026 = vmatprep.subr.bf16.mxu0 0
      %1027 = vmatpush2.bf16.msra.mxu0 0
      %1028 = vmatprep.subr.bf16.mxu0 0
      %1029 = vmatpush2.bf16.msra.mxu0 0
      %1030 = vmatprep.subr.bf16.mxu0 0
      %1031 = vmatpush2.bf16.msra.mxu0 0
      %1032 = vmatprep.subr.bf16.mxu0 0
      %1033 = vmatpush2.bf16.msra.mxu0 0
      %1034 = vmatprep.mubr.bf16.mxu0 0
      %1035 = vmatmul.mubr.bf16.gmra.mxu0 %v1000
      %v1036 = vpop.f32.mrf.mxu0
      %v1037 = vadd.f32 0.0, %v1036
      %v1038 = vpop.f32.mrf.mxu0
      %v1039 = vadd.f32 0.0, %v1038
      %v1040 = vpop.f32.mrf.mxu0
      %v1041 = vadd.f32 0.0, %v1040
      %v1042 = vpop.f32.mrf.mxu0
      %v1043 = vadd.f32 0.0, %v1042
      %1044 = vdwg.mxu0
      %v1045 = vadd.f32 %v976, %v1037
      %v1046 = vadd.f32 %v977, %v1039
      %v1047 = vadd.f32 %v978, %v1041
      %v1048 = vadd.f32 %v979, %v1043
      %v1049 = vld [vmem:[#allocation2 + $0x4] sm:$0xff]
      %v1050 = vld [vmem:[#allocation2 + $0x10] sm:$0xff]
      %s1051 = scalar_lea.vmem %s4, 64
      %v1052 = vld [vmem:[%s1051] sm:$0xf]
      %v1053 = vld [vmem:[%s1051 + $0x4] sm:$0xf]
      %v1056 = vunpack.c.l.b16 %v1052
      %v1057 = vunpack.c.l.b16 %v1053
      %v1058 = vpack.c.b16 %v1057, %v1056
      %v1061 = vunpack.c.l.b16 %v1049
      %v1062 = vunpack.c.h.b16 %v1049
      %v1063 = vunpack.c.l.b16 %v1050
      %v1064 = vunpack.c.h.b16 %v1050
      %v1065 = vpack.c.b16 %v1063, %v1061
      %v1066 = vpack.c.b16 %v1064, %v1062
      %v1070 = vsel %vm528, %v1058, 0
      %1072 = vmatprep.subr.bf16.mxu0 0
      %1073 = vmatpush1.bf16.msra.mxu0 0
      %1074 = vmatprep.subr.bf16.mxu0 0
      %1075 = vmatpush1.bf16.msra.mxu0 0
      %1076 = vmatprep.subr.bf16.mxu0 0
      %1077 = vmatpush1.bf16.msra.mxu0 0
      %1078 = vmatprep.subr.bf16.mxu0 0
      %1079 = vmatpush1.bf16.msra.mxu0 0
      %1080 = vmatprep.subr.bf16.mxu0 0
      %1081 = vmatpush1.bf16.msra.mxu0 0
      %1082 = vmatprep.subr.bf16.mxu0 0
      %1083 = vmatpush1.bf16.msra.mxu0 0
      %1084 = vmatprep.subr.bf16.mxu0 0
      %1085 = vmatpush1.bf16.msra.mxu0 0
      %1086 = vmatprep.subr.bf16.mxu0 %v1066
      %1087 = vmatpush1.bf16.msra.mxu0 %v1065
      %1088 = vmatprep.subr.bf16.mxu0 0
      %1089 = vmatpush2.bf16.msra.mxu0 0
      %1090 = vmatprep.subr.bf16.mxu0 0
      %1091 = vmatpush2.bf16.msra.mxu0 0
      %1092 = vmatprep.subr.bf16.mxu0 0
      %1093 = vmatpush2.bf16.msra.mxu0 0
      %1094 = vmatprep.subr.bf16.mxu0 0
      %1095 = vmatpush2.bf16.msra.mxu0 0
      %1096 = vmatprep.subr.bf16.mxu0 0
      %1097 = vmatpush2.bf16.msra.mxu0 0
      %1098 = vmatprep.subr.bf16.mxu0 0
      %1099 = vmatpush2.bf16.msra.mxu0 0
      %1100 = vmatprep.subr.bf16.mxu0 0
      %1101 = vmatpush2.bf16.msra.mxu0 0
      %1102 = vmatprep.subr.bf16.mxu0 0
      %1103 = vmatpush2.bf16.msra.mxu0 0
      %1104 = vmatprep.mubr.bf16.mxu0 0
      %1105 = vmatmul.mubr.bf16.gmra.mxu0 %v1070
      %v1106 = vpop.f32.mrf.mxu0
      %v1107 = vadd.f32 0.0, %v1106
      %v1108 = vpop.f32.mrf.mxu0
      %v1109 = vadd.f32 0.0, %v1108
      %v1110 = vpop.f32.mrf.mxu0
      %v1111 = vadd.f32 0.0, %v1110
      %v1112 = vpop.f32.mrf.mxu0
      %v1113 = vadd.f32 0.0, %v1112
      %1114 = vdwg.mxu0
      %v1115 = vadd.f32 %v1045, %v1107
      %v1116 = vadd.f32 %v1046, %v1109
      %v1117 = vadd.f32 %v1047, %v1111
      %v1118 = vadd.f32 %v1048, %v1113
      %v1119 = vld [vmem:[%s5] sm:$0xff]
      %v1120 = vld [vmem:[%s5 + $0x8] sm:$0xff]
      %1122 = vset.pattern.permute.xlu0 0
      %1123 = vperm.xlu0 %1122, %v1119
      %v1124 = vpop.permute.xlu0 %1123
      %1127 = vset.pattern.permute.xlu0 0
      %1128 = vperm.xlu0 %1127, %v1120
      %v1129 = vpop.permute.xlu0 %1128
      %v1131 = vmul.f32 %v1115, %v1124
      %v1132 = vmul.f32 %v1116, %v1124
      %v1133 = vmul.f32 %v1117, %v1129
      %v1134 = vmul.f32 %v1118, %v1129
      %v1135 = vld [vmem:[%s6] sm:$0xff]
      %v1136 = vld [vmem:[%s6 + $0x8] sm:$0xff]
      %1138 = vset.pattern.permute.xlu0 0
      %1139 = vperm.xlu0 %1138, %v1135
      %v1140 = vpop.permute.xlu0 %1139
      %1143 = vset.pattern.permute.xlu0 0
      %1144 = vperm.xlu0 %1143, %v1136
      %v1145 = vpop.permute.xlu0 %1144
      %v1147 = vadd.f32 %v1131, %v1140
      %v1148 = vadd.f32 %v1132, %v1140
      %v1149 = vadd.f32 %v1133, %v1145
      %v1150 = vadd.f32 %v1134, %v1145
      %v1151 = vmax.f32 %v1147, 0.0
      %v1152 = vmax.f32 %v1148, 0.0
      %v1153 = vmax.f32 %v1149, 0.0
      %v1154 = vmax.f32 %v1150, 0.0
      %v1155 = vld [vmem:[%s320] sm:$0xff]
      %v1156 = vld [vmem:[%s320 + $0x8] sm:$0xff]
      %v1157 = vunpack.c.l.bf16 %v1155
      %v1158 = vunpack.c.h.bf16 %v1155
      %v1159 = vunpack.c.l.bf16 %v1156
      %v1160 = vunpack.c.h.bf16 %v1156
      %v1161 = vadd.f32 %v1151, %v1157
      %v1162 = vadd.f32 %v1152, %v1158
      %v1163 = vadd.f32 %v1153, %v1159
      %v1164 = vadd.f32 %v1154, %v1160
      %v1165 = vpack.c.bf16 %v1163, %v1161
      %v1166 = vpack.c.bf16 %v1164, %v1162
      %v1169 = vunpack.c.l.b16 %v1165
      %v1170 = vunpack.c.l.b16 %v1166
      %v1171 = vunpack.c.h.b16 %v1165
      %v1172 = vunpack.c.h.b16 %v1166
      %v1173 = vpack.c.b16 %v1170, %v1169
      %v1174 = vpack.c.b16 %v1172, %v1171
      %1177 = vst [vmem:[%s325] sm:$0xff] %v1173
      %1178 = vst [vmem:[%s325 + $0x8] sm:$0xff] %v1174
      %p1179 = scmp.lt.s32.totalorder %s19, 3
      %s1180 = scalar_select %p1179, %s19, 3
      %s1181 = smul.addr %s1180, 4
      %s1182 = smul.addr %s1181, 4
      %s1183 = scalar_lea.vmem %s8, %s1182
      // Predicated region
      $region53: #{_lambda_.11} parent=51 // pred_check
        %p1184 = pneg %p215
      $region54: #{_lambda_.11} parent=51 // pred_check_branch
        %1186 = sbr.rel (%p1184) target = $region56
      $region55: #{_lambda_.11} parent=51 // pred_region
        _
      $region56: #{_lambda_.11} parent=51 // pred_fallthru
        _
    $region52: #{_lambda_.11} parent=5 // pred_fallthru
      _
    %p1187 = scmp.le.s32.totalorder 2, %s14
    // Predicated region
    $region57: #{_lambda_.11} parent=5 // pred_check
      %p1188 = pneg %p1187
    $region58: #{_lambda_.11} parent=5 // pred_check_branch
      %1190 = sbr.rel (%p1188) target = $region60
    $region59: #{_lambda_.11} parent=5 // pred_region
      %s1191 = ssub.s32 %s14, 2
      // Predicated region
      $region61: #{_lambda_.11} parent=59 // pred_check
        %p1192 = pneg %p221
      $region62: #{_lambda_.11} parent=59 // pred_check_branch
        %1194 = sbr.rel (%p1192) target = $region64
      $region63: #{_lambda_.11} parent=59 // pred_region
        %p1195 = scmp.lt.s32.totalorder %s20, 3
        %s1196 = scalar_select %p1195, %s20, 3
        %s1197 = smul.addr %s1196, 4
        %s1198 = smul.addr %s1197, 4
        %s1199 = scalar_lea.vmem %s8, %s1198
      $region64: #{_lambda_.11} parent=59 // pred_fallthru
        _
    $region60: #{_lambda_.11} parent=5 // pred_fallthru
      _
  $region6: #{_lambda_.11} parent=0 // loop_footer
    %s18 = sadd.s32 1, %s14
  $region7: #{_lambda_.11} parent=0 // loop_footer_branch
    %13 = sbr.rel target = $region3
  $region8: #{_lambda_.11} parent=0 // loop_exit
    _

// kernel: _lambda_.13
$region0: #{_lambda_.13}
  #allocation0 [shape = 'u32[]', space=smem, size = 0x4, offset = 0x4, fixed_abs, tag = 'smem constant byte address 0x4 - core index']
  #allocation1 [shape = 'u32[144,128]{1,0:T(1,128)}', space=vmem, size = 0x12000, scoped, tag = 'internal scratch']
  #allocation2 [shape = 'bf16[32,192]{1,0:T(8,128)(2,1)}', space=vmem, size = 0x4000, scoped, tag = 'scratch operand']
  #allocation3 [shape = 'bf16[32,192]{1,0:T(8,128)(2,1)}', space=vmem, size = 0x4000, scoped, tag = 'scratch operand']
  %s0 = inlined_call_operand.vmem [shape: bf16[4,48,256], index: 0, kind: input, shape index: {}]
  %s1 = inlined_call_operand.vmem [shape: bf16[32,48], index: 1, kind: input, shape index: {}]
  %s2 = inlined_call_operand.vmem [shape: f32[32,1], index: 2, kind: input, shape index: {}]
  %s3 = inlined_call_operand.vmem [shape: f32[32,1], index: 3, kind: input, shape index: {}]
  %s4 = inlined_call_operand.vmem [shape: bf16[9,32,32], index: 4, kind: input, shape index: {}]
  %s5 = inlined_call_operand.vmem [shape: f32[32,1], index: 5, kind: input, shape index: {}]
  %s6 = inlined_call_operand.vmem [shape: f32[32,1], index: 6, kind: input, shape index: {}]
  %s7 = inlined_call_operand.vmem [shape: bf16[4,16,128], index: 7, kind: input, shape index: {}]
  %s8 = inlined_call_operand.vmem [shape: bf16[32,16], index: 8, kind: input, shape index: {}]
  %s9 = inlined_call_operand.vmem [shape: f32[32,1], index: 9, kind: input, shape index: {}]
  %s10 = inlined_call_operand.vmem [shape: f32[32,1], index: 10, kind: input, shape index: {}]
  %s11 = inlined_call_operand.vmem [shape: bf16[4,32,128], index: 11, kind: output, shape index: {}]
  %s12 = sld [smem:[#allocation0]]
  $region77: #{_lambda_.13} parent=0
    _
  %s14 = ssub.s32 1, %s12
  %s15 = scalar_select 0, %s14, %s12
  loop: start=0, step=1, limit=6
  $region2: #{_lambda_.13} parent=0 // loop_pre_header
    _
  $region3: #{_lambda_.13} parent=0 // loop_header
    %s17 = sphi 0, %s21
    %p18 = scmp.ge.s32.totalorder %s17, 6
    %s27 = sphi 0, %s29
    %s30 = sphi 0, %s27
    %s31 = sphi 0, %s30
    %s47 = sphi 0, %s31
    %s51 = sphi 0, %s51
    %s53 = sphi 0, %s51
    %s54 = sphi 0, %s53
    %s68 = sphi 0, %s54
    %s72 = sphi 0, %s72
    %s74 = sphi 0, %s72
    %s75 = sphi 0, %s74
    %s89 = sphi 0, %s75
    %s93 = sphi 0, %s93
    %s95 = sphi 0, %s93
    %s96 = sphi 0, %s95
    %s110 = sphi 0, %s96
    %s114 = sphi 0, %s114
    %s116 = sphi 0, %s114
    %s117 = sphi 0, %s116
    %s131 = sphi 0, %s117
    %s135 = sphi 0, %s135
    %s137 = sphi 0, %s135
    %s138 = sphi 0, %s137
    %s152 = sphi 0, %s138
    %s156 = sphi 0, %s156
    %s158 = sphi 0, %s156
    %s159 = sphi 0, %s158
    %s173 = sphi 0, %s159
    %s179 = sphi 0, %s181
    %s182 = sphi 0, %s179
    %s183 = sphi 0, %s182
    %s199 = sphi 0, %s183
    %s203 = sphi 0, %s203
    %s205 = sphi 0, %s203
    %s206 = sphi 0, %s205
    %s220 = sphi 0, %s206
    %s224 = sphi 0, %s224
    %s226 = sphi 0, %s224
    %s227 = sphi 0, %s226
    %s241 = sphi 0, %s227
    %s245 = sphi 0, %s245
    %s247 = sphi 0, %s245
    %s248 = sphi 0, %s247
    %s262 = sphi 0, %s248
    %s268 = sphi 0, %s270
    %s271 = sphi 0, %s268
    %s272 = sphi 0, %s271
    %s288 = sphi 0, %s272
  $region4: #{_lambda_.13} parent=0 // loop_header_branch
    %20 = sbr.rel (%p18) target = $region8
  $region5: #{_lambda_.13} parent=0 // loop_body
    %s22 = ssub.s32 %s17, 1
    %s23 = ssub.s32 %s17, 2
    %s24 = sadd.s32 %s17, 1
    %s25 = ssub.s32 %s17, %s24
    %p26 = scmp.eq.s32.totalorder %s25, 0
    %s28 = sadd.s32 %s27, 1
    %s29 = scalar_select %p26, %s27, %s28
    %p32 = pneg %p26
    %p33 = scmp.eq.s32.totalorder %s17, 3
    %p34 = por %p32, %p33
    %p35 = scmp.ne.s32.totalorder %s27, %s30
    %p36 = scmp.eq.s32.totalorder %s17, 0
    %p37 = por %p35, %p36
    %p38 = scmp.ne.s32.totalorder %s27, %s30
    %p39 = scmp.eq.s32.totalorder %s22, 3
    %p40 = por %p38, %p39
    %p41 = scmp.ne.s32.totalorder %s30, %s31
    %p42 = scmp.eq.s32.totalorder %s22, 0
    %p43 = por %p41, %p42
    %p44 = scmp.ne.s32.totalorder %s30, %s31
    %p45 = scmp.eq.s32.totalorder %s23, 3
    %p46 = por %p44, %p45
    %p48 = scmp.ne.s32.totalorder %s31, %s47
    %p49 = scmp.eq.s32.totalorder %s23, 0
    %p50 = por %p48, %p49
    %s52 = sadd.s32 %s51, 1
    %p55 = scmp.eq.s32.totalorder %s17, 3
    %p56 = scmp.ne.s32.totalorder %s51, %s53
    %p57 = scmp.eq.s32.totalorder %s17, 0
    %p58 = por %p56, %p57
    %p59 = scmp.ne.s32.totalorder %s51, %s53
    %p60 = scmp.eq.s32.totalorder %s22, 3
    %p61 = por %p59, %p60
    %p62 = scmp.ne.s32.totalorder %s53, %s54
    %p63 = scmp.eq.s32.totalorder %s22, 0
    %p64 = por %p62, %p63
    %p65 = scmp.ne.s32.totalorder %s53, %s54
    %p66 = scmp.eq.s32.totalorder %s23, 3
    %p67 = por %p65, %p66
    %p69 = scmp.ne.s32.totalorder %s54, %s68
    %p70 = scmp.eq.s32.totalorder %s23, 0
    %p71 = por %p69, %p70
    %s73 = sadd.s32 %s72, 1
    %p76 = scmp.eq.s32.totalorder %s17, 3
    %p77 = scmp.ne.s32.totalorder %s72, %s74
    %p78 = scmp.eq.s32.totalorder %s17, 0
    %p79 = por %p77, %p78
    %p80 = scmp.ne.s32.totalorder %s72, %s74
    %p81 = scmp.eq.s32.totalorder %s22, 3
    %p82 = por %p80, %p81
    %p83 = scmp.ne.s32.totalorder %s74, %s75
    %p84 = scmp.eq.s32.totalorder %s22, 0
    %p85 = por %p83, %p84
    %p86 = scmp.ne.s32.totalorder %s74, %s75
    %p87 = scmp.eq.s32.totalorder %s23, 3
    %p88 = por %p86, %p87
    %p90 = scmp.ne.s32.totalorder %s75, %s89
    %p91 = scmp.eq.s32.totalorder %s23, 0
    %p92 = por %p90, %p91
    %s94 = sadd.s32 %s93, 1
    %p97 = scmp.eq.s32.totalorder %s17, 3
    %p98 = scmp.ne.s32.totalorder %s93, %s95
    %p99 = scmp.eq.s32.totalorder %s17, 0
    %p100 = por %p98, %p99
    %p101 = scmp.ne.s32.totalorder %s93, %s95
    %p102 = scmp.eq.s32.totalorder %s22, 3
    %p103 = por %p101, %p102
    %p104 = scmp.ne.s32.totalorder %s95, %s96
    %p105 = scmp.eq.s32.totalorder %s22, 0
    %p106 = por %p104, %p105
    %p107 = scmp.ne.s32.totalorder %s95, %s96
    %p108 = scmp.eq.s32.totalorder %s23, 3
    %p109 = por %p107, %p108
    %p111 = scmp.ne.s32.totalorder %s96, %s110
    %p112 = scmp.eq.s32.totalorder %s23, 0
    %p113 = por %p111, %p112
    %s115 = sadd.s32 %s114, 1
    %p118 = scmp.eq.s32.totalorder %s17, 3
    %p119 = scmp.ne.s32.totalorder %s114, %s116
    %p120 = scmp.eq.s32.totalorder %s17, 0
    %p121 = por %p119, %p120
    %p122 = scmp.ne.s32.totalorder %s114, %s116
    %p123 = scmp.eq.s32.totalorder %s22, 3
    %p124 = por %p122, %p123
    %p125 = scmp.ne.s32.totalorder %s116, %s117
    %p126 = scmp.eq.s32.totalorder %s22, 0
    %p127 = por %p125, %p126
    %p128 = scmp.ne.s32.totalorder %s116, %s117
    %p129 = scmp.eq.s32.totalorder %s23, 3
    %p130 = por %p128, %p129
    %p132 = scmp.ne.s32.totalorder %s117, %s131
    %p133 = scmp.eq.s32.totalorder %s23, 0
    %p134 = por %p132, %p133
    %s136 = sadd.s32 %s135, 1
    %p139 = scmp.eq.s32.totalorder %s17, 3
    %p140 = scmp.ne.s32.totalorder %s135, %s137
    %p141 = scmp.eq.s32.totalorder %s17, 0
    %p142 = por %p140, %p141
    %p143 = scmp.ne.s32.totalorder %s135, %s137
    %p144 = scmp.eq.s32.totalorder %s22, 3
    %p145 = por %p143, %p144
    %p146 = scmp.ne.s32.totalorder %s137, %s138
    %p147 = scmp.eq.s32.totalorder %s22, 0
    %p148 = por %p146, %p147
    %p149 = scmp.ne.s32.totalorder %s137, %s138
    %p150 = scmp.eq.s32.totalorder %s23, 3
    %p151 = por %p149, %p150
    %p153 = scmp.ne.s32.totalorder %s138, %s152
    %p154 = scmp.eq.s32.totalorder %s23, 0
    %p155 = por %p153, %p154
    %s157 = sadd.s32 %s156, 1
    %p160 = scmp.eq.s32.totalorder %s17, 3
    %p161 = scmp.ne.s32.totalorder %s156, %s158
    %p162 = scmp.eq.s32.totalorder %s17, 0
    %p163 = por %p161, %p162
    %p164 = scmp.ne.s32.totalorder %s156, %s158
    %p165 = scmp.eq.s32.totalorder %s22, 3
    %p166 = por %p164, %p165
    %p167 = scmp.ne.s32.totalorder %s158, %s159
    %p168 = scmp.eq.s32.totalorder %s22, 0
    %p169 = por %p167, %p168
    %p170 = scmp.ne.s32.totalorder %s158, %s159
    %p171 = scmp.eq.s32.totalorder %s23, 3
    %p172 = por %p170, %p171
    %p174 = scmp.ne.s32.totalorder %s159, %s173
    %p175 = scmp.eq.s32.totalorder %s23, 0
    %p176 = por %p174, %p175
    %s177 = ssub.s32 %s17, %s24
    %p178 = scmp.eq.s32.totalorder %s177, 0
    %s180 = sadd.s32 %s179, 1
    %s181 = scalar_select %p178, %s179, %s180
    %p184 = pneg %p178
    %p185 = scmp.eq.s32.totalorder %s17, 3
    %p186 = por %p184, %p185
    %p187 = scmp.ne.s32.totalorder %s179, %s182
    %p188 = scmp.eq.s32.totalorder %s17, 0
    %p189 = por %p187, %p188
    %p190 = scmp.ne.s32.totalorder %s179, %s182
    %p191 = scmp.eq.s32.totalorder %s22, 3
    %p192 = por %p190, %p191
    %p193 = scmp.ne.s32.totalorder %s182, %s183
    %p194 = scmp.eq.s32.totalorder %s22, 0
    %p195 = por %p193, %p194
    %p196 = scmp.ne.s32.totalorder %s182, %s183
    %p197 = scmp.eq.s32.totalorder %s23, 3
    %p198 = por %p196, %p197
    %p200 = scmp.ne.s32.totalorder %s183, %s199
    %p201 = scmp.eq.s32.totalorder %s23, 0
    %p202 = por %p200, %p201
    %s204 = sadd.s32 %s203, 1
    %p207 = scmp.eq.s32.totalorder %s17, 3
    %p208 = scmp.ne.s32.totalorder %s203, %s205
    %p209 = scmp.eq.s32.totalorder %s17, 0
    %p210 = por %p208, %p209
    %p211 = scmp.ne.s32.totalorder %s203, %s205
    %p212 = scmp.eq.s32.totalorder %s22, 3
    %p213 = por %p211, %p212
    %p214 = scmp.ne.s32.totalorder %s205, %s206
    %p215 = scmp.eq.s32.totalorder %s22, 0
    %p216 = por %p214, %p215
    %p217 = scmp.ne.s32.totalorder %s205, %s206
    %p218 = scmp.eq.s32.totalorder %s23, 3
    %p219 = por %p217, %p218
    %p221 = scmp.ne.s32.totalorder %s206, %s220
    %p222 = scmp.eq.s32.totalorder %s23, 0
    %p223 = por %p221, %p222
    %s225 = sadd.s32 %s224, 1
    %p228 = scmp.eq.s32.totalorder %s17, 3
    %p229 = scmp.ne.s32.totalorder %s224, %s226
    %p230 = scmp.eq.s32.totalorder %s17, 0
    %p231 = por %p229, %p230
    %p232 = scmp.ne.s32.totalorder %s224, %s226
    %p233 = scmp.eq.s32.totalorder %s22, 3
    %p234 = por %p232, %p233
    %p235 = scmp.ne.s32.totalorder %s226, %s227
    %p236 = scmp.eq.s32.totalorder %s22, 0
    %p237 = por %p235, %p236
    %p238 = scmp.ne.s32.totalorder %s226, %s227
    %p239 = scmp.eq.s32.totalorder %s23, 3
    %p240 = por %p238, %p239
    %p242 = scmp.ne.s32.totalorder %s227, %s241
    %p243 = scmp.eq.s32.totalorder %s23, 0
    %p244 = por %p242, %p243
    %s246 = sadd.s32 %s245, 1
    %p249 = scmp.eq.s32.totalorder %s17, 3
    %p250 = scmp.ne.s32.totalorder %s245, %s247
    %p251 = scmp.eq.s32.totalorder %s17, 0
    %p252 = por %p250, %p251
    %p253 = scmp.ne.s32.totalorder %s245, %s247
    %p254 = scmp.eq.s32.totalorder %s22, 3
    %p255 = por %p253, %p254
    %p256 = scmp.ne.s32.totalorder %s247, %s248
    %p257 = scmp.eq.s32.totalorder %s22, 0
    %p258 = por %p256, %p257
    %p259 = scmp.ne.s32.totalorder %s247, %s248
    %p260 = scmp.eq.s32.totalorder %s23, 3
    %p261 = por %p259, %p260
    %p263 = scmp.ne.s32.totalorder %s248, %s262
    %p264 = scmp.eq.s32.totalorder %s23, 0
    %p265 = por %p263, %p264
    %s266 = ssub.s32 %s17, %s24
    %p267 = scmp.eq.s32.totalorder %s266, 0
    %s269 = sadd.s32 %s268, 1
    %s270 = scalar_select %p267, %s268, %s269
    %p273 = pneg %p267
    %p274 = scmp.eq.s32.totalorder %s17, 3
    %p275 = por %p273, %p274
    %p276 = scmp.ne.s32.totalorder %s268, %s271
    %p277 = scmp.eq.s32.totalorder %s17, 0
    %p278 = por %p276, %p277
    %p279 = scmp.ne.s32.totalorder %s268, %s271
    %p280 = scmp.eq.s32.totalorder %s22, 3
    %p281 = por %p279, %p280
    %p282 = scmp.ne.s32.totalorder %s271, %s272
    %p283 = scmp.eq.s32.totalorder %s22, 0
    %p284 = por %p282, %p283
    %p285 = scmp.ne.s32.totalorder %s271, %s272
    %p286 = scmp.eq.s32.totalorder %s23, 3
    %p287 = por %p285, %p286
    %p289 = scmp.ne.s32.totalorder %s272, %s288
    %p290 = scmp.eq.s32.totalorder %s23, 0
    %p291 = por %p289, %p290
    %p292 = scmp.le.s32.totalorder 1, %s17
    %p293 = scmp.lt.s32.totalorder %s17, 5
    %p294 = pnand %p292, %p293
    %p295 = pneg %p294
    // Predicated region
    $region9: #{_lambda_.13} parent=5 // pred_check
      _
    $region10: #{_lambda_.13} parent=5 // pred_check_branch
      %297 = sbr.rel (%p294) target = $region12
    $region11: #{_lambda_.13} parent=5 // pred_region
      %s298 = ssub.s32 %s17, 1
      // Predicated region
      $region13: #{_lambda_.13} parent=11 // pred_check
        %p299 = pneg %p64
      $region14: #{_lambda_.13} parent=11 // pred_check_branch
        %301 = sbr.rel (%p299) target = $region16
      $region15: #{_lambda_.13} parent=11 // pred_region
        _
      $region16: #{_lambda_.13} parent=11 // pred_fallthru
        _
      // Predicated region
      $region17: #{_lambda_.13} parent=11 // pred_check
        %p302 = pneg %p85
      $region18: #{_lambda_.13} parent=11 // pred_check_branch
        %304 = sbr.rel (%p302) target = $region20
      $region19: #{_lambda_.13} parent=11 // pred_region
        _
      $region20: #{_lambda_.13} parent=11 // pred_fallthru
        _
      // Predicated region
      $region21: #{_lambda_.13} parent=11 // pred_check
        %p305 = pneg %p106
      $region22: #{_lambda_.13} parent=11 // pred_check_branch
        %307 = sbr.rel (%p305) target = $region24
      $region23: #{_lambda_.13} parent=11 // pred_region
        _
      $region24: #{_lambda_.13} parent=11 // pred_fallthru
        _
      // Predicated region
      $region25: #{_lambda_.13} parent=11 // pred_check
        %p308 = pneg %p127
      $region26: #{_lambda_.13} parent=11 // pred_check_branch
        %310 = sbr.rel (%p308) target = $region28
      $region27: #{_lambda_.13} parent=11 // pred_region
        _
      $region28: #{_lambda_.13} parent=11 // pred_fallthru
        _
      // Predicated region
      $region29: #{_lambda_.13} parent=11 // pred_check
        %p311 = pneg %p148
      $region30: #{_lambda_.13} parent=11 // pred_check_branch
        %313 = sbr.rel (%p311) target = $region32
      $region31: #{_lambda_.13} parent=11 // pred_region
        _
      $region32: #{_lambda_.13} parent=11 // pred_fallthru
        _
      // Predicated region
      $region33: #{_lambda_.13} parent=11 // pred_check
        %p314 = pneg %p169
      $region34: #{_lambda_.13} parent=11 // pred_check_branch
        %316 = sbr.rel (%p314) target = $region36
      $region35: #{_lambda_.13} parent=11 // pred_region
        _
      $region36: #{_lambda_.13} parent=11 // pred_fallthru
        _
      // Predicated region
      $region37: #{_lambda_.13} parent=11 // pred_check
        %p317 = pneg %p216
      $region38: #{_lambda_.13} parent=11 // pred_check_branch
        %319 = sbr.rel (%p317) target = $region40
      $region39: #{_lambda_.13} parent=11 // pred_region
        _
      $region40: #{_lambda_.13} parent=11 // pred_fallthru
        _
      // Predicated region
      $region41: #{_lambda_.13} parent=11 // pred_check
        %p320 = pneg %p237
      $region42: #{_lambda_.13} parent=11 // pred_check_branch
        %322 = sbr.rel (%p320) target = $region44
      $region43: #{_lambda_.13} parent=11 // pred_region
        _
      $region44: #{_lambda_.13} parent=11 // pred_fallthru
        _
      // Predicated region
      $region45: #{_lambda_.13} parent=11 // pred_check
        %p323 = pneg %p258
      $region46: #{_lambda_.13} parent=11 // pred_check_branch
        %325 = sbr.rel (%p323) target = $region48
      $region47: #{_lambda_.13} parent=11 // pred_region
        _
      $region48: #{_lambda_.13} parent=11 // pred_fallthru
        _
    $region12: #{_lambda_.13} parent=5 // pred_fallthru
      _
    %p326 = scmp.lt.s32.totalorder %s17, 4
    // Predicated region
    $region49: #{_lambda_.13} parent=5 // pred_check
      %p327 = pneg %p326
    $region50: #{_lambda_.13} parent=5 // pred_check_branch
      %329 = sbr.rel (%p327) target = $region52
    $region51: #{_lambda_.13} parent=5 // pred_region
      // Predicated region
      $region53: #{_lambda_.13} parent=51 // pred_check
        %p330 = pneg %p37
      $region54: #{_lambda_.13} parent=51 // pred_check_branch
        %332 = sbr.rel (%p330) target = $region56
      $region55: #{_lambda_.13} parent=51 // pred_region
        %p333 = scmp.lt.s32.totalorder %s17, 3
        %s334 = scalar_select %p333, %s17, 3
        %s335 = smul.addr %s334, 12
        %s336 = smul.addr %s335, 4
        %s337 = scalar_lea.vmem %s0, %s336
      $region56: #{_lambda_.13} parent=51 // pred_fallthru
        _
      // Predicated region
      $region57: #{_lambda_.13} parent=51 // pred_check
        %p338 = pneg %p189
      $region58: #{_lambda_.13} parent=51 // pred_check_branch
        %340 = sbr.rel (%p338) target = $region60
      $region59: #{_lambda_.13} parent=51 // pred_region
        %p341 = scmp.lt.s32.totalorder %s17, 3
        %s342 = scalar_select %p341, %s17, 3
        %s343 = smul.addr %s342, 2
        %s344 = smul.addr %s343, 4
        %s345 = scalar_lea.vmem %s7, %s344
      $region60: #{_lambda_.13} parent=51 // pred_fallthru
        _
    $region52: #{_lambda_.13} parent=5 // pred_fallthru
      _
    %p346 = scmp.le.s32.totalorder 1, %s17
    %p347 = scmp.lt.s32.totalorder %s17, 5
    %p348 = pnand %p346, %p347
    %p349 = pneg %p348
    // Predicated region
    $region61: #{_lambda_.13} parent=5 // pred_check
      _
    $region62: #{_lambda_.13} parent=5 // pred_check_branch
      %351 = sbr.rel (%p348) target = $region64
    $region63: #{_lambda_.13} parent=5 // pred_region
      %s352 = ssub.s32 %s17, 1
      %p353 = scmp.lt.s32.totalorder %s22, 3
      %s354 = scalar_select %p353, %s22, 3
      %s355 = smul.addr %s354, 12
      %s356 = smul.addr %s355, 4
      %s357 = scalar_lea.vmem %s0, %s356
      %p358 = pneg %p43
      %p359 = pneg %p40
      %p360 = pneg %p64
      %p361 = pneg %p61
      %p362 = pneg %p85
      %p363 = pneg %p82
      %p364 = pneg %p106
      %p365 = pneg %p103
      %p366 = pneg %p127
      %p367 = pneg %p124
      %p368 = pneg %p148
      %p369 = pneg %p145
      %p370 = pneg %p169
      %p371 = pneg %p166
      %p372 = scmp.lt.s32.totalorder %s22, 3
      %s373 = scalar_select %p372, %s22, 3
      %s374 = smul.addr %s373, 2
      %s375 = smul.addr %s374, 4
      %s376 = scalar_lea.vmem %s7, %s375
      %p377 = pneg %p195
      %p378 = pneg %p192
      %p379 = pneg %p216
      %p380 = pneg %p213
      %p381 = pneg %p237
      %p382 = pneg %p234
      %p383 = pneg %p258
      %p384 = pneg %p255
      %p385 = pneg %p284
      %p386 = pneg %p281
      %p387 = scmp.lt.s32.totalorder %s22, 3
      %s388 = scalar_select %p387, %s22, 3
      %s389 = smul.addr %s388, 4
      %s390 = smul.addr %s389, 4
      %s391 = scalar_lea.vmem %s11, %s390
      %p392 = scmp.lt.s32.totalorder %s22, 3
      %s393 = scalar_select %p392, %s22, 3
      %s394 = smul.addr %s393, 12
      %s395 = smul.addr %s394, 4
      %s396 = scalar_lea.vmem %s0, %s395
      %p397 = scmp.lt.s32.totalorder %s22, 3
      %s398 = scalar_select %p397, %s22, 3
      %s399 = smul.addr %s398, 2
      %s400 = smul.addr %s399, 4
      %s401 = scalar_lea.vmem %s7, %s400
      %p402 = scmp.lt.s32.totalorder %s22, 3
      %s403 = scalar_select %p402, %s22, 3
      %s404 = smul.addr %s403, 4
      %s405 = smul.addr %s404, 4
      %s406 = scalar_lea.vmem %s11, %s405
      %v408 = vld [vmem:[%s396] sm:$0xff]
      %v409 = vld [vmem:[%s396 + $0x8] sm:$0xff]
      %v410 = vld [vmem:[%s396 + $0x10] sm:$0xff]
      %v411 = vld [vmem:[%s396 + $0x18] sm:$0xff]
      %v412 = vld [vmem:[%s396 + $0x20] sm:$0xff]
      %v413 = vld [vmem:[%s396 + $0x28] sm:$0xff]
      %v414 = vld [vmem:[%s1] sm:$0xf]
      %v415 = vld [vmem:[%s1 + $0x4] sm:$0xf]
      %v416 = vld [vmem:[%s1 + $0x8] sm:$0xf]
      %v417 = vld [vmem:[%s1 + $0xc] sm:$0xf]
      %v422 = vunpack.c.l.b16 %v414
      %v423 = vunpack.c.l.b16 %v415
      %v424 = vunpack.c.l.b16 %v416
      %v425 = vunpack.c.l.b16 %v417
      %v426 = vpack.c.b16 %v423, %v422
      %v427 = vpack.c.b16 %v425, %v424
      %v434 = vunpack.c.l.b16 %v408
      %v435 = vunpack.c.h.b16 %v408
      %v436 = vunpack.c.l.b16 %v409
      %v437 = vunpack.c.h.b16 %v409
      %v438 = vunpack.c.l.b16 %v410
      %v439 = vunpack.c.h.b16 %v410
      %v440 = vunpack.c.l.b16 %v411
      %v441 = vunpack.c.h.b16 %v411
      %v442 = vunpack.c.l.b16 %v412
      %v443 = vunpack.c.h.b16 %v412
      %v444 = vunpack.c.l.b16 %v413
      %v445 = vunpack.c.h.b16 %v413
      %v446 = vpack.c.b16 %v436, %v434
      %v447 = vpack.c.b16 %v437, %v435
      %v448 = vpack.c.b16 %v440, %v438
      %v449 = vpack.c.b16 %v441, %v439
      %v450 = vpack.c.b16 %v444, %v442
      %v451 = vpack.c.b16 %v445, %v443
      %vm458 = vcmask 392192
      %v460 = vsel %vm458, %v426, 0
      %v463 = vsel %vm458, %v427, 0
      %465 = vmatprep.subr.bf16.mxu0 0
      %466 = vmatpush1.bf16.msra.mxu0 0
      %467 = vmatprep.subr.bf16.mxu0 0
      %468 = vmatpush1.bf16.msra.mxu0 0
      %469 = vmatprep.subr.bf16.mxu0 0
      %470 = vmatpush1.bf16.msra.mxu0 0
      %471 = vmatprep.subr.bf16.mxu0 0
      %472 = vmatpush1.bf16.msra.mxu0 0
      %473 = vmatprep.subr.bf16.mxu0 0
      %474 = vmatpush1.bf16.msra.mxu0 0
      %475 = vmatprep.subr.bf16.mxu0 %v451
      %476 = vmatpush1.bf16.msra.mxu0 %v450
      %477 = vmatprep.subr.bf16.mxu0 %v449
      %478 = vmatpush1.bf16.msra.mxu0 %v448
      %479 = vmatprep.subr.bf16.mxu0 %v447
      %480 = vmatpush1.bf16.msra.mxu0 %v446
      %481 = vmatprep.subr.bf16.mxu0 0
      %482 = vmatpush2.bf16.msra.mxu0 0
      %483 = vmatprep.subr.bf16.mxu0 0
      %484 = vmatpush2.bf16.msra.mxu0 0
      %485 = vmatprep.subr.bf16.mxu0 0
      %486 = vmatpush2.bf16.msra.mxu0 0
      %487 = vmatprep.subr.bf16.mxu0 0
      %488 = vmatpush2.bf16.msra.mxu0 0
      %489 = vmatprep.subr.bf16.mxu0 0
      %490 = vmatpush2.bf16.msra.mxu0 0
      %491 = vmatprep.subr.bf16.mxu0 0
      %492 = vmatpush2.bf16.msra.mxu0 0
      %493 = vmatprep.subr.bf16.mxu0 0
      %494 = vmatpush2.bf16.msra.mxu0 0
      %495 = vmatprep.subr.bf16.mxu0 0
      %496 = vmatpush2.bf16.msra.mxu0 0
      %497 = vmatprep.mubr.bf16.mxu0 0
      %498 = vmatmul.mubr.bf16.gmra.mxu0 %v460
      %v499 = vpop.f32.mrf.mxu0
      %v500 = vadd.f32 0.0, %v499
      %v501 = vpop.f32.mrf.mxu0
      %v502 = vadd.f32 0.0, %v501
      %v503 = vpop.f32.mrf.mxu0
      %v504 = vadd.f32 0.0, %v503
      %v505 = vpop.f32.mrf.mxu0
      %v506 = vadd.f32 0.0, %v505
      %507 = vmatprep.mubr.bf16.mxu0 0
      %508 = vmatmul.mubr.bf16.gmra.mxu0 %v463
      %v509 = vpop.f32.mrf.mxu0
      %v510 = vadd.f32 0.0, %v509
      %v511 = vpop.f32.mrf.mxu0
      %v512 = vadd.f32 0.0, %v511
      %v513 = vpop.f32.mrf.mxu0
      %v514 = vadd.f32 0.0, %v513
      %v515 = vpop.f32.mrf.mxu0
      %v516 = vadd.f32 0.0, %v515
      %517 = vdwg.mxu0
      %v518 = vld [vmem:[%s2] sm:$0xff]
      %v519 = vld [vmem:[%s2 + $0x8] sm:$0xff]
      %v520 = vld [vmem:[%s2 + $0x10] sm:$0xff]
      %v521 = vld [vmem:[%s2 + $0x18] sm:$0xff]
      %523 = vset.pattern.permute.xlu0 0
      %524 = vperm.xlu0 %523, %v518
      %v525 = vpop.permute.xlu0 %524
      %528 = vset.pattern.permute.xlu0 0
      %529 = vperm.xlu0 %528, %v519
      %v530 = vpop.permute.xlu0 %529
      %533 = vset.pattern.permute.xlu0 0
      %534 = vperm.xlu0 %533, %v520
      %v535 = vpop.permute.xlu0 %534
      %538 = vset.pattern.permute.xlu0 0
      %539 = vperm.xlu0 %538, %v521
      %v540 = vpop.permute.xlu0 %539
      %v542 = vmul.f32 %v500, %v525
      %v543 = vmul.f32 %v502, %v525
      %v544 = vmul.f32 %v504, %v530
      %v545 = vmul.f32 %v506, %v530
      %v546 = vmul.f32 %v510, %v535
      %v547 = vmul.f32 %v512, %v535
      %v548 = vmul.f32 %v514, %v540
      %v549 = vmul.f32 %v516, %v540
      %v550 = vld [vmem:[%s3] sm:$0xff]
      %v551 = vld [vmem:[%s3 + $0x8] sm:$0xff]
      %v552 = vld [vmem:[%s3 + $0x10] sm:$0xff]
      %v553 = vld [vmem:[%s3 + $0x18] sm:$0xff]
      %555 = vset.pattern.permute.xlu0 0
      %556 = vperm.xlu0 %555, %v550
      %v557 = vpop.permute.xlu0 %556
      %560 = vset.pattern.permute.xlu0 0
      %561 = vperm.xlu0 %560, %v551
      %v562 = vpop.permute.xlu0 %561
      %565 = vset.pattern.permute.xlu0 0
      %566 = vperm.xlu0 %565, %v552
      %v567 = vpop.permute.xlu0 %566
      %570 = vset.pattern.permute.xlu0 0
      %571 = vperm.xlu0 %570, %v553
      %v572 = vpop.permute.xlu0 %571
      %v574 = vadd.f32 %v542, %v557
      %v575 = vadd.f32 %v543, %v557
      %v576 = vadd.f32 %v544, %v562
      %v577 = vadd.f32 %v545, %v562
      %v578 = vadd.f32 %v546, %v567
      %v579 = vadd.f32 %v547, %v567
      %v580 = vadd.f32 %v548, %v572
      %v581 = vadd.f32 %v549, %v572
      %v582 = vmax.f32 %v574, 0.0
      %v583 = vmax.f32 %v575, 0.0
      %v584 = vmax.f32 %v576, 0.0
      %v585 = vmax.f32 %v577, 0.0
      %v586 = vmax.f32 %v578, 0.0
      %v587 = vmax.f32 %v579, 0.0
      %v588 = vmax.f32 %v580, 0.0
      %v589 = vmax.f32 %v581, 0.0
      %v590 = vpack.c.bf16 %v584, %v582
      %v591 = vpack.c.bf16 %v585, %v583
      %v592 = vpack.c.bf16 %v588, %v586
      %v593 = vpack.c.bf16 %v589, %v587
      %vm594 = vcmask 257024
      %595 = vst.msk [vmem:[#allocation2] sm:$0xf] %vm594, 0
      %596 = vst.msk [vmem:[#allocation2 + $0x8] sm:$0xf] %vm594, 0
      %597 = vst.msk [vmem:[#allocation2 + $0x10] sm:$0xf] %vm594, 0
      %598 = vst.msk [vmem:[#allocation2 + $0x18] sm:$0xf] %vm594, 0
      %599 = vst.msk [vmem:[#allocation3] sm:$0xf] %vm594, 0
      %600 = vst.msk [vmem:[#allocation3 + $0x8] sm:$0xf] %vm594, 0
      %601 = vst.msk [vmem:[#allocation3 + $0x10] sm:$0xf] %vm594, 0
      %602 = vst.msk [vmem:[#allocation3 + $0x18] sm:$0xf] %vm594, 0
      %v605 = vunpack.c.l.b16 %v590
      %v606 = vunpack.c.h.b16 %v590
      %v607 = vunpack.c.l.b16 %v592
      %v608 = vunpack.c.h.b16 %v592
      %v609 = vpack.c.b16 %v605, %v605
      %v610 = vpack.c.b16 %v606, %v606
      %v611 = vpack.c.b16 %v607, %v607
      %v612 = vpack.c.b16 %v608, %v608
      %613 = vrot.lane.b32.xlu0 %v609, 32
      %v614 = vpop.permute.xlu0 %613
      %615 = vrot.lane.b32.xlu0 %v610, 32
      %v616 = vpop.permute.xlu0 %615
      %617 = vrot.lane.b32.xlu0 %v611, 32
      %v618 = vpop.permute.xlu0 %617
      %619 = vrot.lane.b32.xlu0 %v612, 32
      %v620 = vpop.permute.xlu0 %619
      %v621 = vrot.slane %v614, 4
      %v622 = vrot.slane %v616, 4
      %v623 = vrot.slane %v618, 4
      %v624 = vrot.slane %v620, 4
      %vm625 = vcmask 261120
      %v626 = vsel %vm625, %v621, %v614
      %v627 = vsel %vm625, %v622, %v616
      %v628 = vsel %vm625, %v623, %v618
      %v629 = vsel %vm625, %v624, %v620
      %vm634 = vcmask 1043712
      %vm635 = vcmask 261124
      %vm636 = vmor %vm635, %vm634
      %637 = vst.msk [vmem:[#allocation2] sm:$0xff] %vm636, %v626
      %638 = vst.msk [vmem:[#allocation2 + $0x8] sm:$0xff] %vm636, %v627
      %639 = vst.msk [vmem:[#allocation2 + $0x10] sm:$0xff] %vm636, %v628
      %640 = vst.msk [vmem:[#allocation2 + $0x18] sm:$0xff] %vm636, %v629
      %v643 = vunpack.c.l.b16 %v591
      %v644 = vunpack.c.h.b16 %v591
      %v645 = vunpack.c.l.b16 %v593
      %v646 = vunpack.c.h.b16 %v593
      %v647 = vpack.c.b16 %v643, %v643
      %v648 = vpack.c.b16 %v644, %v644
      %v649 = vpack.c.b16 %v645, %v645
      %v650 = vpack.c.b16 %v646, %v646
      %651 = vrot.lane.b32.xlu0 %v647, 32
      %v652 = vpop.permute.xlu0 %651
      %653 = vrot.lane.b32.xlu0 %v648, 32
      %v654 = vpop.permute.xlu0 %653
      %655 = vrot.lane.b32.xlu0 %v649, 32
      %v656 = vpop.permute.xlu0 %655
      %657 = vrot.lane.b32.xlu0 %v650, 32
      %v658 = vpop.permute.xlu0 %657
      %v659 = vrot.slane %v652, 4
      %v660 = vrot.slane %v654, 4
      %v661 = vrot.slane %v656, 4
      %v662 = vrot.slane %v658, 4
      %v663 = vsel %vm625, %v659, %v652
      %v664 = vsel %vm625, %v660, %v654
      %v665 = vsel %vm625, %v661, %v656
      %v666 = vsel %vm625, %v662, %v658
      %671 = vst.msk [vmem:[#allocation3] sm:$0xff] %vm636, %v663
      %672 = vst.msk [vmem:[#allocation3 + $0x8] sm:$0xff] %vm636, %v664
      %673 = vst.msk [vmem:[#allocation3 + $0x10] sm:$0xff] %vm636, %v665
      %674 = vst.msk [vmem:[#allocation3 + $0x18] sm:$0xff] %vm636, %v666
      %vm675 = vcmask 519424
      %676 = vst.msk [vmem:[#allocation2 + $0x4] sm:$0xf] %vm675, 0
      %677 = vst.msk [vmem:[#allocation2 + $0xc] sm:$0xf] %vm675, 0
      %678 = vst.msk [vmem:[#allocation2 + $0x14] sm:$0xf] %vm675, 0
      %679 = vst.msk [vmem:[#allocation2 + $0x1c] sm:$0xf] %vm675, 0
      %680 = vst.msk [vmem:[#allocation3 + $0x4] sm:$0xf] %vm675, 0
      %681 = vst.msk [vmem:[#allocation3 + $0xc] sm:$0xf] %vm675, 0
      %682 = vst.msk [vmem:[#allocation3 + $0x14] sm:$0xf] %vm675, 0
      %683 = vst.msk [vmem:[#allocation3 + $0x1c] sm:$0xf] %vm675, 0
      %v684 = vld [vmem:[#allocation2] sm:$0xf]
      %v685 = vld [vmem:[#allocation2 + $0x8] sm:$0xf]
      %v686 = vld [vmem:[#allocation2 + $0x10] sm:$0xf]
      %v687 = vld [vmem:[#allocation2 + $0x18] sm:$0xf]
      %v688 = vld [vmem:[%s4] sm:$0xf]
      %v689 = vld [vmem:[%s4 + $0x4] sm:$0xf]
      %v690 = vld [vmem:[%s4 + $0x8] sm:$0xf]
      %v691 = vld [vmem:[%s4 + $0xc] sm:$0xf]
      %v692 = vld [vmem:[#allocation3] sm:$0xf]
      %v693 = vld [vmem:[#allocation3 + $0x8] sm:$0xf]
      %v694 = vld [vmem:[#allocation3 + $0x10] sm:$0xf]
      %v695 = vld [vmem:[#allocation3 + $0x18] sm:$0xf]
      %s696 = scalar_lea.vmem %s4, 16
      %v697 = vld [vmem:[%s696] sm:$0xf]
      %v698 = vld [vmem:[%s696 + $0x4] sm:$0xf]
      %v699 = vld [vmem:[%s696 + $0x8] sm:$0xf]
      %v700 = vld [vmem:[%s696 + $0xc] sm:$0xf]
      %v705 = vunpack.c.l.b16 %v697
      %v706 = vunpack.c.l.b16 %v698
      %v707 = vunpack.c.l.b16 %v699
      %v708 = vunpack.c.l.b16 %v700
      %v709 = vpack.c.b16 %v706, %v705
      %v710 = vpack.c.b16 %v708, %v707
      %v715 = vunpack.c.l.b16 %v692
      %v716 = vunpack.c.l.b16 %v693
      %v717 = vunpack.c.l.b16 %v694
      %v718 = vunpack.c.l.b16 %v695
      %v719 = vpack.c.b16 %v716, %v715
      %v720 = vpack.c.b16 %v718, %v717
      %vm723 = vcmask 261120
      %v725 = vsel %vm723, %v709, 0
      %v728 = vsel %vm723, %v710, 0
      %730 = vmatprep.subr.bf16.mxu0 0
      %731 = vmatpush1.bf16.msra.mxu0 0
      %732 = vmatprep.subr.bf16.mxu0 0
      %733 = vmatpush1.bf16.msra.mxu0 0
      %734 = vmatprep.subr.bf16.mxu0 0
      %735 = vmatpush1.bf16.msra.mxu0 0
      %736 = vmatprep.subr.bf16.mxu0 0
      %737 = vmatpush1.bf16.msra.mxu0 0
      %738 = vmatprep.subr.bf16.mxu0 0
      %739 = vmatpush1.bf16.msra.mxu0 0
      %740 = vmatprep.subr.bf16.mxu0 0
      %741 = vmatpush1.bf16.msra.mxu0 0
      %742 = vmatprep.subr.bf16.mxu0 0
      %743 = vmatpush1.bf16.msra.mxu0 %v720
      %744 = vmatprep.subr.bf16.mxu0 0
      %745 = vmatpush1.bf16.msra.mxu0 %v719
      %746 = vmatprep.subr.bf16.mxu0 0
      %747 = vmatpush2.bf16.msra.mxu0 0
      %748 = vmatprep.subr.bf16.mxu0 0
      %749 = vmatpush2.bf16.msra.mxu0 0
      %750 = vmatprep.subr.bf16.mxu0 0
      %751 = vmatpush2.bf16.msra.mxu0 0
      %752 = vmatprep.subr.bf16.mxu0 0
      %753 = vmatpush2.bf16.msra.mxu0 0
      %754 = vmatprep.subr.bf16.mxu0 0
      %755 = vmatpush2.bf16.msra.mxu0 0
      %756 = vmatprep.subr.bf16.mxu0 0
      %757 = vmatpush2.bf16.msra.mxu0 0
      %758 = vmatprep.subr.bf16.mxu0 0
      %759 = vmatpush2.bf16.msra.mxu0 0
      %760 = vmatprep.subr.bf16.mxu0 0
      %761 = vmatpush2.bf16.msra.mxu0 0
      %762 = vmatprep.mubr.bf16.mxu0 0
      %763 = vmatmul.mubr.bf16.gmra.mxu0 %v725
      %v764 = vpop.f32.mrf.mxu0
      %v765 = vadd.f32 0.0, %v764
      %v766 = vpop.f32.mrf.mxu0
      %v767 = vpop.f32.mrf.mxu0
      %v768 = vadd.f32 0.0, %v767
      %v769 = vpop.f32.mrf.mxu0
      %770 = vmatprep.mubr.bf16.mxu0 0
      %771 = vmatmul.mubr.bf16.gmra.mxu0 %v728
      %v772 = vpop.f32.mrf.mxu0
      %v773 = vadd.f32 0.0, %v772
      %v774 = vpop.f32.mrf.mxu0
      %v775 = vpop.f32.mrf.mxu0
      %v776 = vadd.f32 0.0, %v775
      %v777 = vpop.f32.mrf.mxu0
      %778 = vdwg.mxu0
      %v783 = vunpack.c.l.b16 %v688
      %v784 = vunpack.c.l.b16 %v689
      %v785 = vunpack.c.l.b16 %v690
      %v786 = vunpack.c.l.b16 %v691
      %v787 = vpack.c.b16 %v784, %v783
      %v788 = vpack.c.b16 %v786, %v785
      %v793 = vunpack.c.l.b16 %v684
      %v794 = vunpack.c.l.b16 %v685
      %v795 = vunpack.c.l.b16 %v686
      %v796 = vunpack.c.l.b16 %v687
      %v797 = vpack.c.b16 %v794, %v793
      %v798 = vpack.c.b16 %v796, %v795
      %v802 = vsel %vm723, %v787, 0
      %v805 = vsel %vm723, %v788, 0
      %807 = vmatprep.subr.bf16.mxu0 0
      %808 = vmatpush1.bf16.msra.mxu0 0
      %809 = vmatprep.subr.bf16.mxu0 0
      %810 = vmatpush1.bf16.msra.mxu0 0
      %811 = vmatprep.subr.bf16.mxu0 0
      %812 = vmatpush1.bf16.msra.mxu0 0
      %813 = vmatprep.subr.bf16.mxu0 0
      %814 = vmatpush1.bf16.msra.mxu0 0
      %815 = vmatprep.subr.bf16.mxu0 0
      %816 = vmatpush1.bf16.msra.mxu0 0
      %817 = vmatprep.subr.bf16.mxu0 0
      %818 = vmatpush1.bf16.msra.mxu0 0
      %819 = vmatprep.subr.bf16.mxu0 0
      %820 = vmatpush1.bf16.msra.mxu0 %v798
      %821 = vmatprep.subr.bf16.mxu0 0
      %822 = vmatpush1.bf16.msra.mxu0 %v797
      %823 = vmatprep.subr.bf16.mxu0 0
      %824 = vmatpush2.bf16.msra.mxu0 0
      %825 = vmatprep.subr.bf16.mxu0 0
      %826 = vmatpush2.bf16.msra.mxu0 0
      %827 = vmatprep.subr.bf16.mxu0 0
      %828 = vmatpush2.bf16.msra.mxu0 0
      %829 = vmatprep.subr.bf16.mxu0 0
      %830 = vmatpush2.bf16.msra.mxu0 0
      %831 = vmatprep.subr.bf16.mxu0 0
      %832 = vmatpush2.bf16.msra.mxu0 0
      %833 = vmatprep.subr.bf16.mxu0 0
      %834 = vmatpush2.bf16.msra.mxu0 0
      %835 = vmatprep.subr.bf16.mxu0 0
      %836 = vmatpush2.bf16.msra.mxu0 0
      %837 = vmatprep.subr.bf16.mxu0 0
      %838 = vmatpush2.bf16.msra.mxu0 0
      %839 = vmatprep.mubr.bf16.mxu0 0
      %840 = vmatmul.mubr.bf16.gmra.mxu0 %v802
      %v841 = vpop.f32.mrf.mxu0
      %v842 = vadd.f32 %v765, %v841
      %v843 = vpop.f32.mrf.mxu0
      %v844 = vpop.f32.mrf.mxu0
      %v845 = vadd.f32 %v768, %v844
      %v846 = vpop.f32.mrf.mxu0
      %847 = vmatprep.mubr.bf16.mxu0 0
      %848 = vmatmul.mubr.bf16.gmra.mxu0 %v805
      %v849 = vpop.f32.mrf.mxu0
      %v850 = vadd.f32 %v773, %v849
      %v851 = vpop.f32.mrf.mxu0
      %v852 = vpop.f32.mrf.mxu0
      %v853 = vadd.f32 %v776, %v852
      %v854 = vpop.f32.mrf.mxu0
      %855 = vdwg.mxu0
      %v856 = vld [vmem:[#allocation2] sm:$0xff]
      %v857 = vld [vmem:[#allocation2 + $0x8] sm:$0xff]
      %v858 = vld [vmem:[#allocation2 + $0x10] sm:$0xff]
      %v859 = vld [vmem:[#allocation2 + $0x18] sm:$0xff]
      %s860 = scalar_lea.vmem %s4, 32
      %v861 = vld [vmem:[%s860] sm:$0xf]
      %v862 = vld [vmem:[%s860 + $0x4] sm:$0xf]
      %v863 = vld [vmem:[%s860 + $0x8] sm:$0xf]
      %v864 = vld [vmem:[%s860 + $0xc] sm:$0xf]
      %v869 = vunpack.c.l.b16 %v861
      %v870 = vunpack.c.l.b16 %v862
      %v871 = vunpack.c.l.b16 %v863
      %v872 = vunpack.c.l.b16 %v864
      %v873 = vpack.c.b16 %v870, %v869
      %v874 = vpack.c.b16 %v872, %v871
      %v879 = vunpack.c.l.b16 %v856
      %v880 = vunpack.c.h.b16 %v856
      %v881 = vunpack.c.l.b16 %v857
      %v882 = vunpack.c.h.b16 %v857
      %v883 = vunpack.c.l.b16 %v858
      %v884 = vunpack.c.h.b16 %v858
      %v885 = vunpack.c.l.b16 %v859
      %v886 = vunpack.c.h.b16 %v859
      %v887 = vpack.c.b16 %v881, %v879
      %v888 = vpack.c.b16 %v882, %v880
      %v889 = vpack.c.b16 %v885, %v883
      %v890 = vpack.c.b16 %v886, %v884
      %891 = vrot.lane.b32.xlu0 %v887, 112
      %v892 = vpop.permute.xlu0 %891
      %893 = vrot.lane.b32.xlu0 %v888, 112
      %v894 = vpop.permute.xlu0 %893
      %895 = vrot.lane.b32.xlu0 %v889, 112
      %v896 = vpop.permute.xlu0 %895
      %897 = vrot.lane.b32.xlu0 %v890, 112
      %v898 = vpop.permute.xlu0 %897
      %vm899 = vcmask 916480
      %v900 = vsel %vm899, %v892, %v894
      %v901 = vsel %vm899, %v896, %v898
      %v905 = vsel %vm723, %v873, 0
      %v908 = vsel %vm723, %v874, 0
      %910 = vmatprep.subr.bf16.mxu0 0
      %911 = vmatpush1.bf16.msra.mxu0 0
      %912 = vmatprep.subr.bf16.mxu0 0
      %913 = vmatpush1.bf16.msra.mxu0 0
      %914 = vmatprep.subr.bf16.mxu0 0
      %915 = vmatpush1.bf16.msra.mxu0 0
      %916 = vmatprep.subr.bf16.mxu0 0
      %917 = vmatpush1.bf16.msra.mxu0 0
      %918 = vmatprep.subr.bf16.mxu0 0
      %919 = vmatpush1.bf16.msra.mxu0 0
      %920 = vmatprep.subr.bf16.mxu0 0
      %921 = vmatpush1.bf16.msra.mxu0 0
      %922 = vmatprep.subr.bf16.mxu0 0
      %923 = vmatpush1.bf16.msra.mxu0 %v901
      %924 = vmatprep.subr.bf16.mxu0 0
      %925 = vmatpush1.bf16.msra.mxu0 %v900
      %926 = vmatprep.subr.bf16.mxu0 0
      %927 = vmatpush2.bf16.msra.mxu0 0
      %928 = vmatprep.subr.bf16.mxu0 0
      %929 = vmatpush2.bf16.msra.mxu0 0
      %930 = vmatprep.subr.bf16.mxu0 0
      %931 = vmatpush2.bf16.msra.mxu0 0
      %932 = vmatprep.subr.bf16.mxu0 0
      %933 = vmatpush2.bf16.msra.mxu0 0
      %934 = vmatprep.subr.bf16.mxu0 0
      %935 = vmatpush2.bf16.msra.mxu0 0
      %936 = vmatprep.subr.bf16.mxu0 0
      %937 = vmatpush2.bf16.msra.mxu0 0
      %938 = vmatprep.subr.bf16.mxu0 0
      %939 = vmatpush2.bf16.msra.mxu0 0
      %940 = vmatprep.subr.bf16.mxu0 0
      %941 = vmatpush2.bf16.msra.mxu0 0
      %942 = vmatprep.mubr.bf16.mxu0 0
      %943 = vmatmul.mubr.bf16.gmra.mxu0 %v905
      %v944 = vpop.f32.mrf.mxu0
      %v945 = vadd.f32 0.0, %v944
      %v946 = vpop.f32.mrf.mxu0
      %v947 = vpop.f32.mrf.mxu0
      %v948 = vadd.f32 0.0, %v947
      %v949 = vpop.f32.mrf.mxu0
      %950 = vmatprep.mubr.bf16.mxu0 0
      %951 = vmatmul.mubr.bf16.gmra.mxu0 %v908
      %v952 = vpop.f32.mrf.mxu0
      %v953 = vadd.f32 0.0, %v952
      %v954 = vpop.f32.mrf.mxu0
      %v955 = vpop.f32.mrf.mxu0
      %v956 = vadd.f32 0.0, %v955
      %v957 = vpop.f32.mrf.mxu0
      %958 = vdwg.mxu0
      %v959 = vadd.f32 %v842, %v945
      %v960 = vadd.f32 %v845, %v948
      %v961 = vadd.f32 %v850, %v953
      %v962 = vadd.f32 %v853, %v956
      %v963 = vld [vmem:[#allocation3] sm:$0xff]
      %v964 = vld [vmem:[#allocation3 + $0x8] sm:$0xff]
      %v965 = vld [vmem:[#allocation3 + $0x10] sm:$0xff]
      %v966 = vld [vmem:[#allocation3 + $0x18] sm:$0xff]
      %s967 = scalar_lea.vmem %s4, 48
      %v968 = vld [vmem:[%s967] sm:$0xf]
      %v969 = vld [vmem:[%s967 + $0x4] sm:$0xf]
      %v970 = vld [vmem:[%s967 + $0x8] sm:$0xf]
      %v971 = vld [vmem:[%s967 + $0xc] sm:$0xf]
      %v976 = vunpack.c.l.b16 %v968
      %v977 = vunpack.c.l.b16 %v969
      %v978 = vunpack.c.l.b16 %v970
      %v979 = vunpack.c.l.b16 %v971
      %v980 = vpack.c.b16 %v977, %v976
      %v981 = vpack.c.b16 %v979, %v978
      %v986 = vunpack.c.l.b16 %v963
      %v987 = vunpack.c.h.b16 %v963
      %v988 = vunpack.c.l.b16 %v964
      %v989 = vunpack.c.h.b16 %v964
      %v990 = vunpack.c.l.b16 %v965
      %v991 = vunpack.c.h.b16 %v965
      %v992 = vunpack.c.l.b16 %v966
      %v993 = vunpack.c.h.b16 %v966
      %v994 = vpack.c.b16 %v988, %v986
      %v995 = vpack.c.b16 %v989, %v987
      %v996 = vpack.c.b16 %v992, %v990
      %v997 = vpack.c.b16 %v993, %v991
      %998 = vrot.lane.b32.xlu0 %v994, 112
      %v999 = vpop.permute.xlu0 %998
      %1000 = vrot.lane.b32.xlu0 %v995, 112
      %v1001 = vpop.permute.xlu0 %1000
      %1002 = vrot.lane.b32.xlu0 %v996, 112
      %v1003 = vpop.permute.xlu0 %1002
      %1004 = vrot.lane.b32.xlu0 %v997, 112
      %v1005 = vpop.permute.xlu0 %1004
      %v1006 = vsel %vm899, %v999, %v1001
      %v1007 = vsel %vm899, %v1003, %v1005
      %v1011 = vsel %vm723, %v980, 0
      %v1014 = vsel %vm723, %v981, 0
      %1016 = vmatprep.subr.bf16.mxu0 0
      %1017 = vmatpush1.bf16.msra.mxu0 0
      %1018 = vmatprep.subr.bf16.mxu0 0
      %1019 = vmatpush1.bf16.msra.mxu0 0
      %1020 = vmatprep.subr.bf16.mxu0 0
      %1021 = vmatpush1.bf16.msra.mxu0 0
      %1022 = vmatprep.subr.bf16.mxu0 0
      %1023 = vmatpush1.bf16.msra.mxu0 0
      %1024 = vmatprep.subr.bf16.mxu0 0
      %1025 = vmatpush1.bf16.msra.mxu0 0
      %1026 = vmatprep.subr.bf16.mxu0 0
      %1027 = vmatpush1.bf16.msra.mxu0 0
      %1028 = vmatprep.subr.bf16.mxu0 0
      %1029 = vmatpush1.bf16.msra.mxu0 %v1007
      %1030 = vmatprep.subr.bf16.mxu0 0
      %1031 = vmatpush1.bf16.msra.mxu0 %v1006
      %1032 = vmatprep.subr.bf16.mxu0 0
      %1033 = vmatpush2.bf16.msra.mxu0 0
      %1034 = vmatprep.subr.bf16.mxu0 0
      %1035 = vmatpush2.bf16.msra.mxu0 0
      %1036 = vmatprep.subr.bf16.mxu0 0
      %1037 = vmatpush2.bf16.msra.mxu0 0
      %1038 = vmatprep.subr.bf16.mxu0 0
      %1039 = vmatpush2.bf16.msra.mxu0 0
      %1040 = vmatprep.subr.bf16.mxu0 0
      %1041 = vmatpush2.bf16.msra.mxu0 0
      %1042 = vmatprep.subr.bf16.mxu0 0
      %1043 = vmatpush2.bf16.msra.mxu0 0
      %1044 = vmatprep.subr.bf16.mxu0 0
      %1045 = vmatpush2.bf16.msra.mxu0 0
      %1046 = vmatprep.subr.bf16.mxu0 0
      %1047 = vmatpush2.bf16.msra.mxu0 0
      %1048 = vmatprep.mubr.bf16.mxu0 0
      %1049 = vmatmul.mubr.bf16.gmra.mxu0 %v1011
      %v1050 = vpop.f32.mrf.mxu0
      %v1051 = vadd.f32 0.0, %v1050
      %v1052 = vpop.f32.mrf.mxu0
      %v1053 = vpop.f32.mrf.mxu0
      %v1054 = vadd.f32 0.0, %v1053
      %v1055 = vpop.f32.mrf.mxu0
      %1056 = vmatprep.mubr.bf16.mxu0 0
      %1057 = vmatmul.mubr.bf16.gmra.mxu0 %v1014
      %v1058 = vpop.f32.mrf.mxu0
      %v1059 = vadd.f32 0.0, %v1058
      %v1060 = vpop.f32.mrf.mxu0
      %v1061 = vpop.f32.mrf.mxu0
      %v1062 = vadd.f32 0.0, %v1061
      %v1063 = vpop.f32.mrf.mxu0
      %1064 = vdwg.mxu0
      %v1065 = vadd.f32 %v959, %v1051
      %v1066 = vadd.f32 %v960, %v1054
      %v1067 = vadd.f32 %v961, %v1059
      %v1068 = vadd.f32 %v962, %v1062
      %s1069 = scalar_lea.vmem %s4, 64
      %v1070 = vld [vmem:[%s1069] sm:$0xf]
      %v1071 = vld [vmem:[%s1069 + $0x4] sm:$0xf]
      %v1072 = vld [vmem:[%s1069 + $0x8] sm:$0xf]
      %v1073 = vld [vmem:[%s1069 + $0xc] sm:$0xf]
      %v1078 = vunpack.c.l.b16 %v1070
      %v1079 = vunpack.c.l.b16 %v1071
      %v1080 = vunpack.c.l.b16 %v1072
      %v1081 = vunpack.c.l.b16 %v1073
      %v1082 = vpack.c.b16 %v1079, %v1078
      %v1083 = vpack.c.b16 %v1081, %v1080
      %1084 = vrot.lane.b32.xlu0 %v887, 96
      %v1085 = vpop.permute.xlu0 %1084
      %1086 = vrot.lane.b32.xlu0 %v888, 96
      %v1087 = vpop.permute.xlu0 %1086
      %1088 = vrot.lane.b32.xlu0 %v889, 96
      %v1089 = vpop.permute.xlu0 %1088
      %1090 = vrot.lane.b32.xlu0 %v890, 96
      %v1091 = vpop.permute.xlu0 %1090
      %vm1092 = vcmask 785408
      %v1093 = vsel %vm1092, %v1085, %v1087
      %v1094 = vsel %vm1092, %v1089, %v1091
      %v1098 = vsel %vm723, %v1082, 0
      %v1101 = vsel %vm723, %v1083, 0
      %1103 = vmatprep.subr.bf16.mxu0 0
      %1104 = vmatpush1.bf16.msra.mxu0 0
      %1105 = vmatprep.subr.bf16.mxu0 0
      %1106 = vmatpush1.bf16.msra.mxu0 0
      %1107 = vmatprep.subr.bf16.mxu0 0
      %1108 = vmatpush1.bf16.msra.mxu0 0
      %1109 = vmatprep.subr.bf16.mxu0 0
      %1110 = vmatpush1.bf16.msra.mxu0 0
      %1111 = vmatprep.subr.bf16.mxu0 0
      %1112 = vmatpush1.bf16.msra.mxu0 0
      %1113 = vmatprep.subr.bf16.mxu0 0
      %1114 = vmatpush1.bf16.msra.mxu0 0
      %1115 = vmatprep.subr.bf16.mxu0 0
      %1116 = vmatpush1.bf16.msra.mxu0 %v1094
      %1117 = vmatprep.subr.bf16.mxu0 0
      %1118 = vmatpush1.bf16.msra.mxu0 %v1093
      %1119 = vmatprep.subr.bf16.mxu0 0
      %1120 = vmatpush2.bf16.msra.mxu0 0
      %1121 = vmatprep.subr.bf16.mxu0 0
      %1122 = vmatpush2.bf16.msra.mxu0 0
      %1123 = vmatprep.subr.bf16.mxu0 0
      %1124 = vmatpush2.bf16.msra.mxu0 0
      %1125 = vmatprep.subr.bf16.mxu0 0
      %1126 = vmatpush2.bf16.msra.mxu0 0
      %1127 = vmatprep.subr.bf16.mxu0 0
      %1128 = vmatpush2.bf16.msra.mxu0 0
      %1129 = vmatprep.subr.bf16.mxu0 0
      %1130 = vmatpush2.bf16.msra.mxu0 0
      %1131 = vmatprep.subr.bf16.mxu0 0
      %1132 = vmatpush2.bf16.msra.mxu0 0
      %1133 = vmatprep.subr.bf16.mxu0 0
      %1134 = vmatpush2.bf16.msra.mxu0 0
      %1135 = vmatprep.mubr.bf16.mxu0 0
      %1136 = vmatmul.mubr.bf16.gmra.mxu0 %v1098
      %v1137 = vpop.f32.mrf.mxu0
      %v1138 = vadd.f32 0.0, %v1137
      %v1139 = vpop.f32.mrf.mxu0
      %v1140 = vpop.f32.mrf.mxu0
      %v1141 = vadd.f32 0.0, %v1140
      %v1142 = vpop.f32.mrf.mxu0
      %1143 = vmatprep.mubr.bf16.mxu0 0
      %1144 = vmatmul.mubr.bf16.gmra.mxu0 %v1101
      %v1145 = vpop.f32.mrf.mxu0
      %v1146 = vadd.f32 0.0, %v1145
      %v1147 = vpop.f32.mrf.mxu0
      %v1148 = vpop.f32.mrf.mxu0
      %v1149 = vadd.f32 0.0, %v1148
      %v1150 = vpop.f32.mrf.mxu0
      %1151 = vdwg.mxu0
      %v1152 = vadd.f32 %v1065, %v1138
      %v1153 = vadd.f32 %v1066, %v1141
      %v1154 = vadd.f32 %v1067, %v1146
      %v1155 = vadd.f32 %v1068, %v1149
      %s1156 = scalar_lea.vmem %s4, 80
      %v1157 = vld [vmem:[%s1156] sm:$0xf]
      %v1158 = vld [vmem:[%s1156 + $0x4] sm:$0xf]
      %v1159 = vld [vmem:[%s1156 + $0x8] sm:$0xf]
      %v1160 = vld [vmem:[%s1156 + $0xc] sm:$0xf]
      %v1165 = vunpack.c.l.b16 %v1157
      %v1166 = vunpack.c.l.b16 %v1158
      %v1167 = vunpack.c.l.b16 %v1159
      %v1168 = vunpack.c.l.b16 %v1160
      %v1169 = vpack.c.b16 %v1166, %v1165
      %v1170 = vpack.c.b16 %v1168, %v1167
      %1171 = vrot.lane.b32.xlu0 %v994, 96
      %v1172 = vpop.permute.xlu0 %1171
      %1173 = vrot.lane.b32.xlu0 %v995, 96
      %v1174 = vpop.permute.xlu0 %1173
      %1175 = vrot.lane.b32.xlu0 %v996, 96
      %v1176 = vpop.permute.xlu0 %1175
      %1177 = vrot.lane.b32.xlu0 %v997, 96
      %v1178 = vpop.permute.xlu0 %1177
      %v1179 = vsel %vm1092, %v1172, %v1174
      %v1180 = vsel %vm1092, %v1176, %v1178
      %v1184 = vsel %vm723, %v1169, 0
      %v1187 = vsel %vm723, %v1170, 0
      %1189 = vmatprep.subr.bf16.mxu0 0
      %1190 = vmatpush1.bf16.msra.mxu0 0
      %1191 = vmatprep.subr.bf16.mxu0 0
      %1192 = vmatpush1.bf16.msra.mxu0 0
      %1193 = vmatprep.subr.bf16.mxu0 0
      %1194 = vmatpush1.bf16.msra.mxu0 0
      %1195 = vmatprep.subr.bf16.mxu0 0
      %1196 = vmatpush1.bf16.msra.mxu0 0
      %1197 = vmatprep.subr.bf16.mxu0 0
      %1198 = vmatpush1.bf16.msra.mxu0 0
      %1199 = vmatprep.subr.bf16.mxu0 0
      %1200 = vmatpush1.bf16.msra.mxu0 0
      %1201 = vmatprep.subr.bf16.mxu0 0
      %1202 = vmatpush1.bf16.msra.mxu0 %v1180
      %1203 = vmatprep.subr.bf16.mxu0 0
      %1204 = vmatpush1.bf16.msra.mxu0 %v1179
      %1205 = vmatprep.subr.bf16.mxu0 0
      %1206 = vmatpush2.bf16.msra.mxu0 0
      %1207 = vmatprep.subr.bf16.mxu0 0
      %1208 = vmatpush2.bf16.msra.mxu0 0
      %1209 = vmatprep.subr.bf16.mxu0 0
      %1210 = vmatpush2.bf16.msra.mxu0 0
      %1211 = vmatprep.subr.bf16.mxu0 0
      %1212 = vmatpush2.bf16.msra.mxu0 0
      %1213 = vmatprep.subr.bf16.mxu0 0
      %1214 = vmatpush2.bf16.msra.mxu0 0
      %1215 = vmatprep.subr.bf16.mxu0 0
      %1216 = vmatpush2.bf16.msra.mxu0 0
      %1217 = vmatprep.subr.bf16.mxu0 0
      %1218 = vmatpush2.bf16.msra.mxu0 0
      %1219 = vmatprep.subr.bf16.mxu0 0
      %1220 = vmatpush2.bf16.msra.mxu0 0
      %1221 = vmatprep.mubr.bf16.mxu0 0
      %1222 = vmatmul.mubr.bf16.gmra.mxu0 %v1184
      %v1223 = vpop.f32.mrf.mxu0
      %v1224 = vadd.f32 0.0, %v1223
      %v1225 = vpop.f32.mrf.mxu0
      %v1226 = vpop.f32.mrf.mxu0
      %v1227 = vadd.f32 0.0, %v1226
      %v1228 = vpop.f32.mrf.mxu0
      %1229 = vmatprep.mubr.bf16.mxu0 0
      %1230 = vmatmul.mubr.bf16.gmra.mxu0 %v1187
      %v1231 = vpop.f32.mrf.mxu0
      %v1232 = vadd.f32 0.0, %v1231
      %v1233 = vpop.f32.mrf.mxu0
      %v1234 = vpop.f32.mrf.mxu0
      %v1235 = vadd.f32 0.0, %v1234
      %v1236 = vpop.f32.mrf.mxu0
      %1237 = vdwg.mxu0
      %v1238 = vadd.f32 %v1152, %v1224
      %v1239 = vadd.f32 %v1153, %v1227
      %v1240 = vadd.f32 %v1154, %v1232
      %v1241 = vadd.f32 %v1155, %v1235
      %s1242 = scalar_lea.vmem %s4, 96
      %v1243 = vld [vmem:[%s1242] sm:$0xf]
      %v1244 = vld [vmem:[%s1242 + $0x4] sm:$0xf]
      %v1245 = vld [vmem:[%s1242 + $0x8] sm:$0xf]
      %v1246 = vld [vmem:[%s1242 + $0xc] sm:$0xf]
      %v1251 = vunpack.c.l.b16 %v1243
      %v1252 = vunpack.c.l.b16 %v1244
      %v1253 = vunpack.c.l.b16 %v1245
      %v1254 = vunpack.c.l.b16 %v1246
      %v1255 = vpack.c.b16 %v1252, %v1251
      %v1256 = vpack.c.b16 %v1254, %v1253
      %1257 = vrot.lane.b32.xlu0 %v887, 80
      %v1258 = vpop.permute.xlu0 %1257
      %1259 = vrot.lane.b32.xlu0 %v888, 80
      %v1260 = vpop.permute.xlu0 %1259
      %1261 = vrot.lane.b32.xlu0 %v889, 80
      %v1262 = vpop.permute.xlu0 %1261
      %1263 = vrot.lane.b32.xlu0 %v890, 80
      %v1264 = vpop.permute.xlu0 %1263
      %vm1265 = vcmask 654336
      %v1266 = vsel %vm1265, %v1258, %v1260
      %v1267 = vsel %vm1265, %v1262, %v1264
      %v1271 = vsel %vm723, %v1255, 0
      %v1274 = vsel %vm723, %v1256, 0
      %1276 = vmatprep.subr.bf16.mxu0 0
      %1277 = vmatpush1.bf16.msra.mxu0 0
      %1278 = vmatprep.subr.bf16.mxu0 0
      %1279 = vmatpush1.bf16.msra.mxu0 0
      %1280 = vmatprep.subr.bf16.mxu0 0
      %1281 = vmatpush1.bf16.msra.mxu0 0
      %1282 = vmatprep.subr.bf16.mxu0 0
      %1283 = vmatpush1.bf16.msra.mxu0 0
      %1284 = vmatprep.subr.bf16.mxu0 0
      %1285 = vmatpush1.bf16.msra.mxu0 0
      %1286 = vmatprep.subr.bf16.mxu0 0
      %1287 = vmatpush1.bf16.msra.mxu0 0
      %1288 = vmatprep.subr.bf16.mxu0 0
      %1289 = vmatpush1.bf16.msra.mxu0 %v1267
      %1290 = vmatprep.subr.bf16.mxu0 0
      %1291 = vmatpush1.bf16.msra.mxu0 %v1266
      %1292 = vmatprep.subr.bf16.mxu0 0
      %1293 = vmatpush2.bf16.msra.mxu0 0
      %1294 = vmatprep.subr.bf16.mxu0 0
      %1295 = vmatpush2.bf16.msra.mxu0 0
      %1296 = vmatprep.subr.bf16.mxu0 0
      %1297 = vmatpush2.bf16.msra.mxu0 0
      %1298 = vmatprep.subr.bf16.mxu0 0
      %1299 = vmatpush2.bf16.msra.mxu0 0
      %1300 = vmatprep.subr.bf16.mxu0 0
      %1301 = vmatpush2.bf16.msra.mxu0 0
      %1302 = vmatprep.subr.bf16.mxu0 0
      %1303 = vmatpush2.bf16.msra.mxu0 0
      %1304 = vmatprep.subr.bf16.mxu0 0
      %1305 = vmatpush2.bf16.msra.mxu0 0
      %1306 = vmatprep.subr.bf16.mxu0 0
      %1307 = vmatpush2.bf16.msra.mxu0 0
      %1308 = vmatprep.mubr.bf16.mxu0 0
      %1309 = vmatmul.mubr.bf16.gmra.mxu0 %v1271
      %v1310 = vpop.f32.mrf.mxu0
      %v1311 = vadd.f32 0.0, %v1310
      %v1312 = vpop.f32.mrf.mxu0
      %v1313 = vpop.f32.mrf.mxu0
      %v1314 = vadd.f32 0.0, %v1313
      %v1315 = vpop.f32.mrf.mxu0
      %1316 = vmatprep.mubr.bf16.mxu0 0
      %1317 = vmatmul.mubr.bf16.gmra.mxu0 %v1274
      %v1318 = vpop.f32.mrf.mxu0
      %v1319 = vadd.f32 0.0, %v1318
      %v1320 = vpop.f32.mrf.mxu0
      %v1321 = vpop.f32.mrf.mxu0
      %v1322 = vadd.f32 0.0, %v1321
      %v1323 = vpop.f32.mrf.mxu0
      %1324 = vdwg.mxu0
      %v1325 = vadd.f32 %v1238, %v1311
      %v1326 = vadd.f32 %v1239, %v1314
      %v1327 = vadd.f32 %v1240, %v1319
      %v1328 = vadd.f32 %v1241, %v1322
      %s1329 = scalar_lea.vmem %s4, 112
      %v1330 = vld [vmem:[%s1329] sm:$0xf]
      %v1331 = vld [vmem:[%s1329 + $0x4] sm:$0xf]
      %v1332 = vld [vmem:[%s1329 + $0x8] sm:$0xf]
      %v1333 = vld [vmem:[%s1329 + $0xc] sm:$0xf]
      %v1338 = vunpack.c.l.b16 %v1330
      %v1339 = vunpack.c.l.b16 %v1331
      %v1340 = vunpack.c.l.b16 %v1332
      %v1341 = vunpack.c.l.b16 %v1333
      %v1342 = vpack.c.b16 %v1339, %v1338
      %v1343 = vpack.c.b16 %v1341, %v1340
      %1344 = vrot.lane.b32.xlu0 %v994, 80
      %v1345 = vpop.permute.xlu0 %1344
      %1346 = vrot.lane.b32.xlu0 %v995, 80
      %v1347 = vpop.permute.xlu0 %1346
      %1348 = vrot.lane.b32.xlu0 %v996, 80
      %v1349 = vpop.permute.xlu0 %1348
      %1350 = vrot.lane.b32.xlu0 %v997, 80
      %v1351 = vpop.permute.xlu0 %1350
      %v1352 = vsel %vm1265, %v1345, %v1347
      %v1353 = vsel %vm1265, %v1349, %v1351
      %v1357 = vsel %vm723, %v1342, 0
      %v1360 = vsel %vm723, %v1343, 0
      %1362 = vmatprep.subr.bf16.mxu0 0
      %1363 = vmatpush1.bf16.msra.mxu0 0
      %1364 = vmatprep.subr.bf16.mxu0 0
      %1365 = vmatpush1.bf16.msra.mxu0 0
      %1366 = vmatprep.subr.bf16.mxu0 0
      %1367 = vmatpush1.bf16.msra.mxu0 0
      %1368 = vmatprep.subr.bf16.mxu0 0
      %1369 = vmatpush1.bf16.msra.mxu0 0
      %1370 = vmatprep.subr.bf16.mxu0 0
      %1371 = vmatpush1.bf16.msra.mxu0 0
      %1372 = vmatprep.subr.bf16.mxu0 0
      %1373 = vmatpush1.bf16.msra.mxu0 0
      %1374 = vmatprep.subr.bf16.mxu0 0
      %1375 = vmatpush1.bf16.msra.mxu0 %v1353
      %1376 = vmatprep.subr.bf16.mxu0 0
      %1377 = vmatpush1.bf16.msra.mxu0 %v1352
      %1378 = vmatprep.subr.bf16.mxu0 0
      %1379 = vmatpush2.bf16.msra.mxu0 0
      %1380 = vmatprep.subr.bf16.mxu0 0
      %1381 = vmatpush2.bf16.msra.mxu0 0
      %1382 = vmatprep.subr.bf16.mxu0 0
      %1383 = vmatpush2.bf16.msra.mxu0 0
      %1384 = vmatprep.subr.bf16.mxu0 0
      %1385 = vmatpush2.bf16.msra.mxu0 0
      %1386 = vmatprep.subr.bf16.mxu0 0
      %1387 = vmatpush2.bf16.msra.mxu0 0
      %1388 = vmatprep.subr.bf16.mxu0 0
      %1389 = vmatpush2.bf16.msra.mxu0 0
      %1390 = vmatprep.subr.bf16.mxu0 0
      %1391 = vmatpush2.bf16.msra.mxu0 0
      %1392 = vmatprep.subr.bf16.mxu0 0
      %1393 = vmatpush2.bf16.msra.mxu0 0
      %1394 = vmatprep.mubr.bf16.mxu0 0
      %1395 = vmatmul.mubr.bf16.gmra.mxu0 %v1357
      %v1396 = vpop.f32.mrf.mxu0
      %v1397 = vadd.f32 0.0, %v1396
      %v1398 = vpop.f32.mrf.mxu0
      %v1399 = vpop.f32.mrf.mxu0
      %v1400 = vadd.f32 0.0, %v1399
      %v1401 = vpop.f32.mrf.mxu0
      %1402 = vmatprep.mubr.bf16.mxu0 0
      %1403 = vmatmul.mubr.bf16.gmra.mxu0 %v1360
      %v1404 = vpop.f32.mrf.mxu0
      %v1405 = vadd.f32 0.0, %v1404
      %v1406 = vpop.f32.mrf.mxu0
      %v1407 = vpop.f32.mrf.mxu0
      %v1408 = vadd.f32 0.0, %v1407
      %v1409 = vpop.f32.mrf.mxu0
      %1410 = vdwg.mxu0
      %v1411 = vadd.f32 %v1325, %v1397
      %v1412 = vadd.f32 %v1326, %v1400
      %v1413 = vadd.f32 %v1327, %v1405
      %v1414 = vadd.f32 %v1328, %v1408
      %s1415 = scalar_lea.vmem %s4, 128
      %v1416 = vld [vmem:[%s1415] sm:$0xf]
      %v1417 = vld [vmem:[%s1415 + $0x4] sm:$0xf]
      %v1418 = vld [vmem:[%s1415 + $0x8] sm:$0xf]
      %v1419 = vld [vmem:[%s1415 + $0xc] sm:$0xf]
      %v1424 = vunpack.c.l.b16 %v1416
      %v1425 = vunpack.c.l.b16 %v1417
      %v1426 = vunpack.c.l.b16 %v1418
      %v1427 = vunpack.c.l.b16 %v1419
      %v1428 = vpack.c.b16 %v1425, %v1424
      %v1429 = vpack.c.b16 %v1427, %v1426
      %1430 = vrot.lane.b32.xlu0 %v887, 64
      %v1431 = vpop.permute.xlu0 %1430
      %1432 = vrot.lane.b32.xlu0 %v888, 64
      %v1433 = vpop.permute.xlu0 %1432
      %1434 = vrot.lane.b32.xlu0 %v889, 64
      %v1435 = vpop.permute.xlu0 %1434
      %1436 = vrot.lane.b32.xlu0 %v890, 64
      %v1437 = vpop.permute.xlu0 %1436
      %vm1438 = vcmask 523264
      %v1439 = vsel %vm1438, %v1431, %v1433
      %v1440 = vsel %vm1438, %v1435, %v1437
      %v1444 = vsel %vm723, %v1428, 0
      %v1447 = vsel %vm723, %v1429, 0
      %1449 = vmatprep.subr.bf16.mxu0 0
      %1450 = vmatpush1.bf16.msra.mxu0 0
      %1451 = vmatprep.subr.bf16.mxu0 0
      %1452 = vmatpush1.bf16.msra.mxu0 0
      %1453 = vmatprep.subr.bf16.mxu0 0
      %1454 = vmatpush1.bf16.msra.mxu0 0
      %1455 = vmatprep.subr.bf16.mxu0 0
      %1456 = vmatpush1.bf16.msra.mxu0 0
      %1457 = vmatprep.subr.bf16.mxu0 0
      %1458 = vmatpush1.bf16.msra.mxu0 0
      %1459 = vmatprep.subr.bf16.mxu0 0
      %1460 = vmatpush1.bf16.msra.mxu0 0
      %1461 = vmatprep.subr.bf16.mxu0 0
      %1462 = vmatpush1.bf16.msra.mxu0 %v1440
      %1463 = vmatprep.subr.bf16.mxu0 0
      %1464 = vmatpush1.bf16.msra.mxu0 %v1439
      %1465 = vmatprep.subr.bf16.mxu0 0
      %1466 = vmatpush2.bf16.msra.mxu0 0
      %1467 = vmatprep.subr.bf16.mxu0 0
      %1468 = vmatpush2.bf16.msra.mxu0 0
      %1469 = vmatprep.subr.bf16.mxu0 0
      %1470 = vmatpush2.bf16.msra.mxu0 0
      %1471 = vmatprep.subr.bf16.mxu0 0
      %1472 = vmatpush2.bf16.msra.mxu0 0
      %1473 = vmatprep.subr.bf16.mxu0 0
      %1474 = vmatpush2.bf16.msra.mxu0 0
      %1475 = vmatprep.subr.bf16.mxu0 0
      %1476 = vmatpush2.bf16.msra.mxu0 0
      %1477 = vmatprep.subr.bf16.mxu0 0
      %1478 = vmatpush2.bf16.msra.mxu0 0
      %1479 = vmatprep.subr.bf16.mxu0 0
      %1480 = vmatpush2.bf16.msra.mxu0 0
      %1481 = vmatprep.mubr.bf16.mxu0 0
      %1482 = vmatmul.mubr.bf16.gmra.mxu0 %v1444
      %v1483 = vpop.f32.mrf.mxu0
      %v1484 = vadd.f32 0.0, %v1483
      %v1485 = vpop.f32.mrf.mxu0
      %v1486 = vpop.f32.mrf.mxu0
      %v1487 = vadd.f32 0.0, %v1486
      %v1488 = vpop.f32.mrf.mxu0
      %1489 = vmatprep.mubr.bf16.mxu0 0
      %1490 = vmatmul.mubr.bf16.gmra.mxu0 %v1447
      %v1491 = vpop.f32.mrf.mxu0
      %v1492 = vadd.f32 0.0, %v1491
      %v1493 = vpop.f32.mrf.mxu0
      %v1494 = vpop.f32.mrf.mxu0
      %v1495 = vadd.f32 0.0, %v1494
      %v1496 = vpop.f32.mrf.mxu0
      %1497 = vdwg.mxu0
      %v1498 = vadd.f32 %v1411, %v1484
      %v1499 = vadd.f32 %v1412, %v1487
      %v1500 = vadd.f32 %v1413, %v1492
      %v1501 = vadd.f32 %v1414, %v1495
      %v1502 = vld [vmem:[%s5] sm:$0xff]
      %v1503 = vld [vmem:[%s5 + $0x8] sm:$0xff]
      %v1504 = vld [vmem:[%s5 + $0x10] sm:$0xff]
      %v1505 = vld [vmem:[%s5 + $0x18] sm:$0xff]
      %1507 = vset.pattern.permute.xlu0 0
      %1508 = vperm.xlu0 %1507, %v1502
      %v1509 = vpop.permute.xlu0 %1508
      %1512 = vset.pattern.permute.xlu0 0
      %1513 = vperm.xlu0 %1512, %v1503
      %v1514 = vpop.permute.xlu0 %1513
      %1517 = vset.pattern.permute.xlu0 0
      %1518 = vperm.xlu0 %1517, %v1504
      %v1519 = vpop.permute.xlu0 %1518
      %1522 = vset.pattern.permute.xlu0 0
      %1523 = vperm.xlu0 %1522, %v1505
      %v1524 = vpop.permute.xlu0 %1523
      %v1526 = vmul.f32 %v1498, %v1509
      %v1527 = vmul.f32 %v1499, %v1514
      %v1528 = vmul.f32 %v1500, %v1519
      %v1529 = vmul.f32 %v1501, %v1524
      %v1530 = vld [vmem:[%s6] sm:$0xff]
      %v1531 = vld [vmem:[%s6 + $0x8] sm:$0xff]
      %v1532 = vld [vmem:[%s6 + $0x10] sm:$0xff]
      %v1533 = vld [vmem:[%s6 + $0x18] sm:$0xff]
      %1535 = vset.pattern.permute.xlu0 0
      %1536 = vperm.xlu0 %1535, %v1530
      %v1537 = vpop.permute.xlu0 %1536
      %1540 = vset.pattern.permute.xlu0 0
      %1541 = vperm.xlu0 %1540, %v1531
      %v1542 = vpop.permute.xlu0 %1541
      %1545 = vset.pattern.permute.xlu0 0
      %1546 = vperm.xlu0 %1545, %v1532
      %v1547 = vpop.permute.xlu0 %1546
      %1550 = vset.pattern.permute.xlu0 0
      %1551 = vperm.xlu0 %1550, %v1533
      %v1552 = vpop.permute.xlu0 %1551
      %v1554 = vadd.f32 %v1526, %v1537
      %v1555 = vadd.f32 %v1527, %v1542
      %v1556 = vadd.f32 %v1528, %v1547
      %v1557 = vadd.f32 %v1529, %v1552
      %v1558 = vmax.f32 %v1554, 0.0
      %v1559 = vmax.f32 %v1555, 0.0
      %v1560 = vmax.f32 %v1556, 0.0
      %v1561 = vmax.f32 %v1557, 0.0
      %v1562 = vld [vmem:[%s8] sm:$0xf]
      %v1563 = vld [vmem:[%s8 + $0x4] sm:$0xf]
      %v1564 = vld [vmem:[%s8 + $0x8] sm:$0xf]
      %v1565 = vld [vmem:[%s8 + $0xc] sm:$0xf]
      %v1566 = vld [vmem:[%s401] sm:$0xf]
      %v1567 = vld [vmem:[%s401 + $0x4] sm:$0xf]
      %v1572 = vunpack.c.l.b16 %v1562
      %v1573 = vunpack.c.l.b16 %v1563
      %v1574 = vunpack.c.l.b16 %v1564
      %v1575 = vunpack.c.l.b16 %v1565
      %v1576 = vpack.c.b16 %v1573, %v1572
      %v1577 = vpack.c.b16 %v1575, %v1574
      %v1580 = vunpack.c.l.b16 %v1566
      %v1581 = vunpack.c.l.b16 %v1567
      %v1582 = vpack.c.b16 %v1581, %v1580
      %vm1584 = vcmask 130048
      %v1586 = vsel %vm1584, %v1576, 0
      %v1589 = vsel %vm1584, %v1577, 0
      %1591 = vmatprep.subr.bf16.mxu0 0
      %1592 = vmatpush1.bf16.msra.mxu0 0
      %1593 = vmatprep.subr.bf16.mxu0 0
      %1594 = vmatpush1.bf16.msra.mxu0 0
      %1595 = vmatprep.subr.bf16.mxu0 0
      %1596 = vmatpush1.bf16.msra.mxu0 0
      %1597 = vmatprep.subr.bf16.mxu0 0
      %1598 = vmatpush1.bf16.msra.mxu0 0
      %1599 = vmatprep.subr.bf16.mxu0 0
      %1600 = vmatpush1.bf16.msra.mxu0 0
      %1601 = vmatprep.subr.bf16.mxu0 0
      %1602 = vmatpush1.bf16.msra.mxu0 0
      %1603 = vmatprep.subr.bf16.mxu0 0
      %1604 = vmatpush1.bf16.msra.mxu0 0
      %1605 = vmatprep.subr.bf16.mxu0 0
      %1606 = vmatpush1.bf16.msra.mxu0 %v1582
      %1607 = vmatprep.subr.bf16.mxu0 0
      %1608 = vmatpush2.bf16.msra.mxu0 0
      %1609 = vmatprep.subr.bf16.mxu0 0
      %1610 = vmatpush2.bf16.msra.mxu0 0
      %1611 = vmatprep.subr.bf16.mxu0 0
      %1612 = vmatpush2.bf16.msra.mxu0 0
      %1613 = vmatprep.subr.bf16.mxu0 0
      %1614 = vmatpush2.bf16.msra.mxu0 0
      %1615 = vmatprep.subr.bf16.mxu0 0
      %1616 = vmatpush2.bf16.msra.mxu0 0
      %1617 = vmatprep.subr.bf16.mxu0 0
      %1618 = vmatpush2.bf16.msra.mxu0 0
      %1619 = vmatprep.subr.bf16.mxu0 0
      %1620 = vmatpush2.bf16.msra.mxu0 0
      %1621 = vmatprep.subr.bf16.mxu0 0
      %1622 = vmatpush2.bf16.msra.mxu0 0
      %1623 = vmatprep.mubr.bf16.mxu0 0
      %1624 = vmatmul.mubr.bf16.gmra.mxu0 %v1586
      %v1625 = vpop.f32.mrf.mxu0
      %v1626 = vadd.f32 0.0, %v1625
      %v1627 = vpop.f32.mrf.mxu0
      %v1628 = vpop.f32.mrf.mxu0
      %v1629 = vadd.f32 0.0, %v1628
      %v1630 = vpop.f32.mrf.mxu0
      %1631 = vmatprep.mubr.bf16.mxu0 0
      %1632 = vmatmul.mubr.bf16.gmra.mxu0 %v1589
      %v1633 = vpop.f32.mrf.mxu0
      %v1634 = vadd.f32 0.0, %v1633
      %v1635 = vpop.f32.mrf.mxu0
      %v1636 = vpop.f32.mrf.mxu0
      %v1637 = vadd.f32 0.0, %v1636
      %v1638 = vpop.f32.mrf.mxu0
      %1639 = vdwg.mxu0
      %v1640 = vld [vmem:[%s9] sm:$0xff]
      %v1641 = vld [vmem:[%s9 + $0x8] sm:$0xff]
      %v1642 = vld [vmem:[%s9 + $0x10] sm:$0xff]
      %v1643 = vld [vmem:[%s9 + $0x18] sm:$0xff]
      %1645 = vset.pattern.permute.xlu0 0
      %1646 = vperm.xlu0 %1645, %v1640
      %v1647 = vpop.permute.xlu0 %1646
      %1650 = vset.pattern.permute.xlu0 0
      %1651 = vperm.xlu0 %1650, %v1641
      %v1652 = vpop.permute.xlu0 %1651
      %1655 = vset.pattern.permute.xlu0 0
      %1656 = vperm.xlu0 %1655, %v1642
      %v1657 = vpop.permute.xlu0 %1656
      %1660 = vset.pattern.permute.xlu0 0
      %1661 = vperm.xlu0 %1660, %v1643
      %v1662 = vpop.permute.xlu0 %1661
      %v1664 = vmul.f32 %v1626, %v1647
      %v1665 = vmul.f32 %v1629, %v1652
      %v1666 = vmul.f32 %v1634, %v1657
      %v1667 = vmul.f32 %v1637, %v1662
      %v1668 = vld [vmem:[%s10] sm:$0xff]
      %v1669 = vld [vmem:[%s10 + $0x8] sm:$0xff]
      %v1670 = vld [vmem:[%s10 + $0x10] sm:$0xff]
      %v1671 = vld [vmem:[%s10 + $0x18] sm:$0xff]
      %1673 = vset.pattern.permute.xlu0 0
      %1674 = vperm.xlu0 %1673, %v1668
      %v1675 = vpop.permute.xlu0 %1674
      %1678 = vset.pattern.permute.xlu0 0
      %1679 = vperm.xlu0 %1678, %v1669
      %v1680 = vpop.permute.xlu0 %1679
      %1683 = vset.pattern.permute.xlu0 0
      %1684 = vperm.xlu0 %1683, %v1670
      %v1685 = vpop.permute.xlu0 %1684
      %1688 = vset.pattern.permute.xlu0 0
      %1689 = vperm.xlu0 %1688, %v1671
      %v1690 = vpop.permute.xlu0 %1689
      %v1692 = vadd.f32 %v1664, %v1675
      %v1693 = vadd.f32 %v1665, %v1680
      %v1694 = vadd.f32 %v1666, %v1685
      %v1695 = vadd.f32 %v1667, %v1690
      %v1696 = vmax.f32 %v1692, 0.0
      %v1697 = vmax.f32 %v1693, 0.0
      %v1698 = vmax.f32 %v1694, 0.0
      %v1699 = vmax.f32 %v1695, 0.0
      %v1700 = vadd.f32 %v1558, %v1696
      %v1701 = vadd.f32 %v1559, %v1697
      %v1702 = vadd.f32 %v1560, %v1698
      %v1703 = vadd.f32 %v1561, %v1699
      %v1704 = vpack.c.bf16 %v1701, %v1700
      %v1705 = vpack.c.bf16 %v1703, %v1702
      %v1708 = vunpack.c.l.b16 %v1704
      %v1709 = vunpack.c.h.b16 %v1704
      %v1710 = vunpack.c.l.b16 %v1705
      %v1711 = vunpack.c.h.b16 %v1705
      %v1712 = vpack.c.b16 %v1708, %v1708
      %v1713 = vpack.c.b16 %v1709, %v1709
      %v1714 = vpack.c.b16 %v1710, %v1710
      %v1715 = vpack.c.b16 %v1711, %v1711
      %1720 = vst [vmem:[%s406] sm:$0xf] %v1712
      %1721 = vst [vmem:[%s406 + $0x4] sm:$0xf] %v1713
      %1722 = vst [vmem:[%s406 + $0x8] sm:$0xf] %v1714
      %1723 = vst [vmem:[%s406 + $0xc] sm:$0xf] %v1715
      %p1724 = scmp.lt.s32.totalorder %s22, 3
      %s1725 = scalar_select %p1724, %s22, 3
      %s1726 = smul.addr %s1725, 4
      %s1727 = smul.addr %s1726, 4
      %s1728 = scalar_lea.vmem %s11, %s1727
      // Predicated region
      $region65: #{_lambda_.13} parent=63 // pred_check
        %p1729 = pneg %p281
      $region66: #{_lambda_.13} parent=63 // pred_check_branch
        %1731 = sbr.rel (%p1729) target = $region68
      $region67: #{_lambda_.13} parent=63 // pred_region
        _
      $region68: #{_lambda_.13} parent=63 // pred_fallthru
        _
    $region64: #{_lambda_.13} parent=5 // pred_fallthru
      _
    %p1732 = scmp.le.s32.totalorder 2, %s17
    // Predicated region
    $region69: #{_lambda_.13} parent=5 // pred_check
      %p1733 = pneg %p1732
    $region70: #{_lambda_.13} parent=5 // pred_check_branch
      %1735 = sbr.rel (%p1733) target = $region72
    $region71: #{_lambda_.13} parent=5 // pred_region
      %s1736 = ssub.s32 %s17, 2
      // Predicated region
      $region73: #{_lambda_.13} parent=71 // pred_check
        %p1737 = pneg %p287
      $region74: #{_lambda_.13} parent=71 // pred_check_branch
        %1739 = sbr.rel (%p1737) target = $region76
      $region75: #{_lambda_.13} parent=71 // pred_region
        %p1740 = scmp.lt.s32.totalorder %s23, 3
        %s1741 = scalar_select %p1740, %s23, 3
        %s1742 = smul.addr %s1741, 4
        %s1743 = smul.addr %s1742, 4
        %s1744 = scalar_lea.vmem %s11, %s1743
      $region76: #{_lambda_.13} parent=71 // pred_fallthru
        _
    $region72: #{_lambda_.13} parent=5 // pred_fallthru
      _
  $region6: #{_lambda_.13} parent=0 // loop_footer
    %s21 = sadd.s32 1, %s17
  $region7: #{_lambda_.13} parent=0 // loop_footer_branch
    %16 = sbr.rel target = $region3
  $region8: #{_lambda_.13} parent=0 // loop_exit
    _

// kernel: _lambda_.15
$region0: #{_lambda_.15}
  #allocation0 [shape = 'u32[]', space=smem, size = 0x4, offset = 0x4, fixed_abs, tag = 'smem constant byte address 0x4 - core index']
  #allocation1 [shape = 'u32[144,128]{1,0:T(1,128)}', space=vmem, size = 0x12000, scoped, tag = 'internal scratch']
  #allocation2 [shape = 'bf16[32,256]{1,0:T(8,128)(2,1)}', space=vmem, size = 0x4000, scoped, tag = 'scratch operand']
  %s0 = inlined_call_operand.vmem [shape: bf16[4,96,128], index: 0, kind: input, shape index: {}]
  %s1 = inlined_call_operand.vmem [shape: bf16[32,96], index: 1, kind: input, shape index: {}]
  %s2 = inlined_call_operand.vmem [shape: f32[32,1], index: 2, kind: input, shape index: {}]
  %s3 = inlined_call_operand.vmem [shape: f32[32,1], index: 3, kind: input, shape index: {}]
  %s4 = inlined_call_operand.vmem [shape: bf16[9,32,32], index: 4, kind: input, shape index: {}]
  %s5 = inlined_call_operand.vmem [shape: f32[32,1], index: 5, kind: input, shape index: {}]
  %s6 = inlined_call_operand.vmem [shape: f32[32,1], index: 6, kind: input, shape index: {}]
  %s7 = inlined_call_operand.vmem [shape: bf16[4,32,128], index: 7, kind: input, shape index: {}]
  %s8 = inlined_call_operand.vmem [shape: bf16[4,32,128], index: 8, kind: output, shape index: {}]
  %s9 = sld [smem:[#allocation0]]
  $region65: #{_lambda_.15} parent=0
    _
  %s11 = ssub.s32 1, %s9
  %s12 = scalar_select 0, %s11, %s9
  loop: start=0, step=1, limit=6
  $region2: #{_lambda_.15} parent=0 // loop_pre_header
    _
  $region3: #{_lambda_.15} parent=0 // loop_header
    %s14 = sphi 0, %s18
    %p15 = scmp.ge.s32.totalorder %s14, 6
    %s24 = sphi 0, %s26
    %s27 = sphi 0, %s24
    %s28 = sphi 0, %s27
    %s44 = sphi 0, %s28
    %s48 = sphi 0, %s48
    %s50 = sphi 0, %s48
    %s51 = sphi 0, %s50
    %s65 = sphi 0, %s51
    %s69 = sphi 0, %s69
    %s71 = sphi 0, %s69
    %s72 = sphi 0, %s71
    %s86 = sphi 0, %s72
    %s90 = sphi 0, %s90
    %s92 = sphi 0, %s90
    %s93 = sphi 0, %s92
    %s107 = sphi 0, %s93
    %s111 = sphi 0, %s111
    %s113 = sphi 0, %s111
    %s114 = sphi 0, %s113
    %s128 = sphi 0, %s114
    %s132 = sphi 0, %s132
    %s134 = sphi 0, %s132
    %s135 = sphi 0, %s134
    %s149 = sphi 0, %s135
    %s153 = sphi 0, %s153
    %s155 = sphi 0, %s153
    %s156 = sphi 0, %s155
    %s170 = sphi 0, %s156
    %s176 = sphi 0, %s178
    %s179 = sphi 0, %s176
    %s180 = sphi 0, %s179
    %s196 = sphi 0, %s180
    %s202 = sphi 0, %s204
    %s205 = sphi 0, %s202
    %s206 = sphi 0, %s205
    %s222 = sphi 0, %s206
  $region4: #{_lambda_.15} parent=0 // loop_header_branch
    %17 = sbr.rel (%p15) target = $region8
  $region5: #{_lambda_.15} parent=0 // loop_body
    %s19 = ssub.s32 %s14, 1
    %s20 = ssub.s32 %s14, 2
    %s21 = sadd.s32 %s14, 1
    %s22 = ssub.s32 %s14, %s21
    %p23 = scmp.eq.s32.totalorder %s22, 0
    %s25 = sadd.s32 %s24, 1
    %s26 = scalar_select %p23, %s24, %s25
    %p29 = pneg %p23
    %p30 = scmp.eq.s32.totalorder %s14, 3
    %p31 = por %p29, %p30
    %p32 = scmp.ne.s32.totalorder %s24, %s27
    %p33 = scmp.eq.s32.totalorder %s14, 0
    %p34 = por %p32, %p33
    %p35 = scmp.ne.s32.totalorder %s24, %s27
    %p36 = scmp.eq.s32.totalorder %s19, 3
    %p37 = por %p35, %p36
    %p38 = scmp.ne.s32.totalorder %s27, %s28
    %p39 = scmp.eq.s32.totalorder %s19, 0
    %p40 = por %p38, %p39
    %p41 = scmp.ne.s32.totalorder %s27, %s28
    %p42 = scmp.eq.s32.totalorder %s20, 3
    %p43 = por %p41, %p42
    %p45 = scmp.ne.s32.totalorder %s28, %s44
    %p46 = scmp.eq.s32.totalorder %s20, 0
    %p47 = por %p45, %p46
    %s49 = sadd.s32 %s48, 1
    %p52 = scmp.eq.s32.totalorder %s14, 3
    %p53 = scmp.ne.s32.totalorder %s48, %s50
    %p54 = scmp.eq.s32.totalorder %s14, 0
    %p55 = por %p53, %p54
    %p56 = scmp.ne.s32.totalorder %s48, %s50
    %p57 = scmp.eq.s32.totalorder %s19, 3
    %p58 = por %p56, %p57
    %p59 = scmp.ne.s32.totalorder %s50, %s51
    %p60 = scmp.eq.s32.totalorder %s19, 0
    %p61 = por %p59, %p60
    %p62 = scmp.ne.s32.totalorder %s50, %s51
    %p63 = scmp.eq.s32.totalorder %s20, 3
    %p64 = por %p62, %p63
    %p66 = scmp.ne.s32.totalorder %s51, %s65
    %p67 = scmp.eq.s32.totalorder %s20, 0
    %p68 = por %p66, %p67
    %s70 = sadd.s32 %s69, 1
    %p73 = scmp.eq.s32.totalorder %s14, 3
    %p74 = scmp.ne.s32.totalorder %s69, %s71
    %p75 = scmp.eq.s32.totalorder %s14, 0
    %p76 = por %p74, %p75
    %p77 = scmp.ne.s32.totalorder %s69, %s71
    %p78 = scmp.eq.s32.totalorder %s19, 3
    %p79 = por %p77, %p78
    %p80 = scmp.ne.s32.totalorder %s71, %s72
    %p81 = scmp.eq.s32.totalorder %s19, 0
    %p82 = por %p80, %p81
    %p83 = scmp.ne.s32.totalorder %s71, %s72
    %p84 = scmp.eq.s32.totalorder %s20, 3
    %p85 = por %p83, %p84
    %p87 = scmp.ne.s32.totalorder %s72, %s86
    %p88 = scmp.eq.s32.totalorder %s20, 0
    %p89 = por %p87, %p88
    %s91 = sadd.s32 %s90, 1
    %p94 = scmp.eq.s32.totalorder %s14, 3
    %p95 = scmp.ne.s32.totalorder %s90, %s92
    %p96 = scmp.eq.s32.totalorder %s14, 0
    %p97 = por %p95, %p96
    %p98 = scmp.ne.s32.totalorder %s90, %s92
    %p99 = scmp.eq.s32.totalorder %s19, 3
    %p100 = por %p98, %p99
    %p101 = scmp.ne.s32.totalorder %s92, %s93
    %p102 = scmp.eq.s32.totalorder %s19, 0
    %p103 = por %p101, %p102
    %p104 = scmp.ne.s32.totalorder %s92, %s93
    %p105 = scmp.eq.s32.totalorder %s20, 3
    %p106 = por %p104, %p105
    %p108 = scmp.ne.s32.totalorder %s93, %s107
    %p109 = scmp.eq.s32.totalorder %s20, 0
    %p110 = por %p108, %p109
    %s112 = sadd.s32 %s111, 1
    %p115 = scmp.eq.s32.totalorder %s14, 3
    %p116 = scmp.ne.s32.totalorder %s111, %s113
    %p117 = scmp.eq.s32.totalorder %s14, 0
    %p118 = por %p116, %p117
    %p119 = scmp.ne.s32.totalorder %s111, %s113
    %p120 = scmp.eq.s32.totalorder %s19, 3
    %p121 = por %p119, %p120
    %p122 = scmp.ne.s32.totalorder %s113, %s114
    %p123 = scmp.eq.s32.totalorder %s19, 0
    %p124 = por %p122, %p123
    %p125 = scmp.ne.s32.totalorder %s113, %s114
    %p126 = scmp.eq.s32.totalorder %s20, 3
    %p127 = por %p125, %p126
    %p129 = scmp.ne.s32.totalorder %s114, %s128
    %p130 = scmp.eq.s32.totalorder %s20, 0
    %p131 = por %p129, %p130
    %s133 = sadd.s32 %s132, 1
    %p136 = scmp.eq.s32.totalorder %s14, 3
    %p137 = scmp.ne.s32.totalorder %s132, %s134
    %p138 = scmp.eq.s32.totalorder %s14, 0
    %p139 = por %p137, %p138
    %p140 = scmp.ne.s32.totalorder %s132, %s134
    %p141 = scmp.eq.s32.totalorder %s19, 3
    %p142 = por %p140, %p141
    %p143 = scmp.ne.s32.totalorder %s134, %s135
    %p144 = scmp.eq.s32.totalorder %s19, 0
    %p145 = por %p143, %p144
    %p146 = scmp.ne.s32.totalorder %s134, %s135
    %p147 = scmp.eq.s32.totalorder %s20, 3
    %p148 = por %p146, %p147
    %p150 = scmp.ne.s32.totalorder %s135, %s149
    %p151 = scmp.eq.s32.totalorder %s20, 0
    %p152 = por %p150, %p151
    %s154 = sadd.s32 %s153, 1
    %p157 = scmp.eq.s32.totalorder %s14, 3
    %p158 = scmp.ne.s32.totalorder %s153, %s155
    %p159 = scmp.eq.s32.totalorder %s14, 0
    %p160 = por %p158, %p159
    %p161 = scmp.ne.s32.totalorder %s153, %s155
    %p162 = scmp.eq.s32.totalorder %s19, 3
    %p163 = por %p161, %p162
    %p164 = scmp.ne.s32.totalorder %s155, %s156
    %p165 = scmp.eq.s32.totalorder %s19, 0
    %p166 = por %p164, %p165
    %p167 = scmp.ne.s32.totalorder %s155, %s156
    %p168 = scmp.eq.s32.totalorder %s20, 3
    %p169 = por %p167, %p168
    %p171 = scmp.ne.s32.totalorder %s156, %s170
    %p172 = scmp.eq.s32.totalorder %s20, 0
    %p173 = por %p171, %p172
    %s174 = ssub.s32 %s14, %s21
    %p175 = scmp.eq.s32.totalorder %s174, 0
    %s177 = sadd.s32 %s176, 1
    %s178 = scalar_select %p175, %s176, %s177
    %p181 = pneg %p175
    %p182 = scmp.eq.s32.totalorder %s14, 3
    %p183 = por %p181, %p182
    %p184 = scmp.ne.s32.totalorder %s176, %s179
    %p185 = scmp.eq.s32.totalorder %s14, 0
    %p186 = por %p184, %p185
    %p187 = scmp.ne.s32.totalorder %s176, %s179
    %p188 = scmp.eq.s32.totalorder %s19, 3
    %p189 = por %p187, %p188
    %p190 = scmp.ne.s32.totalorder %s179, %s180
    %p191 = scmp.eq.s32.totalorder %s19, 0
    %p192 = por %p190, %p191
    %p193 = scmp.ne.s32.totalorder %s179, %s180
    %p194 = scmp.eq.s32.totalorder %s20, 3
    %p195 = por %p193, %p194
    %p197 = scmp.ne.s32.totalorder %s180, %s196
    %p198 = scmp.eq.s32.totalorder %s20, 0
    %p199 = por %p197, %p198
    %s200 = ssub.s32 %s14, %s21
    %p201 = scmp.eq.s32.totalorder %s200, 0
    %s203 = sadd.s32 %s202, 1
    %s204 = scalar_select %p201, %s202, %s203
    %p207 = pneg %p201
    %p208 = scmp.eq.s32.totalorder %s14, 3
    %p209 = por %p207, %p208
    %p210 = scmp.ne.s32.totalorder %s202, %s205
    %p211 = scmp.eq.s32.totalorder %s14, 0
    %p212 = por %p210, %p211
    %p213 = scmp.ne.s32.totalorder %s202, %s205
    %p214 = scmp.eq.s32.totalorder %s19, 3
    %p215 = por %p213, %p214
    %p216 = scmp.ne.s32.totalorder %s205, %s206
    %p217 = scmp.eq.s32.totalorder %s19, 0
    %p218 = por %p216, %p217
    %p219 = scmp.ne.s32.totalorder %s205, %s206
    %p220 = scmp.eq.s32.totalorder %s20, 3
    %p221 = por %p219, %p220
    %p223 = scmp.ne.s32.totalorder %s206, %s222
    %p224 = scmp.eq.s32.totalorder %s20, 0
    %p225 = por %p223, %p224
    %p226 = scmp.le.s32.totalorder 1, %s14
    %p227 = scmp.lt.s32.totalorder %s14, 5
    %p228 = pnand %p226, %p227
    %p229 = pneg %p228
    // Predicated region
    $region9: #{_lambda_.15} parent=5 // pred_check
      _
    $region10: #{_lambda_.15} parent=5 // pred_check_branch
      %231 = sbr.rel (%p228) target = $region12
    $region11: #{_lambda_.15} parent=5 // pred_region
      %s232 = ssub.s32 %s14, 1
      // Predicated region
      $region13: #{_lambda_.15} parent=11 // pred_check
        %p233 = pneg %p61
      $region14: #{_lambda_.15} parent=11 // pred_check_branch
        %235 = sbr.rel (%p233) target = $region16
      $region15: #{_lambda_.15} parent=11 // pred_region
        _
      $region16: #{_lambda_.15} parent=11 // pred_fallthru
        _
      // Predicated region
      $region17: #{_lambda_.15} parent=11 // pred_check
        %p236 = pneg %p82
      $region18: #{_lambda_.15} parent=11 // pred_check_branch
        %238 = sbr.rel (%p236) target = $region20
      $region19: #{_lambda_.15} parent=11 // pred_region
        _
      $region20: #{_lambda_.15} parent=11 // pred_fallthru
        _
      // Predicated region
      $region21: #{_lambda_.15} parent=11 // pred_check
        %p239 = pneg %p103
      $region22: #{_lambda_.15} parent=11 // pred_check_branch
        %241 = sbr.rel (%p239) target = $region24
      $region23: #{_lambda_.15} parent=11 // pred_region
        _
      $region24: #{_lambda_.15} parent=11 // pred_fallthru
        _
      // Predicated region
      $region25: #{_lambda_.15} parent=11 // pred_check
        %p242 = pneg %p124
      $region26: #{_lambda_.15} parent=11 // pred_check_branch
        %244 = sbr.rel (%p242) target = $region28
      $region27: #{_lambda_.15} parent=11 // pred_region
        _
      $region28: #{_lambda_.15} parent=11 // pred_fallthru
        _
      // Predicated region
      $region29: #{_lambda_.15} parent=11 // pred_check
        %p245 = pneg %p145
      $region30: #{_lambda_.15} parent=11 // pred_check_branch
        %247 = sbr.rel (%p245) target = $region32
      $region31: #{_lambda_.15} parent=11 // pred_region
        _
      $region32: #{_lambda_.15} parent=11 // pred_fallthru
        _
      // Predicated region
      $region33: #{_lambda_.15} parent=11 // pred_check
        %p248 = pneg %p166
      $region34: #{_lambda_.15} parent=11 // pred_check_branch
        %250 = sbr.rel (%p248) target = $region36
      $region35: #{_lambda_.15} parent=11 // pred_region
        _
      $region36: #{_lambda_.15} parent=11 // pred_fallthru
        _
    $region12: #{_lambda_.15} parent=5 // pred_fallthru
      _
    %p251 = scmp.lt.s32.totalorder %s14, 4
    // Predicated region
    $region37: #{_lambda_.15} parent=5 // pred_check
      %p252 = pneg %p251
    $region38: #{_lambda_.15} parent=5 // pred_check_branch
      %254 = sbr.rel (%p252) target = $region40
    $region39: #{_lambda_.15} parent=5 // pred_region
      // Predicated region
      $region41: #{_lambda_.15} parent=39 // pred_check
        %p255 = pneg %p34
      $region42: #{_lambda_.15} parent=39 // pred_check_branch
        %257 = sbr.rel (%p255) target = $region44
      $region43: #{_lambda_.15} parent=39 // pred_region
        %p258 = scmp.lt.s32.totalorder %s14, 3
        %s259 = scalar_select %p258, %s14, 3
        %s260 = smul.addr %s259, 12
        %s261 = smul.addr %s260, 4
        %s262 = scalar_lea.vmem %s0, %s261
      $region44: #{_lambda_.15} parent=39 // pred_fallthru
        _
      // Predicated region
      $region45: #{_lambda_.15} parent=39 // pred_check
        %p263 = pneg %p186
      $region46: #{_lambda_.15} parent=39 // pred_check_branch
        %265 = sbr.rel (%p263) target = $region48
      $region47: #{_lambda_.15} parent=39 // pred_region
        %p266 = scmp.lt.s32.totalorder %s14, 3
        %s267 = scalar_select %p266, %s14, 3
        %s268 = smul.addr %s267, 4
        %s269 = smul.addr %s268, 4
        %s270 = scalar_lea.vmem %s7, %s269
      $region48: #{_lambda_.15} parent=39 // pred_fallthru
        _
    $region40: #{_lambda_.15} parent=5 // pred_fallthru
      _
    %p271 = scmp.le.s32.totalorder 1, %s14
    %p272 = scmp.lt.s32.totalorder %s14, 5
    %p273 = pnand %p271, %p272
    %p274 = pneg %p273
    // Predicated region
    $region49: #{_lambda_.15} parent=5 // pred_check
      _
    $region50: #{_lambda_.15} parent=5 // pred_check_branch
      %276 = sbr.rel (%p273) target = $region52
    $region51: #{_lambda_.15} parent=5 // pred_region
      %s277 = ssub.s32 %s14, 1
      %p278 = scmp.lt.s32.totalorder %s19, 3
      %s279 = scalar_select %p278, %s19, 3
      %s280 = smul.addr %s279, 12
      %s281 = smul.addr %s280, 4
      %s282 = scalar_lea.vmem %s0, %s281
      %p283 = pneg %p40
      %p284 = pneg %p37
      %p285 = pneg %p61
      %p286 = pneg %p58
      %p287 = pneg %p82
      %p288 = pneg %p79
      %p289 = pneg %p103
      %p290 = pneg %p100
      %p291 = pneg %p124
      %p292 = pneg %p121
      %p293 = pneg %p145
      %p294 = pneg %p142
      %p295 = pneg %p166
      %p296 = pneg %p163
      %p297 = scmp.lt.s32.totalorder %s19, 3
      %s298 = scalar_select %p297, %s19, 3
      %s299 = smul.addr %s298, 4
      %s300 = smul.addr %s299, 4
      %s301 = scalar_lea.vmem %s7, %s300
      %p302 = pneg %p192
      %p303 = pneg %p189
      %p304 = pneg %p218
      %p305 = pneg %p215
      %p306 = scmp.lt.s32.totalorder %s19, 3
      %s307 = scalar_select %p306, %s19, 3
      %s308 = smul.addr %s307, 4
      %s309 = smul.addr %s308, 4
      %s310 = scalar_lea.vmem %s8, %s309
      %p311 = scmp.lt.s32.totalorder %s19, 3
      %s312 = scalar_select %p311, %s19, 3
      %s313 = smul.addr %s312, 12
      %s314 = smul.addr %s313, 4
      %s315 = scalar_lea.vmem %s0, %s314
      %p316 = scmp.lt.s32.totalorder %s19, 3
      %s317 = scalar_select %p316, %s19, 3
      %s318 = smul.addr %s317, 4
      %s319 = smul.addr %s318, 4
      %s320 = scalar_lea.vmem %s7, %s319
      %p321 = scmp.lt.s32.totalorder %s19, 3
      %s322 = scalar_select %p321, %s19, 3
      %s323 = smul.addr %s322, 4
      %s324 = smul.addr %s323, 4
      %s325 = scalar_lea.vmem %s8, %s324
      %v327 = vld [vmem:[%s315] sm:$0xf]
      %v328 = vld [vmem:[%s315 + $0x4] sm:$0xf]
      %v329 = vld [vmem:[%s315 + $0x8] sm:$0xf]
      %v330 = vld [vmem:[%s315 + $0xc] sm:$0xf]
      %v331 = vld [vmem:[%s315 + $0x10] sm:$0xf]
      %v332 = vld [vmem:[%s315 + $0x14] sm:$0xf]
      %v333 = vld [vmem:[%s315 + $0x18] sm:$0xf]
      %v334 = vld [vmem:[%s315 + $0x1c] sm:$0xf]
      %v335 = vld [vmem:[%s315 + $0x20] sm:$0xf]
      %v336 = vld [vmem:[%s315 + $0x24] sm:$0xf]
      %v337 = vld [vmem:[%s315 + $0x28] sm:$0xf]
      %v338 = vld [vmem:[%s315 + $0x2c] sm:$0xf]
      %v339 = vld [vmem:[%s1] sm:$0xf]
      %v340 = vld [vmem:[%s1 + $0x4] sm:$0xf]
      %v341 = vld [vmem:[%s1 + $0x8] sm:$0xf]
      %v342 = vld [vmem:[%s1 + $0xc] sm:$0xf]
      %v347 = vunpack.c.l.b16 %v339
      %v348 = vunpack.c.l.b16 %v340
      %v349 = vunpack.c.l.b16 %v341
      %v350 = vunpack.c.l.b16 %v342
      %v351 = vpack.c.b16 %v348, %v347
      %v352 = vpack.c.b16 %v350, %v349
      %v365 = vunpack.c.l.b16 %v327
      %v366 = vunpack.c.l.b16 %v328
      %v367 = vunpack.c.l.b16 %v329
      %v368 = vunpack.c.l.b16 %v330
      %v369 = vunpack.c.l.b16 %v331
      %v370 = vunpack.c.l.b16 %v332
      %v371 = vunpack.c.l.b16 %v333
      %v372 = vunpack.c.l.b16 %v334
      %v373 = vunpack.c.l.b16 %v335
      %v374 = vunpack.c.l.b16 %v336
      %v375 = vunpack.c.l.b16 %v337
      %v376 = vunpack.c.l.b16 %v338
      %v377 = vpack.c.b16 %v366, %v365
      %v378 = vpack.c.b16 %v368, %v367
      %v379 = vpack.c.b16 %v370, %v369
      %v380 = vpack.c.b16 %v372, %v371
      %v381 = vpack.c.b16 %v374, %v373
      %v382 = vpack.c.b16 %v376, %v375
      %vm389 = vcmask 785408
      %v391 = vsel %vm389, %v351, 0
      %v394 = vsel %vm389, %v352, 0
      %396 = vmatprep.subr.bf16.mxu0 0
      %397 = vmatpush1.bf16.msra.mxu0 0
      %398 = vmatprep.subr.bf16.mxu0 0
      %399 = vmatpush1.bf16.msra.mxu0 0
      %400 = vmatprep.subr.bf16.mxu0 0
      %401 = vmatpush1.bf16.msra.mxu0 %v382
      %402 = vmatprep.subr.bf16.mxu0 0
      %403 = vmatpush1.bf16.msra.mxu0 %v381
      %404 = vmatprep.subr.bf16.mxu0 0
      %405 = vmatpush1.bf16.msra.mxu0 %v380
      %406 = vmatprep.subr.bf16.mxu0 0
      %407 = vmatpush1.bf16.msra.mxu0 %v379
      %408 = vmatprep.subr.bf16.mxu0 0
      %409 = vmatpush1.bf16.msra.mxu0 %v378
      %410 = vmatprep.subr.bf16.mxu0 0
      %411 = vmatpush1.bf16.msra.mxu0 %v377
      %412 = vmatprep.subr.bf16.mxu0 0
      %413 = vmatpush2.bf16.msra.mxu0 0
      %414 = vmatprep.subr.bf16.mxu0 0
      %415 = vmatpush2.bf16.msra.mxu0 0
      %416 = vmatprep.subr.bf16.mxu0 0
      %417 = vmatpush2.bf16.msra.mxu0 0
      %418 = vmatprep.subr.bf16.mxu0 0
      %419 = vmatpush2.bf16.msra.mxu0 0
      %420 = vmatprep.subr.bf16.mxu0 0
      %421 = vmatpush2.bf16.msra.mxu0 0
      %422 = vmatprep.subr.bf16.mxu0 0
      %423 = vmatpush2.bf16.msra.mxu0 0
      %424 = vmatprep.subr.bf16.mxu0 0
      %425 = vmatpush2.bf16.msra.mxu0 0
      %426 = vmatprep.subr.bf16.mxu0 0
      %427 = vmatpush2.bf16.msra.mxu0 0
      %428 = vmatprep.mubr.bf16.mxu0 0
      %429 = vmatmul.mubr.bf16.gmra.mxu0 %v391
      %v430 = vpop.f32.mrf.mxu0
      %v431 = vadd.f32 0.0, %v430
      %v432 = vpop.f32.mrf.mxu0
      %v433 = vpop.f32.mrf.mxu0
      %v434 = vadd.f32 0.0, %v433
      %v435 = vpop.f32.mrf.mxu0
      %436 = vmatprep.mubr.bf16.mxu0 0
      %437 = vmatmul.mubr.bf16.gmra.mxu0 %v394
      %v438 = vpop.f32.mrf.mxu0
      %v439 = vadd.f32 0.0, %v438
      %v440 = vpop.f32.mrf.mxu0
      %v441 = vpop.f32.mrf.mxu0
      %v442 = vadd.f32 0.0, %v441
      %v443 = vpop.f32.mrf.mxu0
      %444 = vdwg.mxu0
      %v445 = vld [vmem:[%s2] sm:$0xff]
      %v446 = vld [vmem:[%s2 + $0x8] sm:$0xff]
      %v447 = vld [vmem:[%s2 + $0x10] sm:$0xff]
      %v448 = vld [vmem:[%s2 + $0x18] sm:$0xff]
      %450 = vset.pattern.permute.xlu0 0
      %451 = vperm.xlu0 %450, %v445
      %v452 = vpop.permute.xlu0 %451
      %455 = vset.pattern.permute.xlu0 0
      %456 = vperm.xlu0 %455, %v446
      %v457 = vpop.permute.xlu0 %456
      %460 = vset.pattern.permute.xlu0 0
      %461 = vperm.xlu0 %460, %v447
      %v462 = vpop.permute.xlu0 %461
      %465 = vset.pattern.permute.xlu0 0
      %466 = vperm.xlu0 %465, %v448
      %v467 = vpop.permute.xlu0 %466
      %v469 = vmul.f32 %v431, %v452
      %v470 = vmul.f32 %v434, %v457
      %v471 = vmul.f32 %v439, %v462
      %v472 = vmul.f32 %v442, %v467
      %v473 = vld [vmem:[%s3] sm:$0xff]
      %v474 = vld [vmem:[%s3 + $0x8] sm:$0xff]
      %v475 = vld [vmem:[%s3 + $0x10] sm:$0xff]
      %v476 = vld [vmem:[%s3 + $0x18] sm:$0xff]
      %478 = vset.pattern.permute.xlu0 0
      %479 = vperm.xlu0 %478, %v473
      %v480 = vpop.permute.xlu0 %479
      %483 = vset.pattern.permute.xlu0 0
      %484 = vperm.xlu0 %483, %v474
      %v485 = vpop.permute.xlu0 %484
      %488 = vset.pattern.permute.xlu0 0
      %489 = vperm.xlu0 %488, %v475
      %v490 = vpop.permute.xlu0 %489
      %493 = vset.pattern.permute.xlu0 0
      %494 = vperm.xlu0 %493, %v476
      %v495 = vpop.permute.xlu0 %494
      %v497 = vadd.f32 %v469, %v480
      %v498 = vadd.f32 %v470, %v485
      %v499 = vadd.f32 %v471, %v490
      %v500 = vadd.f32 %v472, %v495
      %v501 = vmax.f32 %v497, 0.0
      %v502 = vmax.f32 %v498, 0.0
      %v503 = vmax.f32 %v499, 0.0
      %v504 = vmax.f32 %v500, 0.0
      %v505 = vpack.c.bf16 %v502, %v501
      %v506 = vpack.c.bf16 %v504, %v503
      %vm507 = vcmask 519168
      %508 = vst.msk [vmem:[#allocation2] sm:$0xf] %vm507, 0
      %509 = vst.msk [vmem:[#allocation2 + $0x8] sm:$0xf] %vm507, 0
      %510 = vst.msk [vmem:[#allocation2 + $0x10] sm:$0xf] %vm507, 0
      %511 = vst.msk [vmem:[#allocation2 + $0x18] sm:$0xf] %vm507, 0
      %vm512 = vcmask 1043968
      %513 = vst.msk [vmem:[#allocation2 + $0x4] sm:$0xf] %vm512, 0
      %514 = vst.msk [vmem:[#allocation2 + $0xc] sm:$0xf] %vm512, 0
      %515 = vst.msk [vmem:[#allocation2 + $0x14] sm:$0xf] %vm512, 0
      %516 = vst.msk [vmem:[#allocation2 + $0x1c] sm:$0xf] %vm512, 0
      %v519 = vunpack.c.l.b16 %v505
      %v520 = vunpack.c.h.b16 %v505
      %v521 = vunpack.c.l.b16 %v506
      %v522 = vunpack.c.h.b16 %v506
      %v523 = vpack.c.b16 %v519, %v519
      %v524 = vpack.c.b16 %v520, %v520
      %v525 = vpack.c.b16 %v521, %v521
      %v526 = vpack.c.b16 %v522, %v522
      %527 = vrot.lane.b32.xlu0 %v523, 64
      %v528 = vpop.permute.xlu0 %527
      %529 = vrot.lane.b32.xlu0 %v524, 64
      %v530 = vpop.permute.xlu0 %529
      %531 = vrot.lane.b32.xlu0 %v525, 64
      %v532 = vpop.permute.xlu0 %531
      %533 = vrot.lane.b32.xlu0 %v526, 64
      %v534 = vpop.permute.xlu0 %533
      %v535 = vrot.slane %v528, 4
      %v536 = vrot.slane %v530, 4
      %v537 = vrot.slane %v532, 4
      %v538 = vrot.slane %v534, 4
      %vm539 = vcmask 523264
      %v540 = vsel %vm539, %v535, %v528
      %v541 = vsel %vm539, %v536, %v530
      %v542 = vsel %vm539, %v537, %v532
      %v543 = vsel %vm539, %v538, %v534
      %vm548 = vcmask 523268
      %vm549 = vmor %vm548, %vm512
      %550 = vst.msk [vmem:[#allocation2] sm:$0xff] %vm549, %v540
      %551 = vst.msk [vmem:[#allocation2 + $0x8] sm:$0xff] %vm549, %v541
      %552 = vst.msk [vmem:[#allocation2 + $0x10] sm:$0xff] %vm549, %v542
      %553 = vst.msk [vmem:[#allocation2 + $0x18] sm:$0xff] %vm549, %v543
      %v554 = vld [vmem:[#allocation2] sm:$0xf]
      %v555 = vld [vmem:[#allocation2 + $0x8] sm:$0xf]
      %v556 = vld [vmem:[#allocation2 + $0x10] sm:$0xf]
      %v557 = vld [vmem:[#allocation2 + $0x18] sm:$0xf]
      %v558 = vld [vmem:[%s4] sm:$0xf]
      %v559 = vld [vmem:[%s4 + $0x4] sm:$0xf]
      %v560 = vld [vmem:[%s4 + $0x8] sm:$0xf]
      %v561 = vld [vmem:[%s4 + $0xc] sm:$0xf]
      %v562 = vld [vmem:[#allocation2] sm:$0xff]
      %v563 = vld [vmem:[#allocation2 + $0x8] sm:$0xff]
      %v564 = vld [vmem:[#allocation2 + $0x10] sm:$0xff]
      %v565 = vld [vmem:[#allocation2 + $0x18] sm:$0xff]
      %s566 = scalar_lea.vmem %s4, 16
      %v567 = vld [vmem:[%s566] sm:$0xf]
      %v568 = vld [vmem:[%s566 + $0x4] sm:$0xf]
      %v569 = vld [vmem:[%s566 + $0x8] sm:$0xf]
      %v570 = vld [vmem:[%s566 + $0xc] sm:$0xf]
      %v575 = vunpack.c.l.b16 %v567
      %v576 = vunpack.c.l.b16 %v568
      %v577 = vunpack.c.l.b16 %v569
      %v578 = vunpack.c.l.b16 %v570
      %v579 = vpack.c.b16 %v576, %v575
      %v580 = vpack.c.b16 %v578, %v577
      %v585 = vunpack.c.l.b16 %v562
      %v586 = vunpack.c.h.b16 %v562
      %v587 = vunpack.c.l.b16 %v563
      %v588 = vunpack.c.h.b16 %v563
      %v589 = vunpack.c.l.b16 %v564
      %v590 = vunpack.c.h.b16 %v564
      %v591 = vunpack.c.l.b16 %v565
      %v592 = vunpack.c.h.b16 %v565
      %v593 = vpack.c.b16 %v587, %v585
      %v594 = vpack.c.b16 %v588, %v586
      %v595 = vpack.c.b16 %v591, %v589
      %v596 = vpack.c.b16 %v592, %v590
      %597 = vrot.lane.b32.xlu0 %v593, 112
      %v598 = vpop.permute.xlu0 %597
      %599 = vrot.lane.b32.xlu0 %v594, 112
      %v600 = vpop.permute.xlu0 %599
      %601 = vrot.lane.b32.xlu0 %v595, 112
      %v602 = vpop.permute.xlu0 %601
      %603 = vrot.lane.b32.xlu0 %v596, 112
      %v604 = vpop.permute.xlu0 %603
      %vm605 = vcmask 916480
      %v606 = vsel %vm605, %v598, %v600
      %v607 = vsel %vm605, %v602, %v604
      %vm610 = vcmask 261120
      %v612 = vsel %vm610, %v579, 0
      %v615 = vsel %vm610, %v580, 0
      %617 = vmatprep.subr.bf16.mxu0 0
      %618 = vmatpush1.bf16.msra.mxu0 0
      %619 = vmatprep.subr.bf16.mxu0 0
      %620 = vmatpush1.bf16.msra.mxu0 0
      %621 = vmatprep.subr.bf16.mxu0 0
      %622 = vmatpush1.bf16.msra.mxu0 0
      %623 = vmatprep.subr.bf16.mxu0 0
      %624 = vmatpush1.bf16.msra.mxu0 0
      %625 = vmatprep.subr.bf16.mxu0 0
      %626 = vmatpush1.bf16.msra.mxu0 0
      %627 = vmatprep.subr.bf16.mxu0 0
      %628 = vmatpush1.bf16.msra.mxu0 0
      %629 = vmatprep.subr.bf16.mxu0 0
      %630 = vmatpush1.bf16.msra.mxu0 %v607
      %631 = vmatprep.subr.bf16.mxu0 0
      %632 = vmatpush1.bf16.msra.mxu0 %v606
      %633 = vmatprep.subr.bf16.mxu0 0
      %634 = vmatpush2.bf16.msra.mxu0 0
      %635 = vmatprep.subr.bf16.mxu0 0
      %636 = vmatpush2.bf16.msra.mxu0 0
      %637 = vmatprep.subr.bf16.mxu0 0
      %638 = vmatpush2.bf16.msra.mxu0 0
      %639 = vmatprep.subr.bf16.mxu0 0
      %640 = vmatpush2.bf16.msra.mxu0 0
      %641 = vmatprep.subr.bf16.mxu0 0
      %642 = vmatpush2.bf16.msra.mxu0 0
      %643 = vmatprep.subr.bf16.mxu0 0
      %644 = vmatpush2.bf16.msra.mxu0 0
      %645 = vmatprep.subr.bf16.mxu0 0
      %646 = vmatpush2.bf16.msra.mxu0 0
      %647 = vmatprep.subr.bf16.mxu0 0
      %648 = vmatpush2.bf16.msra.mxu0 0
      %649 = vmatprep.mubr.bf16.mxu0 0
      %650 = vmatmul.mubr.bf16.gmra.mxu0 %v612
      %v651 = vpop.f32.mrf.mxu0
      %v652 = vadd.f32 0.0, %v651
      %v653 = vpop.f32.mrf.mxu0
      %v654 = vpop.f32.mrf.mxu0
      %v655 = vadd.f32 0.0, %v654
      %v656 = vpop.f32.mrf.mxu0
      %657 = vmatprep.mubr.bf16.mxu0 0
      %658 = vmatmul.mubr.bf16.gmra.mxu0 %v615
      %v659 = vpop.f32.mrf.mxu0
      %v660 = vadd.f32 0.0, %v659
      %v661 = vpop.f32.mrf.mxu0
      %v662 = vpop.f32.mrf.mxu0
      %v663 = vadd.f32 0.0, %v662
      %v664 = vpop.f32.mrf.mxu0
      %665 = vdwg.mxu0
      %v670 = vunpack.c.l.b16 %v558
      %v671 = vunpack.c.l.b16 %v559
      %v672 = vunpack.c.l.b16 %v560
      %v673 = vunpack.c.l.b16 %v561
      %v674 = vpack.c.b16 %v671, %v670
      %v675 = vpack.c.b16 %v673, %v672
      %v680 = vunpack.c.l.b16 %v554
      %v681 = vunpack.c.l.b16 %v555
      %v682 = vunpack.c.l.b16 %v556
      %v683 = vunpack.c.l.b16 %v557
      %v684 = vpack.c.b16 %v681, %v680
      %v685 = vpack.c.b16 %v683, %v682
      %v689 = vsel %vm610, %v674, 0
      %v692 = vsel %vm610, %v675, 0
      %694 = vmatprep.subr.bf16.mxu0 0
      %695 = vmatpush1.bf16.msra.mxu0 0
      %696 = vmatprep.subr.bf16.mxu0 0
      %697 = vmatpush1.bf16.msra.mxu0 0
      %698 = vmatprep.subr.bf16.mxu0 0
      %699 = vmatpush1.bf16.msra.mxu0 0
      %700 = vmatprep.subr.bf16.mxu0 0
      %701 = vmatpush1.bf16.msra.mxu0 0
      %702 = vmatprep.subr.bf16.mxu0 0
      %703 = vmatpush1.bf16.msra.mxu0 0
      %704 = vmatprep.subr.bf16.mxu0 0
      %705 = vmatpush1.bf16.msra.mxu0 0
      %706 = vmatprep.subr.bf16.mxu0 0
      %707 = vmatpush1.bf16.msra.mxu0 %v685
      %708 = vmatprep.subr.bf16.mxu0 0
      %709 = vmatpush1.bf16.msra.mxu0 %v684
      %710 = vmatprep.subr.bf16.mxu0 0
      %711 = vmatpush2.bf16.msra.mxu0 0
      %712 = vmatprep.subr.bf16.mxu0 0
      %713 = vmatpush2.bf16.msra.mxu0 0
      %714 = vmatprep.subr.bf16.mxu0 0
      %715 = vmatpush2.bf16.msra.mxu0 0
      %716 = vmatprep.subr.bf16.mxu0 0
      %717 = vmatpush2.bf16.msra.mxu0 0
      %718 = vmatprep.subr.bf16.mxu0 0
      %719 = vmatpush2.bf16.msra.mxu0 0
      %720 = vmatprep.subr.bf16.mxu0 0
      %721 = vmatpush2.bf16.msra.mxu0 0
      %722 = vmatprep.subr.bf16.mxu0 0
      %723 = vmatpush2.bf16.msra.mxu0 0
      %724 = vmatprep.subr.bf16.mxu0 0
      %725 = vmatpush2.bf16.msra.mxu0 0
      %726 = vmatprep.mubr.bf16.mxu0 0
      %727 = vmatmul.mubr.bf16.gmra.mxu0 %v689
      %v728 = vpop.f32.mrf.mxu0
      %v729 = vadd.f32 %v652, %v728
      %v730 = vpop.f32.mrf.mxu0
      %v731 = vpop.f32.mrf.mxu0
      %v732 = vadd.f32 %v655, %v731
      %v733 = vpop.f32.mrf.mxu0
      %734 = vmatprep.mubr.bf16.mxu0 0
      %735 = vmatmul.mubr.bf16.gmra.mxu0 %v692
      %v736 = vpop.f32.mrf.mxu0
      %v737 = vadd.f32 %v660, %v736
      %v738 = vpop.f32.mrf.mxu0
      %v739 = vpop.f32.mrf.mxu0
      %v740 = vadd.f32 %v663, %v739
      %v741 = vpop.f32.mrf.mxu0
      %742 = vdwg.mxu0
      %s743 = scalar_lea.vmem %s4, 32
      %v744 = vld [vmem:[%s743] sm:$0xf]
      %v745 = vld [vmem:[%s743 + $0x4] sm:$0xf]
      %v746 = vld [vmem:[%s743 + $0x8] sm:$0xf]
      %v747 = vld [vmem:[%s743 + $0xc] sm:$0xf]
      %v752 = vunpack.c.l.b16 %v744
      %v753 = vunpack.c.l.b16 %v745
      %v754 = vunpack.c.l.b16 %v746
      %v755 = vunpack.c.l.b16 %v747
      %v756 = vpack.c.b16 %v753, %v752
      %v757 = vpack.c.b16 %v755, %v754
      %758 = vrot.lane.b32.xlu0 %v593, 96
      %v759 = vpop.permute.xlu0 %758
      %760 = vrot.lane.b32.xlu0 %v594, 96
      %v761 = vpop.permute.xlu0 %760
      %762 = vrot.lane.b32.xlu0 %v595, 96
      %v763 = vpop.permute.xlu0 %762
      %764 = vrot.lane.b32.xlu0 %v596, 96
      %v765 = vpop.permute.xlu0 %764
      %vm766 = vcmask 785408
      %v767 = vsel %vm766, %v759, %v761
      %v768 = vsel %vm766, %v763, %v765
      %v772 = vsel %vm610, %v756, 0
      %v775 = vsel %vm610, %v757, 0
      %777 = vmatprep.subr.bf16.mxu0 0
      %778 = vmatpush1.bf16.msra.mxu0 0
      %779 = vmatprep.subr.bf16.mxu0 0
      %780 = vmatpush1.bf16.msra.mxu0 0
      %781 = vmatprep.subr.bf16.mxu0 0
      %782 = vmatpush1.bf16.msra.mxu0 0
      %783 = vmatprep.subr.bf16.mxu0 0
      %784 = vmatpush1.bf16.msra.mxu0 0
      %785 = vmatprep.subr.bf16.mxu0 0
      %786 = vmatpush1.bf16.msra.mxu0 0
      %787 = vmatprep.subr.bf16.mxu0 0
      %788 = vmatpush1.bf16.msra.mxu0 0
      %789 = vmatprep.subr.bf16.mxu0 0
      %790 = vmatpush1.bf16.msra.mxu0 %v768
      %791 = vmatprep.subr.bf16.mxu0 0
      %792 = vmatpush1.bf16.msra.mxu0 %v767
      %793 = vmatprep.subr.bf16.mxu0 0
      %794 = vmatpush2.bf16.msra.mxu0 0
      %795 = vmatprep.subr.bf16.mxu0 0
      %796 = vmatpush2.bf16.msra.mxu0 0
      %797 = vmatprep.subr.bf16.mxu0 0
      %798 = vmatpush2.bf16.msra.mxu0 0
      %799 = vmatprep.subr.bf16.mxu0 0
      %800 = vmatpush2.bf16.msra.mxu0 0
      %801 = vmatprep.subr.bf16.mxu0 0
      %802 = vmatpush2.bf16.msra.mxu0 0
      %803 = vmatprep.subr.bf16.mxu0 0
      %804 = vmatpush2.bf16.msra.mxu0 0
      %805 = vmatprep.subr.bf16.mxu0 0
      %806 = vmatpush2.bf16.msra.mxu0 0
      %807 = vmatprep.subr.bf16.mxu0 0
      %808 = vmatpush2.bf16.msra.mxu0 0
      %809 = vmatprep.mubr.bf16.mxu0 0
      %810 = vmatmul.mubr.bf16.gmra.mxu0 %v772
      %v811 = vpop.f32.mrf.mxu0
      %v812 = vadd.f32 0.0, %v811
      %v813 = vpop.f32.mrf.mxu0
      %v814 = vpop.f32.mrf.mxu0
      %v815 = vadd.f32 0.0, %v814
      %v816 = vpop.f32.mrf.mxu0
      %817 = vmatprep.mubr.bf16.mxu0 0
      %818 = vmatmul.mubr.bf16.gmra.mxu0 %v775
      %v819 = vpop.f32.mrf.mxu0
      %v820 = vadd.f32 0.0, %v819
      %v821 = vpop.f32.mrf.mxu0
      %v822 = vpop.f32.mrf.mxu0
      %v823 = vadd.f32 0.0, %v822
      %v824 = vpop.f32.mrf.mxu0
      %825 = vdwg.mxu0
      %v826 = vadd.f32 %v729, %v812
      %v827 = vadd.f32 %v732, %v815
      %v828 = vadd.f32 %v737, %v820
      %v829 = vadd.f32 %v740, %v823
      %s830 = scalar_lea.vmem %s4, 48
      %v831 = vld [vmem:[%s830] sm:$0xf]
      %v832 = vld [vmem:[%s830 + $0x4] sm:$0xf]
      %v833 = vld [vmem:[%s830 + $0x8] sm:$0xf]
      %v834 = vld [vmem:[%s830 + $0xc] sm:$0xf]
      %v839 = vunpack.c.l.b16 %v831
      %v840 = vunpack.c.l.b16 %v832
      %v841 = vunpack.c.l.b16 %v833
      %v842 = vunpack.c.l.b16 %v834
      %v843 = vpack.c.b16 %v840, %v839
      %v844 = vpack.c.b16 %v842, %v841
      %845 = vrot.lane.b32.xlu0 %v593, 80
      %v846 = vpop.permute.xlu0 %845
      %847 = vrot.lane.b32.xlu0 %v594, 80
      %v848 = vpop.permute.xlu0 %847
      %849 = vrot.lane.b32.xlu0 %v595, 80
      %v850 = vpop.permute.xlu0 %849
      %851 = vrot.lane.b32.xlu0 %v596, 80
      %v852 = vpop.permute.xlu0 %851
      %vm853 = vcmask 654336
      %v854 = vsel %vm853, %v846, %v848
      %v855 = vsel %vm853, %v850, %v852
      %v859 = vsel %vm610, %v843, 0
      %v862 = vsel %vm610, %v844, 0
      %864 = vmatprep.subr.bf16.mxu0 0
      %865 = vmatpush1.bf16.msra.mxu0 0
      %866 = vmatprep.subr.bf16.mxu0 0
      %867 = vmatpush1.bf16.msra.mxu0 0
      %868 = vmatprep.subr.bf16.mxu0 0
      %869 = vmatpush1.bf16.msra.mxu0 0
      %870 = vmatprep.subr.bf16.mxu0 0
      %871 = vmatpush1.bf16.msra.mxu0 0
      %872 = vmatprep.subr.bf16.mxu0 0
      %873 = vmatpush1.bf16.msra.mxu0 0
      %874 = vmatprep.subr.bf16.mxu0 0
      %875 = vmatpush1.bf16.msra.mxu0 0
      %876 = vmatprep.subr.bf16.mxu0 0
      %877 = vmatpush1.bf16.msra.mxu0 %v855
      %878 = vmatprep.subr.bf16.mxu0 0
      %879 = vmatpush1.bf16.msra.mxu0 %v854
      %880 = vmatprep.subr.bf16.mxu0 0
      %881 = vmatpush2.bf16.msra.mxu0 0
      %882 = vmatprep.subr.bf16.mxu0 0
      %883 = vmatpush2.bf16.msra.mxu0 0
      %884 = vmatprep.subr.bf16.mxu0 0
      %885 = vmatpush2.bf16.msra.mxu0 0
      %886 = vmatprep.subr.bf16.mxu0 0
      %887 = vmatpush2.bf16.msra.mxu0 0
      %888 = vmatprep.subr.bf16.mxu0 0
      %889 = vmatpush2.bf16.msra.mxu0 0
      %890 = vmatprep.subr.bf16.mxu0 0
      %891 = vmatpush2.bf16.msra.mxu0 0
      %892 = vmatprep.subr.bf16.mxu0 0
      %893 = vmatpush2.bf16.msra.mxu0 0
      %894 = vmatprep.subr.bf16.mxu0 0
      %895 = vmatpush2.bf16.msra.mxu0 0
      %896 = vmatprep.mubr.bf16.mxu0 0
      %897 = vmatmul.mubr.bf16.gmra.mxu0 %v859
      %v898 = vpop.f32.mrf.mxu0
      %v899 = vadd.f32 0.0, %v898
      %v900 = vpop.f32.mrf.mxu0
      %v901 = vpop.f32.mrf.mxu0
      %v902 = vadd.f32 0.0, %v901
      %v903 = vpop.f32.mrf.mxu0
      %904 = vmatprep.mubr.bf16.mxu0 0
      %905 = vmatmul.mubr.bf16.gmra.mxu0 %v862
      %v906 = vpop.f32.mrf.mxu0
      %v907 = vadd.f32 0.0, %v906
      %v908 = vpop.f32.mrf.mxu0
      %v909 = vpop.f32.mrf.mxu0
      %v910 = vadd.f32 0.0, %v909
      %v911 = vpop.f32.mrf.mxu0
      %912 = vdwg.mxu0
      %v913 = vadd.f32 %v826, %v899
      %v914 = vadd.f32 %v827, %v902
      %v915 = vadd.f32 %v828, %v907
      %v916 = vadd.f32 %v829, %v910
      %s917 = scalar_lea.vmem %s4, 64
      %v918 = vld [vmem:[%s917] sm:$0xf]
      %v919 = vld [vmem:[%s917 + $0x4] sm:$0xf]
      %v920 = vld [vmem:[%s917 + $0x8] sm:$0xf]
      %v921 = vld [vmem:[%s917 + $0xc] sm:$0xf]
      %v926 = vunpack.c.l.b16 %v918
      %v927 = vunpack.c.l.b16 %v919
      %v928 = vunpack.c.l.b16 %v920
      %v929 = vunpack.c.l.b16 %v921
      %v930 = vpack.c.b16 %v927, %v926
      %v931 = vpack.c.b16 %v929, %v928
      %932 = vrot.lane.b32.xlu0 %v593, 64
      %v933 = vpop.permute.xlu0 %932
      %934 = vrot.lane.b32.xlu0 %v594, 64
      %v935 = vpop.permute.xlu0 %934
      %936 = vrot.lane.b32.xlu0 %v595, 64
      %v937 = vpop.permute.xlu0 %936
      %938 = vrot.lane.b32.xlu0 %v596, 64
      %v939 = vpop.permute.xlu0 %938
      %v940 = vsel %vm539, %v933, %v935
      %v941 = vsel %vm539, %v937, %v939
      %v945 = vsel %vm610, %v930, 0
      %v948 = vsel %vm610, %v931, 0
      %950 = vmatprep.subr.bf16.mxu0 0
      %951 = vmatpush1.bf16.msra.mxu0 0
      %952 = vmatprep.subr.bf16.mxu0 0
      %953 = vmatpush1.bf16.msra.mxu0 0
      %954 = vmatprep.subr.bf16.mxu0 0
      %955 = vmatpush1.bf16.msra.mxu0 0
      %956 = vmatprep.subr.bf16.mxu0 0
      %957 = vmatpush1.bf16.msra.mxu0 0
      %958 = vmatprep.subr.bf16.mxu0 0
      %959 = vmatpush1.bf16.msra.mxu0 0
      %960 = vmatprep.subr.bf16.mxu0 0
      %961 = vmatpush1.bf16.msra.mxu0 0
      %962 = vmatprep.subr.bf16.mxu0 0
      %963 = vmatpush1.bf16.msra.mxu0 %v941
      %964 = vmatprep.subr.bf16.mxu0 0
      %965 = vmatpush1.bf16.msra.mxu0 %v940
      %966 = vmatprep.subr.bf16.mxu0 0
      %967 = vmatpush2.bf16.msra.mxu0 0
      %968 = vmatprep.subr.bf16.mxu0 0
      %969 = vmatpush2.bf16.msra.mxu0 0
      %970 = vmatprep.subr.bf16.mxu0 0
      %971 = vmatpush2.bf16.msra.mxu0 0
      %972 = vmatprep.subr.bf16.mxu0 0
      %973 = vmatpush2.bf16.msra.mxu0 0
      %974 = vmatprep.subr.bf16.mxu0 0
      %975 = vmatpush2.bf16.msra.mxu0 0
      %976 = vmatprep.subr.bf16.mxu0 0
      %977 = vmatpush2.bf16.msra.mxu0 0
      %978 = vmatprep.subr.bf16.mxu0 0
      %979 = vmatpush2.bf16.msra.mxu0 0
      %980 = vmatprep.subr.bf16.mxu0 0
      %981 = vmatpush2.bf16.msra.mxu0 0
      %982 = vmatprep.mubr.bf16.mxu0 0
      %983 = vmatmul.mubr.bf16.gmra.mxu0 %v945
      %v984 = vpop.f32.mrf.mxu0
      %v985 = vadd.f32 0.0, %v984
      %v986 = vpop.f32.mrf.mxu0
      %v987 = vpop.f32.mrf.mxu0
      %v988 = vadd.f32 0.0, %v987
      %v989 = vpop.f32.mrf.mxu0
      %990 = vmatprep.mubr.bf16.mxu0 0
      %991 = vmatmul.mubr.bf16.gmra.mxu0 %v948
      %v992 = vpop.f32.mrf.mxu0
      %v993 = vadd.f32 0.0, %v992
      %v994 = vpop.f32.mrf.mxu0
      %v995 = vpop.f32.mrf.mxu0
      %v996 = vadd.f32 0.0, %v995
      %v997 = vpop.f32.mrf.mxu0
      %998 = vdwg.mxu0
      %v999 = vadd.f32 %v913, %v985
      %v1000 = vadd.f32 %v914, %v988
      %v1001 = vadd.f32 %v915, %v993
      %v1002 = vadd.f32 %v916, %v996
      %s1003 = scalar_lea.vmem %s4, 80
      %v1004 = vld [vmem:[%s1003] sm:$0xf]
      %v1005 = vld [vmem:[%s1003 + $0x4] sm:$0xf]
      %v1006 = vld [vmem:[%s1003 + $0x8] sm:$0xf]
      %v1007 = vld [vmem:[%s1003 + $0xc] sm:$0xf]
      %v1012 = vunpack.c.l.b16 %v1004
      %v1013 = vunpack.c.l.b16 %v1005
      %v1014 = vunpack.c.l.b16 %v1006
      %v1015 = vunpack.c.l.b16 %v1007
      %v1016 = vpack.c.b16 %v1013, %v1012
      %v1017 = vpack.c.b16 %v1015, %v1014
      %1018 = vrot.lane.b32.xlu0 %v593, 48
      %v1019 = vpop.permute.xlu0 %1018
      %1020 = vrot.lane.b32.xlu0 %v594, 48
      %v1021 = vpop.permute.xlu0 %1020
      %1022 = vrot.lane.b32.xlu0 %v595, 48
      %v1023 = vpop.permute.xlu0 %1022
      %1024 = vrot.lane.b32.xlu0 %v596, 48
      %v1025 = vpop.permute.xlu0 %1024
      %vm1026 = vcmask 392192
      %v1027 = vsel %vm1026, %v1019, %v1021
      %v1028 = vsel %vm1026, %v1023, %v1025
      %v1032 = vsel %vm610, %v1016, 0
      %v1035 = vsel %vm610, %v1017, 0
      %1037 = vmatprep.subr.bf16.mxu0 0
      %1038 = vmatpush1.bf16.msra.mxu0 0
      %1039 = vmatprep.subr.bf16.mxu0 0
      %1040 = vmatpush1.bf16.msra.mxu0 0
      %1041 = vmatprep.subr.bf16.mxu0 0
      %1042 = vmatpush1.bf16.msra.mxu0 0
      %1043 = vmatprep.subr.bf16.mxu0 0
      %1044 = vmatpush1.bf16.msra.mxu0 0
      %1045 = vmatprep.subr.bf16.mxu0 0
      %1046 = vmatpush1.bf16.msra.mxu0 0
      %1047 = vmatprep.subr.bf16.mxu0 0
      %1048 = vmatpush1.bf16.msra.mxu0 0
      %1049 = vmatprep.subr.bf16.mxu0 0
      %1050 = vmatpush1.bf16.msra.mxu0 %v1028
      %1051 = vmatprep.subr.bf16.mxu0 0
      %1052 = vmatpush1.bf16.msra.mxu0 %v1027
      %1053 = vmatprep.subr.bf16.mxu0 0
      %1054 = vmatpush2.bf16.msra.mxu0 0
      %1055 = vmatprep.subr.bf16.mxu0 0
      %1056 = vmatpush2.bf16.msra.mxu0 0
      %1057 = vmatprep.subr.bf16.mxu0 0
      %1058 = vmatpush2.bf16.msra.mxu0 0
      %1059 = vmatprep.subr.bf16.mxu0 0
      %1060 = vmatpush2.bf16.msra.mxu0 0
      %1061 = vmatprep.subr.bf16.mxu0 0
      %1062 = vmatpush2.bf16.msra.mxu0 0
      %1063 = vmatprep.subr.bf16.mxu0 0
      %1064 = vmatpush2.bf16.msra.mxu0 0
      %1065 = vmatprep.subr.bf16.mxu0 0
      %1066 = vmatpush2.bf16.msra.mxu0 0
      %1067 = vmatprep.subr.bf16.mxu0 0
      %1068 = vmatpush2.bf16.msra.mxu0 0
      %1069 = vmatprep.mubr.bf16.mxu0 0
      %1070 = vmatmul.mubr.bf16.gmra.mxu0 %v1032
      %v1071 = vpop.f32.mrf.mxu0
      %v1072 = vadd.f32 0.0, %v1071
      %v1073 = vpop.f32.mrf.mxu0
      %v1074 = vpop.f32.mrf.mxu0
      %v1075 = vadd.f32 0.0, %v1074
      %v1076 = vpop.f32.mrf.mxu0
      %1077 = vmatprep.mubr.bf16.mxu0 0
      %1078 = vmatmul.mubr.bf16.gmra.mxu0 %v1035
      %v1079 = vpop.f32.mrf.mxu0
      %v1080 = vadd.f32 0.0, %v1079
      %v1081 = vpop.f32.mrf.mxu0
      %v1082 = vpop.f32.mrf.mxu0
      %v1083 = vadd.f32 0.0, %v1082
      %v1084 = vpop.f32.mrf.mxu0
      %1085 = vdwg.mxu0
      %v1086 = vadd.f32 %v999, %v1072
      %v1087 = vadd.f32 %v1000, %v1075
      %v1088 = vadd.f32 %v1001, %v1080
      %v1089 = vadd.f32 %v1002, %v1083
      %s1090 = scalar_lea.vmem %s4, 96
      %v1091 = vld [vmem:[%s1090] sm:$0xf]
      %v1092 = vld [vmem:[%s1090 + $0x4] sm:$0xf]
      %v1093 = vld [vmem:[%s1090 + $0x8] sm:$0xf]
      %v1094 = vld [vmem:[%s1090 + $0xc] sm:$0xf]
      %v1099 = vunpack.c.l.b16 %v1091
      %v1100 = vunpack.c.l.b16 %v1092
      %v1101 = vunpack.c.l.b16 %v1093
      %v1102 = vunpack.c.l.b16 %v1094
      %v1103 = vpack.c.b16 %v1100, %v1099
      %v1104 = vpack.c.b16 %v1102, %v1101
      %1105 = vrot.lane.b32.xlu0 %v593, 32
      %v1106 = vpop.permute.xlu0 %1105
      %1107 = vrot.lane.b32.xlu0 %v594, 32
      %v1108 = vpop.permute.xlu0 %1107
      %1109 = vrot.lane.b32.xlu0 %v595, 32
      %v1110 = vpop.permute.xlu0 %1109
      %1111 = vrot.lane.b32.xlu0 %v596, 32
      %v1112 = vpop.permute.xlu0 %1111
      %vm1113 = vcmask 261120
      %v1114 = vsel %vm1113, %v1106, %v1108
      %v1115 = vsel %vm1113, %v1110, %v1112
      %v1119 = vsel %vm610, %v1103, 0
      %v1122 = vsel %vm610, %v1104, 0
      %1124 = vmatprep.subr.bf16.mxu0 0
      %1125 = vmatpush1.bf16.msra.mxu0 0
      %1126 = vmatprep.subr.bf16.mxu0 0
      %1127 = vmatpush1.bf16.msra.mxu0 0
      %1128 = vmatprep.subr.bf16.mxu0 0
      %1129 = vmatpush1.bf16.msra.mxu0 0
      %1130 = vmatprep.subr.bf16.mxu0 0
      %1131 = vmatpush1.bf16.msra.mxu0 0
      %1132 = vmatprep.subr.bf16.mxu0 0
      %1133 = vmatpush1.bf16.msra.mxu0 0
      %1134 = vmatprep.subr.bf16.mxu0 0
      %1135 = vmatpush1.bf16.msra.mxu0 0
      %1136 = vmatprep.subr.bf16.mxu0 0
      %1137 = vmatpush1.bf16.msra.mxu0 %v1115
      %1138 = vmatprep.subr.bf16.mxu0 0
      %1139 = vmatpush1.bf16.msra.mxu0 %v1114
      %1140 = vmatprep.subr.bf16.mxu0 0
      %1141 = vmatpush2.bf16.msra.mxu0 0
      %1142 = vmatprep.subr.bf16.mxu0 0
      %1143 = vmatpush2.bf16.msra.mxu0 0
      %1144 = vmatprep.subr.bf16.mxu0 0
      %1145 = vmatpush2.bf16.msra.mxu0 0
      %1146 = vmatprep.subr.bf16.mxu0 0
      %1147 = vmatpush2.bf16.msra.mxu0 0
      %1148 = vmatprep.subr.bf16.mxu0 0
      %1149 = vmatpush2.bf16.msra.mxu0 0
      %1150 = vmatprep.subr.bf16.mxu0 0
      %1151 = vmatpush2.bf16.msra.mxu0 0
      %1152 = vmatprep.subr.bf16.mxu0 0
      %1153 = vmatpush2.bf16.msra.mxu0 0
      %1154 = vmatprep.subr.bf16.mxu0 0
      %1155 = vmatpush2.bf16.msra.mxu0 0
      %1156 = vmatprep.mubr.bf16.mxu0 0
      %1157 = vmatmul.mubr.bf16.gmra.mxu0 %v1119
      %v1158 = vpop.f32.mrf.mxu0
      %v1159 = vadd.f32 0.0, %v1158
      %v1160 = vpop.f32.mrf.mxu0
      %v1161 = vpop.f32.mrf.mxu0
      %v1162 = vadd.f32 0.0, %v1161
      %v1163 = vpop.f32.mrf.mxu0
      %1164 = vmatprep.mubr.bf16.mxu0 0
      %1165 = vmatmul.mubr.bf16.gmra.mxu0 %v1122
      %v1166 = vpop.f32.mrf.mxu0
      %v1167 = vadd.f32 0.0, %v1166
      %v1168 = vpop.f32.mrf.mxu0
      %v1169 = vpop.f32.mrf.mxu0
      %v1170 = vadd.f32 0.0, %v1169
      %v1171 = vpop.f32.mrf.mxu0
      %1172 = vdwg.mxu0
      %v1173 = vadd.f32 %v1086, %v1159
      %v1174 = vadd.f32 %v1087, %v1162
      %v1175 = vadd.f32 %v1088, %v1167
      %v1176 = vadd.f32 %v1089, %v1170
      %s1177 = scalar_lea.vmem %s4, 112
      %v1178 = vld [vmem:[%s1177] sm:$0xf]
      %v1179 = vld [vmem:[%s1177 + $0x4] sm:$0xf]
      %v1180 = vld [vmem:[%s1177 + $0x8] sm:$0xf]
      %v1181 = vld [vmem:[%s1177 + $0xc] sm:$0xf]
      %v1186 = vunpack.c.l.b16 %v1178
      %v1187 = vunpack.c.l.b16 %v1179
      %v1188 = vunpack.c.l.b16 %v1180
      %v1189 = vunpack.c.l.b16 %v1181
      %v1190 = vpack.c.b16 %v1187, %v1186
      %v1191 = vpack.c.b16 %v1189, %v1188
      %1192 = vrot.lane.b32.xlu0 %v593, 16
      %v1193 = vpop.permute.xlu0 %1192
      %1194 = vrot.lane.b32.xlu0 %v594, 16
      %v1195 = vpop.permute.xlu0 %1194
      %1196 = vrot.lane.b32.xlu0 %v595, 16
      %v1197 = vpop.permute.xlu0 %1196
      %1198 = vrot.lane.b32.xlu0 %v596, 16
      %v1199 = vpop.permute.xlu0 %1198
      %vm1200 = vcmask 130048
      %v1201 = vsel %vm1200, %v1193, %v1195
      %v1202 = vsel %vm1200, %v1197, %v1199
      %v1206 = vsel %vm610, %v1190, 0
      %v1209 = vsel %vm610, %v1191, 0
      %1211 = vmatprep.subr.bf16.mxu0 0
      %1212 = vmatpush1.bf16.msra.mxu0 0
      %1213 = vmatprep.subr.bf16.mxu0 0
      %1214 = vmatpush1.bf16.msra.mxu0 0
      %1215 = vmatprep.subr.bf16.mxu0 0
      %1216 = vmatpush1.bf16.msra.mxu0 0
      %1217 = vmatprep.subr.bf16.mxu0 0
      %1218 = vmatpush1.bf16.msra.mxu0 0
      %1219 = vmatprep.subr.bf16.mxu0 0
      %1220 = vmatpush1.bf16.msra.mxu0 0
      %1221 = vmatprep.subr.bf16.mxu0 0
      %1222 = vmatpush1.bf16.msra.mxu0 0
      %1223 = vmatprep.subr.bf16.mxu0 0
      %1224 = vmatpush1.bf16.msra.mxu0 %v1202
      %1225 = vmatprep.subr.bf16.mxu0 0
      %1226 = vmatpush1.bf16.msra.mxu0 %v1201
      %1227 = vmatprep.subr.bf16.mxu0 0
      %1228 = vmatpush2.bf16.msra.mxu0 0
      %1229 = vmatprep.subr.bf16.mxu0 0
      %1230 = vmatpush2.bf16.msra.mxu0 0
      %1231 = vmatprep.subr.bf16.mxu0 0
      %1232 = vmatpush2.bf16.msra.mxu0 0
      %1233 = vmatprep.subr.bf16.mxu0 0
      %1234 = vmatpush2.bf16.msra.mxu0 0
      %1235 = vmatprep.subr.bf16.mxu0 0
      %1236 = vmatpush2.bf16.msra.mxu0 0
      %1237 = vmatprep.subr.bf16.mxu0 0
      %1238 = vmatpush2.bf16.msra.mxu0 0
      %1239 = vmatprep.subr.bf16.mxu0 0
      %1240 = vmatpush2.bf16.msra.mxu0 0
      %1241 = vmatprep.subr.bf16.mxu0 0
      %1242 = vmatpush2.bf16.msra.mxu0 0
      %1243 = vmatprep.mubr.bf16.mxu0 0
      %1244 = vmatmul.mubr.bf16.gmra.mxu0 %v1206
      %v1245 = vpop.f32.mrf.mxu0
      %v1246 = vadd.f32 0.0, %v1245
      %v1247 = vpop.f32.mrf.mxu0
      %v1248 = vpop.f32.mrf.mxu0
      %v1249 = vadd.f32 0.0, %v1248
      %v1250 = vpop.f32.mrf.mxu0
      %1251 = vmatprep.mubr.bf16.mxu0 0
      %1252 = vmatmul.mubr.bf16.gmra.mxu0 %v1209
      %v1253 = vpop.f32.mrf.mxu0
      %v1254 = vadd.f32 0.0, %v1253
      %v1255 = vpop.f32.mrf.mxu0
      %v1256 = vpop.f32.mrf.mxu0
      %v1257 = vadd.f32 0.0, %v1256
      %v1258 = vpop.f32.mrf.mxu0
      %1259 = vdwg.mxu0
      %v1260 = vadd.f32 %v1173, %v1246
      %v1261 = vadd.f32 %v1174, %v1249
      %v1262 = vadd.f32 %v1175, %v1254
      %v1263 = vadd.f32 %v1176, %v1257
      %v1264 = vld [vmem:[#allocation2 + $0x4] sm:$0xf]
      %v1265 = vld [vmem:[#allocation2 + $0xc] sm:$0xf]
      %v1266 = vld [vmem:[#allocation2 + $0x14] sm:$0xf]
      %v1267 = vld [vmem:[#allocation2 + $0x1c] sm:$0xf]
      %s1268 = scalar_lea.vmem %s4, 128
      %v1269 = vld [vmem:[%s1268] sm:$0xf]
      %v1270 = vld [vmem:[%s1268 + $0x4] sm:$0xf]
      %v1271 = vld [vmem:[%s1268 + $0x8] sm:$0xf]
      %v1272 = vld [vmem:[%s1268 + $0xc] sm:$0xf]
      %v1277 = vunpack.c.l.b16 %v1269
      %v1278 = vunpack.c.l.b16 %v1270
      %v1279 = vunpack.c.l.b16 %v1271
      %v1280 = vunpack.c.l.b16 %v1272
      %v1281 = vpack.c.b16 %v1278, %v1277
      %v1282 = vpack.c.b16 %v1280, %v1279
      %v1287 = vunpack.c.l.b16 %v1264
      %v1288 = vunpack.c.l.b16 %v1265
      %v1289 = vunpack.c.l.b16 %v1266
      %v1290 = vunpack.c.l.b16 %v1267
      %v1291 = vpack.c.b16 %v1288, %v1287
      %v1292 = vpack.c.b16 %v1290, %v1289
      %v1296 = vsel %vm610, %v1281, 0
      %v1299 = vsel %vm610, %v1282, 0
      %1301 = vmatprep.subr.bf16.mxu0 0
      %1302 = vmatpush1.bf16.msra.mxu0 0
      %1303 = vmatprep.subr.bf16.mxu0 0
      %1304 = vmatpush1.bf16.msra.mxu0 0
      %1305 = vmatprep.subr.bf16.mxu0 0
      %1306 = vmatpush1.bf16.msra.mxu0 0
      %1307 = vmatprep.subr.bf16.mxu0 0
      %1308 = vmatpush1.bf16.msra.mxu0 0
      %1309 = vmatprep.subr.bf16.mxu0 0
      %1310 = vmatpush1.bf16.msra.mxu0 0
      %1311 = vmatprep.subr.bf16.mxu0 0
      %1312 = vmatpush1.bf16.msra.mxu0 0
      %1313 = vmatprep.subr.bf16.mxu0 0
      %1314 = vmatpush1.bf16.msra.mxu0 %v1292
      %1315 = vmatprep.subr.bf16.mxu0 0
      %1316 = vmatpush1.bf16.msra.mxu0 %v1291
      %1317 = vmatprep.subr.bf16.mxu0 0
      %1318 = vmatpush2.bf16.msra.mxu0 0
      %1319 = vmatprep.subr.bf16.mxu0 0
      %1320 = vmatpush2.bf16.msra.mxu0 0
      %1321 = vmatprep.subr.bf16.mxu0 0
      %1322 = vmatpush2.bf16.msra.mxu0 0
      %1323 = vmatprep.subr.bf16.mxu0 0
      %1324 = vmatpush2.bf16.msra.mxu0 0
      %1325 = vmatprep.subr.bf16.mxu0 0
      %1326 = vmatpush2.bf16.msra.mxu0 0
      %1327 = vmatprep.subr.bf16.mxu0 0
      %1328 = vmatpush2.bf16.msra.mxu0 0
      %1329 = vmatprep.subr.bf16.mxu0 0
      %1330 = vmatpush2.bf16.msra.mxu0 0
      %1331 = vmatprep.subr.bf16.mxu0 0
      %1332 = vmatpush2.bf16.msra.mxu0 0
      %1333 = vmatprep.mubr.bf16.mxu0 0
      %1334 = vmatmul.mubr.bf16.gmra.mxu0 %v1296
      %v1335 = vpop.f32.mrf.mxu0
      %v1336 = vadd.f32 0.0, %v1335
      %v1337 = vpop.f32.mrf.mxu0
      %v1338 = vpop.f32.mrf.mxu0
      %v1339 = vadd.f32 0.0, %v1338
      %v1340 = vpop.f32.mrf.mxu0
      %1341 = vmatprep.mubr.bf16.mxu0 0
      %1342 = vmatmul.mubr.bf16.gmra.mxu0 %v1299
      %v1343 = vpop.f32.mrf.mxu0
      %v1344 = vadd.f32 0.0, %v1343
      %v1345 = vpop.f32.mrf.mxu0
      %v1346 = vpop.f32.mrf.mxu0
      %v1347 = vadd.f32 0.0, %v1346
      %v1348 = vpop.f32.mrf.mxu0
      %1349 = vdwg.mxu0
      %v1350 = vadd.f32 %v1260, %v1336
      %v1351 = vadd.f32 %v1261, %v1339
      %v1352 = vadd.f32 %v1262, %v1344
      %v1353 = vadd.f32 %v1263, %v1347
      %v1354 = vld [vmem:[%s5] sm:$0xff]
      %v1355 = vld [vmem:[%s5 + $0x8] sm:$0xff]
      %v1356 = vld [vmem:[%s5 + $0x10] sm:$0xff]
      %v1357 = vld [vmem:[%s5 + $0x18] sm:$0xff]
      %1359 = vset.pattern.permute.xlu0 0
      %1360 = vperm.xlu0 %1359, %v1354
      %v1361 = vpop.permute.xlu0 %1360
      %1364 = vset.pattern.permute.xlu0 0
      %1365 = vperm.xlu0 %1364, %v1355
      %v1366 = vpop.permute.xlu0 %1365
      %1369 = vset.pattern.permute.xlu0 0
      %1370 = vperm.xlu0 %1369, %v1356
      %v1371 = vpop.permute.xlu0 %1370
      %1374 = vset.pattern.permute.xlu0 0
      %1375 = vperm.xlu0 %1374, %v1357
      %v1376 = vpop.permute.xlu0 %1375
      %v1378 = vmul.f32 %v1350, %v1361
      %v1379 = vmul.f32 %v1351, %v1366
      %v1380 = vmul.f32 %v1352, %v1371
      %v1381 = vmul.f32 %v1353, %v1376
      %v1382 = vld [vmem:[%s6] sm:$0xff]
      %v1383 = vld [vmem:[%s6 + $0x8] sm:$0xff]
      %v1384 = vld [vmem:[%s6 + $0x10] sm:$0xff]
      %v1385 = vld [vmem:[%s6 + $0x18] sm:$0xff]
      %1387 = vset.pattern.permute.xlu0 0
      %1388 = vperm.xlu0 %1387, %v1382
      %v1389 = vpop.permute.xlu0 %1388
      %1392 = vset.pattern.permute.xlu0 0
      %1393 = vperm.xlu0 %1392, %v1383
      %v1394 = vpop.permute.xlu0 %1393
      %1397 = vset.pattern.permute.xlu0 0
      %1398 = vperm.xlu0 %1397, %v1384
      %v1399 = vpop.permute.xlu0 %1398
      %1402 = vset.pattern.permute.xlu0 0
      %1403 = vperm.xlu0 %1402, %v1385
      %v1404 = vpop.permute.xlu0 %1403
      %v1406 = vadd.f32 %v1378, %v1389
      %v1407 = vadd.f32 %v1379, %v1394
      %v1408 = vadd.f32 %v1380, %v1399
      %v1409 = vadd.f32 %v1381, %v1404
      %v1410 = vmax.f32 %v1406, 0.0
      %v1411 = vmax.f32 %v1407, 0.0
      %v1412 = vmax.f32 %v1408, 0.0
      %v1413 = vmax.f32 %v1409, 0.0
      %v1414 = vld [vmem:[%s320] sm:$0xf]
      %v1415 = vld [vmem:[%s320 + $0x4] sm:$0xf]
      %v1416 = vld [vmem:[%s320 + $0x8] sm:$0xf]
      %v1417 = vld [vmem:[%s320 + $0xc] sm:$0xf]
      %v1418 = vunpack.c.l.bf16 %v1414
      %v1419 = vunpack.c.l.bf16 %v1415
      %v1420 = vunpack.c.l.bf16 %v1416
      %v1421 = vunpack.c.l.bf16 %v1417
      %v1422 = vadd.f32 %v1410, %v1418
      %v1423 = vadd.f32 %v1411, %v1419
      %v1424 = vadd.f32 %v1412, %v1420
      %v1425 = vadd.f32 %v1413, %v1421
      %v1426 = vpack.c.bf16 %v1423, %v1422
      %v1427 = vpack.c.bf16 %v1425, %v1424
      %v1430 = vunpack.c.l.b16 %v1426
      %v1431 = vunpack.c.h.b16 %v1426
      %v1432 = vunpack.c.l.b16 %v1427
      %v1433 = vunpack.c.h.b16 %v1427
      %v1434 = vpack.c.b16 %v1430, %v1430
      %v1435 = vpack.c.b16 %v1431, %v1431
      %v1436 = vpack.c.b16 %v1432, %v1432
      %v1437 = vpack.c.b16 %v1433, %v1433
      %1442 = vst [vmem:[%s325] sm:$0xf] %v1434
      %1443 = vst [vmem:[%s325 + $0x4] sm:$0xf] %v1435
      %1444 = vst [vmem:[%s325 + $0x8] sm:$0xf] %v1436
      %1445 = vst [vmem:[%s325 + $0xc] sm:$0xf] %v1437
      %p1446 = scmp.lt.s32.totalorder %s19, 3
      %s1447 = scalar_select %p1446, %s19, 3
      %s1448 = smul.addr %s1447, 4
      %s1449 = smul.addr %s1448, 4
      %s1450 = scalar_lea.vmem %s8, %s1449
      // Predicated region
      $region53: #{_lambda_.15} parent=51 // pred_check
        %p1451 = pneg %p215
      $region54: #{_lambda_.15} parent=51 // pred_check_branch
        %1453 = sbr.rel (%p1451) target = $region56
      $region55: #{_lambda_.15} parent=51 // pred_region
        _
      $region56: #{_lambda_.15} parent=51 // pred_fallthru
        _
    $region52: #{_lambda_.15} parent=5 // pred_fallthru
      _
    %p1454 = scmp.le.s32.totalorder 2, %s14
    // Predicated region
    $region57: #{_lambda_.15} parent=5 // pred_check
      %p1455 = pneg %p1454
    $region58: #{_lambda_.15} parent=5 // pred_check_branch
      %1457 = sbr.rel (%p1455) target = $region60
    $region59: #{_lambda_.15} parent=5 // pred_region
      %s1458 = ssub.s32 %s14, 2
      // Predicated region
      $region61: #{_lambda_.15} parent=59 // pred_check
        %p1459 = pneg %p221
      $region62: #{_lambda_.15} parent=59 // pred_check_branch
        %1461 = sbr.rel (%p1459) target = $region64
      $region63: #{_lambda_.15} parent=59 // pred_region
        %p1462 = scmp.lt.s32.totalorder %s20, 3
        %s1463 = scalar_select %p1462, %s20, 3
        %s1464 = smul.addr %s1463, 4
        %s1465 = smul.addr %s1464, 4
        %s1466 = scalar_lea.vmem %s8, %s1465
      $region64: #{_lambda_.15} parent=59 // pred_fallthru
        _
    $region60: #{_lambda_.15} parent=5 // pred_fallthru
      _
  $region6: #{_lambda_.15} parent=0 // loop_footer
    %s18 = sadd.s32 1, %s14
  $region7: #{_lambda_.15} parent=0 // loop_footer_branch
    %13 = sbr.rel target = $region3
  $region8: #{_lambda_.15} parent=0 // loop_exit
    _

</llo_original>
